<compile_context>
chip_gen: v5e
topology: v5e:2x2
jax: 0.10.0
libtpu: 0.0.40
codegen_flags: <defaults>
</compile_context>

<pallas_src>
from functools import partial

import jax
import jax.numpy as jnp
from jax import lax
from jax.experimental import pallas as pl
from jax.experimental.pallas import tpu as pltpu


# ----------------------------------------------------------------------------
# Fused VQ kernel (packed layout): distances -> argmin -> one-hot -> lookup
#                                  + running loss / code-usage accumulation
# ----------------------------------------------------------------------------
def _vq_kernel(x_ref, w_ref, esq_ref, ebd_ref,
               q_ref, enc_ref, loss_ref, perp_ref,
               sq_acc, cnt_acc, *,
               tr, m_total, d, k, p, commitment_cost, needs_mask):
    step = pl.program_id(0)
    last = pl.num_programs(0) - 1

    @pl.when(step == 0)
    def _init():
        sq_acc[...] = jnp.zeros_like(sq_acc)
        cnt_acc[...] = jnp.zeros_like(cnt_acc)

    x = x_ref[...]                                     # (tr, p*d)  p pixels / row

    # Bias-shifted distances, packed per pixel-segment: |e|^2 - 2 x.e
    # (|x|^2 is constant per pixel -> irrelevant for argmin; loss uses (q-x)^2.)
    dist = jnp.dot(x, w_ref[...],
                   preferred_element_type=jnp.float32,
                   precision=lax.Precision.HIGHEST) + esq_ref[...]   # (tr, p*k)

    # Per-pixel first-minimum argmin -> one-hot (matches torch.argmin ties).
    col = lax.broadcasted_iota(jnp.int32, (tr, k), 1)
    enc_segs = []
    for j in range(p):
        dj = dist[:, j * k:(j + 1) * k]                              # (tr, k)
        mn = jnp.min(dj, axis=-1, keepdims=True)
        idx = jnp.min(jnp.where(dj <= mn, col, k), axis=-1, keepdims=True)
        enc_segs.append((col == idx).astype(jnp.float32))
    enc = (jnp.concatenate(enc_segs, axis=-1) if p > 1 else enc_segs[0])  # (tr, p*k)

    # Codebook lookup as one-hot matmul against the block-diagonal codebook.
    q = jnp.dot(enc, ebd_ref[...],
                preferred_element_type=jnp.float32,
                precision=lax.Precision.HIGHEST)                     # (tr, p*d)

    q_ref[...] = q
    enc_ref[...] = enc.astype(enc_ref.dtype)           # bf16 one-hot is exact

    sq = (q - x) * (q - x)                                           # (tr, p*d)

    if needs_mask:
        # Only the final tile can contain padded pixels -> mask only there.
        @pl.when(step == last)
        def _acc_masked():
            row = lax.broadcasted_iota(jnp.int32, (tr, 1), 0)
            rem = jnp.clip(m_total - (step * tr + row) * p, 0, p)    # valid pixels/row
            lane_d = lax.broadcasted_iota(jnp.int32, (tr, p * d), 1)
            lane_k = lax.broadcasted_iota(jnp.int32, (tr, p * k), 1)
            sq_m = jnp.where(lane_d < rem * d, sq, 0.0)
            enc_m = jnp.where(lane_k < rem * k, enc, 0.0)
            sq_acc[...] += jnp.sum(sq_m, axis=0, keepdims=True)
            cnt_acc[...] += jnp.sum(enc_m, axis=0, keepdims=True)

        @pl.when(step != last)
        def _acc_plain():
            sq_acc[...] += jnp.sum(sq, axis=0, keepdims=True)
            cnt_acc[...] += jnp.sum(enc, axis=0, keepdims=True)
    else:
        sq_acc[...] += jnp.sum(sq, axis=0, keepdims=True)
        cnt_acc[...] += jnp.sum(enc, axis=0, keepdims=True)

    @pl.when(step == last)
    def _finalize():
        total_sq = jnp.sum(sq_acc[...], axis=-1, keepdims=True)      # (1, 1)
        loss_ref[...] = (commitment_cost / float(m_total * d)) * total_sq
        cnt = cnt_acc[...]                                           # (1, p*k)
        cnt_k = cnt[:, 0:k]
        for j in range(1, p):
            cnt_k = cnt_k + cnt[:, j * k:(j + 1) * k]
        probs = cnt_k * (1.0 / float(m_total))
        ent = jnp.sum(probs * jnp.log(probs + 1e-10), axis=-1, keepdims=True)
        perp_ref[...] = jnp.exp(-ent)


# ----------------------------------------------------------------------------
# Tile picking: prefer a large tile that divides M (no pad, no mask)
# ----------------------------------------------------------------------------
def _pick_tile(m, tile_m, p):
    quantum = 16 * p                        # keeps packed-row blocks >= 16 sublanes
    tile_m = max(quantum, (tile_m // quantum) * quantum)
    c = tile_m
    while c >= max(quantum, tile_m // 8):
        if m % c == 0:
            return c
        c //= 2
    return min(tile_m, pl.cdiv(m, quantum) * quantum)   # ragged fallback (padded)


# ----------------------------------------------------------------------------
# Wrapper: layout glue + pallas_call
# ----------------------------------------------------------------------------
def vq_ema_forward(x_nchw, embedding, commitment_cost, *, tile_m=2048,
                   encodings_dtype=jnp.bfloat16):
    k, d = embedding.shape
    n, c, h, w = x_nchw.shape
    assert c == d, "channel dim must equal embedding_dim"

    # Pixels packed per 128-lane row (lane-dense loads/stores) when D divides 128.
    p = 128 // d if (d <= 128 and 128 % d == 0) else 1

    x_nhwc = jnp.transpose(x_nchw, (0, 2, 3, 1)).astype(jnp.float32)
    flat = x_nhwc.reshape(-1, d)
    m = flat.shape[0]

    tm = _pick_tile(m, tile_m, p)
    m_pad = pl.cdiv(m, tm) * tm
    needs_mask = m_pad != m
    flat_p = jnp.pad(flat, ((0, m_pad - m), (0, 0))) if needs_mask else flat

    tr = tm // p
    x_packed = flat_p.reshape(m_pad // p, p * d)      # free row-major repack

    e = embedding.astype(jnp.float32)
    eye = jnp.eye(p, dtype=jnp.float32)
    w_mat = jnp.kron(eye, -2.0 * e.T)                 # (p*d, p*k), folds the -2
    e_bd = jnp.kron(eye, e)                           # (p*k, p*d) block-diag codebook
    e_sq = jnp.tile(jnp.sum(e * e, axis=1), p).reshape(1, p * k)

    kernel = partial(_vq_kernel, tr=tr, m_total=m, d=d, k=k, p=p,
                     commitment_cost=float(commitment_cost),
                     needs_mask=needs_mask)

    q_packed, enc_packed, loss, perp = pl.pallas_call(
        kernel,
        out_shape=(
            jax.ShapeDtypeStruct((m_pad // p, p * d), jnp.float32),    # quantized
            jax.ShapeDtypeStruct((m_pad // p, p * k), encodings_dtype),  # one-hot
            jax.ShapeDtypeStruct((1, 1), jnp.float32),                 # loss
            jax.ShapeDtypeStruct((1, 1), jnp.float32),                 # perplexity
        ),
        grid=(m_pad // tm,),
        in_specs=[
            pl.BlockSpec((tr, p * d), lambda i: (i, 0)),       # packed pixels
            pl.BlockSpec((p * d, p * k), lambda i: (0, 0)),    # -2*E^T blockdiag (resident)
            pl.BlockSpec((1, p * k), lambda i: (0, 0)),        # |e|^2 tiled (resident)
            pl.BlockSpec((p * k, p * d), lambda i: (0, 0)),    # E blockdiag (resident)
        ],
        out_specs=(
            pl.BlockSpec((tr, p * d), lambda i: (i, 0)),
            pl.BlockSpec((tr, p * k), lambda i: (i, 0)),
            pl.BlockSpec((1, 1), lambda i: (0, 0)),
            pl.BlockSpec((1, 1), lambda i: (0, 0)),
        ),
        scratch_shapes=[
            pltpu.VMEM((1, p * d), jnp.float32),               # sum of squared error
            pltpu.VMEM((1, p * k), jnp.float32),               # per-code counts
        ],
        compiler_params=pltpu.CompilerParams(
            dimension_semantics=("arbitrary",)),               # reduction-carrying axis
    )(x_packed, w_mat, e_sq, e_bd)

    q_flat = q_packed.reshape(m_pad, d)[:m]
    enc = enc_packed.reshape(m_pad, k)[:m]            # bf16 one-hot (values exact)
    quantized = jnp.transpose(q_flat.reshape(n, h, w, d), (0, 3, 1, 2))
    # Straight-through estimator (inputs + (q - inputs).detach()) is a
    # gradient-only transform; its forward value equals `quantized`.
    return loss[0, 0], quantized, perp[0, 0], enc


# ----------------------------------------------------------------------------
# Pure-JAX reference mirroring the PyTorch forward (eval-mode outputs)
# ----------------------------------------------------------------------------
def vq_ema_ref(x_nchw, embedding, commitment_cost):
    k, d = embedding.shape
    x = jnp.transpose(x_nchw, (0, 2, 3, 1)).astype(jnp.float32)
    flat = x.reshape(-1, d)
    dist = (jnp.sum(flat ** 2, axis=1, keepdims=True)
            + jnp.sum(embedding ** 2, axis=1)
            - 2.0 * jnp.matmul(flat, embedding.T,
                               precision=lax.Precision.HIGHEST))
    idx = jnp.argmin(dist, axis=1)
    enc = jax.nn.one_hot(idx, k, dtype=jnp.float32)
    q = jnp.matmul(enc, embedding, precision=lax.Precision.HIGHEST)
    qx = q.reshape(x.shape)
    e_latent = jnp.mean((qx - x) ** 2)
    loss = commitment_cost * e_latent
    avg = jnp.mean(enc, axis=0)
    perp = jnp.exp(-jnp.sum(avg * jnp.log(avg + 1e-10)))
    return loss, jnp.transpose(qx, (0, 3, 1, 2)), perp, enc


if __name__ == "__main__":
    # Config consistent with the module:
    # VectorQuantizerEMA(num_embeddings=128, embedding_dim=32,
    #                    commitment_cost=0.25, decay=0.99)
    num_embeddings = 128
    embedding_dim = 32
    commitment_cost = 0.25

    key = jax.random.PRNGKey(0)
    k_x, k_e = jax.random.split(key)
    x = jax.random.normal(k_x, (2, embedding_dim, 16, 16), jnp.float32)   # NCHW
    embedding = jax.random.normal(
        k_e, (num_embeddings, embedding_dim), jnp.float32)                # codebook

    loss, quantized, perplexity, encodings = jax.block_until_ready(
        vq_ema_forward(x, embedding, commitment_cost))

    assert quantized.shape == x.shape, quantized.shape
    assert encodings.shape == (2 * 16 * 16, num_embeddings), encodings.shape

    l_r, q_r, p_r, e_r = jax.block_until_ready(
        vq_ema_ref(x, embedding, commitment_cost))

    assert jnp.allclose(loss, l_r, rtol=2e-3, atol=2e-3), (float(loss), float(l_r))
    assert jnp.allclose(quantized, q_r, rtol=2e-3, atol=2e-3), (
        float(jnp.max(jnp.abs(quantized - q_r))))
    assert jnp.allclose(perplexity, p_r, rtol=2e-3, atol=2e-3), (
        float(perplexity), float(p_r))
    assert jnp.allclose(encodings.astype(jnp.float32), e_r, atol=1e-6), \
        "encoding mismatch"

    print("KERNEL_OK")
</pallas_src>

<mosaic_0001>
module attributes {stable_mosaic.version = 11 : i64} {
  func.func @_vq_kernel(%arg0: i32, %arg1: memref<128x128xf32, #tpu.memory_space<vmem>>, %arg2: memref<128x512xf32, #tpu.memory_space<vmem>>, %arg3: memref<1x512xf32, #tpu.memory_space<vmem>>, %arg4: memref<512x128xf32, #tpu.memory_space<vmem>>, %arg5: memref<128x128xf32, #tpu.memory_space<vmem>>, %arg6: memref<128x512xbf16, #tpu.memory_space<vmem>>, %arg7: memref<1x1xf32, #tpu.memory_space<vmem>>, %arg8: memref<1x1xf32, #tpu.memory_space<vmem>>, %arg9: memref<1x128xf32, #tpu.memory_space<vmem>>, %arg10: memref<1x512xf32, #tpu.memory_space<vmem>>) attributes {dimension_semantics = [#tpu.dimension_semantics<arbitrary>], iteration_bounds = array<i64: 1>, scalar_prefetch = 0 : i64, scratch_operands = 2 : i64, tpu.core_type = #tpu.core_type<tc>, window_params = [{transform_indices = @transform_0, window_bounds = array<i64: 128, 128>}, {pipeline_mode = #tpu.pipeline_mode<synchronous>, transform_indices = @transform_1, window_bounds = array<i64: 128, 512>}, {pipeline_mode = #tpu.pipeline_mode<synchronous>, transform_indices = @transform_2, window_bounds = array<i64: 1, 512>}, {pipeline_mode = #tpu.pipeline_mode<synchronous>, transform_indices = @transform_3, window_bounds = array<i64: 512, 128>}, {transform_indices = @transform_4, window_bounds = array<i64: 128, 128>}, {transform_indices = @transform_5, window_bounds = array<i64: 128, 512>}, {pipeline_mode = #tpu.pipeline_mode<synchronous>, transform_indices = @transform_6, window_bounds = array<i64: 1, 1>}, {pipeline_mode = #tpu.pipeline_mode<synchronous>, transform_indices = @transform_7, window_bounds = array<i64: 1, 1>}]} {
    %c0_i32 = arith.constant 0 : i32
    %0 = arith.cmpi eq, %arg0, %c0_i32 : i32
    %1 = arith.extui %0 : i1 to i32
    %c0_i32_0 = arith.constant 0 : i32
    %2 = arith.cmpi ne, %1, %c0_i32_0 : i32
    scf.if %2 {
      %cst_36 = arith.constant 0.000000e+00 : f32
      %84 = vector.broadcast %cst_36 : f32 to vector<1x128xf32>
      %c0_37 = arith.constant 0 : index
      %c0_38 = arith.constant 0 : index
      %85 = vector.load %arg9[%c0_37, %c0_38] : memref<1x128xf32, #tpu.memory_space<vmem>>, vector<1x128xf32>
      tpu.vector_store %arg9[%c0_37, %c0_38], %84 {strides = array<i32>} : memref<1x128xf32, #tpu.memory_space<vmem>>, vector<1x128xf32>,
      %cst_39 = arith.constant 0.000000e+00 : f32
      %86 = vector.broadcast %cst_39 : f32 to vector<1x512xf32>
      %c0_40 = arith.constant 0 : index
      %c0_41 = arith.constant 0 : index
      %87 = vector.load %arg10[%c0_40, %c0_41] : memref<1x512xf32, #tpu.memory_space<vmem>>, vector<1x512xf32>
      tpu.vector_store %arg10[%c0_40, %c0_41], %86 {strides = array<i32>} : memref<1x512xf32, #tpu.memory_space<vmem>>, vector<1x512xf32>,
    } else {
    }
    %c0 = arith.constant 0 : index
    %c0_1 = arith.constant 0 : index
    %3 = vector.load %arg1[%c0, %c0_1] : memref<128x128xf32, #tpu.memory_space<vmem>>, vector<128x128xf32>
    %c0_2 = arith.constant 0 : index
    %c0_3 = arith.constant 0 : index
    %4 = vector.load %arg2[%c0_2, %c0_3] : memref<128x512xf32, #tpu.memory_space<vmem>>, vector<128x512xf32>
    %cst = arith.constant dense<0.000000e+00> : vector<128x512xf32>
    %5 = tpu.matmul %3, %4, %cst {dimension_numbers = #tpu.dot_dimension_numbers<[1], [0], [0], [1], [0, 0, 1, 1], [], []>, precision = #tpu.contract_precision<fp32>} : vector<128x128xf32>, vector<128x512xf32>, vector<128x512xf32> -> vector<128x512xf32>
    %c0_4 = arith.constant 0 : index
    %c0_5 = arith.constant 0 : index
    %6 = vector.load %arg3[%c0_4, %c0_5] : memref<1x512xf32, #tpu.memory_space<vmem>>, vector<1x512xf32>
    %7 = vector.broadcast %6 : vector<1x512xf32> to vector<128x512xf32>
    %8 = arith.addf %5, %7 : vector<128x512xf32>
    %9 = tpu.iota {dimensions = array<i32: 1>} : vector<128x128xi32>
    %10 = vector.extract_strided_slice %8 {offsets = [0, 0], sizes = [128, 128], strides = [1, 1]} : vector<128x512xf32> to vector<128x128xf32>
    %cst_6 = arith.constant dense<0x7F800000> : vector<128xf32>
    %11 = vector.multi_reduction <minimumf>, %10, %cst_6 [1] : vector<128x128xf32> to vector<128xf32>
    %12 = vector.shape_cast %11 : vector<128xf32> to vector<128x1xf32>
    %13 = vector.broadcast %12 : vector<128x1xf32> to vector<128x128xf32>
    %14 = arith.cmpf ole, %10, %13 : vector<128x128xf32>
    %c128_i32 = arith.constant 128 : i32
    %15 = vector.broadcast %c128_i32 : i32 to vector<128x128xi32>
    %16 = arith.select %14, %9, %15 : vector<128x128xi1>, vector<128x128xi32>
    %cst_7 = arith.constant dense<2147483647> : vector<128xi32>
    %17 = vector.multi_reduction <minsi>, %16, %cst_7 [1] : vector<128x128xi32> to vector<128xi32>
    %18 = vector.shape_cast %17 : vector<128xi32> to vector<128x1xi32>
    %19 = vector.broadcast %18 : vector<128x1xi32> to vector<128x128xi32>
    %20 = arith.cmpi eq, %9, %19 : vector<128x128xi32>
    %21 = arith.extui %20 : vector<128x128xi1> to vector<128x128xi32>
    %22 = arith.sitofp %21 : vector<128x128xi32> to vector<128x128xf32>
    %23 = vector.extract_strided_slice %8 {offsets = [0, 128], sizes = [128, 128], strides = [1, 1]} : vector<128x512xf32> to vector<128x128xf32>
    %cst_8 = arith.constant dense<0x7F800000> : vector<128xf32>
    %24 = vector.multi_reduction <minimumf>, %23, %cst_8 [1] : vector<128x128xf32> to vector<128xf32>
    %25 = vector.shape_cast %24 : vector<128xf32> to vector<128x1xf32>
    %26 = vector.broadcast %25 : vector<128x1xf32> to vector<128x128xf32>
    %27 = arith.cmpf ole, %23, %26 : vector<128x128xf32>
    %c128_i32_9 = arith.constant 128 : i32
    %28 = vector.broadcast %c128_i32_9 : i32 to vector<128x128xi32>
    %29 = arith.select %27, %9, %28 : vector<128x128xi1>, vector<128x128xi32>
    %cst_10 = arith.constant dense<2147483647> : vector<128xi32>
    %30 = vector.multi_reduction <minsi>, %29, %cst_10 [1] : vector<128x128xi32> to vector<128xi32>
    %31 = vector.shape_cast %30 : vector<128xi32> to vector<128x1xi32>
    %32 = vector.broadcast %31 : vector<128x1xi32> to vector<128x128xi32>
    %33 = arith.cmpi eq, %9, %32 : vector<128x128xi32>
    %34 = arith.extui %33 : vector<128x128xi1> to vector<128x128xi32>
    %35 = arith.sitofp %34 : vector<128x128xi32> to vector<128x128xf32>
    %36 = vector.extract_strided_slice %8 {offsets = [0, 256], sizes = [128, 128], strides = [1, 1]} : vector<128x512xf32> to vector<128x128xf32>
    %cst_11 = arith.constant dense<0x7F800000> : vector<128xf32>
    %37 = vector.multi_reduction <minimumf>, %36, %cst_11 [1] : vector<128x128xf32> to vector<128xf32>
    %38 = vector.shape_cast %37 : vector<128xf32> to vector<128x1xf32>
    %39 = vector.broadcast %38 : vector<128x1xf32> to vector<128x128xf32>
    %40 = arith.cmpf ole, %36, %39 : vector<128x128xf32>
    %c128_i32_12 = arith.constant 128 : i32
    %41 = vector.broadcast %c128_i32_12 : i32 to vector<128x128xi32>
    %42 = arith.select %40, %9, %41 : vector<128x128xi1>, vector<128x128xi32>
    %cst_13 = arith.constant dense<2147483647> : vector<128xi32>
    %43 = vector.multi_reduction <minsi>, %42, %cst_13 [1] : vector<128x128xi32> to vector<128xi32>
    %44 = vector.shape_cast %43 : vector<128xi32> to vector<128x1xi32>
    %45 = vector.broadcast %44 : vector<128x1xi32> to vector<128x128xi32>
    %46 = arith.cmpi eq, %9, %45 : vector<128x128xi32>
    %47 = arith.extui %46 : vector<128x128xi1> to vector<128x128xi32>
    %48 = arith.sitofp %47 : vector<128x128xi32> to vector<128x128xf32>
    %49 = vector.extract_strided_slice %8 {offsets = [0, 384], sizes = [128, 128], strides = [1, 1]} : vector<128x512xf32> to vector<128x128xf32>
    %cst_14 = arith.constant dense<0x7F800000> : vector<128xf32>
    %50 = vector.multi_reduction <minimumf>, %49, %cst_14 [1] : vector<128x128xf32> to vector<128xf32>
    %51 = vector.shape_cast %50 : vector<128xf32> to vector<128x1xf32>
    %52 = vector.broadcast %51 : vector<128x1xf32> to vector<128x128xf32>
    %53 = arith.cmpf ole, %49, %52 : vector<128x128xf32>
    %c128_i32_15 = arith.constant 128 : i32
    %54 = vector.broadcast %c128_i32_15 : i32 to vector<128x128xi32>
    %55 = arith.select %53, %9, %54 : vector<128x128xi1>, vector<128x128xi32>
    %cst_16 = arith.constant dense<2147483647> : vector<128xi32>
    %56 = vector.multi_reduction <minsi>, %55, %cst_16 [1] : vector<128x128xi32> to vector<128xi32>
    %57 = vector.shape_cast %56 : vector<128xi32> to vector<128x1xi32>
    %58 = vector.broadcast %57 : vector<128x1xi32> to vector<128x128xi32>
    %59 = arith.cmpi eq, %9, %58 : vector<128x128xi32>
    %60 = arith.extui %59 : vector<128x128xi1> to vector<128x128xi32>
    %61 = arith.sitofp %60 : vector<128x128xi32> to vector<128x128xf32>
    %62 = tpu.concatenate %22, %35, %48, %61 in 1 : vector<128x128xf32>, vector<128x128xf32>, vector<128x128xf32>, vector<128x128xf32> -> vector<128x512xf32>
    %c0_17 = arith.constant 0 : index
    %c0_18 = arith.constant 0 : index
    %63 = vector.load %arg4[%c0_17, %c0_18] : memref<512x128xf32, #tpu.memory_space<vmem>>, vector<512x128xf32>
    %cst_19 = arith.constant dense<0.000000e+00> : vector<128x128xf32>
    %64 = tpu.matmul %62, %63, %cst_19 {dimension_numbers = #tpu.dot_dimension_numbers<[1], [0], [0], [1], [0, 0, 1, 1], [], []>, precision = #tpu.contract_precision<fp32>} : vector<128x512xf32>, vector<512x128xf32>, vector<128x128xf32> -> vector<128x128xf32>
    %c0_20 = arith.constant 0 : index
    %c0_21 = arith.constant 0 : index
    %65 = vector.load %arg5[%c0_20, %c0_21] : memref<128x128xf32, #tpu.memory_space<vmem>>, vector<128x128xf32>
    tpu.vector_store %arg5[%c0_20, %c0_21], %64 {strides = array<i32>} : memref<128x128xf32, #tpu.memory_space<vmem>>, vector<128x128xf32>,
    %66 = arith.truncf %62 : vector<128x512xf32> to vector<128x512xbf16>
    %c0_22 = arith.constant 0 : index
    %c0_23 = arith.constant 0 : index
    %67 = vector.load %arg6[%c0_22, %c0_23] : memref<128x512xbf16, #tpu.memory_space<vmem>>, vector<128x512xbf16>
    tpu.vector_store %arg6[%c0_22, %c0_23], %66 {strides = array<i32>} : memref<128x512xbf16, #tpu.memory_space<vmem>>, vector<128x512xbf16>,
    %68 = arith.subf %64, %3 : vector<128x128xf32>
    %69 = arith.subf %64, %3 : vector<128x128xf32>
    %70 = arith.mulf %68, %69 : vector<128x128xf32>
    %c0_24 = arith.constant 0 : index
    %c0_25 = arith.constant 0 : index
    %71 = vector.load %arg9[%c0_24, %c0_25] : memref<1x128xf32, #tpu.memory_space<vmem>>, vector<1x128xf32>
    %cst_26 = arith.constant dense<0.000000e+00> : vector<128xf32>
    %72 = vector.multi_reduction <add>, %70, %cst_26 [0] : vector<128x128xf32> to vector<128xf32>
    %73 = vector.shape_cast %72 : vector<128xf32> to vector<1x128xf32>
    %74 = arith.addf %71, %73 : vector<1x128xf32>
    %c0_27 = arith.constant 0 : index
    %c0_28 = arith.constant 0 : index
    %75 = vector.load %arg9[%c0_27, %c0_28] : memref<1x128xf32, #tpu.memory_space<vmem>>, vector<1x128xf32>
    tpu.vector_store %arg9[%c0_27, %c0_28], %74 {strides = array<i32>} : memref<1x128xf32, #tpu.memory_space<vmem>>, vector<1x128xf32>,
    %c0_29 = arith.constant 0 : index
    %c0_30 = arith.constant 0 : index
    %76 = vector.load %arg10[%c0_29, %c0_30] : memref<1x512xf32, #tpu.memory_space<vmem>>, vector<1x512xf32>
    %cst_31 = arith.constant dense<0.000000e+00> : vector<512xf32>
    %77 = vector.multi_reduction <add>, %62, %cst_31 [0] : vector<128x512xf32> to vector<512xf32>
    %78 = vector.shape_cast %77 : vector<512xf32> to vector<1x512xf32>
    %79 = arith.addf %76, %78 : vector<1x512xf32>
    %c0_32 = arith.constant 0 : index
    %c0_33 = arith.constant 0 : index
    %80 = vector.load %arg10[%c0_32, %c0_33] : memref<1x512xf32, #tpu.memory_space<vmem>>, vector<1x512xf32>
    tpu.vector_store %arg10[%c0_32, %c0_33], %79 {strides = array<i32>} : memref<1x512xf32, #tpu.memory_space<vmem>>, vector<1x512xf32>,
    %c0_i32_34 = arith.constant 0 : i32
    %81 = arith.cmpi eq, %arg0, %c0_i32_34 : i32
    %82 = arith.extui %81 : i1 to i32
    %c0_i32_35 = arith.constant 0 : i32
    %83 = arith.cmpi ne, %82, %c0_i32_35 : i32
    scf.if %83 {
      %c0_36 = arith.constant 0 : index
      %c0_37 = arith.constant 0 : index
      %84 = vector.load %arg9[%c0_36, %c0_37] : memref<1x128xf32, #tpu.memory_space<vmem>>, vector<1x128xf32>
      %cst_38 = arith.constant dense<0.000000e+00> : vector<1xf32>
      %85 = vector.multi_reduction <add>, %84, %cst_38 [1] : vector<1x128xf32> to vector<1xf32>
      %86 = vector.shape_cast %85 : vector<1xf32> to vector<1x1xf32>
      %cst_39 = arith.constant 1.52587891E-5 : f32
      %87 = vector.broadcast %cst_39 : f32 to vector<1x1xf32>
      %88 = arith.mulf %87, %86 : vector<1x1xf32>
      %c0_40 = arith.constant 0 : index
      %c0_41 = arith.constant 0 : index
      %89 = vector.load %arg7[%c0_40, %c0_41] : memref<1x1xf32, #tpu.memory_space<vmem>>, vector<1x1xf32>
      tpu.vector_store %arg7[%c0_40, %c0_41], %88 {strides = array<i32>} : memref<1x1xf32, #tpu.memory_space<vmem>>, vector<1x1xf32>,
      %c0_42 = arith.constant 0 : index
      %c0_43 = arith.constant 0 : index
      %90 = vector.load %arg10[%c0_42, %c0_43] : memref<1x512xf32, #tpu.memory_space<vmem>>, vector<1x512xf32>
      %91 = vector.extract_strided_slice %90 {offsets = [0, 0], sizes = [1, 128], strides = [1, 1]} : vector<1x512xf32> to vector<1x128xf32>
      %92 = vector.extract_strided_slice %90 {offsets = [0, 128], sizes = [1, 128], strides = [1, 1]} : vector<1x512xf32> to vector<1x128xf32>
      %93 = arith.addf %91, %92 : vector<1x128xf32>
      %94 = vector.extract_strided_slice %90 {offsets = [0, 256], sizes = [1, 128], strides = [1, 1]} : vector<1x512xf32> to vector<1x128xf32>
      %95 = arith.addf %93, %94 : vector<1x128xf32>
      %96 = vector.extract_strided_slice %90 {offsets = [0, 384], sizes = [1, 128], strides = [1, 1]} : vector<1x512xf32> to vector<1x128xf32>
      %97 = arith.addf %95, %96 : vector<1x128xf32>
      %cst_44 = arith.constant 0.001953125 : f32
      %98 = vector.broadcast %cst_44 : f32 to vector<1x128xf32>
      %99 = arith.mulf %97, %98 : vector<1x128xf32>
      %cst_45 = arith.constant 1.000000e-10 : f32
      %100 = vector.broadcast %cst_45 : f32 to vector<1x128xf32>
      %101 = arith.addf %99, %100 : vector<1x128xf32>
      %102 = math.log %101 : vector<1x128xf32>
      %103 = arith.mulf %99, %102 : vector<1x128xf32>
      %cst_46 = arith.constant dense<0.000000e+00> : vector<1xf32>
      %104 = vector.multi_reduction <add>, %103, %cst_46 [1] : vector<1x128xf32> to vector<1xf32>
      %105 = vector.shape_cast %104 : vector<1xf32> to vector<1x1xf32>
      %cst_47 = arith.constant 0.000000e+00 : f32
      %106 = vector.broadcast %cst_47 : f32 to vector<1x1xf32>
      %107 = arith.subf %106, %105 : vector<1x1xf32>
      %108 = math.exp %107 : vector<1x1xf32>
      %c0_48 = arith.constant 0 : index
      %c0_49 = arith.constant 0 : index
      %109 = vector.load %arg8[%c0_48, %c0_49] : memref<1x1xf32, #tpu.memory_space<vmem>>, vector<1x1xf32>
      tpu.vector_store %arg8[%c0_48, %c0_49], %108 {strides = array<i32>} : memref<1x1xf32, #tpu.memory_space<vmem>>, vector<1x1xf32>,
    } else {
    }
    return
  }
  func.func @transform_0(%arg0: i32) -> (i32, i32) {
    %c0_i32 = arith.constant 0 : i32
    %c0_i32_0 = arith.constant 0 : i32
    return %arg0, %c0_i32 : i32, i32
  }
  func.func @transform_1(%arg0: i32) -> (i32, i32) {
    %c0_i32 = arith.constant 0 : i32
    %c0_i32_0 = arith.constant 0 : i32
    %c0_i32_1 = arith.constant 0 : i32
    return %c0_i32, %c0_i32_0 : i32, i32
  }
  func.func @transform_2(%arg0: i32) -> (i32, i32) {
    %c0_i32 = arith.constant 0 : i32
    %c0_i32_0 = arith.constant 0 : i32
    %c0_i32_1 = arith.constant 0 : i32
    return %c0_i32, %c0_i32_0 : i32, i32
  }
  func.func @transform_3(%arg0: i32) -> (i32, i32) {
    %c0_i32 = arith.constant 0 : i32
    %c0_i32_0 = arith.constant 0 : i32
    %c0_i32_1 = arith.constant 0 : i32
    return %c0_i32, %c0_i32_0 : i32, i32
  }
  func.func @transform_4(%arg0: i32) -> (i32, i32) {
    %c0_i32 = arith.constant 0 : i32
    %c0_i32_0 = arith.constant 0 : i32
    return %arg0, %c0_i32 : i32, i32
  }
  func.func @transform_5(%arg0: i32) -> (i32, i32) {
    %c0_i32 = arith.constant 0 : i32
    %c0_i32_0 = arith.constant 0 : i32
    return %arg0, %c0_i32 : i32, i32
  }
  func.func @transform_6(%arg0: i32) -> (i32, i32) {
    %c0_i32 = arith.constant 0 : i32
    %c0_i32_0 = arith.constant 0 : i32
    %c0_i32_1 = arith.constant 0 : i32
    return %c0_i32, %c0_i32_0 : i32, i32
  }
  func.func @transform_7(%arg0: i32) -> (i32, i32) {
    %c0_i32 = arith.constant 0 : i32
    %c0_i32_0 = arith.constant 0 : i32
    %c0_i32_1 = arith.constant 0 : i32
    return %c0_i32, %c0_i32_0 : i32, i32
  }
}

</mosaic_0001>

<llo_original>
// kernel: tpu_custom_call.1
$region0: #{tpu_custom_call.1}
  #allocation0 [shape = 'u32[]', space=smem, size = 0x4, offset = 0x4, fixed_abs, tag = 'smem constant byte address 0x4 - core index']
  #allocation1 [shape = 'u32[72,128]{1,0:T(1,128)}', space=vmem, size = 0x9000, scoped, tag = 'internal scratch']
  #allocation2 [shape = 'f32[1,128]{1,0:T(1,128)}', space=vmem, size = 0x200, scoped, tag = 'scratch operand']
  #allocation3 [shape = 'f32[1,512]{1,0:T(1,128)}', space=vmem, size = 0x800, scoped, tag = 'scratch operand']
  %s0 = inlined_call_operand.hbm [shape: f32[128,128], index: 0, kind: input, shape index: {}]
  %s1 = inlined_call_operand.hbm [shape: f32[128,512], index: 1, kind: input, shape index: {}]
  %s2 = inlined_call_operand.hbm [shape: f32[1,512], index: 2, kind: input, shape index: {}]
  %s3 = inlined_call_operand.hbm [shape: f32[512,128], index: 3, kind: input, shape index: {}]
  %s4 = inlined_call_operand.hbm [shape: f32[128,128], index: 4, kind: output, shape index: {0}]
  %s5 = inlined_call_operand.hbm [shape: bf16[128,512], index: 5, kind: output, shape index: {1}]
  %s6 = inlined_call_operand.hbm [shape: f32[1,1], index: 6, kind: output, shape index: {2}]
  %s7 = inlined_call_operand.hbm [shape: f32[1,1], index: 7, kind: output, shape index: {3}]
  %8 = xla_tuple %s4, %s5, %s6, %s7
  %s9 = sld [smem:[#allocation0]]
  $region74: #{tpu_custom_call.1} parent=0
    _
  %s11 = ssub.s32 1, %s9
  %s12 = scalar_select 0, %s11, %s9
  $region1: #{tpu_custom_call.1} parent=0
    #allocation4 [shape = 'u8[65536]{0}', space=vmem, size = 0x10000, scoped, tag = 'input window, operand 0, single buffered']
    #allocation5 [shape = 's32[1]{0}', space=sflag, size = 0x4, scoped, tag = 'scoped memory for tpu_custom_call.1']
    #allocation6 [shape = 's32[1]{0}', space=sflag, size = 0x4, scoped, tag = 'scoped memory for tpu_custom_call.1']
    #allocation7 [shape = 'u8[262144]{0}', space=vmem, size = 0x40000, scoped, tag = 'input window, operand 1, single buffered']
    #allocation8 [shape = 's32[1]{0}', space=sflag, size = 0x4, scoped, tag = 'scoped memory for tpu_custom_call.1']
    #allocation9 [shape = 'u8[2048]{0}', space=vmem, size = 0x800, scoped, tag = 'input window, operand 2, single buffered']
    #allocation10 [shape = 'u8[262144]{0}', space=vmem, size = 0x40000, scoped, tag = 'input window, operand 3, single buffered']
    #allocation11 [shape = 's32[1]{0}', space=sflag, size = 0x4, scoped, tag = 'scoped memory for tpu_custom_call.1']
    #allocation12 [shape = 'u8[65536]{0}', space=vmem, size = 0x10000, scoped, tag = 'output window, operand 0, single buffered']
    #allocation13 [shape = 'u8[131072]{0}', space=vmem, size = 0x20000, scoped, tag = 'output window, operand 1, single buffered']
    #allocation14 [shape = 's32[1]{0}', space=sflag, size = 0x4, scoped, tag = 'scoped memory for tpu_custom_call.1']
    #allocation15 [shape = 'u8[512]{0}', space=vmem, size = 0x400, scoped, tag = 'output window, operand 2, single buffered']
    #allocation16 [shape = 'u8[512]{0}', space=vmem, size = 0x400, scoped, tag = 'output window, operand 3, single buffered']
    #allocation17 [shape = 's32[1]{0}', space=sflag, size = 0x4, scoped, tag = 'scoped memory for tpu_custom_call.1']
    %13 = vsyncpa [#allocation5], 0
    %14 = vsyncpa [#allocation8], 0
    %15 = vsyncpa [#allocation11], 0
    %16 = vsyncpa [#allocation6], 0
    %17 = vsyncpa [#allocation14], 0
    %18 = vsyncpa [#allocation17], 0
    // Predicated region
    $region2: #{tpu_custom_call.1} parent=1 // pred_check
      _
    $region3: #{tpu_custom_call.1} parent=1 // pred_check_branch
      %20 = sbr.rel (0) target = $region5
    $region4: #{tpu_custom_call.1} parent=1 // pred_region
      %22 = vsyncadd [#allocation5], 0
      %s23 = sshll.u32 %s0, 4
      %s24 = int_to_ptr.hbm [resolvable:$true] %s23
      %s25 = sshll.u32 [#allocation4], 4
      %s26 = int_to_ptr.vmem [resolvable:$true] %s25
      %31 = dma.hbm_to_vmem [thread:$0]  %s24, 2048, %s26, [#allocation5], 128, 128, 8
    $region5: #{tpu_custom_call.1} parent=1 // pred_fallthru
      _
    // Predicated region
    $region6: #{tpu_custom_call.1} parent=1 // pred_check
      _
    $region7: #{tpu_custom_call.1} parent=1 // pred_check_branch
      %33 = sbr.rel (0) target = $region9
    $region8: #{tpu_custom_call.1} parent=1 // pred_region
      %35 = vsyncadd [#allocation8], 0
      %s36 = sshll.u32 %s1, 4
      %s37 = int_to_ptr.hbm [resolvable:$true] %s36
      %s38 = sshll.u32 [#allocation7], 4
      %s39 = int_to_ptr.vmem [resolvable:$true] %s38
      %44 = dma.hbm_to_vmem [thread:$0]  %s37, 8192, %s39, [#allocation8], 512, 512, 32
    $region9: #{tpu_custom_call.1} parent=1 // pred_fallthru
      _
    // Predicated region
    $region10: #{tpu_custom_call.1} parent=1 // pred_check
      _
    $region11: #{tpu_custom_call.1} parent=1 // pred_check_branch
      %46 = sbr.rel (0) target = $region13
    $region12: #{tpu_custom_call.1} parent=1 // pred_region
      %48 = vsyncadd [#allocation8], 0
      %s50 = sshll.u32 %s2, 4
      %s51 = int_to_ptr.hbm [resolvable:$true] %s50
      %s52 = sshll.u32 [#allocation9], 4
      %s53 = int_to_ptr.vmem [resolvable:$true] %s52
      %55 = dma.hbm_to_vmem [thread:$0]  %s51, 64, %s53, [#allocation8]
    $region13: #{tpu_custom_call.1} parent=1 // pred_fallthru
      _
    // Predicated region
    $region14: #{tpu_custom_call.1} parent=1 // pred_check
      _
    $region15: #{tpu_custom_call.1} parent=1 // pred_check_branch
      %57 = sbr.rel (0) target = $region17
    $region16: #{tpu_custom_call.1} parent=1 // pred_region
      %59 = vsyncadd [#allocation11], 0
      %s60 = sshll.u32 %s3, 4
      %s61 = int_to_ptr.hbm [resolvable:$true] %s60
      %s62 = sshll.u32 [#allocation10], 4
      %s63 = int_to_ptr.vmem [resolvable:$true] %s62
      %68 = dma.hbm_to_vmem [thread:$0]  %s61, 8192, %s63, [#allocation11], 128, 128, 8
    $region17: #{tpu_custom_call.1} parent=1 // pred_fallthru
      _
    // Predicated region
    $region18: #{tpu_custom_call.1} parent=1 // pred_check
      _
    $region19: #{tpu_custom_call.1} parent=1 // pred_check_branch
      %70 = sbr.rel (0) target = $region21
    $region20: #{tpu_custom_call.1} parent=1 // pred_region
      %72 = dma.done [#allocation5], 2048
    $region21: #{tpu_custom_call.1} parent=1 // pred_fallthru
      _
    // Predicated region
    $region22: #{tpu_custom_call.1} parent=1 // pred_check
      _
    $region23: #{tpu_custom_call.1} parent=1 // pred_check_branch
      %74 = sbr.rel (0) target = $region25
    $region24: #{tpu_custom_call.1} parent=1 // pred_region
      %76 = dma.done [#allocation8], 8192
    $region25: #{tpu_custom_call.1} parent=1 // pred_fallthru
      _
    // Predicated region
    $region26: #{tpu_custom_call.1} parent=1 // pred_check
      _
    $region27: #{tpu_custom_call.1} parent=1 // pred_check_branch
      %78 = sbr.rel (0) target = $region29
    $region28: #{tpu_custom_call.1} parent=1 // pred_region
      %80 = dma.done [#allocation8], 64
    $region29: #{tpu_custom_call.1} parent=1 // pred_fallthru
      _
    // Predicated region
    $region30: #{tpu_custom_call.1} parent=1 // pred_check
      _
    $region31: #{tpu_custom_call.1} parent=1 // pred_check_branch
      %82 = sbr.rel (0) target = $region33
    $region32: #{tpu_custom_call.1} parent=1 // pred_region
      %84 = dma.done [#allocation11], 8192
    $region33: #{tpu_custom_call.1} parent=1 // pred_fallthru
      _
    %p85 = scmp.eq.s32.totalorder 0, 0
    // Predicated region
    $region34: #{tpu_custom_call.1} parent=1 // pred_check
      %p86 = pneg %p85
    $region35: #{tpu_custom_call.1} parent=1 // pred_check_branch
      %88 = sbr.rel (%p86) target = $region37
    $region36: #{tpu_custom_call.1} parent=1 // pred_region
      %89 = vst [vmem:[#allocation2] sm:$0x1] 0.0
      %v90 = vlaneseq
      %vm91 = vcmp.ge.s32.totalorder %v90, 0
      %vm92 = vcmp.lt.s32.totalorder %v90, 512
      %vm93 = vmand %vm91, %vm92
      %94 = vst.msk [vmem:[#allocation3] sm:$0xf] %vm93, 0.0
    $region37: #{tpu_custom_call.1} parent=1 // pred_fallthru
      _
    %v95 = vld [vmem:[#allocation4] sm:$0xff]
    %v96 = vld [vmem:[#allocation4 + $0x8] sm:$0xff]
    %v97 = vld [vmem:[#allocation4 + $0x10] sm:$0xff]
    %v98 = vld [vmem:[#allocation4 + $0x18] sm:$0xff]
    %v99 = vld [vmem:[#allocation4 + $0x20] sm:$0xff]
    %v100 = vld [vmem:[#allocation4 + $0x28] sm:$0xff]
    %v101 = vld [vmem:[#allocation4 + $0x30] sm:$0xff]
    %v102 = vld [vmem:[#allocation4 + $0x38] sm:$0xff]
    %v103 = vld [vmem:[#allocation4 + $0x40] sm:$0xff]
    %v104 = vld [vmem:[#allocation4 + $0x48] sm:$0xff]
    %v105 = vld [vmem:[#allocation4 + $0x50] sm:$0xff]
    %v106 = vld [vmem:[#allocation4 + $0x58] sm:$0xff]
    %v107 = vld [vmem:[#allocation4 + $0x60] sm:$0xff]
    %v108 = vld [vmem:[#allocation4 + $0x68] sm:$0xff]
    %v109 = vld [vmem:[#allocation4 + $0x70] sm:$0xff]
    %v110 = vld [vmem:[#allocation4 + $0x78] sm:$0xff]
    %v111 = vld [vmem:[#allocation7] sm:$0xff]
    %v112 = vld [vmem:[#allocation7 + $0x8] sm:$0xff]
    %v113 = vld [vmem:[#allocation7 + $0x10] sm:$0xff]
    %v114 = vld [vmem:[#allocation7 + $0x18] sm:$0xff]
    %v115 = vld [vmem:[#allocation7 + $0x20] sm:$0xff]
    %v116 = vld [vmem:[#allocation7 + $0x28] sm:$0xff]
    %v117 = vld [vmem:[#allocation7 + $0x30] sm:$0xff]
    %v118 = vld [vmem:[#allocation7 + $0x38] sm:$0xff]
    %v119 = vld [vmem:[#allocation7 + $0x40] sm:$0xff]
    %v120 = vld [vmem:[#allocation7 + $0x48] sm:$0xff]
    %v121 = vld [vmem:[#allocation7 + $0x50] sm:$0xff]
    %v122 = vld [vmem:[#allocation7 + $0x58] sm:$0xff]
    %v123 = vld [vmem:[#allocation7 + $0x60] sm:$0xff]
    %v124 = vld [vmem:[#allocation7 + $0x68] sm:$0xff]
    %v125 = vld [vmem:[#allocation7 + $0x70] sm:$0xff]
    %v126 = vld [vmem:[#allocation7 + $0x78] sm:$0xff]
    %v127 = vld [vmem:[#allocation7 + $0x80] sm:$0xff]
    %v128 = vld [vmem:[#allocation7 + $0x88] sm:$0xff]
    %v129 = vld [vmem:[#allocation7 + $0x90] sm:$0xff]
    %v130 = vld [vmem:[#allocation7 + $0x98] sm:$0xff]
    %v131 = vld [vmem:[#allocation7 + $0xa0] sm:$0xff]
    %v132 = vld [vmem:[#allocation7 + $0xa8] sm:$0xff]
    %v133 = vld [vmem:[#allocation7 + $0xb0] sm:$0xff]
    %v134 = vld [vmem:[#allocation7 + $0xb8] sm:$0xff]
    %v135 = vld [vmem:[#allocation7 + $0xc0] sm:$0xff]
    %v136 = vld [vmem:[#allocation7 + $0xc8] sm:$0xff]
    %v137 = vld [vmem:[#allocation7 + $0xd0] sm:$0xff]
    %v138 = vld [vmem:[#allocation7 + $0xd8] sm:$0xff]
    %v139 = vld [vmem:[#allocation7 + $0xe0] sm:$0xff]
    %v140 = vld [vmem:[#allocation7 + $0xe8] sm:$0xff]
    %v141 = vld [vmem:[#allocation7 + $0xf0] sm:$0xff]
    %v142 = vld [vmem:[#allocation7 + $0xf8] sm:$0xff]
    %v143 = vld [vmem:[#allocation7 + $0x100] sm:$0xff]
    %v144 = vld [vmem:[#allocation7 + $0x108] sm:$0xff]
    %v145 = vld [vmem:[#allocation7 + $0x110] sm:$0xff]
    %v146 = vld [vmem:[#allocation7 + $0x118] sm:$0xff]
    %v147 = vld [vmem:[#allocation7 + $0x120] sm:$0xff]
    %v148 = vld [vmem:[#allocation7 + $0x128] sm:$0xff]
    %v149 = vld [vmem:[#allocation7 + $0x130] sm:$0xff]
    %v150 = vld [vmem:[#allocation7 + $0x138] sm:$0xff]
    %v151 = vld [vmem:[#allocation7 + $0x140] sm:$0xff]
    %v152 = vld [vmem:[#allocation7 + $0x148] sm:$0xff]
    %v153 = vld [vmem:[#allocation7 + $0x150] sm:$0xff]
    %v154 = vld [vmem:[#allocation7 + $0x158] sm:$0xff]
    %v155 = vld [vmem:[#allocation7 + $0x160] sm:$0xff]
    %v156 = vld [vmem:[#allocation7 + $0x168] sm:$0xff]
    %v157 = vld [vmem:[#allocation7 + $0x170] sm:$0xff]
    %v158 = vld [vmem:[#allocation7 + $0x178] sm:$0xff]
    %v159 = vld [vmem:[#allocation7 + $0x180] sm:$0xff]
    %v160 = vld [vmem:[#allocation7 + $0x188] sm:$0xff]
    %v161 = vld [vmem:[#allocation7 + $0x190] sm:$0xff]
    %v162 = vld [vmem:[#allocation7 + $0x198] sm:$0xff]
    %v163 = vld [vmem:[#allocation7 + $0x1a0] sm:$0xff]
    %v164 = vld [vmem:[#allocation7 + $0x1a8] sm:$0xff]
    %v165 = vld [vmem:[#allocation7 + $0x1b0] sm:$0xff]
    %v166 = vld [vmem:[#allocation7 + $0x1b8] sm:$0xff]
    %v167 = vld [vmem:[#allocation7 + $0x1c0] sm:$0xff]
    %v168 = vld [vmem:[#allocation7 + $0x1c8] sm:$0xff]
    %v169 = vld [vmem:[#allocation7 + $0x1d0] sm:$0xff]
    %v170 = vld [vmem:[#allocation7 + $0x1d8] sm:$0xff]
    %v171 = vld [vmem:[#allocation7 + $0x1e0] sm:$0xff]
    %v172 = vld [vmem:[#allocation7 + $0x1e8] sm:$0xff]
    %v173 = vld [vmem:[#allocation7 + $0x1f0] sm:$0xff]
    %v174 = vld [vmem:[#allocation7 + $0x1f8] sm:$0xff]
    %v175 = vld [vmem:[#allocation9] sm:$0xf]
    %v177 = vperm.slane %v175, 0
    %v178 = vperm.slane %v175, 1
    %v179 = vperm.slane %v175, 2
    %v180 = vperm.slane %v175, 3
    %v185 = vand.u32 %v171, 4294901760
    %186 = vmatpush.msra.mxu0 %v185
    %v187 = vand.u32 %v167, 4294901760
    %188 = vmatpush.msra.mxu0 %v187
    %v189 = vand.u32 %v163, 4294901760
    %190 = vmatpush.msra.mxu0 %v189
    %v191 = vand.u32 %v159, 4294901760
    %192 = vmatpush.msra.mxu0 %v191
    %v193 = vand.u32 %v155, 4294901760
    %194 = vmatpush.msra.mxu0 %v193
    %v195 = vand.u32 %v151, 4294901760
    %196 = vmatpush.msra.mxu0 %v195
    %v197 = vand.u32 %v147, 4294901760
    %198 = vmatpush.msra.mxu0 %v197
    %v199 = vand.u32 %v143, 4294901760
    %200 = vmatpush.msra.mxu0 %v199
    %v201 = vand.u32 %v139, 4294901760
    %202 = vmatpush.msra.mxu0 %v201
    %v203 = vand.u32 %v135, 4294901760
    %204 = vmatpush.msra.mxu0 %v203
    %v205 = vand.u32 %v131, 4294901760
    %206 = vmatpush.msra.mxu0 %v205
    %v207 = vand.u32 %v127, 4294901760
    %208 = vmatpush.msra.mxu0 %v207
    %v209 = vand.u32 %v123, 4294901760
    %210 = vmatpush.msra.mxu0 %v209
    %v211 = vand.u32 %v119, 4294901760
    %212 = vmatpush.msra.mxu0 %v211
    %v213 = vand.u32 %v115, 4294901760
    %214 = vmatpush.msra.mxu0 %v213
    %v215 = vand.u32 %v111, 4294901760
    %216 = vmatpush.msra.mxu0 %v215
    %v217 = vand.u32 %v95, 4294901760
    %v218 = vsub.f32 %v95, %v217
    %v219 = vand.u32 %v218, 4294901760
    %v220 = vsub.f32 %v218, %v219
    %v221 = vand.u32 %v220, 4294901760
    %222 = vmatmul.f32.gmra.mxu0 %v221
    %v223 = vpop.f32.mrf.mxu0
    %v224 = vadd.f32 %v177, %v223
    %v225 = vand.u32 %v96, 4294901760
    %v226 = vsub.f32 %v96, %v225
    %v227 = vand.u32 %v226, 4294901760
    %v228 = vsub.f32 %v226, %v227
    %v229 = vand.u32 %v228, 4294901760
    %230 = vmatmul.f32.gmra.mxu0 %v229
    %v231 = vpop.f32.mrf.mxu0
    %v232 = vadd.f32 %v177, %v231
    %v233 = vand.u32 %v97, 4294901760
    %v234 = vsub.f32 %v97, %v233
    %v235 = vand.u32 %v234, 4294901760
    %v236 = vsub.f32 %v234, %v235
    %v237 = vand.u32 %v236, 4294901760
    %238 = vmatmul.f32.gmra.mxu0 %v237
    %v239 = vpop.f32.mrf.mxu0
    %v240 = vadd.f32 %v177, %v239
    %v241 = vand.u32 %v98, 4294901760
    %v242 = vsub.f32 %v98, %v241
    %v243 = vand.u32 %v242, 4294901760
    %v244 = vsub.f32 %v242, %v243
    %v245 = vand.u32 %v244, 4294901760
    %246 = vmatmul.f32.gmra.mxu0 %v245
    %v247 = vpop.f32.mrf.mxu0
    %v248 = vadd.f32 %v177, %v247
    %v249 = vand.u32 %v99, 4294901760
    %v250 = vsub.f32 %v99, %v249
    %v251 = vand.u32 %v250, 4294901760
    %v252 = vsub.f32 %v250, %v251
    %v253 = vand.u32 %v252, 4294901760
    %254 = vmatmul.f32.gmra.mxu0 %v253
    %v255 = vpop.f32.mrf.mxu0
    %v256 = vadd.f32 %v177, %v255
    %v257 = vand.u32 %v100, 4294901760
    %v258 = vsub.f32 %v100, %v257
    %v259 = vand.u32 %v258, 4294901760
    %v260 = vsub.f32 %v258, %v259
    %v261 = vand.u32 %v260, 4294901760
    %262 = vmatmul.f32.gmra.mxu0 %v261
    %v263 = vpop.f32.mrf.mxu0
    %v264 = vadd.f32 %v177, %v263
    %v265 = vand.u32 %v101, 4294901760
    %v266 = vsub.f32 %v101, %v265
    %v267 = vand.u32 %v266, 4294901760
    %v268 = vsub.f32 %v266, %v267
    %v269 = vand.u32 %v268, 4294901760
    %270 = vmatmul.f32.gmra.mxu0 %v269
    %v271 = vpop.f32.mrf.mxu0
    %v272 = vadd.f32 %v177, %v271
    %v273 = vand.u32 %v102, 4294901760
    %v274 = vsub.f32 %v102, %v273
    %v275 = vand.u32 %v274, 4294901760
    %v276 = vsub.f32 %v274, %v275
    %v277 = vand.u32 %v276, 4294901760
    %278 = vmatmul.f32.gmra.mxu0 %v277
    %v279 = vpop.f32.mrf.mxu0
    %v280 = vadd.f32 %v177, %v279
    %v281 = vand.u32 %v103, 4294901760
    %v282 = vsub.f32 %v103, %v281
    %v283 = vand.u32 %v282, 4294901760
    %v284 = vsub.f32 %v282, %v283
    %v285 = vand.u32 %v284, 4294901760
    %286 = vmatmul.f32.gmra.mxu0 %v285
    %v287 = vpop.f32.mrf.mxu0
    %v288 = vadd.f32 %v177, %v287
    %v289 = vand.u32 %v104, 4294901760
    %v290 = vsub.f32 %v104, %v289
    %v291 = vand.u32 %v290, 4294901760
    %v292 = vsub.f32 %v290, %v291
    %v293 = vand.u32 %v292, 4294901760
    %294 = vmatmul.f32.gmra.mxu0 %v293
    %v295 = vpop.f32.mrf.mxu0
    %v296 = vadd.f32 %v177, %v295
    %v297 = vand.u32 %v105, 4294901760
    %v298 = vsub.f32 %v105, %v297
    %v299 = vand.u32 %v298, 4294901760
    %v300 = vsub.f32 %v298, %v299
    %v301 = vand.u32 %v300, 4294901760
    %302 = vmatmul.f32.gmra.mxu0 %v301
    %v303 = vpop.f32.mrf.mxu0
    %v304 = vadd.f32 %v177, %v303
    %v305 = vand.u32 %v106, 4294901760
    %v306 = vsub.f32 %v106, %v305
    %v307 = vand.u32 %v306, 4294901760
    %v308 = vsub.f32 %v306, %v307
    %v309 = vand.u32 %v308, 4294901760
    %310 = vmatmul.f32.gmra.mxu0 %v309
    %v311 = vpop.f32.mrf.mxu0
    %v312 = vadd.f32 %v177, %v311
    %v313 = vand.u32 %v107, 4294901760
    %v314 = vsub.f32 %v107, %v313
    %v315 = vand.u32 %v314, 4294901760
    %v316 = vsub.f32 %v314, %v315
    %v317 = vand.u32 %v316, 4294901760
    %318 = vmatmul.f32.gmra.mxu0 %v317
    %v319 = vpop.f32.mrf.mxu0
    %v320 = vadd.f32 %v177, %v319
    %v321 = vand.u32 %v108, 4294901760
    %v322 = vsub.f32 %v108, %v321
    %v323 = vand.u32 %v322, 4294901760
    %v324 = vsub.f32 %v322, %v323
    %v325 = vand.u32 %v324, 4294901760
    %326 = vmatmul.f32.gmra.mxu0 %v325
    %v327 = vpop.f32.mrf.mxu0
    %v328 = vadd.f32 %v177, %v327
    %v329 = vand.u32 %v109, 4294901760
    %v330 = vsub.f32 %v109, %v329
    %v331 = vand.u32 %v330, 4294901760
    %v332 = vsub.f32 %v330, %v331
    %v333 = vand.u32 %v332, 4294901760
    %334 = vmatmul.f32.gmra.mxu0 %v333
    %v335 = vpop.f32.mrf.mxu0
    %v336 = vadd.f32 %v177, %v335
    %v337 = vand.u32 %v110, 4294901760
    %v338 = vsub.f32 %v110, %v337
    %v339 = vand.u32 %v338, 4294901760
    %v340 = vsub.f32 %v338, %v339
    %v341 = vand.u32 %v340, 4294901760
    %342 = vmatmul.f32.gmra.mxu0 %v341
    %v343 = vpop.f32.mrf.mxu0
    %v344 = vadd.f32 %v177, %v343
    %345 = vdwg.mxu0
    %v346 = vand.u32 %v171, 4294901760
    %v347 = vsub.f32 %v171, %v346
    %v348 = vand.u32 %v347, 4294901760
    %v349 = vsub.f32 %v347, %v348
    %v350 = vand.u32 %v349, 4294901760
    %351 = vmatpush.msra.mxu0 %v350
    %v352 = vand.u32 %v167, 4294901760
    %v353 = vsub.f32 %v167, %v352
    %v354 = vand.u32 %v353, 4294901760
    %v355 = vsub.f32 %v353, %v354
    %v356 = vand.u32 %v355, 4294901760
    %357 = vmatpush.msra.mxu0 %v356
    %v358 = vand.u32 %v163, 4294901760
    %v359 = vsub.f32 %v163, %v358
    %v360 = vand.u32 %v359, 4294901760
    %v361 = vsub.f32 %v359, %v360
    %v362 = vand.u32 %v361, 4294901760
    %363 = vmatpush.msra.mxu0 %v362
    %v364 = vand.u32 %v159, 4294901760
    %v365 = vsub.f32 %v159, %v364
    %v366 = vand.u32 %v365, 4294901760
    %v367 = vsub.f32 %v365, %v366
    %v368 = vand.u32 %v367, 4294901760
    %369 = vmatpush.msra.mxu0 %v368
    %v370 = vand.u32 %v155, 4294901760
    %v371 = vsub.f32 %v155, %v370
    %v372 = vand.u32 %v371, 4294901760
    %v373 = vsub.f32 %v371, %v372
    %v374 = vand.u32 %v373, 4294901760
    %375 = vmatpush.msra.mxu0 %v374
    %v376 = vand.u32 %v151, 4294901760
    %v377 = vsub.f32 %v151, %v376
    %v378 = vand.u32 %v377, 4294901760
    %v379 = vsub.f32 %v377, %v378
    %v380 = vand.u32 %v379, 4294901760
    %381 = vmatpush.msra.mxu0 %v380
    %v382 = vand.u32 %v147, 4294901760
    %v383 = vsub.f32 %v147, %v382
    %v384 = vand.u32 %v383, 4294901760
    %v385 = vsub.f32 %v383, %v384
    %v386 = vand.u32 %v385, 4294901760
    %387 = vmatpush.msra.mxu0 %v386
    %v388 = vand.u32 %v143, 4294901760
    %v389 = vsub.f32 %v143, %v388
    %v390 = vand.u32 %v389, 4294901760
    %v391 = vsub.f32 %v389, %v390
    %v392 = vand.u32 %v391, 4294901760
    %393 = vmatpush.msra.mxu0 %v392
    %v394 = vand.u32 %v139, 4294901760
    %v395 = vsub.f32 %v139, %v394
    %v396 = vand.u32 %v395, 4294901760
    %v397 = vsub.f32 %v395, %v396
    %v398 = vand.u32 %v397, 4294901760
    %399 = vmatpush.msra.mxu0 %v398
    %v400 = vand.u32 %v135, 4294901760
    %v401 = vsub.f32 %v135, %v400
    %v402 = vand.u32 %v401, 4294901760
    %v403 = vsub.f32 %v401, %v402
    %v404 = vand.u32 %v403, 4294901760
    %405 = vmatpush.msra.mxu0 %v404
    %v406 = vand.u32 %v131, 4294901760
    %v407 = vsub.f32 %v131, %v406
    %v408 = vand.u32 %v407, 4294901760
    %v409 = vsub.f32 %v407, %v408
    %v410 = vand.u32 %v409, 4294901760
    %411 = vmatpush.msra.mxu0 %v410
    %v412 = vand.u32 %v127, 4294901760
    %v413 = vsub.f32 %v127, %v412
    %v414 = vand.u32 %v413, 4294901760
    %v415 = vsub.f32 %v413, %v414
    %v416 = vand.u32 %v415, 4294901760
    %417 = vmatpush.msra.mxu0 %v416
    %v418 = vand.u32 %v123, 4294901760
    %v419 = vsub.f32 %v123, %v418
    %v420 = vand.u32 %v419, 4294901760
    %v421 = vsub.f32 %v419, %v420
    %v422 = vand.u32 %v421, 4294901760
    %423 = vmatpush.msra.mxu0 %v422
    %v424 = vand.u32 %v119, 4294901760
    %v425 = vsub.f32 %v119, %v424
    %v426 = vand.u32 %v425, 4294901760
    %v427 = vsub.f32 %v425, %v426
    %v428 = vand.u32 %v427, 4294901760
    %429 = vmatpush.msra.mxu0 %v428
    %v430 = vand.u32 %v115, 4294901760
    %v431 = vsub.f32 %v115, %v430
    %v432 = vand.u32 %v431, 4294901760
    %v433 = vsub.f32 %v431, %v432
    %v434 = vand.u32 %v433, 4294901760
    %435 = vmatpush.msra.mxu0 %v434
    %v436 = vand.u32 %v111, 4294901760
    %v437 = vsub.f32 %v111, %v436
    %v438 = vand.u32 %v437, 4294901760
    %v439 = vsub.f32 %v437, %v438
    %v440 = vand.u32 %v439, 4294901760
    %441 = vmatpush.msra.mxu0 %v440
    %v442 = vand.u32 %v95, 4294901760
    %443 = vmatmul.f32.gmra.mxu0 %v442
    %v444 = vpop.f32.mrf.mxu0
    %v445 = vadd.f32 %v224, %v444
    %v446 = vand.u32 %v96, 4294901760
    %447 = vmatmul.f32.gmra.mxu0 %v446
    %v448 = vpop.f32.mrf.mxu0
    %v449 = vadd.f32 %v232, %v448
    %v450 = vand.u32 %v97, 4294901760
    %451 = vmatmul.f32.gmra.mxu0 %v450
    %v452 = vpop.f32.mrf.mxu0
    %v453 = vadd.f32 %v240, %v452
    %v454 = vand.u32 %v98, 4294901760
    %455 = vmatmul.f32.gmra.mxu0 %v454
    %v456 = vpop.f32.mrf.mxu0
    %v457 = vadd.f32 %v248, %v456
    %v458 = vand.u32 %v99, 4294901760
    %459 = vmatmul.f32.gmra.mxu0 %v458
    %v460 = vpop.f32.mrf.mxu0
    %v461 = vadd.f32 %v256, %v460
    %v462 = vand.u32 %v100, 4294901760
    %463 = vmatmul.f32.gmra.mxu0 %v462
    %v464 = vpop.f32.mrf.mxu0
    %v465 = vadd.f32 %v264, %v464
    %v466 = vand.u32 %v101, 4294901760
    %467 = vmatmul.f32.gmra.mxu0 %v466
    %v468 = vpop.f32.mrf.mxu0
    %v469 = vadd.f32 %v272, %v468
    %v470 = vand.u32 %v102, 4294901760
    %471 = vmatmul.f32.gmra.mxu0 %v470
    %v472 = vpop.f32.mrf.mxu0
    %v473 = vadd.f32 %v280, %v472
    %v474 = vand.u32 %v103, 4294901760
    %475 = vmatmul.f32.gmra.mxu0 %v474
    %v476 = vpop.f32.mrf.mxu0
    %v477 = vadd.f32 %v288, %v476
    %v478 = vand.u32 %v104, 4294901760
    %479 = vmatmul.f32.gmra.mxu0 %v478
    %v480 = vpop.f32.mrf.mxu0
    %v481 = vadd.f32 %v296, %v480
    %v482 = vand.u32 %v105, 4294901760
    %483 = vmatmul.f32.gmra.mxu0 %v482
    %v484 = vpop.f32.mrf.mxu0
    %v485 = vadd.f32 %v304, %v484
    %v486 = vand.u32 %v106, 4294901760
    %487 = vmatmul.f32.gmra.mxu0 %v486
    %v488 = vpop.f32.mrf.mxu0
    %v489 = vadd.f32 %v312, %v488
    %v490 = vand.u32 %v107, 4294901760
    %491 = vmatmul.f32.gmra.mxu0 %v490
    %v492 = vpop.f32.mrf.mxu0
    %v493 = vadd.f32 %v320, %v492
    %v494 = vand.u32 %v108, 4294901760
    %495 = vmatmul.f32.gmra.mxu0 %v494
    %v496 = vpop.f32.mrf.mxu0
    %v497 = vadd.f32 %v328, %v496
    %v498 = vand.u32 %v109, 4294901760
    %499 = vmatmul.f32.gmra.mxu0 %v498
    %v500 = vpop.f32.mrf.mxu0
    %v501 = vadd.f32 %v336, %v500
    %v502 = vand.u32 %v110, 4294901760
    %503 = vmatmul.f32.gmra.mxu0 %v502
    %v504 = vpop.f32.mrf.mxu0
    %v505 = vadd.f32 %v344, %v504
    %506 = vdwg.mxu0
    %v507 = vand.u32 %v171, 4294901760
    %v508 = vsub.f32 %v171, %v507
    %509 = vmatpush.msra.mxu0 %v508
    %v510 = vand.u32 %v167, 4294901760
    %v511 = vsub.f32 %v167, %v510
    %512 = vmatpush.msra.mxu0 %v511
    %v513 = vand.u32 %v163, 4294901760
    %v514 = vsub.f32 %v163, %v513
    %515 = vmatpush.msra.mxu0 %v514
    %v516 = vand.u32 %v159, 4294901760
    %v517 = vsub.f32 %v159, %v516
    %518 = vmatpush.msra.mxu0 %v517
    %v519 = vand.u32 %v155, 4294901760
    %v520 = vsub.f32 %v155, %v519
    %521 = vmatpush.msra.mxu0 %v520
    %v522 = vand.u32 %v151, 4294901760
    %v523 = vsub.f32 %v151, %v522
    %524 = vmatpush.msra.mxu0 %v523
    %v525 = vand.u32 %v147, 4294901760
    %v526 = vsub.f32 %v147, %v525
    %527 = vmatpush.msra.mxu0 %v526
    %v528 = vand.u32 %v143, 4294901760
    %v529 = vsub.f32 %v143, %v528
    %530 = vmatpush.msra.mxu0 %v529
    %v531 = vand.u32 %v139, 4294901760
    %v532 = vsub.f32 %v139, %v531
    %533 = vmatpush.msra.mxu0 %v532
    %v534 = vand.u32 %v135, 4294901760
    %v535 = vsub.f32 %v135, %v534
    %536 = vmatpush.msra.mxu0 %v535
    %v537 = vand.u32 %v131, 4294901760
    %v538 = vsub.f32 %v131, %v537
    %539 = vmatpush.msra.mxu0 %v538
    %v540 = vand.u32 %v127, 4294901760
    %v541 = vsub.f32 %v127, %v540
    %542 = vmatpush.msra.mxu0 %v541
    %v543 = vand.u32 %v123, 4294901760
    %v544 = vsub.f32 %v123, %v543
    %545 = vmatpush.msra.mxu0 %v544
    %v546 = vand.u32 %v119, 4294901760
    %v547 = vsub.f32 %v119, %v546
    %548 = vmatpush.msra.mxu0 %v547
    %v549 = vand.u32 %v115, 4294901760
    %v550 = vsub.f32 %v115, %v549
    %551 = vmatpush.msra.mxu0 %v550
    %v552 = vand.u32 %v111, 4294901760
    %v553 = vsub.f32 %v111, %v552
    %554 = vmatpush.msra.mxu0 %v553
    %v555 = vand.u32 %v95, 4294901760
    %v556 = vsub.f32 %v95, %v555
    %557 = vmatmul.f32.gmra.mxu0 %v556
    %v558 = vpop.f32.mrf.mxu0
    %v559 = vadd.f32 %v445, %v558
    %v560 = vand.u32 %v96, 4294901760
    %v561 = vsub.f32 %v96, %v560
    %562 = vmatmul.f32.gmra.mxu0 %v561
    %v563 = vpop.f32.mrf.mxu0
    %v564 = vadd.f32 %v449, %v563
    %v565 = vand.u32 %v97, 4294901760
    %v566 = vsub.f32 %v97, %v565
    %567 = vmatmul.f32.gmra.mxu0 %v566
    %v568 = vpop.f32.mrf.mxu0
    %v569 = vadd.f32 %v453, %v568
    %v570 = vand.u32 %v98, 4294901760
    %v571 = vsub.f32 %v98, %v570
    %572 = vmatmul.f32.gmra.mxu0 %v571
    %v573 = vpop.f32.mrf.mxu0
    %v574 = vadd.f32 %v457, %v573
    %v575 = vand.u32 %v99, 4294901760
    %v576 = vsub.f32 %v99, %v575
    %577 = vmatmul.f32.gmra.mxu0 %v576
    %v578 = vpop.f32.mrf.mxu0
    %v579 = vadd.f32 %v461, %v578
    %v580 = vand.u32 %v100, 4294901760
    %v581 = vsub.f32 %v100, %v580
    %582 = vmatmul.f32.gmra.mxu0 %v581
    %v583 = vpop.f32.mrf.mxu0
    %v584 = vadd.f32 %v465, %v583
    %v585 = vand.u32 %v101, 4294901760
    %v586 = vsub.f32 %v101, %v585
    %587 = vmatmul.f32.gmra.mxu0 %v586
    %v588 = vpop.f32.mrf.mxu0
    %v589 = vadd.f32 %v469, %v588
    %v590 = vand.u32 %v102, 4294901760
    %v591 = vsub.f32 %v102, %v590
    %592 = vmatmul.f32.gmra.mxu0 %v591
    %v593 = vpop.f32.mrf.mxu0
    %v594 = vadd.f32 %v473, %v593
    %v595 = vand.u32 %v103, 4294901760
    %v596 = vsub.f32 %v103, %v595
    %597 = vmatmul.f32.gmra.mxu0 %v596
    %v598 = vpop.f32.mrf.mxu0
    %v599 = vadd.f32 %v477, %v598
    %v600 = vand.u32 %v104, 4294901760
    %v601 = vsub.f32 %v104, %v600
    %602 = vmatmul.f32.gmra.mxu0 %v601
    %v603 = vpop.f32.mrf.mxu0
    %v604 = vadd.f32 %v481, %v603
    %v605 = vand.u32 %v105, 4294901760
    %v606 = vsub.f32 %v105, %v605
    %607 = vmatmul.f32.gmra.mxu0 %v606
    %v608 = vpop.f32.mrf.mxu0
    %v609 = vadd.f32 %v485, %v608
    %v610 = vand.u32 %v106, 4294901760
    %v611 = vsub.f32 %v106, %v610
    %612 = vmatmul.f32.gmra.mxu0 %v611
    %v613 = vpop.f32.mrf.mxu0
    %v614 = vadd.f32 %v489, %v613
    %v615 = vand.u32 %v107, 4294901760
    %v616 = vsub.f32 %v107, %v615
    %617 = vmatmul.f32.gmra.mxu0 %v616
    %v618 = vpop.f32.mrf.mxu0
    %v619 = vadd.f32 %v493, %v618
    %v620 = vand.u32 %v108, 4294901760
    %v621 = vsub.f32 %v108, %v620
    %622 = vmatmul.f32.gmra.mxu0 %v621
    %v623 = vpop.f32.mrf.mxu0
    %v624 = vadd.f32 %v497, %v623
    %v625 = vand.u32 %v109, 4294901760
    %v626 = vsub.f32 %v109, %v625
    %627 = vmatmul.f32.gmra.mxu0 %v626
    %v628 = vpop.f32.mrf.mxu0
    %v629 = vadd.f32 %v501, %v628
    %v630 = vand.u32 %v110, 4294901760
    %v631 = vsub.f32 %v110, %v630
    %632 = vmatmul.f32.gmra.mxu0 %v631
    %v633 = vpop.f32.mrf.mxu0
    %v634 = vadd.f32 %v505, %v633
    %635 = vdwg.mxu0
    %v636 = vand.u32 %v171, 4294901760
    %637 = vmatpush.msra.mxu0 %v636
    %v638 = vand.u32 %v167, 4294901760
    %639 = vmatpush.msra.mxu0 %v638
    %v640 = vand.u32 %v163, 4294901760
    %641 = vmatpush.msra.mxu0 %v640
    %v642 = vand.u32 %v159, 4294901760
    %643 = vmatpush.msra.mxu0 %v642
    %v644 = vand.u32 %v155, 4294901760
    %645 = vmatpush.msra.mxu0 %v644
    %v646 = vand.u32 %v151, 4294901760
    %647 = vmatpush.msra.mxu0 %v646
    %v648 = vand.u32 %v147, 4294901760
    %649 = vmatpush.msra.mxu0 %v648
    %v650 = vand.u32 %v143, 4294901760
    %651 = vmatpush.msra.mxu0 %v650
    %v652 = vand.u32 %v139, 4294901760
    %653 = vmatpush.msra.mxu0 %v652
    %v654 = vand.u32 %v135, 4294901760
    %655 = vmatpush.msra.mxu0 %v654
    %v656 = vand.u32 %v131, 4294901760
    %657 = vmatpush.msra.mxu0 %v656
    %v658 = vand.u32 %v127, 4294901760
    %659 = vmatpush.msra.mxu0 %v658
    %v660 = vand.u32 %v123, 4294901760
    %661 = vmatpush.msra.mxu0 %v660
    %v662 = vand.u32 %v119, 4294901760
    %663 = vmatpush.msra.mxu0 %v662
    %v664 = vand.u32 %v115, 4294901760
    %665 = vmatpush.msra.mxu0 %v664
    %v666 = vand.u32 %v111, 4294901760
    %667 = vmatpush.msra.mxu0 %v666
    %v668 = vand.u32 %v95, 4294901760
    %v669 = vsub.f32 %v95, %v668
    %v670 = vand.u32 %v669, 4294901760
    %671 = vmatmul.f32.gmra.mxu0 %v670
    %v672 = vpop.f32.mrf.mxu0
    %v673 = vadd.f32 %v559, %v672
    %v674 = vand.u32 %v96, 4294901760
    %v675 = vsub.f32 %v96, %v674
    %v676 = vand.u32 %v675, 4294901760
    %677 = vmatmul.f32.gmra.mxu0 %v676
    %v678 = vpop.f32.mrf.mxu0
    %v679 = vadd.f32 %v564, %v678
    %v680 = vand.u32 %v97, 4294901760
    %v681 = vsub.f32 %v97, %v680
    %v682 = vand.u32 %v681, 4294901760
    %683 = vmatmul.f32.gmra.mxu0 %v682
    %v684 = vpop.f32.mrf.mxu0
    %v685 = vadd.f32 %v569, %v684
    %v686 = vand.u32 %v98, 4294901760
    %v687 = vsub.f32 %v98, %v686
    %v688 = vand.u32 %v687, 4294901760
    %689 = vmatmul.f32.gmra.mxu0 %v688
    %v690 = vpop.f32.mrf.mxu0
    %v691 = vadd.f32 %v574, %v690
    %v692 = vand.u32 %v99, 4294901760
    %v693 = vsub.f32 %v99, %v692
    %v694 = vand.u32 %v693, 4294901760
    %695 = vmatmul.f32.gmra.mxu0 %v694
    %v696 = vpop.f32.mrf.mxu0
    %v697 = vadd.f32 %v579, %v696
    %v698 = vand.u32 %v100, 4294901760
    %v699 = vsub.f32 %v100, %v698
    %v700 = vand.u32 %v699, 4294901760
    %701 = vmatmul.f32.gmra.mxu0 %v700
    %v702 = vpop.f32.mrf.mxu0
    %v703 = vadd.f32 %v584, %v702
    %v704 = vand.u32 %v101, 4294901760
    %v705 = vsub.f32 %v101, %v704
    %v706 = vand.u32 %v705, 4294901760
    %707 = vmatmul.f32.gmra.mxu0 %v706
    %v708 = vpop.f32.mrf.mxu0
    %v709 = vadd.f32 %v589, %v708
    %v710 = vand.u32 %v102, 4294901760
    %v711 = vsub.f32 %v102, %v710
    %v712 = vand.u32 %v711, 4294901760
    %713 = vmatmul.f32.gmra.mxu0 %v712
    %v714 = vpop.f32.mrf.mxu0
    %v715 = vadd.f32 %v594, %v714
    %v716 = vand.u32 %v103, 4294901760
    %v717 = vsub.f32 %v103, %v716
    %v718 = vand.u32 %v717, 4294901760
    %719 = vmatmul.f32.gmra.mxu0 %v718
    %v720 = vpop.f32.mrf.mxu0
    %v721 = vadd.f32 %v599, %v720
    %v722 = vand.u32 %v104, 4294901760
    %v723 = vsub.f32 %v104, %v722
    %v724 = vand.u32 %v723, 4294901760
    %725 = vmatmul.f32.gmra.mxu0 %v724
    %v726 = vpop.f32.mrf.mxu0
    %v727 = vadd.f32 %v604, %v726
    %v728 = vand.u32 %v105, 4294901760
    %v729 = vsub.f32 %v105, %v728
    %v730 = vand.u32 %v729, 4294901760
    %731 = vmatmul.f32.gmra.mxu0 %v730
    %v732 = vpop.f32.mrf.mxu0
    %v733 = vadd.f32 %v609, %v732
    %v734 = vand.u32 %v106, 4294901760
    %v735 = vsub.f32 %v106, %v734
    %v736 = vand.u32 %v735, 4294901760
    %737 = vmatmul.f32.gmra.mxu0 %v736
    %v738 = vpop.f32.mrf.mxu0
    %v739 = vadd.f32 %v614, %v738
    %v740 = vand.u32 %v107, 4294901760
    %v741 = vsub.f32 %v107, %v740
    %v742 = vand.u32 %v741, 4294901760
    %743 = vmatmul.f32.gmra.mxu0 %v742
    %v744 = vpop.f32.mrf.mxu0
    %v745 = vadd.f32 %v619, %v744
    %v746 = vand.u32 %v108, 4294901760
    %v747 = vsub.f32 %v108, %v746
    %v748 = vand.u32 %v747, 4294901760
    %749 = vmatmul.f32.gmra.mxu0 %v748
    %v750 = vpop.f32.mrf.mxu0
    %v751 = vadd.f32 %v624, %v750
    %v752 = vand.u32 %v109, 4294901760
    %v753 = vsub.f32 %v109, %v752
    %v754 = vand.u32 %v753, 4294901760
    %755 = vmatmul.f32.gmra.mxu0 %v754
    %v756 = vpop.f32.mrf.mxu0
    %v757 = vadd.f32 %v629, %v756
    %v758 = vand.u32 %v110, 4294901760
    %v759 = vsub.f32 %v110, %v758
    %v760 = vand.u32 %v759, 4294901760
    %761 = vmatmul.f32.gmra.mxu0 %v760
    %v762 = vpop.f32.mrf.mxu0
    %v763 = vadd.f32 %v634, %v762
    %764 = vdwg.mxu0
    %v765 = vand.u32 %v171, 4294901760
    %v766 = vsub.f32 %v171, %v765
    %v767 = vand.u32 %v766, 4294901760
    %768 = vmatpush.msra.mxu0 %v767
    %v769 = vand.u32 %v167, 4294901760
    %v770 = vsub.f32 %v167, %v769
    %v771 = vand.u32 %v770, 4294901760
    %772 = vmatpush.msra.mxu0 %v771
    %v773 = vand.u32 %v163, 4294901760
    %v774 = vsub.f32 %v163, %v773
    %v775 = vand.u32 %v774, 4294901760
    %776 = vmatpush.msra.mxu0 %v775
    %v777 = vand.u32 %v159, 4294901760
    %v778 = vsub.f32 %v159, %v777
    %v779 = vand.u32 %v778, 4294901760
    %780 = vmatpush.msra.mxu0 %v779
    %v781 = vand.u32 %v155, 4294901760
    %v782 = vsub.f32 %v155, %v781
    %v783 = vand.u32 %v782, 4294901760
    %784 = vmatpush.msra.mxu0 %v783
    %v785 = vand.u32 %v151, 4294901760
    %v786 = vsub.f32 %v151, %v785
    %v787 = vand.u32 %v786, 4294901760
    %788 = vmatpush.msra.mxu0 %v787
    %v789 = vand.u32 %v147, 4294901760
    %v790 = vsub.f32 %v147, %v789
    %v791 = vand.u32 %v790, 4294901760
    %792 = vmatpush.msra.mxu0 %v791
    %v793 = vand.u32 %v143, 4294901760
    %v794 = vsub.f32 %v143, %v793
    %v795 = vand.u32 %v794, 4294901760
    %796 = vmatpush.msra.mxu0 %v795
    %v797 = vand.u32 %v139, 4294901760
    %v798 = vsub.f32 %v139, %v797
    %v799 = vand.u32 %v798, 4294901760
    %800 = vmatpush.msra.mxu0 %v799
    %v801 = vand.u32 %v135, 4294901760
    %v802 = vsub.f32 %v135, %v801
    %v803 = vand.u32 %v802, 4294901760
    %804 = vmatpush.msra.mxu0 %v803
    %v805 = vand.u32 %v131, 4294901760
    %v806 = vsub.f32 %v131, %v805
    %v807 = vand.u32 %v806, 4294901760
    %808 = vmatpush.msra.mxu0 %v807
    %v809 = vand.u32 %v127, 4294901760
    %v810 = vsub.f32 %v127, %v809
    %v811 = vand.u32 %v810, 4294901760
    %812 = vmatpush.msra.mxu0 %v811
    %v813 = vand.u32 %v123, 4294901760
    %v814 = vsub.f32 %v123, %v813
    %v815 = vand.u32 %v814, 4294901760
    %816 = vmatpush.msra.mxu0 %v815
    %v817 = vand.u32 %v119, 4294901760
    %v818 = vsub.f32 %v119, %v817
    %v819 = vand.u32 %v818, 4294901760
    %820 = vmatpush.msra.mxu0 %v819
    %v821 = vand.u32 %v115, 4294901760
    %v822 = vsub.f32 %v115, %v821
    %v823 = vand.u32 %v822, 4294901760
    %824 = vmatpush.msra.mxu0 %v823
    %v825 = vand.u32 %v111, 4294901760
    %v826 = vsub.f32 %v111, %v825
    %v827 = vand.u32 %v826, 4294901760
    %828 = vmatpush.msra.mxu0 %v827
    %v829 = vand.u32 %v95, 4294901760
    %830 = vmatmul.f32.gmra.mxu0 %v829
    %v831 = vpop.f32.mrf.mxu0
    %v832 = vadd.f32 %v673, %v831
    %v833 = vand.u32 %v96, 4294901760
    %834 = vmatmul.f32.gmra.mxu0 %v833
    %v835 = vpop.f32.mrf.mxu0
    %v836 = vadd.f32 %v679, %v835
    %v837 = vand.u32 %v97, 4294901760
    %838 = vmatmul.f32.gmra.mxu0 %v837
    %v839 = vpop.f32.mrf.mxu0
    %v840 = vadd.f32 %v685, %v839
    %v841 = vand.u32 %v98, 4294901760
    %842 = vmatmul.f32.gmra.mxu0 %v841
    %v843 = vpop.f32.mrf.mxu0
    %v844 = vadd.f32 %v691, %v843
    %v845 = vand.u32 %v99, 4294901760
    %846 = vmatmul.f32.gmra.mxu0 %v845
    %v847 = vpop.f32.mrf.mxu0
    %v848 = vadd.f32 %v697, %v847
    %v849 = vand.u32 %v100, 4294901760
    %850 = vmatmul.f32.gmra.mxu0 %v849
    %v851 = vpop.f32.mrf.mxu0
    %v852 = vadd.f32 %v703, %v851
    %v853 = vand.u32 %v101, 4294901760
    %854 = vmatmul.f32.gmra.mxu0 %v853
    %v855 = vpop.f32.mrf.mxu0
    %v856 = vadd.f32 %v709, %v855
    %v857 = vand.u32 %v102, 4294901760
    %858 = vmatmul.f32.gmra.mxu0 %v857
    %v859 = vpop.f32.mrf.mxu0
    %v860 = vadd.f32 %v715, %v859
    %v861 = vand.u32 %v103, 4294901760
    %862 = vmatmul.f32.gmra.mxu0 %v861
    %v863 = vpop.f32.mrf.mxu0
    %v864 = vadd.f32 %v721, %v863
    %v865 = vand.u32 %v104, 4294901760
    %866 = vmatmul.f32.gmra.mxu0 %v865
    %v867 = vpop.f32.mrf.mxu0
    %v868 = vadd.f32 %v727, %v867
    %v869 = vand.u32 %v105, 4294901760
    %870 = vmatmul.f32.gmra.mxu0 %v869
    %v871 = vpop.f32.mrf.mxu0
    %v872 = vadd.f32 %v733, %v871
    %v873 = vand.u32 %v106, 4294901760
    %874 = vmatmul.f32.gmra.mxu0 %v873
    %v875 = vpop.f32.mrf.mxu0
    %v876 = vadd.f32 %v739, %v875
    %v877 = vand.u32 %v107, 4294901760
    %878 = vmatmul.f32.gmra.mxu0 %v877
    %v879 = vpop.f32.mrf.mxu0
    %v880 = vadd.f32 %v745, %v879
    %v881 = vand.u32 %v108, 4294901760
    %882 = vmatmul.f32.gmra.mxu0 %v881
    %v883 = vpop.f32.mrf.mxu0
    %v884 = vadd.f32 %v751, %v883
    %v885 = vand.u32 %v109, 4294901760
    %886 = vmatmul.f32.gmra.mxu0 %v885
    %v887 = vpop.f32.mrf.mxu0
    %v888 = vadd.f32 %v757, %v887
    %v889 = vand.u32 %v110, 4294901760
    %890 = vmatmul.f32.gmra.mxu0 %v889
    %v891 = vpop.f32.mrf.mxu0
    %v892 = vadd.f32 %v763, %v891
    %893 = vdwg.mxu0
    %v894 = vand.u32 %v171, 4294901760
    %895 = vmatpush.msra.mxu0 %v894
    %v896 = vand.u32 %v167, 4294901760
    %897 = vmatpush.msra.mxu0 %v896
    %v898 = vand.u32 %v163, 4294901760
    %899 = vmatpush.msra.mxu0 %v898
    %v900 = vand.u32 %v159, 4294901760
    %901 = vmatpush.msra.mxu0 %v900
    %v902 = vand.u32 %v155, 4294901760
    %903 = vmatpush.msra.mxu0 %v902
    %v904 = vand.u32 %v151, 4294901760
    %905 = vmatpush.msra.mxu0 %v904
    %v906 = vand.u32 %v147, 4294901760
    %907 = vmatpush.msra.mxu0 %v906
    %v908 = vand.u32 %v143, 4294901760
    %909 = vmatpush.msra.mxu0 %v908
    %v910 = vand.u32 %v139, 4294901760
    %911 = vmatpush.msra.mxu0 %v910
    %v912 = vand.u32 %v135, 4294901760
    %913 = vmatpush.msra.mxu0 %v912
    %v914 = vand.u32 %v131, 4294901760
    %915 = vmatpush.msra.mxu0 %v914
    %v916 = vand.u32 %v127, 4294901760
    %917 = vmatpush.msra.mxu0 %v916
    %v918 = vand.u32 %v123, 4294901760
    %919 = vmatpush.msra.mxu0 %v918
    %v920 = vand.u32 %v119, 4294901760
    %921 = vmatpush.msra.mxu0 %v920
    %v922 = vand.u32 %v115, 4294901760
    %923 = vmatpush.msra.mxu0 %v922
    %v924 = vand.u32 %v111, 4294901760
    %925 = vmatpush.msra.mxu0 %v924
    %v926 = vand.u32 %v95, 4294901760
    %927 = vmatmul.f32.gmra.mxu0 %v926
    %v928 = vpop.f32.mrf.mxu0
    %v929 = vadd.f32 %v832, %v928
    %v930 = vand.u32 %v96, 4294901760
    %931 = vmatmul.f32.gmra.mxu0 %v930
    %v932 = vpop.f32.mrf.mxu0
    %v933 = vadd.f32 %v836, %v932
    %v934 = vand.u32 %v97, 4294901760
    %935 = vmatmul.f32.gmra.mxu0 %v934
    %v936 = vpop.f32.mrf.mxu0
    %v937 = vadd.f32 %v840, %v936
    %v938 = vand.u32 %v98, 4294901760
    %939 = vmatmul.f32.gmra.mxu0 %v938
    %v940 = vpop.f32.mrf.mxu0
    %v941 = vadd.f32 %v844, %v940
    %v942 = vand.u32 %v99, 4294901760
    %943 = vmatmul.f32.gmra.mxu0 %v942
    %v944 = vpop.f32.mrf.mxu0
    %v945 = vadd.f32 %v848, %v944
    %v946 = vand.u32 %v100, 4294901760
    %947 = vmatmul.f32.gmra.mxu0 %v946
    %v948 = vpop.f32.mrf.mxu0
    %v949 = vadd.f32 %v852, %v948
    %v950 = vand.u32 %v101, 4294901760
    %951 = vmatmul.f32.gmra.mxu0 %v950
    %v952 = vpop.f32.mrf.mxu0
    %v953 = vadd.f32 %v856, %v952
    %v954 = vand.u32 %v102, 4294901760
    %955 = vmatmul.f32.gmra.mxu0 %v954
    %v956 = vpop.f32.mrf.mxu0
    %v957 = vadd.f32 %v860, %v956
    %v958 = vand.u32 %v103, 4294901760
    %959 = vmatmul.f32.gmra.mxu0 %v958
    %v960 = vpop.f32.mrf.mxu0
    %v961 = vadd.f32 %v864, %v960
    %v962 = vand.u32 %v104, 4294901760
    %963 = vmatmul.f32.gmra.mxu0 %v962
    %v964 = vpop.f32.mrf.mxu0
    %v965 = vadd.f32 %v868, %v964
    %v966 = vand.u32 %v105, 4294901760
    %967 = vmatmul.f32.gmra.mxu0 %v966
    %v968 = vpop.f32.mrf.mxu0
    %v969 = vadd.f32 %v872, %v968
    %v970 = vand.u32 %v106, 4294901760
    %971 = vmatmul.f32.gmra.mxu0 %v970
    %v972 = vpop.f32.mrf.mxu0
    %v973 = vadd.f32 %v876, %v972
    %v974 = vand.u32 %v107, 4294901760
    %975 = vmatmul.f32.gmra.mxu0 %v974
    %v976 = vpop.f32.mrf.mxu0
    %v977 = vadd.f32 %v880, %v976
    %v978 = vand.u32 %v108, 4294901760
    %979 = vmatmul.f32.gmra.mxu0 %v978
    %v980 = vpop.f32.mrf.mxu0
    %v981 = vadd.f32 %v884, %v980
    %v982 = vand.u32 %v109, 4294901760
    %983 = vmatmul.f32.gmra.mxu0 %v982
    %v984 = vpop.f32.mrf.mxu0
    %v985 = vadd.f32 %v888, %v984
    %v986 = vand.u32 %v110, 4294901760
    %987 = vmatmul.f32.gmra.mxu0 %v986
    %v988 = vpop.f32.mrf.mxu0
    %v989 = vadd.f32 %v892, %v988
    %990 = vdwg.mxu0
    %v991 = vand.u32 %v172, 4294901760
    %992 = vmatpush.msra.mxu0 %v991
    %v993 = vand.u32 %v168, 4294901760
    %994 = vmatpush.msra.mxu0 %v993
    %v995 = vand.u32 %v164, 4294901760
    %996 = vmatpush.msra.mxu0 %v995
    %v997 = vand.u32 %v160, 4294901760
    %998 = vmatpush.msra.mxu0 %v997
    %v999 = vand.u32 %v156, 4294901760
    %1000 = vmatpush.msra.mxu0 %v999
    %v1001 = vand.u32 %v152, 4294901760
    %1002 = vmatpush.msra.mxu0 %v1001
    %v1003 = vand.u32 %v148, 4294901760
    %1004 = vmatpush.msra.mxu0 %v1003
    %v1005 = vand.u32 %v144, 4294901760
    %1006 = vmatpush.msra.mxu0 %v1005
    %v1007 = vand.u32 %v140, 4294901760
    %1008 = vmatpush.msra.mxu0 %v1007
    %v1009 = vand.u32 %v136, 4294901760
    %1010 = vmatpush.msra.mxu0 %v1009
    %v1011 = vand.u32 %v132, 4294901760
    %1012 = vmatpush.msra.mxu0 %v1011
    %v1013 = vand.u32 %v128, 4294901760
    %1014 = vmatpush.msra.mxu0 %v1013
    %v1015 = vand.u32 %v124, 4294901760
    %1016 = vmatpush.msra.mxu0 %v1015
    %v1017 = vand.u32 %v120, 4294901760
    %1018 = vmatpush.msra.mxu0 %v1017
    %v1019 = vand.u32 %v116, 4294901760
    %1020 = vmatpush.msra.mxu0 %v1019
    %v1021 = vand.u32 %v112, 4294901760
    %1022 = vmatpush.msra.mxu0 %v1021
    %v1023 = vand.u32 %v95, 4294901760
    %v1024 = vsub.f32 %v95, %v1023
    %v1025 = vand.u32 %v1024, 4294901760
    %v1026 = vsub.f32 %v1024, %v1025
    %v1027 = vand.u32 %v1026, 4294901760
    %1028 = vmatmul.f32.gmra.mxu0 %v1027
    %v1029 = vpop.f32.mrf.mxu0
    %v1030 = vadd.f32 %v178, %v1029
    %v1031 = vand.u32 %v96, 4294901760
    %v1032 = vsub.f32 %v96, %v1031
    %v1033 = vand.u32 %v1032, 4294901760
    %v1034 = vsub.f32 %v1032, %v1033
    %v1035 = vand.u32 %v1034, 4294901760
    %1036 = vmatmul.f32.gmra.mxu0 %v1035
    %v1037 = vpop.f32.mrf.mxu0
    %v1038 = vadd.f32 %v178, %v1037
    %v1039 = vand.u32 %v97, 4294901760
    %v1040 = vsub.f32 %v97, %v1039
    %v1041 = vand.u32 %v1040, 4294901760
    %v1042 = vsub.f32 %v1040, %v1041
    %v1043 = vand.u32 %v1042, 4294901760
    %1044 = vmatmul.f32.gmra.mxu0 %v1043
    %v1045 = vpop.f32.mrf.mxu0
    %v1046 = vadd.f32 %v178, %v1045
    %v1047 = vand.u32 %v98, 4294901760
    %v1048 = vsub.f32 %v98, %v1047
    %v1049 = vand.u32 %v1048, 4294901760
    %v1050 = vsub.f32 %v1048, %v1049
    %v1051 = vand.u32 %v1050, 4294901760
    %1052 = vmatmul.f32.gmra.mxu0 %v1051
    %v1053 = vpop.f32.mrf.mxu0
    %v1054 = vadd.f32 %v178, %v1053
    %v1055 = vand.u32 %v99, 4294901760
    %v1056 = vsub.f32 %v99, %v1055
    %v1057 = vand.u32 %v1056, 4294901760
    %v1058 = vsub.f32 %v1056, %v1057
    %v1059 = vand.u32 %v1058, 4294901760
    %1060 = vmatmul.f32.gmra.mxu0 %v1059
    %v1061 = vpop.f32.mrf.mxu0
    %v1062 = vadd.f32 %v178, %v1061
    %v1063 = vand.u32 %v100, 4294901760
    %v1064 = vsub.f32 %v100, %v1063
    %v1065 = vand.u32 %v1064, 4294901760
    %v1066 = vsub.f32 %v1064, %v1065
    %v1067 = vand.u32 %v1066, 4294901760
    %1068 = vmatmul.f32.gmra.mxu0 %v1067
    %v1069 = vpop.f32.mrf.mxu0
    %v1070 = vadd.f32 %v178, %v1069
    %v1071 = vand.u32 %v101, 4294901760
    %v1072 = vsub.f32 %v101, %v1071
    %v1073 = vand.u32 %v1072, 4294901760
    %v1074 = vsub.f32 %v1072, %v1073
    %v1075 = vand.u32 %v1074, 4294901760
    %1076 = vmatmul.f32.gmra.mxu0 %v1075
    %v1077 = vpop.f32.mrf.mxu0
    %v1078 = vadd.f32 %v178, %v1077
    %v1079 = vand.u32 %v102, 4294901760
    %v1080 = vsub.f32 %v102, %v1079
    %v1081 = vand.u32 %v1080, 4294901760
    %v1082 = vsub.f32 %v1080, %v1081
    %v1083 = vand.u32 %v1082, 4294901760
    %1084 = vmatmul.f32.gmra.mxu0 %v1083
    %v1085 = vpop.f32.mrf.mxu0
    %v1086 = vadd.f32 %v178, %v1085
    %v1087 = vand.u32 %v103, 4294901760
    %v1088 = vsub.f32 %v103, %v1087
    %v1089 = vand.u32 %v1088, 4294901760
    %v1090 = vsub.f32 %v1088, %v1089
    %v1091 = vand.u32 %v1090, 4294901760
    %1092 = vmatmul.f32.gmra.mxu0 %v1091
    %v1093 = vpop.f32.mrf.mxu0
    %v1094 = vadd.f32 %v178, %v1093
    %v1095 = vand.u32 %v104, 4294901760
    %v1096 = vsub.f32 %v104, %v1095
    %v1097 = vand.u32 %v1096, 4294901760
    %v1098 = vsub.f32 %v1096, %v1097
    %v1099 = vand.u32 %v1098, 4294901760
    %1100 = vmatmul.f32.gmra.mxu0 %v1099
    %v1101 = vpop.f32.mrf.mxu0
    %v1102 = vadd.f32 %v178, %v1101
    %v1103 = vand.u32 %v105, 4294901760
    %v1104 = vsub.f32 %v105, %v1103
    %v1105 = vand.u32 %v1104, 4294901760
    %v1106 = vsub.f32 %v1104, %v1105
    %v1107 = vand.u32 %v1106, 4294901760
    %1108 = vmatmul.f32.gmra.mxu0 %v1107
    %v1109 = vpop.f32.mrf.mxu0
    %v1110 = vadd.f32 %v178, %v1109
    %v1111 = vand.u32 %v106, 4294901760
    %v1112 = vsub.f32 %v106, %v1111
    %v1113 = vand.u32 %v1112, 4294901760
    %v1114 = vsub.f32 %v1112, %v1113
    %v1115 = vand.u32 %v1114, 4294901760
    %1116 = vmatmul.f32.gmra.mxu0 %v1115
    %v1117 = vpop.f32.mrf.mxu0
    %v1118 = vadd.f32 %v178, %v1117
    %v1119 = vand.u32 %v107, 4294901760
    %v1120 = vsub.f32 %v107, %v1119
    %v1121 = vand.u32 %v1120, 4294901760
    %v1122 = vsub.f32 %v1120, %v1121
    %v1123 = vand.u32 %v1122, 4294901760
    %1124 = vmatmul.f32.gmra.mxu0 %v1123
    %v1125 = vpop.f32.mrf.mxu0
    %v1126 = vadd.f32 %v178, %v1125
    %v1127 = vand.u32 %v108, 4294901760
    %v1128 = vsub.f32 %v108, %v1127
    %v1129 = vand.u32 %v1128, 4294901760
    %v1130 = vsub.f32 %v1128, %v1129
    %v1131 = vand.u32 %v1130, 4294901760
    %1132 = vmatmul.f32.gmra.mxu0 %v1131
    %v1133 = vpop.f32.mrf.mxu0
    %v1134 = vadd.f32 %v178, %v1133
    %v1135 = vand.u32 %v109, 4294901760
    %v1136 = vsub.f32 %v109, %v1135
    %v1137 = vand.u32 %v1136, 4294901760
    %v1138 = vsub.f32 %v1136, %v1137
    %v1139 = vand.u32 %v1138, 4294901760
    %1140 = vmatmul.f32.gmra.mxu0 %v1139
    %v1141 = vpop.f32.mrf.mxu0
    %v1142 = vadd.f32 %v178, %v1141
    %v1143 = vand.u32 %v110, 4294901760
    %v1144 = vsub.f32 %v110, %v1143
    %v1145 = vand.u32 %v1144, 4294901760
    %v1146 = vsub.f32 %v1144, %v1145
    %v1147 = vand.u32 %v1146, 4294901760
    %1148 = vmatmul.f32.gmra.mxu0 %v1147
    %v1149 = vpop.f32.mrf.mxu0
    %v1150 = vadd.f32 %v178, %v1149
    %1151 = vdwg.mxu0
    %v1152 = vand.u32 %v172, 4294901760
    %v1153 = vsub.f32 %v172, %v1152
    %v1154 = vand.u32 %v1153, 4294901760
    %v1155 = vsub.f32 %v1153, %v1154
    %v1156 = vand.u32 %v1155, 4294901760
    %1157 = vmatpush.msra.mxu0 %v1156
    %v1158 = vand.u32 %v168, 4294901760
    %v1159 = vsub.f32 %v168, %v1158
    %v1160 = vand.u32 %v1159, 4294901760
    %v1161 = vsub.f32 %v1159, %v1160
    %v1162 = vand.u32 %v1161, 4294901760
    %1163 = vmatpush.msra.mxu0 %v1162
    %v1164 = vand.u32 %v164, 4294901760
    %v1165 = vsub.f32 %v164, %v1164
    %v1166 = vand.u32 %v1165, 4294901760
    %v1167 = vsub.f32 %v1165, %v1166
    %v1168 = vand.u32 %v1167, 4294901760
    %1169 = vmatpush.msra.mxu0 %v1168
    %v1170 = vand.u32 %v160, 4294901760
    %v1171 = vsub.f32 %v160, %v1170
    %v1172 = vand.u32 %v1171, 4294901760
    %v1173 = vsub.f32 %v1171, %v1172
    %v1174 = vand.u32 %v1173, 4294901760
    %1175 = vmatpush.msra.mxu0 %v1174
    %v1176 = vand.u32 %v156, 4294901760
    %v1177 = vsub.f32 %v156, %v1176
    %v1178 = vand.u32 %v1177, 4294901760
    %v1179 = vsub.f32 %v1177, %v1178
    %v1180 = vand.u32 %v1179, 4294901760
    %1181 = vmatpush.msra.mxu0 %v1180
    %v1182 = vand.u32 %v152, 4294901760
    %v1183 = vsub.f32 %v152, %v1182
    %v1184 = vand.u32 %v1183, 4294901760
    %v1185 = vsub.f32 %v1183, %v1184
    %v1186 = vand.u32 %v1185, 4294901760
    %1187 = vmatpush.msra.mxu0 %v1186
    %v1188 = vand.u32 %v148, 4294901760
    %v1189 = vsub.f32 %v148, %v1188
    %v1190 = vand.u32 %v1189, 4294901760
    %v1191 = vsub.f32 %v1189, %v1190
    %v1192 = vand.u32 %v1191, 4294901760
    %1193 = vmatpush.msra.mxu0 %v1192
    %v1194 = vand.u32 %v144, 4294901760
    %v1195 = vsub.f32 %v144, %v1194
    %v1196 = vand.u32 %v1195, 4294901760
    %v1197 = vsub.f32 %v1195, %v1196
    %v1198 = vand.u32 %v1197, 4294901760
    %1199 = vmatpush.msra.mxu0 %v1198
    %v1200 = vand.u32 %v140, 4294901760
    %v1201 = vsub.f32 %v140, %v1200
    %v1202 = vand.u32 %v1201, 4294901760
    %v1203 = vsub.f32 %v1201, %v1202
    %v1204 = vand.u32 %v1203, 4294901760
    %1205 = vmatpush.msra.mxu0 %v1204
    %v1206 = vand.u32 %v136, 4294901760
    %v1207 = vsub.f32 %v136, %v1206
    %v1208 = vand.u32 %v1207, 4294901760
    %v1209 = vsub.f32 %v1207, %v1208
    %v1210 = vand.u32 %v1209, 4294901760
    %1211 = vmatpush.msra.mxu0 %v1210
    %v1212 = vand.u32 %v132, 4294901760
    %v1213 = vsub.f32 %v132, %v1212
    %v1214 = vand.u32 %v1213, 4294901760
    %v1215 = vsub.f32 %v1213, %v1214
    %v1216 = vand.u32 %v1215, 4294901760
    %1217 = vmatpush.msra.mxu0 %v1216
    %v1218 = vand.u32 %v128, 4294901760
    %v1219 = vsub.f32 %v128, %v1218
    %v1220 = vand.u32 %v1219, 4294901760
    %v1221 = vsub.f32 %v1219, %v1220
    %v1222 = vand.u32 %v1221, 4294901760
    %1223 = vmatpush.msra.mxu0 %v1222
    %v1224 = vand.u32 %v124, 4294901760
    %v1225 = vsub.f32 %v124, %v1224
    %v1226 = vand.u32 %v1225, 4294901760
    %v1227 = vsub.f32 %v1225, %v1226
    %v1228 = vand.u32 %v1227, 4294901760
    %1229 = vmatpush.msra.mxu0 %v1228
    %v1230 = vand.u32 %v120, 4294901760
    %v1231 = vsub.f32 %v120, %v1230
    %v1232 = vand.u32 %v1231, 4294901760
    %v1233 = vsub.f32 %v1231, %v1232
    %v1234 = vand.u32 %v1233, 4294901760
    %1235 = vmatpush.msra.mxu0 %v1234
    %v1236 = vand.u32 %v116, 4294901760
    %v1237 = vsub.f32 %v116, %v1236
    %v1238 = vand.u32 %v1237, 4294901760
    %v1239 = vsub.f32 %v1237, %v1238
    %v1240 = vand.u32 %v1239, 4294901760
    %1241 = vmatpush.msra.mxu0 %v1240
    %v1242 = vand.u32 %v112, 4294901760
    %v1243 = vsub.f32 %v112, %v1242
    %v1244 = vand.u32 %v1243, 4294901760
    %v1245 = vsub.f32 %v1243, %v1244
    %v1246 = vand.u32 %v1245, 4294901760
    %1247 = vmatpush.msra.mxu0 %v1246
    %v1248 = vand.u32 %v95, 4294901760
    %1249 = vmatmul.f32.gmra.mxu0 %v1248
    %v1250 = vpop.f32.mrf.mxu0
    %v1251 = vadd.f32 %v1030, %v1250
    %v1252 = vand.u32 %v96, 4294901760
    %1253 = vmatmul.f32.gmra.mxu0 %v1252
    %v1254 = vpop.f32.mrf.mxu0
    %v1255 = vadd.f32 %v1038, %v1254
    %v1256 = vand.u32 %v97, 4294901760
    %1257 = vmatmul.f32.gmra.mxu0 %v1256
    %v1258 = vpop.f32.mrf.mxu0
    %v1259 = vadd.f32 %v1046, %v1258
    %v1260 = vand.u32 %v98, 4294901760
    %1261 = vmatmul.f32.gmra.mxu0 %v1260
    %v1262 = vpop.f32.mrf.mxu0
    %v1263 = vadd.f32 %v1054, %v1262
    %v1264 = vand.u32 %v99, 4294901760
    %1265 = vmatmul.f32.gmra.mxu0 %v1264
    %v1266 = vpop.f32.mrf.mxu0
    %v1267 = vadd.f32 %v1062, %v1266
    %v1268 = vand.u32 %v100, 4294901760
    %1269 = vmatmul.f32.gmra.mxu0 %v1268
    %v1270 = vpop.f32.mrf.mxu0
    %v1271 = vadd.f32 %v1070, %v1270
    %v1272 = vand.u32 %v101, 4294901760
    %1273 = vmatmul.f32.gmra.mxu0 %v1272
    %v1274 = vpop.f32.mrf.mxu0
    %v1275 = vadd.f32 %v1078, %v1274
    %v1276 = vand.u32 %v102, 4294901760
    %1277 = vmatmul.f32.gmra.mxu0 %v1276
    %v1278 = vpop.f32.mrf.mxu0
    %v1279 = vadd.f32 %v1086, %v1278
    %v1280 = vand.u32 %v103, 4294901760
    %1281 = vmatmul.f32.gmra.mxu0 %v1280
    %v1282 = vpop.f32.mrf.mxu0
    %v1283 = vadd.f32 %v1094, %v1282
    %v1284 = vand.u32 %v104, 4294901760
    %1285 = vmatmul.f32.gmra.mxu0 %v1284
    %v1286 = vpop.f32.mrf.mxu0
    %v1287 = vadd.f32 %v1102, %v1286
    %v1288 = vand.u32 %v105, 4294901760
    %1289 = vmatmul.f32.gmra.mxu0 %v1288
    %v1290 = vpop.f32.mrf.mxu0
    %v1291 = vadd.f32 %v1110, %v1290
    %v1292 = vand.u32 %v106, 4294901760
    %1293 = vmatmul.f32.gmra.mxu0 %v1292
    %v1294 = vpop.f32.mrf.mxu0
    %v1295 = vadd.f32 %v1118, %v1294
    %v1296 = vand.u32 %v107, 4294901760
    %1297 = vmatmul.f32.gmra.mxu0 %v1296
    %v1298 = vpop.f32.mrf.mxu0
    %v1299 = vadd.f32 %v1126, %v1298
    %v1300 = vand.u32 %v108, 4294901760
    %1301 = vmatmul.f32.gmra.mxu0 %v1300
    %v1302 = vpop.f32.mrf.mxu0
    %v1303 = vadd.f32 %v1134, %v1302
    %v1304 = vand.u32 %v109, 4294901760
    %1305 = vmatmul.f32.gmra.mxu0 %v1304
    %v1306 = vpop.f32.mrf.mxu0
    %v1307 = vadd.f32 %v1142, %v1306
    %v1308 = vand.u32 %v110, 4294901760
    %1309 = vmatmul.f32.gmra.mxu0 %v1308
    %v1310 = vpop.f32.mrf.mxu0
    %v1311 = vadd.f32 %v1150, %v1310
    %1312 = vdwg.mxu0
    %v1313 = vand.u32 %v172, 4294901760
    %v1314 = vsub.f32 %v172, %v1313
    %1315 = vmatpush.msra.mxu0 %v1314
    %v1316 = vand.u32 %v168, 4294901760
    %v1317 = vsub.f32 %v168, %v1316
    %1318 = vmatpush.msra.mxu0 %v1317
    %v1319 = vand.u32 %v164, 4294901760
    %v1320 = vsub.f32 %v164, %v1319
    %1321 = vmatpush.msra.mxu0 %v1320
    %v1322 = vand.u32 %v160, 4294901760
    %v1323 = vsub.f32 %v160, %v1322
    %1324 = vmatpush.msra.mxu0 %v1323
    %v1325 = vand.u32 %v156, 4294901760
    %v1326 = vsub.f32 %v156, %v1325
    %1327 = vmatpush.msra.mxu0 %v1326
    %v1328 = vand.u32 %v152, 4294901760
    %v1329 = vsub.f32 %v152, %v1328
    %1330 = vmatpush.msra.mxu0 %v1329
    %v1331 = vand.u32 %v148, 4294901760
    %v1332 = vsub.f32 %v148, %v1331
    %1333 = vmatpush.msra.mxu0 %v1332
    %v1334 = vand.u32 %v144, 4294901760
    %v1335 = vsub.f32 %v144, %v1334
    %1336 = vmatpush.msra.mxu0 %v1335
    %v1337 = vand.u32 %v140, 4294901760
    %v1338 = vsub.f32 %v140, %v1337
    %1339 = vmatpush.msra.mxu0 %v1338
    %v1340 = vand.u32 %v136, 4294901760
    %v1341 = vsub.f32 %v136, %v1340
    %1342 = vmatpush.msra.mxu0 %v1341
    %v1343 = vand.u32 %v132, 4294901760
    %v1344 = vsub.f32 %v132, %v1343
    %1345 = vmatpush.msra.mxu0 %v1344
    %v1346 = vand.u32 %v128, 4294901760
    %v1347 = vsub.f32 %v128, %v1346
    %1348 = vmatpush.msra.mxu0 %v1347
    %v1349 = vand.u32 %v124, 4294901760
    %v1350 = vsub.f32 %v124, %v1349
    %1351 = vmatpush.msra.mxu0 %v1350
    %v1352 = vand.u32 %v120, 4294901760
    %v1353 = vsub.f32 %v120, %v1352
    %1354 = vmatpush.msra.mxu0 %v1353
    %v1355 = vand.u32 %v116, 4294901760
    %v1356 = vsub.f32 %v116, %v1355
    %1357 = vmatpush.msra.mxu0 %v1356
    %v1358 = vand.u32 %v112, 4294901760
    %v1359 = vsub.f32 %v112, %v1358
    %1360 = vmatpush.msra.mxu0 %v1359
    %v1361 = vand.u32 %v95, 4294901760
    %v1362 = vsub.f32 %v95, %v1361
    %1363 = vmatmul.f32.gmra.mxu0 %v1362
    %v1364 = vpop.f32.mrf.mxu0
    %v1365 = vadd.f32 %v1251, %v1364
    %v1366 = vand.u32 %v96, 4294901760
    %v1367 = vsub.f32 %v96, %v1366
    %1368 = vmatmul.f32.gmra.mxu0 %v1367
    %v1369 = vpop.f32.mrf.mxu0
    %v1370 = vadd.f32 %v1255, %v1369
    %v1371 = vand.u32 %v97, 4294901760
    %v1372 = vsub.f32 %v97, %v1371
    %1373 = vmatmul.f32.gmra.mxu0 %v1372
    %v1374 = vpop.f32.mrf.mxu0
    %v1375 = vadd.f32 %v1259, %v1374
    %v1376 = vand.u32 %v98, 4294901760
    %v1377 = vsub.f32 %v98, %v1376
    %1378 = vmatmul.f32.gmra.mxu0 %v1377
    %v1379 = vpop.f32.mrf.mxu0
    %v1380 = vadd.f32 %v1263, %v1379
    %v1381 = vand.u32 %v99, 4294901760
    %v1382 = vsub.f32 %v99, %v1381
    %1383 = vmatmul.f32.gmra.mxu0 %v1382
    %v1384 = vpop.f32.mrf.mxu0
    %v1385 = vadd.f32 %v1267, %v1384
    %v1386 = vand.u32 %v100, 4294901760
    %v1387 = vsub.f32 %v100, %v1386
    %1388 = vmatmul.f32.gmra.mxu0 %v1387
    %v1389 = vpop.f32.mrf.mxu0
    %v1390 = vadd.f32 %v1271, %v1389
    %v1391 = vand.u32 %v101, 4294901760
    %v1392 = vsub.f32 %v101, %v1391
    %1393 = vmatmul.f32.gmra.mxu0 %v1392
    %v1394 = vpop.f32.mrf.mxu0
    %v1395 = vadd.f32 %v1275, %v1394
    %v1396 = vand.u32 %v102, 4294901760
    %v1397 = vsub.f32 %v102, %v1396
    %1398 = vmatmul.f32.gmra.mxu0 %v1397
    %v1399 = vpop.f32.mrf.mxu0
    %v1400 = vadd.f32 %v1279, %v1399
    %v1401 = vand.u32 %v103, 4294901760
    %v1402 = vsub.f32 %v103, %v1401
    %1403 = vmatmul.f32.gmra.mxu0 %v1402
    %v1404 = vpop.f32.mrf.mxu0
    %v1405 = vadd.f32 %v1283, %v1404
    %v1406 = vand.u32 %v104, 4294901760
    %v1407 = vsub.f32 %v104, %v1406
    %1408 = vmatmul.f32.gmra.mxu0 %v1407
    %v1409 = vpop.f32.mrf.mxu0
    %v1410 = vadd.f32 %v1287, %v1409
    %v1411 = vand.u32 %v105, 4294901760
    %v1412 = vsub.f32 %v105, %v1411
    %1413 = vmatmul.f32.gmra.mxu0 %v1412
    %v1414 = vpop.f32.mrf.mxu0
    %v1415 = vadd.f32 %v1291, %v1414
    %v1416 = vand.u32 %v106, 4294901760
    %v1417 = vsub.f32 %v106, %v1416
    %1418 = vmatmul.f32.gmra.mxu0 %v1417
    %v1419 = vpop.f32.mrf.mxu0
    %v1420 = vadd.f32 %v1295, %v1419
    %v1421 = vand.u32 %v107, 4294901760
    %v1422 = vsub.f32 %v107, %v1421
    %1423 = vmatmul.f32.gmra.mxu0 %v1422
    %v1424 = vpop.f32.mrf.mxu0
    %v1425 = vadd.f32 %v1299, %v1424
    %v1426 = vand.u32 %v108, 4294901760
    %v1427 = vsub.f32 %v108, %v1426
    %1428 = vmatmul.f32.gmra.mxu0 %v1427
    %v1429 = vpop.f32.mrf.mxu0
    %v1430 = vadd.f32 %v1303, %v1429
    %v1431 = vand.u32 %v109, 4294901760
    %v1432 = vsub.f32 %v109, %v1431
    %1433 = vmatmul.f32.gmra.mxu0 %v1432
    %v1434 = vpop.f32.mrf.mxu0
    %v1435 = vadd.f32 %v1307, %v1434
    %v1436 = vand.u32 %v110, 4294901760
    %v1437 = vsub.f32 %v110, %v1436
    %1438 = vmatmul.f32.gmra.mxu0 %v1437
    %v1439 = vpop.f32.mrf.mxu0
    %v1440 = vadd.f32 %v1311, %v1439
    %1441 = vdwg.mxu0
    %v1442 = vand.u32 %v172, 4294901760
    %1443 = vmatpush.msra.mxu0 %v1442
    %v1444 = vand.u32 %v168, 4294901760
    %1445 = vmatpush.msra.mxu0 %v1444
    %v1446 = vand.u32 %v164, 4294901760
    %1447 = vmatpush.msra.mxu0 %v1446
    %v1448 = vand.u32 %v160, 4294901760
    %1449 = vmatpush.msra.mxu0 %v1448
    %v1450 = vand.u32 %v156, 4294901760
    %1451 = vmatpush.msra.mxu0 %v1450
    %v1452 = vand.u32 %v152, 4294901760
    %1453 = vmatpush.msra.mxu0 %v1452
    %v1454 = vand.u32 %v148, 4294901760
    %1455 = vmatpush.msra.mxu0 %v1454
    %v1456 = vand.u32 %v144, 4294901760
    %1457 = vmatpush.msra.mxu0 %v1456
    %v1458 = vand.u32 %v140, 4294901760
    %1459 = vmatpush.msra.mxu0 %v1458
    %v1460 = vand.u32 %v136, 4294901760
    %1461 = vmatpush.msra.mxu0 %v1460
    %v1462 = vand.u32 %v132, 4294901760
    %1463 = vmatpush.msra.mxu0 %v1462
    %v1464 = vand.u32 %v128, 4294901760
    %1465 = vmatpush.msra.mxu0 %v1464
    %v1466 = vand.u32 %v124, 4294901760
    %1467 = vmatpush.msra.mxu0 %v1466
    %v1468 = vand.u32 %v120, 4294901760
    %1469 = vmatpush.msra.mxu0 %v1468
    %v1470 = vand.u32 %v116, 4294901760
    %1471 = vmatpush.msra.mxu0 %v1470
    %v1472 = vand.u32 %v112, 4294901760
    %1473 = vmatpush.msra.mxu0 %v1472
    %v1474 = vand.u32 %v95, 4294901760
    %v1475 = vsub.f32 %v95, %v1474
    %v1476 = vand.u32 %v1475, 4294901760
    %1477 = vmatmul.f32.gmra.mxu0 %v1476
    %v1478 = vpop.f32.mrf.mxu0
    %v1479 = vadd.f32 %v1365, %v1478
    %v1480 = vand.u32 %v96, 4294901760
    %v1481 = vsub.f32 %v96, %v1480
    %v1482 = vand.u32 %v1481, 4294901760
    %1483 = vmatmul.f32.gmra.mxu0 %v1482
    %v1484 = vpop.f32.mrf.mxu0
    %v1485 = vadd.f32 %v1370, %v1484
    %v1486 = vand.u32 %v97, 4294901760
    %v1487 = vsub.f32 %v97, %v1486
    %v1488 = vand.u32 %v1487, 4294901760
    %1489 = vmatmul.f32.gmra.mxu0 %v1488
    %v1490 = vpop.f32.mrf.mxu0
    %v1491 = vadd.f32 %v1375, %v1490
    %v1492 = vand.u32 %v98, 4294901760
    %v1493 = vsub.f32 %v98, %v1492
    %v1494 = vand.u32 %v1493, 4294901760
    %1495 = vmatmul.f32.gmra.mxu0 %v1494
    %v1496 = vpop.f32.mrf.mxu0
    %v1497 = vadd.f32 %v1380, %v1496
    %v1498 = vand.u32 %v99, 4294901760
    %v1499 = vsub.f32 %v99, %v1498
    %v1500 = vand.u32 %v1499, 4294901760
    %1501 = vmatmul.f32.gmra.mxu0 %v1500
    %v1502 = vpop.f32.mrf.mxu0
    %v1503 = vadd.f32 %v1385, %v1502
    %v1504 = vand.u32 %v100, 4294901760
    %v1505 = vsub.f32 %v100, %v1504
    %v1506 = vand.u32 %v1505, 4294901760
    %1507 = vmatmul.f32.gmra.mxu0 %v1506
    %v1508 = vpop.f32.mrf.mxu0
    %v1509 = vadd.f32 %v1390, %v1508
    %v1510 = vand.u32 %v101, 4294901760
    %v1511 = vsub.f32 %v101, %v1510
    %v1512 = vand.u32 %v1511, 4294901760
    %1513 = vmatmul.f32.gmra.mxu0 %v1512
    %v1514 = vpop.f32.mrf.mxu0
    %v1515 = vadd.f32 %v1395, %v1514
    %v1516 = vand.u32 %v102, 4294901760
    %v1517 = vsub.f32 %v102, %v1516
    %v1518 = vand.u32 %v1517, 4294901760
    %1519 = vmatmul.f32.gmra.mxu0 %v1518
    %v1520 = vpop.f32.mrf.mxu0
    %v1521 = vadd.f32 %v1400, %v1520
    %v1522 = vand.u32 %v103, 4294901760
    %v1523 = vsub.f32 %v103, %v1522
    %v1524 = vand.u32 %v1523, 4294901760
    %1525 = vmatmul.f32.gmra.mxu0 %v1524
    %v1526 = vpop.f32.mrf.mxu0
    %v1527 = vadd.f32 %v1405, %v1526
    %v1528 = vand.u32 %v104, 4294901760
    %v1529 = vsub.f32 %v104, %v1528
    %v1530 = vand.u32 %v1529, 4294901760
    %1531 = vmatmul.f32.gmra.mxu0 %v1530
    %v1532 = vpop.f32.mrf.mxu0
    %v1533 = vadd.f32 %v1410, %v1532
    %v1534 = vand.u32 %v105, 4294901760
    %v1535 = vsub.f32 %v105, %v1534
    %v1536 = vand.u32 %v1535, 4294901760
    %1537 = vmatmul.f32.gmra.mxu0 %v1536
    %v1538 = vpop.f32.mrf.mxu0
    %v1539 = vadd.f32 %v1415, %v1538
    %v1540 = vand.u32 %v106, 4294901760
    %v1541 = vsub.f32 %v106, %v1540
    %v1542 = vand.u32 %v1541, 4294901760
    %1543 = vmatmul.f32.gmra.mxu0 %v1542
    %v1544 = vpop.f32.mrf.mxu0
    %v1545 = vadd.f32 %v1420, %v1544
    %v1546 = vand.u32 %v107, 4294901760
    %v1547 = vsub.f32 %v107, %v1546
    %v1548 = vand.u32 %v1547, 4294901760
    %1549 = vmatmul.f32.gmra.mxu0 %v1548
    %v1550 = vpop.f32.mrf.mxu0
    %v1551 = vadd.f32 %v1425, %v1550
    %v1552 = vand.u32 %v108, 4294901760
    %v1553 = vsub.f32 %v108, %v1552
    %v1554 = vand.u32 %v1553, 4294901760
    %1555 = vmatmul.f32.gmra.mxu0 %v1554
    %v1556 = vpop.f32.mrf.mxu0
    %v1557 = vadd.f32 %v1430, %v1556
    %v1558 = vand.u32 %v109, 4294901760
    %v1559 = vsub.f32 %v109, %v1558
    %v1560 = vand.u32 %v1559, 4294901760
    %1561 = vmatmul.f32.gmra.mxu0 %v1560
    %v1562 = vpop.f32.mrf.mxu0
    %v1563 = vadd.f32 %v1435, %v1562
    %v1564 = vand.u32 %v110, 4294901760
    %v1565 = vsub.f32 %v110, %v1564
    %v1566 = vand.u32 %v1565, 4294901760
    %1567 = vmatmul.f32.gmra.mxu0 %v1566
    %v1568 = vpop.f32.mrf.mxu0
    %v1569 = vadd.f32 %v1440, %v1568
    %1570 = vdwg.mxu0
    %v1571 = vand.u32 %v172, 4294901760
    %v1572 = vsub.f32 %v172, %v1571
    %v1573 = vand.u32 %v1572, 4294901760
    %1574 = vmatpush.msra.mxu0 %v1573
    %v1575 = vand.u32 %v168, 4294901760
    %v1576 = vsub.f32 %v168, %v1575
    %v1577 = vand.u32 %v1576, 4294901760
    %1578 = vmatpush.msra.mxu0 %v1577
    %v1579 = vand.u32 %v164, 4294901760
    %v1580 = vsub.f32 %v164, %v1579
    %v1581 = vand.u32 %v1580, 4294901760
    %1582 = vmatpush.msra.mxu0 %v1581
    %v1583 = vand.u32 %v160, 4294901760
    %v1584 = vsub.f32 %v160, %v1583
    %v1585 = vand.u32 %v1584, 4294901760
    %1586 = vmatpush.msra.mxu0 %v1585
    %v1587 = vand.u32 %v156, 4294901760
    %v1588 = vsub.f32 %v156, %v1587
    %v1589 = vand.u32 %v1588, 4294901760
    %1590 = vmatpush.msra.mxu0 %v1589
    %v1591 = vand.u32 %v152, 4294901760
    %v1592 = vsub.f32 %v152, %v1591
    %v1593 = vand.u32 %v1592, 4294901760
    %1594 = vmatpush.msra.mxu0 %v1593
    %v1595 = vand.u32 %v148, 4294901760
    %v1596 = vsub.f32 %v148, %v1595
    %v1597 = vand.u32 %v1596, 4294901760
    %1598 = vmatpush.msra.mxu0 %v1597
    %v1599 = vand.u32 %v144, 4294901760
    %v1600 = vsub.f32 %v144, %v1599
    %v1601 = vand.u32 %v1600, 4294901760
    %1602 = vmatpush.msra.mxu0 %v1601
    %v1603 = vand.u32 %v140, 4294901760
    %v1604 = vsub.f32 %v140, %v1603
    %v1605 = vand.u32 %v1604, 4294901760
    %1606 = vmatpush.msra.mxu0 %v1605
    %v1607 = vand.u32 %v136, 4294901760
    %v1608 = vsub.f32 %v136, %v1607
    %v1609 = vand.u32 %v1608, 4294901760
    %1610 = vmatpush.msra.mxu0 %v1609
    %v1611 = vand.u32 %v132, 4294901760
    %v1612 = vsub.f32 %v132, %v1611
    %v1613 = vand.u32 %v1612, 4294901760
    %1614 = vmatpush.msra.mxu0 %v1613
    %v1615 = vand.u32 %v128, 4294901760
    %v1616 = vsub.f32 %v128, %v1615
    %v1617 = vand.u32 %v1616, 4294901760
    %1618 = vmatpush.msra.mxu0 %v1617
    %v1619 = vand.u32 %v124, 4294901760
    %v1620 = vsub.f32 %v124, %v1619
    %v1621 = vand.u32 %v1620, 4294901760
    %1622 = vmatpush.msra.mxu0 %v1621
    %v1623 = vand.u32 %v120, 4294901760
    %v1624 = vsub.f32 %v120, %v1623
    %v1625 = vand.u32 %v1624, 4294901760
    %1626 = vmatpush.msra.mxu0 %v1625
    %v1627 = vand.u32 %v116, 4294901760
    %v1628 = vsub.f32 %v116, %v1627
    %v1629 = vand.u32 %v1628, 4294901760
    %1630 = vmatpush.msra.mxu0 %v1629
    %v1631 = vand.u32 %v112, 4294901760
    %v1632 = vsub.f32 %v112, %v1631
    %v1633 = vand.u32 %v1632, 4294901760
    %1634 = vmatpush.msra.mxu0 %v1633
    %v1635 = vand.u32 %v95, 4294901760
    %1636 = vmatmul.f32.gmra.mxu0 %v1635
    %v1637 = vpop.f32.mrf.mxu0
    %v1638 = vadd.f32 %v1479, %v1637
    %v1639 = vand.u32 %v96, 4294901760
    %1640 = vmatmul.f32.gmra.mxu0 %v1639
    %v1641 = vpop.f32.mrf.mxu0
    %v1642 = vadd.f32 %v1485, %v1641
    %v1643 = vand.u32 %v97, 4294901760
    %1644 = vmatmul.f32.gmra.mxu0 %v1643
    %v1645 = vpop.f32.mrf.mxu0
    %v1646 = vadd.f32 %v1491, %v1645
    %v1647 = vand.u32 %v98, 4294901760
    %1648 = vmatmul.f32.gmra.mxu0 %v1647
    %v1649 = vpop.f32.mrf.mxu0
    %v1650 = vadd.f32 %v1497, %v1649
    %v1651 = vand.u32 %v99, 4294901760
    %1652 = vmatmul.f32.gmra.mxu0 %v1651
    %v1653 = vpop.f32.mrf.mxu0
    %v1654 = vadd.f32 %v1503, %v1653
    %v1655 = vand.u32 %v100, 4294901760
    %1656 = vmatmul.f32.gmra.mxu0 %v1655
    %v1657 = vpop.f32.mrf.mxu0
    %v1658 = vadd.f32 %v1509, %v1657
    %v1659 = vand.u32 %v101, 4294901760
    %1660 = vmatmul.f32.gmra.mxu0 %v1659
    %v1661 = vpop.f32.mrf.mxu0
    %v1662 = vadd.f32 %v1515, %v1661
    %v1663 = vand.u32 %v102, 4294901760
    %1664 = vmatmul.f32.gmra.mxu0 %v1663
    %v1665 = vpop.f32.mrf.mxu0
    %v1666 = vadd.f32 %v1521, %v1665
    %v1667 = vand.u32 %v103, 4294901760
    %1668 = vmatmul.f32.gmra.mxu0 %v1667
    %v1669 = vpop.f32.mrf.mxu0
    %v1670 = vadd.f32 %v1527, %v1669
    %v1671 = vand.u32 %v104, 4294901760
    %1672 = vmatmul.f32.gmra.mxu0 %v1671
    %v1673 = vpop.f32.mrf.mxu0
    %v1674 = vadd.f32 %v1533, %v1673
    %v1675 = vand.u32 %v105, 4294901760
    %1676 = vmatmul.f32.gmra.mxu0 %v1675
    %v1677 = vpop.f32.mrf.mxu0
    %v1678 = vadd.f32 %v1539, %v1677
    %v1679 = vand.u32 %v106, 4294901760
    %1680 = vmatmul.f32.gmra.mxu0 %v1679
    %v1681 = vpop.f32.mrf.mxu0
    %v1682 = vadd.f32 %v1545, %v1681
    %v1683 = vand.u32 %v107, 4294901760
    %1684 = vmatmul.f32.gmra.mxu0 %v1683
    %v1685 = vpop.f32.mrf.mxu0
    %v1686 = vadd.f32 %v1551, %v1685
    %v1687 = vand.u32 %v108, 4294901760
    %1688 = vmatmul.f32.gmra.mxu0 %v1687
    %v1689 = vpop.f32.mrf.mxu0
    %v1690 = vadd.f32 %v1557, %v1689
    %v1691 = vand.u32 %v109, 4294901760
    %1692 = vmatmul.f32.gmra.mxu0 %v1691
    %v1693 = vpop.f32.mrf.mxu0
    %v1694 = vadd.f32 %v1563, %v1693
    %v1695 = vand.u32 %v110, 4294901760
    %1696 = vmatmul.f32.gmra.mxu0 %v1695
    %v1697 = vpop.f32.mrf.mxu0
    %v1698 = vadd.f32 %v1569, %v1697
    %1699 = vdwg.mxu0
    %v1700 = vand.u32 %v172, 4294901760
    %1701 = vmatpush.msra.mxu0 %v1700
    %v1702 = vand.u32 %v168, 4294901760
    %1703 = vmatpush.msra.mxu0 %v1702
    %v1704 = vand.u32 %v164, 4294901760
    %1705 = vmatpush.msra.mxu0 %v1704
    %v1706 = vand.u32 %v160, 4294901760
    %1707 = vmatpush.msra.mxu0 %v1706
    %v1708 = vand.u32 %v156, 4294901760
    %1709 = vmatpush.msra.mxu0 %v1708
    %v1710 = vand.u32 %v152, 4294901760
    %1711 = vmatpush.msra.mxu0 %v1710
    %v1712 = vand.u32 %v148, 4294901760
    %1713 = vmatpush.msra.mxu0 %v1712
    %v1714 = vand.u32 %v144, 4294901760
    %1715 = vmatpush.msra.mxu0 %v1714
    %v1716 = vand.u32 %v140, 4294901760
    %1717 = vmatpush.msra.mxu0 %v1716
    %v1718 = vand.u32 %v136, 4294901760
    %1719 = vmatpush.msra.mxu0 %v1718
    %v1720 = vand.u32 %v132, 4294901760
    %1721 = vmatpush.msra.mxu0 %v1720
    %v1722 = vand.u32 %v128, 4294901760
    %1723 = vmatpush.msra.mxu0 %v1722
    %v1724 = vand.u32 %v124, 4294901760
    %1725 = vmatpush.msra.mxu0 %v1724
    %v1726 = vand.u32 %v120, 4294901760
    %1727 = vmatpush.msra.mxu0 %v1726
    %v1728 = vand.u32 %v116, 4294901760
    %1729 = vmatpush.msra.mxu0 %v1728
    %v1730 = vand.u32 %v112, 4294901760
    %1731 = vmatpush.msra.mxu0 %v1730
    %v1732 = vand.u32 %v95, 4294901760
    %1733 = vmatmul.f32.gmra.mxu0 %v1732
    %v1734 = vpop.f32.mrf.mxu0
    %v1735 = vadd.f32 %v1638, %v1734
    %v1736 = vand.u32 %v96, 4294901760
    %1737 = vmatmul.f32.gmra.mxu0 %v1736
    %v1738 = vpop.f32.mrf.mxu0
    %v1739 = vadd.f32 %v1642, %v1738
    %v1740 = vand.u32 %v97, 4294901760
    %1741 = vmatmul.f32.gmra.mxu0 %v1740
    %v1742 = vpop.f32.mrf.mxu0
    %v1743 = vadd.f32 %v1646, %v1742
    %v1744 = vand.u32 %v98, 4294901760
    %1745 = vmatmul.f32.gmra.mxu0 %v1744
    %v1746 = vpop.f32.mrf.mxu0
    %v1747 = vadd.f32 %v1650, %v1746
    %v1748 = vand.u32 %v99, 4294901760
    %1749 = vmatmul.f32.gmra.mxu0 %v1748
    %v1750 = vpop.f32.mrf.mxu0
    %v1751 = vadd.f32 %v1654, %v1750
    %v1752 = vand.u32 %v100, 4294901760
    %1753 = vmatmul.f32.gmra.mxu0 %v1752
    %v1754 = vpop.f32.mrf.mxu0
    %v1755 = vadd.f32 %v1658, %v1754
    %v1756 = vand.u32 %v101, 4294901760
    %1757 = vmatmul.f32.gmra.mxu0 %v1756
    %v1758 = vpop.f32.mrf.mxu0
    %v1759 = vadd.f32 %v1662, %v1758
    %v1760 = vand.u32 %v102, 4294901760
    %1761 = vmatmul.f32.gmra.mxu0 %v1760
    %v1762 = vpop.f32.mrf.mxu0
    %v1763 = vadd.f32 %v1666, %v1762
    %v1764 = vand.u32 %v103, 4294901760
    %1765 = vmatmul.f32.gmra.mxu0 %v1764
    %v1766 = vpop.f32.mrf.mxu0
    %v1767 = vadd.f32 %v1670, %v1766
    %v1768 = vand.u32 %v104, 4294901760
    %1769 = vmatmul.f32.gmra.mxu0 %v1768
    %v1770 = vpop.f32.mrf.mxu0
    %v1771 = vadd.f32 %v1674, %v1770
    %v1772 = vand.u32 %v105, 4294901760
    %1773 = vmatmul.f32.gmra.mxu0 %v1772
    %v1774 = vpop.f32.mrf.mxu0
    %v1775 = vadd.f32 %v1678, %v1774
    %v1776 = vand.u32 %v106, 4294901760
    %1777 = vmatmul.f32.gmra.mxu0 %v1776
    %v1778 = vpop.f32.mrf.mxu0
    %v1779 = vadd.f32 %v1682, %v1778
    %v1780 = vand.u32 %v107, 4294901760
    %1781 = vmatmul.f32.gmra.mxu0 %v1780
    %v1782 = vpop.f32.mrf.mxu0
    %v1783 = vadd.f32 %v1686, %v1782
    %v1784 = vand.u32 %v108, 4294901760
    %1785 = vmatmul.f32.gmra.mxu0 %v1784
    %v1786 = vpop.f32.mrf.mxu0
    %v1787 = vadd.f32 %v1690, %v1786
    %v1788 = vand.u32 %v109, 4294901760
    %1789 = vmatmul.f32.gmra.mxu0 %v1788
    %v1790 = vpop.f32.mrf.mxu0
    %v1791 = vadd.f32 %v1694, %v1790
    %v1792 = vand.u32 %v110, 4294901760
    %1793 = vmatmul.f32.gmra.mxu0 %v1792
    %v1794 = vpop.f32.mrf.mxu0
    %v1795 = vadd.f32 %v1698, %v1794
    %1796 = vdwg.mxu0
    %v1797 = vand.u32 %v173, 4294901760
    %1798 = vmatpush.msra.mxu0 %v1797
    %v1799 = vand.u32 %v169, 4294901760
    %1800 = vmatpush.msra.mxu0 %v1799
    %v1801 = vand.u32 %v165, 4294901760
    %1802 = vmatpush.msra.mxu0 %v1801
    %v1803 = vand.u32 %v161, 4294901760
    %1804 = vmatpush.msra.mxu0 %v1803
    %v1805 = vand.u32 %v157, 4294901760
    %1806 = vmatpush.msra.mxu0 %v1805
    %v1807 = vand.u32 %v153, 4294901760
    %1808 = vmatpush.msra.mxu0 %v1807
    %v1809 = vand.u32 %v149, 4294901760
    %1810 = vmatpush.msra.mxu0 %v1809
    %v1811 = vand.u32 %v145, 4294901760
    %1812 = vmatpush.msra.mxu0 %v1811
    %v1813 = vand.u32 %v141, 4294901760
    %1814 = vmatpush.msra.mxu0 %v1813
    %v1815 = vand.u32 %v137, 4294901760
    %1816 = vmatpush.msra.mxu0 %v1815
    %v1817 = vand.u32 %v133, 4294901760
    %1818 = vmatpush.msra.mxu0 %v1817
    %v1819 = vand.u32 %v129, 4294901760
    %1820 = vmatpush.msra.mxu0 %v1819
    %v1821 = vand.u32 %v125, 4294901760
    %1822 = vmatpush.msra.mxu0 %v1821
    %v1823 = vand.u32 %v121, 4294901760
    %1824 = vmatpush.msra.mxu0 %v1823
    %v1825 = vand.u32 %v117, 4294901760
    %1826 = vmatpush.msra.mxu0 %v1825
    %v1827 = vand.u32 %v113, 4294901760
    %1828 = vmatpush.msra.mxu0 %v1827
    %v1829 = vand.u32 %v95, 4294901760
    %v1830 = vsub.f32 %v95, %v1829
    %v1831 = vand.u32 %v1830, 4294901760
    %v1832 = vsub.f32 %v1830, %v1831
    %v1833 = vand.u32 %v1832, 4294901760
    %1834 = vmatmul.f32.gmra.mxu0 %v1833
    %v1835 = vpop.f32.mrf.mxu0
    %v1836 = vadd.f32 %v179, %v1835
    %v1837 = vand.u32 %v96, 4294901760
    %v1838 = vsub.f32 %v96, %v1837
    %v1839 = vand.u32 %v1838, 4294901760
    %v1840 = vsub.f32 %v1838, %v1839
    %v1841 = vand.u32 %v1840, 4294901760
    %1842 = vmatmul.f32.gmra.mxu0 %v1841
    %v1843 = vpop.f32.mrf.mxu0
    %v1844 = vadd.f32 %v179, %v1843
    %v1845 = vand.u32 %v97, 4294901760
    %v1846 = vsub.f32 %v97, %v1845
    %v1847 = vand.u32 %v1846, 4294901760
    %v1848 = vsub.f32 %v1846, %v1847
    %v1849 = vand.u32 %v1848, 4294901760
    %1850 = vmatmul.f32.gmra.mxu0 %v1849
    %v1851 = vpop.f32.mrf.mxu0
    %v1852 = vadd.f32 %v179, %v1851
    %v1853 = vand.u32 %v98, 4294901760
    %v1854 = vsub.f32 %v98, %v1853
    %v1855 = vand.u32 %v1854, 4294901760
    %v1856 = vsub.f32 %v1854, %v1855
    %v1857 = vand.u32 %v1856, 4294901760
    %1858 = vmatmul.f32.gmra.mxu0 %v1857
    %v1859 = vpop.f32.mrf.mxu0
    %v1860 = vadd.f32 %v179, %v1859
    %v1861 = vand.u32 %v99, 4294901760
    %v1862 = vsub.f32 %v99, %v1861
    %v1863 = vand.u32 %v1862, 4294901760
    %v1864 = vsub.f32 %v1862, %v1863
    %v1865 = vand.u32 %v1864, 4294901760
    %1866 = vmatmul.f32.gmra.mxu0 %v1865
    %v1867 = vpop.f32.mrf.mxu0
    %v1868 = vadd.f32 %v179, %v1867
    %v1869 = vand.u32 %v100, 4294901760
    %v1870 = vsub.f32 %v100, %v1869
    %v1871 = vand.u32 %v1870, 4294901760
    %v1872 = vsub.f32 %v1870, %v1871
    %v1873 = vand.u32 %v1872, 4294901760
    %1874 = vmatmul.f32.gmra.mxu0 %v1873
    %v1875 = vpop.f32.mrf.mxu0
    %v1876 = vadd.f32 %v179, %v1875
    %v1877 = vand.u32 %v101, 4294901760
    %v1878 = vsub.f32 %v101, %v1877
    %v1879 = vand.u32 %v1878, 4294901760
    %v1880 = vsub.f32 %v1878, %v1879
    %v1881 = vand.u32 %v1880, 4294901760
    %1882 = vmatmul.f32.gmra.mxu0 %v1881
    %v1883 = vpop.f32.mrf.mxu0
    %v1884 = vadd.f32 %v179, %v1883
    %v1885 = vand.u32 %v102, 4294901760
    %v1886 = vsub.f32 %v102, %v1885
    %v1887 = vand.u32 %v1886, 4294901760
    %v1888 = vsub.f32 %v1886, %v1887
    %v1889 = vand.u32 %v1888, 4294901760
    %1890 = vmatmul.f32.gmra.mxu0 %v1889
    %v1891 = vpop.f32.mrf.mxu0
    %v1892 = vadd.f32 %v179, %v1891
    %v1893 = vand.u32 %v103, 4294901760
    %v1894 = vsub.f32 %v103, %v1893
    %v1895 = vand.u32 %v1894, 4294901760
    %v1896 = vsub.f32 %v1894, %v1895
    %v1897 = vand.u32 %v1896, 4294901760
    %1898 = vmatmul.f32.gmra.mxu0 %v1897
    %v1899 = vpop.f32.mrf.mxu0
    %v1900 = vadd.f32 %v179, %v1899
    %v1901 = vand.u32 %v104, 4294901760
    %v1902 = vsub.f32 %v104, %v1901
    %v1903 = vand.u32 %v1902, 4294901760
    %v1904 = vsub.f32 %v1902, %v1903
    %v1905 = vand.u32 %v1904, 4294901760
    %1906 = vmatmul.f32.gmra.mxu0 %v1905
    %v1907 = vpop.f32.mrf.mxu0
    %v1908 = vadd.f32 %v179, %v1907
    %v1909 = vand.u32 %v105, 4294901760
    %v1910 = vsub.f32 %v105, %v1909
    %v1911 = vand.u32 %v1910, 4294901760
    %v1912 = vsub.f32 %v1910, %v1911
    %v1913 = vand.u32 %v1912, 4294901760
    %1914 = vmatmul.f32.gmra.mxu0 %v1913
    %v1915 = vpop.f32.mrf.mxu0
    %v1916 = vadd.f32 %v179, %v1915
    %v1917 = vand.u32 %v106, 4294901760
    %v1918 = vsub.f32 %v106, %v1917
    %v1919 = vand.u32 %v1918, 4294901760
    %v1920 = vsub.f32 %v1918, %v1919
    %v1921 = vand.u32 %v1920, 4294901760
    %1922 = vmatmul.f32.gmra.mxu0 %v1921
    %v1923 = vpop.f32.mrf.mxu0
    %v1924 = vadd.f32 %v179, %v1923
    %v1925 = vand.u32 %v107, 4294901760
    %v1926 = vsub.f32 %v107, %v1925
    %v1927 = vand.u32 %v1926, 4294901760
    %v1928 = vsub.f32 %v1926, %v1927
    %v1929 = vand.u32 %v1928, 4294901760
    %1930 = vmatmul.f32.gmra.mxu0 %v1929
    %v1931 = vpop.f32.mrf.mxu0
    %v1932 = vadd.f32 %v179, %v1931
    %v1933 = vand.u32 %v108, 4294901760
    %v1934 = vsub.f32 %v108, %v1933
    %v1935 = vand.u32 %v1934, 4294901760
    %v1936 = vsub.f32 %v1934, %v1935
    %v1937 = vand.u32 %v1936, 4294901760
    %1938 = vmatmul.f32.gmra.mxu0 %v1937
    %v1939 = vpop.f32.mrf.mxu0
    %v1940 = vadd.f32 %v179, %v1939
    %v1941 = vand.u32 %v109, 4294901760
    %v1942 = vsub.f32 %v109, %v1941
    %v1943 = vand.u32 %v1942, 4294901760
    %v1944 = vsub.f32 %v1942, %v1943
    %v1945 = vand.u32 %v1944, 4294901760
    %1946 = vmatmul.f32.gmra.mxu0 %v1945
    %v1947 = vpop.f32.mrf.mxu0
    %v1948 = vadd.f32 %v179, %v1947
    %v1949 = vand.u32 %v110, 4294901760
    %v1950 = vsub.f32 %v110, %v1949
    %v1951 = vand.u32 %v1950, 4294901760
    %v1952 = vsub.f32 %v1950, %v1951
    %v1953 = vand.u32 %v1952, 4294901760
    %1954 = vmatmul.f32.gmra.mxu0 %v1953
    %v1955 = vpop.f32.mrf.mxu0
    %v1956 = vadd.f32 %v179, %v1955
    %1957 = vdwg.mxu0
    %v1958 = vand.u32 %v173, 4294901760
    %v1959 = vsub.f32 %v173, %v1958
    %v1960 = vand.u32 %v1959, 4294901760
    %v1961 = vsub.f32 %v1959, %v1960
    %v1962 = vand.u32 %v1961, 4294901760
    %1963 = vmatpush.msra.mxu0 %v1962
    %v1964 = vand.u32 %v169, 4294901760
    %v1965 = vsub.f32 %v169, %v1964
    %v1966 = vand.u32 %v1965, 4294901760
    %v1967 = vsub.f32 %v1965, %v1966
    %v1968 = vand.u32 %v1967, 4294901760
    %1969 = vmatpush.msra.mxu0 %v1968
    %v1970 = vand.u32 %v165, 4294901760
    %v1971 = vsub.f32 %v165, %v1970
    %v1972 = vand.u32 %v1971, 4294901760
    %v1973 = vsub.f32 %v1971, %v1972
    %v1974 = vand.u32 %v1973, 4294901760
    %1975 = vmatpush.msra.mxu0 %v1974
    %v1976 = vand.u32 %v161, 4294901760
    %v1977 = vsub.f32 %v161, %v1976
    %v1978 = vand.u32 %v1977, 4294901760
    %v1979 = vsub.f32 %v1977, %v1978
    %v1980 = vand.u32 %v1979, 4294901760
    %1981 = vmatpush.msra.mxu0 %v1980
    %v1982 = vand.u32 %v157, 4294901760
    %v1983 = vsub.f32 %v157, %v1982
    %v1984 = vand.u32 %v1983, 4294901760
    %v1985 = vsub.f32 %v1983, %v1984
    %v1986 = vand.u32 %v1985, 4294901760
    %1987 = vmatpush.msra.mxu0 %v1986
    %v1988 = vand.u32 %v153, 4294901760
    %v1989 = vsub.f32 %v153, %v1988
    %v1990 = vand.u32 %v1989, 4294901760
    %v1991 = vsub.f32 %v1989, %v1990
    %v1992 = vand.u32 %v1991, 4294901760
    %1993 = vmatpush.msra.mxu0 %v1992
    %v1994 = vand.u32 %v149, 4294901760
    %v1995 = vsub.f32 %v149, %v1994
    %v1996 = vand.u32 %v1995, 4294901760
    %v1997 = vsub.f32 %v1995, %v1996
    %v1998 = vand.u32 %v1997, 4294901760
    %1999 = vmatpush.msra.mxu0 %v1998
    %v2000 = vand.u32 %v145, 4294901760
    %v2001 = vsub.f32 %v145, %v2000
    %v2002 = vand.u32 %v2001, 4294901760
    %v2003 = vsub.f32 %v2001, %v2002
    %v2004 = vand.u32 %v2003, 4294901760
    %2005 = vmatpush.msra.mxu0 %v2004
    %v2006 = vand.u32 %v141, 4294901760
    %v2007 = vsub.f32 %v141, %v2006
    %v2008 = vand.u32 %v2007, 4294901760
    %v2009 = vsub.f32 %v2007, %v2008
    %v2010 = vand.u32 %v2009, 4294901760
    %2011 = vmatpush.msra.mxu0 %v2010
    %v2012 = vand.u32 %v137, 4294901760
    %v2013 = vsub.f32 %v137, %v2012
    %v2014 = vand.u32 %v2013, 4294901760
    %v2015 = vsub.f32 %v2013, %v2014
    %v2016 = vand.u32 %v2015, 4294901760
    %2017 = vmatpush.msra.mxu0 %v2016
    %v2018 = vand.u32 %v133, 4294901760
    %v2019 = vsub.f32 %v133, %v2018
    %v2020 = vand.u32 %v2019, 4294901760
    %v2021 = vsub.f32 %v2019, %v2020
    %v2022 = vand.u32 %v2021, 4294901760
    %2023 = vmatpush.msra.mxu0 %v2022
    %v2024 = vand.u32 %v129, 4294901760
    %v2025 = vsub.f32 %v129, %v2024
    %v2026 = vand.u32 %v2025, 4294901760
    %v2027 = vsub.f32 %v2025, %v2026
    %v2028 = vand.u32 %v2027, 4294901760
    %2029 = vmatpush.msra.mxu0 %v2028
    %v2030 = vand.u32 %v125, 4294901760
    %v2031 = vsub.f32 %v125, %v2030
    %v2032 = vand.u32 %v2031, 4294901760
    %v2033 = vsub.f32 %v2031, %v2032
    %v2034 = vand.u32 %v2033, 4294901760
    %2035 = vmatpush.msra.mxu0 %v2034
    %v2036 = vand.u32 %v121, 4294901760
    %v2037 = vsub.f32 %v121, %v2036
    %v2038 = vand.u32 %v2037, 4294901760
    %v2039 = vsub.f32 %v2037, %v2038
    %v2040 = vand.u32 %v2039, 4294901760
    %2041 = vmatpush.msra.mxu0 %v2040
    %v2042 = vand.u32 %v117, 4294901760
    %v2043 = vsub.f32 %v117, %v2042
    %v2044 = vand.u32 %v2043, 4294901760
    %v2045 = vsub.f32 %v2043, %v2044
    %v2046 = vand.u32 %v2045, 4294901760
    %2047 = vmatpush.msra.mxu0 %v2046
    %v2048 = vand.u32 %v113, 4294901760
    %v2049 = vsub.f32 %v113, %v2048
    %v2050 = vand.u32 %v2049, 4294901760
    %v2051 = vsub.f32 %v2049, %v2050
    %v2052 = vand.u32 %v2051, 4294901760
    %2053 = vmatpush.msra.mxu0 %v2052
    %v2054 = vand.u32 %v95, 4294901760
    %2055 = vmatmul.f32.gmra.mxu0 %v2054
    %v2056 = vpop.f32.mrf.mxu0
    %v2057 = vadd.f32 %v1836, %v2056
    %v2058 = vand.u32 %v96, 4294901760
    %2059 = vmatmul.f32.gmra.mxu0 %v2058
    %v2060 = vpop.f32.mrf.mxu0
    %v2061 = vadd.f32 %v1844, %v2060
    %v2062 = vand.u32 %v97, 4294901760
    %2063 = vmatmul.f32.gmra.mxu0 %v2062
    %v2064 = vpop.f32.mrf.mxu0
    %v2065 = vadd.f32 %v1852, %v2064
    %v2066 = vand.u32 %v98, 4294901760
    %2067 = vmatmul.f32.gmra.mxu0 %v2066
    %v2068 = vpop.f32.mrf.mxu0
    %v2069 = vadd.f32 %v1860, %v2068
    %v2070 = vand.u32 %v99, 4294901760
    %2071 = vmatmul.f32.gmra.mxu0 %v2070
    %v2072 = vpop.f32.mrf.mxu0
    %v2073 = vadd.f32 %v1868, %v2072
    %v2074 = vand.u32 %v100, 4294901760
    %2075 = vmatmul.f32.gmra.mxu0 %v2074
    %v2076 = vpop.f32.mrf.mxu0
    %v2077 = vadd.f32 %v1876, %v2076
    %v2078 = vand.u32 %v101, 4294901760
    %2079 = vmatmul.f32.gmra.mxu0 %v2078
    %v2080 = vpop.f32.mrf.mxu0
    %v2081 = vadd.f32 %v1884, %v2080
    %v2082 = vand.u32 %v102, 4294901760
    %2083 = vmatmul.f32.gmra.mxu0 %v2082
    %v2084 = vpop.f32.mrf.mxu0
    %v2085 = vadd.f32 %v1892, %v2084
    %v2086 = vand.u32 %v103, 4294901760
    %2087 = vmatmul.f32.gmra.mxu0 %v2086
    %v2088 = vpop.f32.mrf.mxu0
    %v2089 = vadd.f32 %v1900, %v2088
    %v2090 = vand.u32 %v104, 4294901760
    %2091 = vmatmul.f32.gmra.mxu0 %v2090
    %v2092 = vpop.f32.mrf.mxu0
    %v2093 = vadd.f32 %v1908, %v2092
    %v2094 = vand.u32 %v105, 4294901760
    %2095 = vmatmul.f32.gmra.mxu0 %v2094
    %v2096 = vpop.f32.mrf.mxu0
    %v2097 = vadd.f32 %v1916, %v2096
    %v2098 = vand.u32 %v106, 4294901760
    %2099 = vmatmul.f32.gmra.mxu0 %v2098
    %v2100 = vpop.f32.mrf.mxu0
    %v2101 = vadd.f32 %v1924, %v2100
    %v2102 = vand.u32 %v107, 4294901760
    %2103 = vmatmul.f32.gmra.mxu0 %v2102
    %v2104 = vpop.f32.mrf.mxu0
    %v2105 = vadd.f32 %v1932, %v2104
    %v2106 = vand.u32 %v108, 4294901760
    %2107 = vmatmul.f32.gmra.mxu0 %v2106
    %v2108 = vpop.f32.mrf.mxu0
    %v2109 = vadd.f32 %v1940, %v2108
    %v2110 = vand.u32 %v109, 4294901760
    %2111 = vmatmul.f32.gmra.mxu0 %v2110
    %v2112 = vpop.f32.mrf.mxu0
    %v2113 = vadd.f32 %v1948, %v2112
    %v2114 = vand.u32 %v110, 4294901760
    %2115 = vmatmul.f32.gmra.mxu0 %v2114
    %v2116 = vpop.f32.mrf.mxu0
    %v2117 = vadd.f32 %v1956, %v2116
    %2118 = vdwg.mxu0
    %v2119 = vand.u32 %v173, 4294901760
    %v2120 = vsub.f32 %v173, %v2119
    %2121 = vmatpush.msra.mxu0 %v2120
    %v2122 = vand.u32 %v169, 4294901760
    %v2123 = vsub.f32 %v169, %v2122
    %2124 = vmatpush.msra.mxu0 %v2123
    %v2125 = vand.u32 %v165, 4294901760
    %v2126 = vsub.f32 %v165, %v2125
    %2127 = vmatpush.msra.mxu0 %v2126
    %v2128 = vand.u32 %v161, 4294901760
    %v2129 = vsub.f32 %v161, %v2128
    %2130 = vmatpush.msra.mxu0 %v2129
    %v2131 = vand.u32 %v157, 4294901760
    %v2132 = vsub.f32 %v157, %v2131
    %2133 = vmatpush.msra.mxu0 %v2132
    %v2134 = vand.u32 %v153, 4294901760
    %v2135 = vsub.f32 %v153, %v2134
    %2136 = vmatpush.msra.mxu0 %v2135
    %v2137 = vand.u32 %v149, 4294901760
    %v2138 = vsub.f32 %v149, %v2137
    %2139 = vmatpush.msra.mxu0 %v2138
    %v2140 = vand.u32 %v145, 4294901760
    %v2141 = vsub.f32 %v145, %v2140
    %2142 = vmatpush.msra.mxu0 %v2141
    %v2143 = vand.u32 %v141, 4294901760
    %v2144 = vsub.f32 %v141, %v2143
    %2145 = vmatpush.msra.mxu0 %v2144
    %v2146 = vand.u32 %v137, 4294901760
    %v2147 = vsub.f32 %v137, %v2146
    %2148 = vmatpush.msra.mxu0 %v2147
    %v2149 = vand.u32 %v133, 4294901760
    %v2150 = vsub.f32 %v133, %v2149
    %2151 = vmatpush.msra.mxu0 %v2150
    %v2152 = vand.u32 %v129, 4294901760
    %v2153 = vsub.f32 %v129, %v2152
    %2154 = vmatpush.msra.mxu0 %v2153
    %v2155 = vand.u32 %v125, 4294901760
    %v2156 = vsub.f32 %v125, %v2155
    %2157 = vmatpush.msra.mxu0 %v2156
    %v2158 = vand.u32 %v121, 4294901760
    %v2159 = vsub.f32 %v121, %v2158
    %2160 = vmatpush.msra.mxu0 %v2159
    %v2161 = vand.u32 %v117, 4294901760
    %v2162 = vsub.f32 %v117, %v2161
    %2163 = vmatpush.msra.mxu0 %v2162
    %v2164 = vand.u32 %v113, 4294901760
    %v2165 = vsub.f32 %v113, %v2164
    %2166 = vmatpush.msra.mxu0 %v2165
    %v2167 = vand.u32 %v95, 4294901760
    %v2168 = vsub.f32 %v95, %v2167
    %2169 = vmatmul.f32.gmra.mxu0 %v2168
    %v2170 = vpop.f32.mrf.mxu0
    %v2171 = vadd.f32 %v2057, %v2170
    %v2172 = vand.u32 %v96, 4294901760
    %v2173 = vsub.f32 %v96, %v2172
    %2174 = vmatmul.f32.gmra.mxu0 %v2173
    %v2175 = vpop.f32.mrf.mxu0
    %v2176 = vadd.f32 %v2061, %v2175
    %v2177 = vand.u32 %v97, 4294901760
    %v2178 = vsub.f32 %v97, %v2177
    %2179 = vmatmul.f32.gmra.mxu0 %v2178
    %v2180 = vpop.f32.mrf.mxu0
    %v2181 = vadd.f32 %v2065, %v2180
    %v2182 = vand.u32 %v98, 4294901760
    %v2183 = vsub.f32 %v98, %v2182
    %2184 = vmatmul.f32.gmra.mxu0 %v2183
    %v2185 = vpop.f32.mrf.mxu0
    %v2186 = vadd.f32 %v2069, %v2185
    %v2187 = vand.u32 %v99, 4294901760
    %v2188 = vsub.f32 %v99, %v2187
    %2189 = vmatmul.f32.gmra.mxu0 %v2188
    %v2190 = vpop.f32.mrf.mxu0
    %v2191 = vadd.f32 %v2073, %v2190
    %v2192 = vand.u32 %v100, 4294901760
    %v2193 = vsub.f32 %v100, %v2192
    %2194 = vmatmul.f32.gmra.mxu0 %v2193
    %v2195 = vpop.f32.mrf.mxu0
    %v2196 = vadd.f32 %v2077, %v2195
    %v2197 = vand.u32 %v101, 4294901760
    %v2198 = vsub.f32 %v101, %v2197
    %2199 = vmatmul.f32.gmra.mxu0 %v2198
    %v2200 = vpop.f32.mrf.mxu0
    %v2201 = vadd.f32 %v2081, %v2200
    %v2202 = vand.u32 %v102, 4294901760
    %v2203 = vsub.f32 %v102, %v2202
    %2204 = vmatmul.f32.gmra.mxu0 %v2203
    %v2205 = vpop.f32.mrf.mxu0
    %v2206 = vadd.f32 %v2085, %v2205
    %v2207 = vand.u32 %v103, 4294901760
    %v2208 = vsub.f32 %v103, %v2207
    %2209 = vmatmul.f32.gmra.mxu0 %v2208
    %v2210 = vpop.f32.mrf.mxu0
    %v2211 = vadd.f32 %v2089, %v2210
    %v2212 = vand.u32 %v104, 4294901760
    %v2213 = vsub.f32 %v104, %v2212
    %2214 = vmatmul.f32.gmra.mxu0 %v2213
    %v2215 = vpop.f32.mrf.mxu0
    %v2216 = vadd.f32 %v2093, %v2215
    %v2217 = vand.u32 %v105, 4294901760
    %v2218 = vsub.f32 %v105, %v2217
    %2219 = vmatmul.f32.gmra.mxu0 %v2218
    %v2220 = vpop.f32.mrf.mxu0
    %v2221 = vadd.f32 %v2097, %v2220
    %v2222 = vand.u32 %v106, 4294901760
    %v2223 = vsub.f32 %v106, %v2222
    %2224 = vmatmul.f32.gmra.mxu0 %v2223
    %v2225 = vpop.f32.mrf.mxu0
    %v2226 = vadd.f32 %v2101, %v2225
    %v2227 = vand.u32 %v107, 4294901760
    %v2228 = vsub.f32 %v107, %v2227
    %2229 = vmatmul.f32.gmra.mxu0 %v2228
    %v2230 = vpop.f32.mrf.mxu0
    %v2231 = vadd.f32 %v2105, %v2230
    %v2232 = vand.u32 %v108, 4294901760
    %v2233 = vsub.f32 %v108, %v2232
    %2234 = vmatmul.f32.gmra.mxu0 %v2233
    %v2235 = vpop.f32.mrf.mxu0
    %v2236 = vadd.f32 %v2109, %v2235
    %v2237 = vand.u32 %v109, 4294901760
    %v2238 = vsub.f32 %v109, %v2237
    %2239 = vmatmul.f32.gmra.mxu0 %v2238
    %v2240 = vpop.f32.mrf.mxu0
    %v2241 = vadd.f32 %v2113, %v2240
    %v2242 = vand.u32 %v110, 4294901760
    %v2243 = vsub.f32 %v110, %v2242
    %2244 = vmatmul.f32.gmra.mxu0 %v2243
    %v2245 = vpop.f32.mrf.mxu0
    %v2246 = vadd.f32 %v2117, %v2245
    %2247 = vdwg.mxu0
    %v2248 = vand.u32 %v173, 4294901760
    %2249 = vmatpush.msra.mxu0 %v2248
    %v2250 = vand.u32 %v169, 4294901760
    %2251 = vmatpush.msra.mxu0 %v2250
    %v2252 = vand.u32 %v165, 4294901760
    %2253 = vmatpush.msra.mxu0 %v2252
    %v2254 = vand.u32 %v161, 4294901760
    %2255 = vmatpush.msra.mxu0 %v2254
    %v2256 = vand.u32 %v157, 4294901760
    %2257 = vmatpush.msra.mxu0 %v2256
    %v2258 = vand.u32 %v153, 4294901760
    %2259 = vmatpush.msra.mxu0 %v2258
    %v2260 = vand.u32 %v149, 4294901760
    %2261 = vmatpush.msra.mxu0 %v2260
    %v2262 = vand.u32 %v145, 4294901760
    %2263 = vmatpush.msra.mxu0 %v2262
    %v2264 = vand.u32 %v141, 4294901760
    %2265 = vmatpush.msra.mxu0 %v2264
    %v2266 = vand.u32 %v137, 4294901760
    %2267 = vmatpush.msra.mxu0 %v2266
    %v2268 = vand.u32 %v133, 4294901760
    %2269 = vmatpush.msra.mxu0 %v2268
    %v2270 = vand.u32 %v129, 4294901760
    %2271 = vmatpush.msra.mxu0 %v2270
    %v2272 = vand.u32 %v125, 4294901760
    %2273 = vmatpush.msra.mxu0 %v2272
    %v2274 = vand.u32 %v121, 4294901760
    %2275 = vmatpush.msra.mxu0 %v2274
    %v2276 = vand.u32 %v117, 4294901760
    %2277 = vmatpush.msra.mxu0 %v2276
    %v2278 = vand.u32 %v113, 4294901760
    %2279 = vmatpush.msra.mxu0 %v2278
    %v2280 = vand.u32 %v95, 4294901760
    %v2281 = vsub.f32 %v95, %v2280
    %v2282 = vand.u32 %v2281, 4294901760
    %2283 = vmatmul.f32.gmra.mxu0 %v2282
    %v2284 = vpop.f32.mrf.mxu0
    %v2285 = vadd.f32 %v2171, %v2284
    %v2286 = vand.u32 %v96, 4294901760
    %v2287 = vsub.f32 %v96, %v2286
    %v2288 = vand.u32 %v2287, 4294901760
    %2289 = vmatmul.f32.gmra.mxu0 %v2288
    %v2290 = vpop.f32.mrf.mxu0
    %v2291 = vadd.f32 %v2176, %v2290
    %v2292 = vand.u32 %v97, 4294901760
    %v2293 = vsub.f32 %v97, %v2292
    %v2294 = vand.u32 %v2293, 4294901760
    %2295 = vmatmul.f32.gmra.mxu0 %v2294
    %v2296 = vpop.f32.mrf.mxu0
    %v2297 = vadd.f32 %v2181, %v2296
    %v2298 = vand.u32 %v98, 4294901760
    %v2299 = vsub.f32 %v98, %v2298
    %v2300 = vand.u32 %v2299, 4294901760
    %2301 = vmatmul.f32.gmra.mxu0 %v2300
    %v2302 = vpop.f32.mrf.mxu0
    %v2303 = vadd.f32 %v2186, %v2302
    %v2304 = vand.u32 %v99, 4294901760
    %v2305 = vsub.f32 %v99, %v2304
    %v2306 = vand.u32 %v2305, 4294901760
    %2307 = vmatmul.f32.gmra.mxu0 %v2306
    %v2308 = vpop.f32.mrf.mxu0
    %v2309 = vadd.f32 %v2191, %v2308
    %v2310 = vand.u32 %v100, 4294901760
    %v2311 = vsub.f32 %v100, %v2310
    %v2312 = vand.u32 %v2311, 4294901760
    %2313 = vmatmul.f32.gmra.mxu0 %v2312
    %v2314 = vpop.f32.mrf.mxu0
    %v2315 = vadd.f32 %v2196, %v2314
    %v2316 = vand.u32 %v101, 4294901760
    %v2317 = vsub.f32 %v101, %v2316
    %v2318 = vand.u32 %v2317, 4294901760
    %2319 = vmatmul.f32.gmra.mxu0 %v2318
    %v2320 = vpop.f32.mrf.mxu0
    %v2321 = vadd.f32 %v2201, %v2320
    %v2322 = vand.u32 %v102, 4294901760
    %v2323 = vsub.f32 %v102, %v2322
    %v2324 = vand.u32 %v2323, 4294901760
    %2325 = vmatmul.f32.gmra.mxu0 %v2324
    %v2326 = vpop.f32.mrf.mxu0
    %v2327 = vadd.f32 %v2206, %v2326
    %v2328 = vand.u32 %v103, 4294901760
    %v2329 = vsub.f32 %v103, %v2328
    %v2330 = vand.u32 %v2329, 4294901760
    %2331 = vmatmul.f32.gmra.mxu0 %v2330
    %v2332 = vpop.f32.mrf.mxu0
    %v2333 = vadd.f32 %v2211, %v2332
    %v2334 = vand.u32 %v104, 4294901760
    %v2335 = vsub.f32 %v104, %v2334
    %v2336 = vand.u32 %v2335, 4294901760
    %2337 = vmatmul.f32.gmra.mxu0 %v2336
    %v2338 = vpop.f32.mrf.mxu0
    %v2339 = vadd.f32 %v2216, %v2338
    %v2340 = vand.u32 %v105, 4294901760
    %v2341 = vsub.f32 %v105, %v2340
    %v2342 = vand.u32 %v2341, 4294901760
    %2343 = vmatmul.f32.gmra.mxu0 %v2342
    %v2344 = vpop.f32.mrf.mxu0
    %v2345 = vadd.f32 %v2221, %v2344
    %v2346 = vand.u32 %v106, 4294901760
    %v2347 = vsub.f32 %v106, %v2346
    %v2348 = vand.u32 %v2347, 4294901760
    %2349 = vmatmul.f32.gmra.mxu0 %v2348
    %v2350 = vpop.f32.mrf.mxu0
    %v2351 = vadd.f32 %v2226, %v2350
    %v2352 = vand.u32 %v107, 4294901760
    %v2353 = vsub.f32 %v107, %v2352
    %v2354 = vand.u32 %v2353, 4294901760
    %2355 = vmatmul.f32.gmra.mxu0 %v2354
    %v2356 = vpop.f32.mrf.mxu0
    %v2357 = vadd.f32 %v2231, %v2356
    %v2358 = vand.u32 %v108, 4294901760
    %v2359 = vsub.f32 %v108, %v2358
    %v2360 = vand.u32 %v2359, 4294901760
    %2361 = vmatmul.f32.gmra.mxu0 %v2360
    %v2362 = vpop.f32.mrf.mxu0
    %v2363 = vadd.f32 %v2236, %v2362
    %v2364 = vand.u32 %v109, 4294901760
    %v2365 = vsub.f32 %v109, %v2364
    %v2366 = vand.u32 %v2365, 4294901760
    %2367 = vmatmul.f32.gmra.mxu0 %v2366
    %v2368 = vpop.f32.mrf.mxu0
    %v2369 = vadd.f32 %v2241, %v2368
    %v2370 = vand.u32 %v110, 4294901760
    %v2371 = vsub.f32 %v110, %v2370
    %v2372 = vand.u32 %v2371, 4294901760
    %2373 = vmatmul.f32.gmra.mxu0 %v2372
    %v2374 = vpop.f32.mrf.mxu0
    %v2375 = vadd.f32 %v2246, %v2374
    %2376 = vdwg.mxu0
    %v2377 = vand.u32 %v173, 4294901760
    %v2378 = vsub.f32 %v173, %v2377
    %v2379 = vand.u32 %v2378, 4294901760
    %2380 = vmatpush.msra.mxu0 %v2379
    %v2381 = vand.u32 %v169, 4294901760
    %v2382 = vsub.f32 %v169, %v2381
    %v2383 = vand.u32 %v2382, 4294901760
    %2384 = vmatpush.msra.mxu0 %v2383
    %v2385 = vand.u32 %v165, 4294901760
    %v2386 = vsub.f32 %v165, %v2385
    %v2387 = vand.u32 %v2386, 4294901760
    %2388 = vmatpush.msra.mxu0 %v2387
    %v2389 = vand.u32 %v161, 4294901760
    %v2390 = vsub.f32 %v161, %v2389
    %v2391 = vand.u32 %v2390, 4294901760
    %2392 = vmatpush.msra.mxu0 %v2391
    %v2393 = vand.u32 %v157, 4294901760
    %v2394 = vsub.f32 %v157, %v2393
    %v2395 = vand.u32 %v2394, 4294901760
    %2396 = vmatpush.msra.mxu0 %v2395
    %v2397 = vand.u32 %v153, 4294901760
    %v2398 = vsub.f32 %v153, %v2397
    %v2399 = vand.u32 %v2398, 4294901760
    %2400 = vmatpush.msra.mxu0 %v2399
    %v2401 = vand.u32 %v149, 4294901760
    %v2402 = vsub.f32 %v149, %v2401
    %v2403 = vand.u32 %v2402, 4294901760
    %2404 = vmatpush.msra.mxu0 %v2403
    %v2405 = vand.u32 %v145, 4294901760
    %v2406 = vsub.f32 %v145, %v2405
    %v2407 = vand.u32 %v2406, 4294901760
    %2408 = vmatpush.msra.mxu0 %v2407
    %v2409 = vand.u32 %v141, 4294901760
    %v2410 = vsub.f32 %v141, %v2409
    %v2411 = vand.u32 %v2410, 4294901760
    %2412 = vmatpush.msra.mxu0 %v2411
    %v2413 = vand.u32 %v137, 4294901760
    %v2414 = vsub.f32 %v137, %v2413
    %v2415 = vand.u32 %v2414, 4294901760
    %2416 = vmatpush.msra.mxu0 %v2415
    %v2417 = vand.u32 %v133, 4294901760
    %v2418 = vsub.f32 %v133, %v2417
    %v2419 = vand.u32 %v2418, 4294901760
    %2420 = vmatpush.msra.mxu0 %v2419
    %v2421 = vand.u32 %v129, 4294901760
    %v2422 = vsub.f32 %v129, %v2421
    %v2423 = vand.u32 %v2422, 4294901760
    %2424 = vmatpush.msra.mxu0 %v2423
    %v2425 = vand.u32 %v125, 4294901760
    %v2426 = vsub.f32 %v125, %v2425
    %v2427 = vand.u32 %v2426, 4294901760
    %2428 = vmatpush.msra.mxu0 %v2427
    %v2429 = vand.u32 %v121, 4294901760
    %v2430 = vsub.f32 %v121, %v2429
    %v2431 = vand.u32 %v2430, 4294901760
    %2432 = vmatpush.msra.mxu0 %v2431
    %v2433 = vand.u32 %v117, 4294901760
    %v2434 = vsub.f32 %v117, %v2433
    %v2435 = vand.u32 %v2434, 4294901760
    %2436 = vmatpush.msra.mxu0 %v2435
    %v2437 = vand.u32 %v113, 4294901760
    %v2438 = vsub.f32 %v113, %v2437
    %v2439 = vand.u32 %v2438, 4294901760
    %2440 = vmatpush.msra.mxu0 %v2439
    %v2441 = vand.u32 %v95, 4294901760
    %2442 = vmatmul.f32.gmra.mxu0 %v2441
    %v2443 = vpop.f32.mrf.mxu0
    %v2444 = vadd.f32 %v2285, %v2443
    %v2445 = vand.u32 %v96, 4294901760
    %2446 = vmatmul.f32.gmra.mxu0 %v2445
    %v2447 = vpop.f32.mrf.mxu0
    %v2448 = vadd.f32 %v2291, %v2447
    %v2449 = vand.u32 %v97, 4294901760
    %2450 = vmatmul.f32.gmra.mxu0 %v2449
    %v2451 = vpop.f32.mrf.mxu0
    %v2452 = vadd.f32 %v2297, %v2451
    %v2453 = vand.u32 %v98, 4294901760
    %2454 = vmatmul.f32.gmra.mxu0 %v2453
    %v2455 = vpop.f32.mrf.mxu0
    %v2456 = vadd.f32 %v2303, %v2455
    %v2457 = vand.u32 %v99, 4294901760
    %2458 = vmatmul.f32.gmra.mxu0 %v2457
    %v2459 = vpop.f32.mrf.mxu0
    %v2460 = vadd.f32 %v2309, %v2459
    %v2461 = vand.u32 %v100, 4294901760
    %2462 = vmatmul.f32.gmra.mxu0 %v2461
    %v2463 = vpop.f32.mrf.mxu0
    %v2464 = vadd.f32 %v2315, %v2463
    %v2465 = vand.u32 %v101, 4294901760
    %2466 = vmatmul.f32.gmra.mxu0 %v2465
    %v2467 = vpop.f32.mrf.mxu0
    %v2468 = vadd.f32 %v2321, %v2467
    %v2469 = vand.u32 %v102, 4294901760
    %2470 = vmatmul.f32.gmra.mxu0 %v2469
    %v2471 = vpop.f32.mrf.mxu0
    %v2472 = vadd.f32 %v2327, %v2471
    %v2473 = vand.u32 %v103, 4294901760
    %2474 = vmatmul.f32.gmra.mxu0 %v2473
    %v2475 = vpop.f32.mrf.mxu0
    %v2476 = vadd.f32 %v2333, %v2475
    %v2477 = vand.u32 %v104, 4294901760
    %2478 = vmatmul.f32.gmra.mxu0 %v2477
    %v2479 = vpop.f32.mrf.mxu0
    %v2480 = vadd.f32 %v2339, %v2479
    %v2481 = vand.u32 %v105, 4294901760
    %2482 = vmatmul.f32.gmra.mxu0 %v2481
    %v2483 = vpop.f32.mrf.mxu0
    %v2484 = vadd.f32 %v2345, %v2483
    %v2485 = vand.u32 %v106, 4294901760
    %2486 = vmatmul.f32.gmra.mxu0 %v2485
    %v2487 = vpop.f32.mrf.mxu0
    %v2488 = vadd.f32 %v2351, %v2487
    %v2489 = vand.u32 %v107, 4294901760
    %2490 = vmatmul.f32.gmra.mxu0 %v2489
    %v2491 = vpop.f32.mrf.mxu0
    %v2492 = vadd.f32 %v2357, %v2491
    %v2493 = vand.u32 %v108, 4294901760
    %2494 = vmatmul.f32.gmra.mxu0 %v2493
    %v2495 = vpop.f32.mrf.mxu0
    %v2496 = vadd.f32 %v2363, %v2495
    %v2497 = vand.u32 %v109, 4294901760
    %2498 = vmatmul.f32.gmra.mxu0 %v2497
    %v2499 = vpop.f32.mrf.mxu0
    %v2500 = vadd.f32 %v2369, %v2499
    %v2501 = vand.u32 %v110, 4294901760
    %2502 = vmatmul.f32.gmra.mxu0 %v2501
    %v2503 = vpop.f32.mrf.mxu0
    %v2504 = vadd.f32 %v2375, %v2503
    %2505 = vdwg.mxu0
    %v2506 = vand.u32 %v173, 4294901760
    %2507 = vmatpush.msra.mxu0 %v2506
    %v2508 = vand.u32 %v169, 4294901760
    %2509 = vmatpush.msra.mxu0 %v2508
    %v2510 = vand.u32 %v165, 4294901760
    %2511 = vmatpush.msra.mxu0 %v2510
    %v2512 = vand.u32 %v161, 4294901760
    %2513 = vmatpush.msra.mxu0 %v2512
    %v2514 = vand.u32 %v157, 4294901760
    %2515 = vmatpush.msra.mxu0 %v2514
    %v2516 = vand.u32 %v153, 4294901760
    %2517 = vmatpush.msra.mxu0 %v2516
    %v2518 = vand.u32 %v149, 4294901760
    %2519 = vmatpush.msra.mxu0 %v2518
    %v2520 = vand.u32 %v145, 4294901760
    %2521 = vmatpush.msra.mxu0 %v2520
    %v2522 = vand.u32 %v141, 4294901760
    %2523 = vmatpush.msra.mxu0 %v2522
    %v2524 = vand.u32 %v137, 4294901760
    %2525 = vmatpush.msra.mxu0 %v2524
    %v2526 = vand.u32 %v133, 4294901760
    %2527 = vmatpush.msra.mxu0 %v2526
    %v2528 = vand.u32 %v129, 4294901760
    %2529 = vmatpush.msra.mxu0 %v2528
    %v2530 = vand.u32 %v125, 4294901760
    %2531 = vmatpush.msra.mxu0 %v2530
    %v2532 = vand.u32 %v121, 4294901760
    %2533 = vmatpush.msra.mxu0 %v2532
    %v2534 = vand.u32 %v117, 4294901760
    %2535 = vmatpush.msra.mxu0 %v2534
    %v2536 = vand.u32 %v113, 4294901760
    %2537 = vmatpush.msra.mxu0 %v2536
    %v2538 = vand.u32 %v95, 4294901760
    %2539 = vmatmul.f32.gmra.mxu0 %v2538
    %v2540 = vpop.f32.mrf.mxu0
    %v2541 = vadd.f32 %v2444, %v2540
    %v2542 = vand.u32 %v96, 4294901760
    %2543 = vmatmul.f32.gmra.mxu0 %v2542
    %v2544 = vpop.f32.mrf.mxu0
    %v2545 = vadd.f32 %v2448, %v2544
    %v2546 = vand.u32 %v97, 4294901760
    %2547 = vmatmul.f32.gmra.mxu0 %v2546
    %v2548 = vpop.f32.mrf.mxu0
    %v2549 = vadd.f32 %v2452, %v2548
    %v2550 = vand.u32 %v98, 4294901760
    %2551 = vmatmul.f32.gmra.mxu0 %v2550
    %v2552 = vpop.f32.mrf.mxu0
    %v2553 = vadd.f32 %v2456, %v2552
    %v2554 = vand.u32 %v99, 4294901760
    %2555 = vmatmul.f32.gmra.mxu0 %v2554
    %v2556 = vpop.f32.mrf.mxu0
    %v2557 = vadd.f32 %v2460, %v2556
    %v2558 = vand.u32 %v100, 4294901760
    %2559 = vmatmul.f32.gmra.mxu0 %v2558
    %v2560 = vpop.f32.mrf.mxu0
    %v2561 = vadd.f32 %v2464, %v2560
    %v2562 = vand.u32 %v101, 4294901760
    %2563 = vmatmul.f32.gmra.mxu0 %v2562
    %v2564 = vpop.f32.mrf.mxu0
    %v2565 = vadd.f32 %v2468, %v2564
    %v2566 = vand.u32 %v102, 4294901760
    %2567 = vmatmul.f32.gmra.mxu0 %v2566
    %v2568 = vpop.f32.mrf.mxu0
    %v2569 = vadd.f32 %v2472, %v2568
    %v2570 = vand.u32 %v103, 4294901760
    %2571 = vmatmul.f32.gmra.mxu0 %v2570
    %v2572 = vpop.f32.mrf.mxu0
    %v2573 = vadd.f32 %v2476, %v2572
    %v2574 = vand.u32 %v104, 4294901760
    %2575 = vmatmul.f32.gmra.mxu0 %v2574
    %v2576 = vpop.f32.mrf.mxu0
    %v2577 = vadd.f32 %v2480, %v2576
    %v2578 = vand.u32 %v105, 4294901760
    %2579 = vmatmul.f32.gmra.mxu0 %v2578
    %v2580 = vpop.f32.mrf.mxu0
    %v2581 = vadd.f32 %v2484, %v2580
    %v2582 = vand.u32 %v106, 4294901760
    %2583 = vmatmul.f32.gmra.mxu0 %v2582
    %v2584 = vpop.f32.mrf.mxu0
    %v2585 = vadd.f32 %v2488, %v2584
    %v2586 = vand.u32 %v107, 4294901760
    %2587 = vmatmul.f32.gmra.mxu0 %v2586
    %v2588 = vpop.f32.mrf.mxu0
    %v2589 = vadd.f32 %v2492, %v2588
    %v2590 = vand.u32 %v108, 4294901760
    %2591 = vmatmul.f32.gmra.mxu0 %v2590
    %v2592 = vpop.f32.mrf.mxu0
    %v2593 = vadd.f32 %v2496, %v2592
    %v2594 = vand.u32 %v109, 4294901760
    %2595 = vmatmul.f32.gmra.mxu0 %v2594
    %v2596 = vpop.f32.mrf.mxu0
    %v2597 = vadd.f32 %v2500, %v2596
    %v2598 = vand.u32 %v110, 4294901760
    %2599 = vmatmul.f32.gmra.mxu0 %v2598
    %v2600 = vpop.f32.mrf.mxu0
    %v2601 = vadd.f32 %v2504, %v2600
    %2602 = vdwg.mxu0
    %v2603 = vand.u32 %v174, 4294901760
    %2604 = vmatpush.msra.mxu0 %v2603
    %v2605 = vand.u32 %v170, 4294901760
    %2606 = vmatpush.msra.mxu0 %v2605
    %v2607 = vand.u32 %v166, 4294901760
    %2608 = vmatpush.msra.mxu0 %v2607
    %v2609 = vand.u32 %v162, 4294901760
    %2610 = vmatpush.msra.mxu0 %v2609
    %v2611 = vand.u32 %v158, 4294901760
    %2612 = vmatpush.msra.mxu0 %v2611
    %v2613 = vand.u32 %v154, 4294901760
    %2614 = vmatpush.msra.mxu0 %v2613
    %v2615 = vand.u32 %v150, 4294901760
    %2616 = vmatpush.msra.mxu0 %v2615
    %v2617 = vand.u32 %v146, 4294901760
    %2618 = vmatpush.msra.mxu0 %v2617
    %v2619 = vand.u32 %v142, 4294901760
    %2620 = vmatpush.msra.mxu0 %v2619
    %v2621 = vand.u32 %v138, 4294901760
    %2622 = vmatpush.msra.mxu0 %v2621
    %v2623 = vand.u32 %v134, 4294901760
    %2624 = vmatpush.msra.mxu0 %v2623
    %v2625 = vand.u32 %v130, 4294901760
    %2626 = vmatpush.msra.mxu0 %v2625
    %v2627 = vand.u32 %v126, 4294901760
    %2628 = vmatpush.msra.mxu0 %v2627
    %v2629 = vand.u32 %v122, 4294901760
    %2630 = vmatpush.msra.mxu0 %v2629
    %v2631 = vand.u32 %v118, 4294901760
    %2632 = vmatpush.msra.mxu0 %v2631
    %v2633 = vand.u32 %v114, 4294901760
    %2634 = vmatpush.msra.mxu0 %v2633
    %v2635 = vand.u32 %v95, 4294901760
    %v2636 = vsub.f32 %v95, %v2635
    %v2637 = vand.u32 %v2636, 4294901760
    %v2638 = vsub.f32 %v2636, %v2637
    %v2639 = vand.u32 %v2638, 4294901760
    %2640 = vmatmul.f32.gmra.mxu0 %v2639
    %v2641 = vpop.f32.mrf.mxu0
    %v2642 = vadd.f32 %v180, %v2641
    %v2643 = vand.u32 %v96, 4294901760
    %v2644 = vsub.f32 %v96, %v2643
    %v2645 = vand.u32 %v2644, 4294901760
    %v2646 = vsub.f32 %v2644, %v2645
    %v2647 = vand.u32 %v2646, 4294901760
    %2648 = vmatmul.f32.gmra.mxu0 %v2647
    %v2649 = vpop.f32.mrf.mxu0
    %v2650 = vadd.f32 %v180, %v2649
    %v2651 = vand.u32 %v97, 4294901760
    %v2652 = vsub.f32 %v97, %v2651
    %v2653 = vand.u32 %v2652, 4294901760
    %v2654 = vsub.f32 %v2652, %v2653
    %v2655 = vand.u32 %v2654, 4294901760
    %2656 = vmatmul.f32.gmra.mxu0 %v2655
    %v2657 = vpop.f32.mrf.mxu0
    %v2658 = vadd.f32 %v180, %v2657
    %v2659 = vand.u32 %v98, 4294901760
    %v2660 = vsub.f32 %v98, %v2659
    %v2661 = vand.u32 %v2660, 4294901760
    %v2662 = vsub.f32 %v2660, %v2661
    %v2663 = vand.u32 %v2662, 4294901760
    %2664 = vmatmul.f32.gmra.mxu0 %v2663
    %v2665 = vpop.f32.mrf.mxu0
    %v2666 = vadd.f32 %v180, %v2665
    %v2667 = vand.u32 %v99, 4294901760
    %v2668 = vsub.f32 %v99, %v2667
    %v2669 = vand.u32 %v2668, 4294901760
    %v2670 = vsub.f32 %v2668, %v2669
    %v2671 = vand.u32 %v2670, 4294901760
    %2672 = vmatmul.f32.gmra.mxu0 %v2671
    %v2673 = vpop.f32.mrf.mxu0
    %v2674 = vadd.f32 %v180, %v2673
    %v2675 = vand.u32 %v100, 4294901760
    %v2676 = vsub.f32 %v100, %v2675
    %v2677 = vand.u32 %v2676, 4294901760
    %v2678 = vsub.f32 %v2676, %v2677
    %v2679 = vand.u32 %v2678, 4294901760
    %2680 = vmatmul.f32.gmra.mxu0 %v2679
    %v2681 = vpop.f32.mrf.mxu0
    %v2682 = vadd.f32 %v180, %v2681
    %v2683 = vand.u32 %v101, 4294901760
    %v2684 = vsub.f32 %v101, %v2683
    %v2685 = vand.u32 %v2684, 4294901760
    %v2686 = vsub.f32 %v2684, %v2685
    %v2687 = vand.u32 %v2686, 4294901760
    %2688 = vmatmul.f32.gmra.mxu0 %v2687
    %v2689 = vpop.f32.mrf.mxu0
    %v2690 = vadd.f32 %v180, %v2689
    %v2691 = vand.u32 %v102, 4294901760
    %v2692 = vsub.f32 %v102, %v2691
    %v2693 = vand.u32 %v2692, 4294901760
    %v2694 = vsub.f32 %v2692, %v2693
    %v2695 = vand.u32 %v2694, 4294901760
    %2696 = vmatmul.f32.gmra.mxu0 %v2695
    %v2697 = vpop.f32.mrf.mxu0
    %v2698 = vadd.f32 %v180, %v2697
    %v2699 = vand.u32 %v103, 4294901760
    %v2700 = vsub.f32 %v103, %v2699
    %v2701 = vand.u32 %v2700, 4294901760
    %v2702 = vsub.f32 %v2700, %v2701
    %v2703 = vand.u32 %v2702, 4294901760
    %2704 = vmatmul.f32.gmra.mxu0 %v2703
    %v2705 = vpop.f32.mrf.mxu0
    %v2706 = vadd.f32 %v180, %v2705
    %v2707 = vand.u32 %v104, 4294901760
    %v2708 = vsub.f32 %v104, %v2707
    %v2709 = vand.u32 %v2708, 4294901760
    %v2710 = vsub.f32 %v2708, %v2709
    %v2711 = vand.u32 %v2710, 4294901760
    %2712 = vmatmul.f32.gmra.mxu0 %v2711
    %v2713 = vpop.f32.mrf.mxu0
    %v2714 = vadd.f32 %v180, %v2713
    %v2715 = vand.u32 %v105, 4294901760
    %v2716 = vsub.f32 %v105, %v2715
    %v2717 = vand.u32 %v2716, 4294901760
    %v2718 = vsub.f32 %v2716, %v2717
    %v2719 = vand.u32 %v2718, 4294901760
    %2720 = vmatmul.f32.gmra.mxu0 %v2719
    %v2721 = vpop.f32.mrf.mxu0
    %v2722 = vadd.f32 %v180, %v2721
    %v2723 = vand.u32 %v106, 4294901760
    %v2724 = vsub.f32 %v106, %v2723
    %v2725 = vand.u32 %v2724, 4294901760
    %v2726 = vsub.f32 %v2724, %v2725
    %v2727 = vand.u32 %v2726, 4294901760
    %2728 = vmatmul.f32.gmra.mxu0 %v2727
    %v2729 = vpop.f32.mrf.mxu0
    %v2730 = vadd.f32 %v180, %v2729
    %v2731 = vand.u32 %v107, 4294901760
    %v2732 = vsub.f32 %v107, %v2731
    %v2733 = vand.u32 %v2732, 4294901760
    %v2734 = vsub.f32 %v2732, %v2733
    %v2735 = vand.u32 %v2734, 4294901760
    %2736 = vmatmul.f32.gmra.mxu0 %v2735
    %v2737 = vpop.f32.mrf.mxu0
    %v2738 = vadd.f32 %v180, %v2737
    %v2739 = vand.u32 %v108, 4294901760
    %v2740 = vsub.f32 %v108, %v2739
    %v2741 = vand.u32 %v2740, 4294901760
    %v2742 = vsub.f32 %v2740, %v2741
    %v2743 = vand.u32 %v2742, 4294901760
    %2744 = vmatmul.f32.gmra.mxu0 %v2743
    %v2745 = vpop.f32.mrf.mxu0
    %v2746 = vadd.f32 %v180, %v2745
    %v2747 = vand.u32 %v109, 4294901760
    %v2748 = vsub.f32 %v109, %v2747
    %v2749 = vand.u32 %v2748, 4294901760
    %v2750 = vsub.f32 %v2748, %v2749
    %v2751 = vand.u32 %v2750, 4294901760
    %2752 = vmatmul.f32.gmra.mxu0 %v2751
    %v2753 = vpop.f32.mrf.mxu0
    %v2754 = vadd.f32 %v180, %v2753
    %v2755 = vand.u32 %v110, 4294901760
    %v2756 = vsub.f32 %v110, %v2755
    %v2757 = vand.u32 %v2756, 4294901760
    %v2758 = vsub.f32 %v2756, %v2757
    %v2759 = vand.u32 %v2758, 4294901760
    %2760 = vmatmul.f32.gmra.mxu0 %v2759
    %v2761 = vpop.f32.mrf.mxu0
    %v2762 = vadd.f32 %v180, %v2761
    %2763 = vdwg.mxu0
    %v2764 = vand.u32 %v174, 4294901760
    %v2765 = vsub.f32 %v174, %v2764
    %v2766 = vand.u32 %v2765, 4294901760
    %v2767 = vsub.f32 %v2765, %v2766
    %v2768 = vand.u32 %v2767, 4294901760
    %2769 = vmatpush.msra.mxu0 %v2768
    %v2770 = vand.u32 %v170, 4294901760
    %v2771 = vsub.f32 %v170, %v2770
    %v2772 = vand.u32 %v2771, 4294901760
    %v2773 = vsub.f32 %v2771, %v2772
    %v2774 = vand.u32 %v2773, 4294901760
    %2775 = vmatpush.msra.mxu0 %v2774
    %v2776 = vand.u32 %v166, 4294901760
    %v2777 = vsub.f32 %v166, %v2776
    %v2778 = vand.u32 %v2777, 4294901760
    %v2779 = vsub.f32 %v2777, %v2778
    %v2780 = vand.u32 %v2779, 4294901760
    %2781 = vmatpush.msra.mxu0 %v2780
    %v2782 = vand.u32 %v162, 4294901760
    %v2783 = vsub.f32 %v162, %v2782
    %v2784 = vand.u32 %v2783, 4294901760
    %v2785 = vsub.f32 %v2783, %v2784
    %v2786 = vand.u32 %v2785, 4294901760
    %2787 = vmatpush.msra.mxu0 %v2786
    %v2788 = vand.u32 %v158, 4294901760
    %v2789 = vsub.f32 %v158, %v2788
    %v2790 = vand.u32 %v2789, 4294901760
    %v2791 = vsub.f32 %v2789, %v2790
    %v2792 = vand.u32 %v2791, 4294901760
    %2793 = vmatpush.msra.mxu0 %v2792
    %v2794 = vand.u32 %v154, 4294901760
    %v2795 = vsub.f32 %v154, %v2794
    %v2796 = vand.u32 %v2795, 4294901760
    %v2797 = vsub.f32 %v2795, %v2796
    %v2798 = vand.u32 %v2797, 4294901760
    %2799 = vmatpush.msra.mxu0 %v2798
    %v2800 = vand.u32 %v150, 4294901760
    %v2801 = vsub.f32 %v150, %v2800
    %v2802 = vand.u32 %v2801, 4294901760
    %v2803 = vsub.f32 %v2801, %v2802
    %v2804 = vand.u32 %v2803, 4294901760
    %2805 = vmatpush.msra.mxu0 %v2804
    %v2806 = vand.u32 %v146, 4294901760
    %v2807 = vsub.f32 %v146, %v2806
    %v2808 = vand.u32 %v2807, 4294901760
    %v2809 = vsub.f32 %v2807, %v2808
    %v2810 = vand.u32 %v2809, 4294901760
    %2811 = vmatpush.msra.mxu0 %v2810
    %v2812 = vand.u32 %v142, 4294901760
    %v2813 = vsub.f32 %v142, %v2812
    %v2814 = vand.u32 %v2813, 4294901760
    %v2815 = vsub.f32 %v2813, %v2814
    %v2816 = vand.u32 %v2815, 4294901760
    %2817 = vmatpush.msra.mxu0 %v2816
    %v2818 = vand.u32 %v138, 4294901760
    %v2819 = vsub.f32 %v138, %v2818
    %v2820 = vand.u32 %v2819, 4294901760
    %v2821 = vsub.f32 %v2819, %v2820
    %v2822 = vand.u32 %v2821, 4294901760
    %2823 = vmatpush.msra.mxu0 %v2822
    %v2824 = vand.u32 %v134, 4294901760
    %v2825 = vsub.f32 %v134, %v2824
    %v2826 = vand.u32 %v2825, 4294901760
    %v2827 = vsub.f32 %v2825, %v2826
    %v2828 = vand.u32 %v2827, 4294901760
    %2829 = vmatpush.msra.mxu0 %v2828
    %v2830 = vand.u32 %v130, 4294901760
    %v2831 = vsub.f32 %v130, %v2830
    %v2832 = vand.u32 %v2831, 4294901760
    %v2833 = vsub.f32 %v2831, %v2832
    %v2834 = vand.u32 %v2833, 4294901760
    %2835 = vmatpush.msra.mxu0 %v2834
    %v2836 = vand.u32 %v126, 4294901760
    %v2837 = vsub.f32 %v126, %v2836
    %v2838 = vand.u32 %v2837, 4294901760
    %v2839 = vsub.f32 %v2837, %v2838
    %v2840 = vand.u32 %v2839, 4294901760
    %2841 = vmatpush.msra.mxu0 %v2840
    %v2842 = vand.u32 %v122, 4294901760
    %v2843 = vsub.f32 %v122, %v2842
    %v2844 = vand.u32 %v2843, 4294901760
    %v2845 = vsub.f32 %v2843, %v2844
    %v2846 = vand.u32 %v2845, 4294901760
    %2847 = vmatpush.msra.mxu0 %v2846
    %v2848 = vand.u32 %v118, 4294901760
    %v2849 = vsub.f32 %v118, %v2848
    %v2850 = vand.u32 %v2849, 4294901760
    %v2851 = vsub.f32 %v2849, %v2850
    %v2852 = vand.u32 %v2851, 4294901760
    %2853 = vmatpush.msra.mxu0 %v2852
    %v2854 = vand.u32 %v114, 4294901760
    %v2855 = vsub.f32 %v114, %v2854
    %v2856 = vand.u32 %v2855, 4294901760
    %v2857 = vsub.f32 %v2855, %v2856
    %v2858 = vand.u32 %v2857, 4294901760
    %2859 = vmatpush.msra.mxu0 %v2858
    %v2860 = vand.u32 %v95, 4294901760
    %2861 = vmatmul.f32.gmra.mxu0 %v2860
    %v2862 = vpop.f32.mrf.mxu0
    %v2863 = vadd.f32 %v2642, %v2862
    %v2864 = vand.u32 %v96, 4294901760
    %2865 = vmatmul.f32.gmra.mxu0 %v2864
    %v2866 = vpop.f32.mrf.mxu0
    %v2867 = vadd.f32 %v2650, %v2866
    %v2868 = vand.u32 %v97, 4294901760
    %2869 = vmatmul.f32.gmra.mxu0 %v2868
    %v2870 = vpop.f32.mrf.mxu0
    %v2871 = vadd.f32 %v2658, %v2870
    %v2872 = vand.u32 %v98, 4294901760
    %2873 = vmatmul.f32.gmra.mxu0 %v2872
    %v2874 = vpop.f32.mrf.mxu0
    %v2875 = vadd.f32 %v2666, %v2874
    %v2876 = vand.u32 %v99, 4294901760
    %2877 = vmatmul.f32.gmra.mxu0 %v2876
    %v2878 = vpop.f32.mrf.mxu0
    %v2879 = vadd.f32 %v2674, %v2878
    %v2880 = vand.u32 %v100, 4294901760
    %2881 = vmatmul.f32.gmra.mxu0 %v2880
    %v2882 = vpop.f32.mrf.mxu0
    %v2883 = vadd.f32 %v2682, %v2882
    %v2884 = vand.u32 %v101, 4294901760
    %2885 = vmatmul.f32.gmra.mxu0 %v2884
    %v2886 = vpop.f32.mrf.mxu0
    %v2887 = vadd.f32 %v2690, %v2886
    %v2888 = vand.u32 %v102, 4294901760
    %2889 = vmatmul.f32.gmra.mxu0 %v2888
    %v2890 = vpop.f32.mrf.mxu0
    %v2891 = vadd.f32 %v2698, %v2890
    %v2892 = vand.u32 %v103, 4294901760
    %2893 = vmatmul.f32.gmra.mxu0 %v2892
    %v2894 = vpop.f32.mrf.mxu0
    %v2895 = vadd.f32 %v2706, %v2894
    %v2896 = vand.u32 %v104, 4294901760
    %2897 = vmatmul.f32.gmra.mxu0 %v2896
    %v2898 = vpop.f32.mrf.mxu0
    %v2899 = vadd.f32 %v2714, %v2898
    %v2900 = vand.u32 %v105, 4294901760
    %2901 = vmatmul.f32.gmra.mxu0 %v2900
    %v2902 = vpop.f32.mrf.mxu0
    %v2903 = vadd.f32 %v2722, %v2902
    %v2904 = vand.u32 %v106, 4294901760
    %2905 = vmatmul.f32.gmra.mxu0 %v2904
    %v2906 = vpop.f32.mrf.mxu0
    %v2907 = vadd.f32 %v2730, %v2906
    %v2908 = vand.u32 %v107, 4294901760
    %2909 = vmatmul.f32.gmra.mxu0 %v2908
    %v2910 = vpop.f32.mrf.mxu0
    %v2911 = vadd.f32 %v2738, %v2910
    %v2912 = vand.u32 %v108, 4294901760
    %2913 = vmatmul.f32.gmra.mxu0 %v2912
    %v2914 = vpop.f32.mrf.mxu0
    %v2915 = vadd.f32 %v2746, %v2914
    %v2916 = vand.u32 %v109, 4294901760
    %2917 = vmatmul.f32.gmra.mxu0 %v2916
    %v2918 = vpop.f32.mrf.mxu0
    %v2919 = vadd.f32 %v2754, %v2918
    %v2920 = vand.u32 %v110, 4294901760
    %2921 = vmatmul.f32.gmra.mxu0 %v2920
    %v2922 = vpop.f32.mrf.mxu0
    %v2923 = vadd.f32 %v2762, %v2922
    %2924 = vdwg.mxu0
    %v2925 = vand.u32 %v174, 4294901760
    %v2926 = vsub.f32 %v174, %v2925
    %2927 = vmatpush.msra.mxu0 %v2926
    %v2928 = vand.u32 %v170, 4294901760
    %v2929 = vsub.f32 %v170, %v2928
    %2930 = vmatpush.msra.mxu0 %v2929
    %v2931 = vand.u32 %v166, 4294901760
    %v2932 = vsub.f32 %v166, %v2931
    %2933 = vmatpush.msra.mxu0 %v2932
    %v2934 = vand.u32 %v162, 4294901760
    %v2935 = vsub.f32 %v162, %v2934
    %2936 = vmatpush.msra.mxu0 %v2935
    %v2937 = vand.u32 %v158, 4294901760
    %v2938 = vsub.f32 %v158, %v2937
    %2939 = vmatpush.msra.mxu0 %v2938
    %v2940 = vand.u32 %v154, 4294901760
    %v2941 = vsub.f32 %v154, %v2940
    %2942 = vmatpush.msra.mxu0 %v2941
    %v2943 = vand.u32 %v150, 4294901760
    %v2944 = vsub.f32 %v150, %v2943
    %2945 = vmatpush.msra.mxu0 %v2944
    %v2946 = vand.u32 %v146, 4294901760
    %v2947 = vsub.f32 %v146, %v2946
    %2948 = vmatpush.msra.mxu0 %v2947
    %v2949 = vand.u32 %v142, 4294901760
    %v2950 = vsub.f32 %v142, %v2949
    %2951 = vmatpush.msra.mxu0 %v2950
    %v2952 = vand.u32 %v138, 4294901760
    %v2953 = vsub.f32 %v138, %v2952
    %2954 = vmatpush.msra.mxu0 %v2953
    %v2955 = vand.u32 %v134, 4294901760
    %v2956 = vsub.f32 %v134, %v2955
    %2957 = vmatpush.msra.mxu0 %v2956
    %v2958 = vand.u32 %v130, 4294901760
    %v2959 = vsub.f32 %v130, %v2958
    %2960 = vmatpush.msra.mxu0 %v2959
    %v2961 = vand.u32 %v126, 4294901760
    %v2962 = vsub.f32 %v126, %v2961
    %2963 = vmatpush.msra.mxu0 %v2962
    %v2964 = vand.u32 %v122, 4294901760
    %v2965 = vsub.f32 %v122, %v2964
    %2966 = vmatpush.msra.mxu0 %v2965
    %v2967 = vand.u32 %v118, 4294901760
    %v2968 = vsub.f32 %v118, %v2967
    %2969 = vmatpush.msra.mxu0 %v2968
    %v2970 = vand.u32 %v114, 4294901760
    %v2971 = vsub.f32 %v114, %v2970
    %2972 = vmatpush.msra.mxu0 %v2971
    %v2973 = vand.u32 %v95, 4294901760
    %v2974 = vsub.f32 %v95, %v2973
    %2975 = vmatmul.f32.gmra.mxu0 %v2974
    %v2976 = vpop.f32.mrf.mxu0
    %v2977 = vadd.f32 %v2863, %v2976
    %v2978 = vand.u32 %v96, 4294901760
    %v2979 = vsub.f32 %v96, %v2978
    %2980 = vmatmul.f32.gmra.mxu0 %v2979
    %v2981 = vpop.f32.mrf.mxu0
    %v2982 = vadd.f32 %v2867, %v2981
    %v2983 = vand.u32 %v97, 4294901760
    %v2984 = vsub.f32 %v97, %v2983
    %2985 = vmatmul.f32.gmra.mxu0 %v2984
    %v2986 = vpop.f32.mrf.mxu0
    %v2987 = vadd.f32 %v2871, %v2986
    %v2988 = vand.u32 %v98, 4294901760
    %v2989 = vsub.f32 %v98, %v2988
    %2990 = vmatmul.f32.gmra.mxu0 %v2989
    %v2991 = vpop.f32.mrf.mxu0
    %v2992 = vadd.f32 %v2875, %v2991
    %v2993 = vand.u32 %v99, 4294901760
    %v2994 = vsub.f32 %v99, %v2993
    %2995 = vmatmul.f32.gmra.mxu0 %v2994
    %v2996 = vpop.f32.mrf.mxu0
    %v2997 = vadd.f32 %v2879, %v2996
    %v2998 = vand.u32 %v100, 4294901760
    %v2999 = vsub.f32 %v100, %v2998
    %3000 = vmatmul.f32.gmra.mxu0 %v2999
    %v3001 = vpop.f32.mrf.mxu0
    %v3002 = vadd.f32 %v2883, %v3001
    %v3003 = vand.u32 %v101, 4294901760
    %v3004 = vsub.f32 %v101, %v3003
    %3005 = vmatmul.f32.gmra.mxu0 %v3004
    %v3006 = vpop.f32.mrf.mxu0
    %v3007 = vadd.f32 %v2887, %v3006
    %v3008 = vand.u32 %v102, 4294901760
    %v3009 = vsub.f32 %v102, %v3008
    %3010 = vmatmul.f32.gmra.mxu0 %v3009
    %v3011 = vpop.f32.mrf.mxu0
    %v3012 = vadd.f32 %v2891, %v3011
    %v3013 = vand.u32 %v103, 4294901760
    %v3014 = vsub.f32 %v103, %v3013
    %3015 = vmatmul.f32.gmra.mxu0 %v3014
    %v3016 = vpop.f32.mrf.mxu0
    %v3017 = vadd.f32 %v2895, %v3016
    %v3018 = vand.u32 %v104, 4294901760
    %v3019 = vsub.f32 %v104, %v3018
    %3020 = vmatmul.f32.gmra.mxu0 %v3019
    %v3021 = vpop.f32.mrf.mxu0
    %v3022 = vadd.f32 %v2899, %v3021
    %v3023 = vand.u32 %v105, 4294901760
    %v3024 = vsub.f32 %v105, %v3023
    %3025 = vmatmul.f32.gmra.mxu0 %v3024
    %v3026 = vpop.f32.mrf.mxu0
    %v3027 = vadd.f32 %v2903, %v3026
    %v3028 = vand.u32 %v106, 4294901760
    %v3029 = vsub.f32 %v106, %v3028
    %3030 = vmatmul.f32.gmra.mxu0 %v3029
    %v3031 = vpop.f32.mrf.mxu0
    %v3032 = vadd.f32 %v2907, %v3031
    %v3033 = vand.u32 %v107, 4294901760
    %v3034 = vsub.f32 %v107, %v3033
    %3035 = vmatmul.f32.gmra.mxu0 %v3034
    %v3036 = vpop.f32.mrf.mxu0
    %v3037 = vadd.f32 %v2911, %v3036
    %v3038 = vand.u32 %v108, 4294901760
    %v3039 = vsub.f32 %v108, %v3038
    %3040 = vmatmul.f32.gmra.mxu0 %v3039
    %v3041 = vpop.f32.mrf.mxu0
    %v3042 = vadd.f32 %v2915, %v3041
    %v3043 = vand.u32 %v109, 4294901760
    %v3044 = vsub.f32 %v109, %v3043
    %3045 = vmatmul.f32.gmra.mxu0 %v3044
    %v3046 = vpop.f32.mrf.mxu0
    %v3047 = vadd.f32 %v2919, %v3046
    %v3048 = vand.u32 %v110, 4294901760
    %v3049 = vsub.f32 %v110, %v3048
    %3050 = vmatmul.f32.gmra.mxu0 %v3049
    %v3051 = vpop.f32.mrf.mxu0
    %v3052 = vadd.f32 %v2923, %v3051
    %3053 = vdwg.mxu0
    %v3054 = vand.u32 %v174, 4294901760
    %3055 = vmatpush.msra.mxu0 %v3054
    %v3056 = vand.u32 %v170, 4294901760
    %3057 = vmatpush.msra.mxu0 %v3056
    %v3058 = vand.u32 %v166, 4294901760
    %3059 = vmatpush.msra.mxu0 %v3058
    %v3060 = vand.u32 %v162, 4294901760
    %3061 = vmatpush.msra.mxu0 %v3060
    %v3062 = vand.u32 %v158, 4294901760
    %3063 = vmatpush.msra.mxu0 %v3062
    %v3064 = vand.u32 %v154, 4294901760
    %3065 = vmatpush.msra.mxu0 %v3064
    %v3066 = vand.u32 %v150, 4294901760
    %3067 = vmatpush.msra.mxu0 %v3066
    %v3068 = vand.u32 %v146, 4294901760
    %3069 = vmatpush.msra.mxu0 %v3068
    %v3070 = vand.u32 %v142, 4294901760
    %3071 = vmatpush.msra.mxu0 %v3070
    %v3072 = vand.u32 %v138, 4294901760
    %3073 = vmatpush.msra.mxu0 %v3072
    %v3074 = vand.u32 %v134, 4294901760
    %3075 = vmatpush.msra.mxu0 %v3074
    %v3076 = vand.u32 %v130, 4294901760
    %3077 = vmatpush.msra.mxu0 %v3076
    %v3078 = vand.u32 %v126, 4294901760
    %3079 = vmatpush.msra.mxu0 %v3078
    %v3080 = vand.u32 %v122, 4294901760
    %3081 = vmatpush.msra.mxu0 %v3080
    %v3082 = vand.u32 %v118, 4294901760
    %3083 = vmatpush.msra.mxu0 %v3082
    %v3084 = vand.u32 %v114, 4294901760
    %3085 = vmatpush.msra.mxu0 %v3084
    %v3086 = vand.u32 %v95, 4294901760
    %v3087 = vsub.f32 %v95, %v3086
    %v3088 = vand.u32 %v3087, 4294901760
    %3089 = vmatmul.f32.gmra.mxu0 %v3088
    %v3090 = vpop.f32.mrf.mxu0
    %v3091 = vadd.f32 %v2977, %v3090
    %v3092 = vand.u32 %v96, 4294901760
    %v3093 = vsub.f32 %v96, %v3092
    %v3094 = vand.u32 %v3093, 4294901760
    %3095 = vmatmul.f32.gmra.mxu0 %v3094
    %v3096 = vpop.f32.mrf.mxu0
    %v3097 = vadd.f32 %v2982, %v3096
    %v3098 = vand.u32 %v97, 4294901760
    %v3099 = vsub.f32 %v97, %v3098
    %v3100 = vand.u32 %v3099, 4294901760
    %3101 = vmatmul.f32.gmra.mxu0 %v3100
    %v3102 = vpop.f32.mrf.mxu0
    %v3103 = vadd.f32 %v2987, %v3102
    %v3104 = vand.u32 %v98, 4294901760
    %v3105 = vsub.f32 %v98, %v3104
    %v3106 = vand.u32 %v3105, 4294901760
    %3107 = vmatmul.f32.gmra.mxu0 %v3106
    %v3108 = vpop.f32.mrf.mxu0
    %v3109 = vadd.f32 %v2992, %v3108
    %v3110 = vand.u32 %v99, 4294901760
    %v3111 = vsub.f32 %v99, %v3110
    %v3112 = vand.u32 %v3111, 4294901760
    %3113 = vmatmul.f32.gmra.mxu0 %v3112
    %v3114 = vpop.f32.mrf.mxu0
    %v3115 = vadd.f32 %v2997, %v3114
    %v3116 = vand.u32 %v100, 4294901760
    %v3117 = vsub.f32 %v100, %v3116
    %v3118 = vand.u32 %v3117, 4294901760
    %3119 = vmatmul.f32.gmra.mxu0 %v3118
    %v3120 = vpop.f32.mrf.mxu0
    %v3121 = vadd.f32 %v3002, %v3120
    %v3122 = vand.u32 %v101, 4294901760
    %v3123 = vsub.f32 %v101, %v3122
    %v3124 = vand.u32 %v3123, 4294901760
    %3125 = vmatmul.f32.gmra.mxu0 %v3124
    %v3126 = vpop.f32.mrf.mxu0
    %v3127 = vadd.f32 %v3007, %v3126
    %v3128 = vand.u32 %v102, 4294901760
    %v3129 = vsub.f32 %v102, %v3128
    %v3130 = vand.u32 %v3129, 4294901760
    %3131 = vmatmul.f32.gmra.mxu0 %v3130
    %v3132 = vpop.f32.mrf.mxu0
    %v3133 = vadd.f32 %v3012, %v3132
    %v3134 = vand.u32 %v103, 4294901760
    %v3135 = vsub.f32 %v103, %v3134
    %v3136 = vand.u32 %v3135, 4294901760
    %3137 = vmatmul.f32.gmra.mxu0 %v3136
    %v3138 = vpop.f32.mrf.mxu0
    %v3139 = vadd.f32 %v3017, %v3138
    %v3140 = vand.u32 %v104, 4294901760
    %v3141 = vsub.f32 %v104, %v3140
    %v3142 = vand.u32 %v3141, 4294901760
    %3143 = vmatmul.f32.gmra.mxu0 %v3142
    %v3144 = vpop.f32.mrf.mxu0
    %v3145 = vadd.f32 %v3022, %v3144
    %v3146 = vand.u32 %v105, 4294901760
    %v3147 = vsub.f32 %v105, %v3146
    %v3148 = vand.u32 %v3147, 4294901760
    %3149 = vmatmul.f32.gmra.mxu0 %v3148
    %v3150 = vpop.f32.mrf.mxu0
    %v3151 = vadd.f32 %v3027, %v3150
    %v3152 = vand.u32 %v106, 4294901760
    %v3153 = vsub.f32 %v106, %v3152
    %v3154 = vand.u32 %v3153, 4294901760
    %3155 = vmatmul.f32.gmra.mxu0 %v3154
    %v3156 = vpop.f32.mrf.mxu0
    %v3157 = vadd.f32 %v3032, %v3156
    %v3158 = vand.u32 %v107, 4294901760
    %v3159 = vsub.f32 %v107, %v3158
    %v3160 = vand.u32 %v3159, 4294901760
    %3161 = vmatmul.f32.gmra.mxu0 %v3160
    %v3162 = vpop.f32.mrf.mxu0
    %v3163 = vadd.f32 %v3037, %v3162
    %v3164 = vand.u32 %v108, 4294901760
    %v3165 = vsub.f32 %v108, %v3164
    %v3166 = vand.u32 %v3165, 4294901760
    %3167 = vmatmul.f32.gmra.mxu0 %v3166
    %v3168 = vpop.f32.mrf.mxu0
    %v3169 = vadd.f32 %v3042, %v3168
    %v3170 = vand.u32 %v109, 4294901760
    %v3171 = vsub.f32 %v109, %v3170
    %v3172 = vand.u32 %v3171, 4294901760
    %3173 = vmatmul.f32.gmra.mxu0 %v3172
    %v3174 = vpop.f32.mrf.mxu0
    %v3175 = vadd.f32 %v3047, %v3174
    %v3176 = vand.u32 %v110, 4294901760
    %v3177 = vsub.f32 %v110, %v3176
    %v3178 = vand.u32 %v3177, 4294901760
    %3179 = vmatmul.f32.gmra.mxu0 %v3178
    %v3180 = vpop.f32.mrf.mxu0
    %v3181 = vadd.f32 %v3052, %v3180
    %3182 = vdwg.mxu0
    %v3183 = vand.u32 %v174, 4294901760
    %v3184 = vsub.f32 %v174, %v3183
    %v3185 = vand.u32 %v3184, 4294901760
    %3186 = vmatpush.msra.mxu0 %v3185
    %v3187 = vand.u32 %v170, 4294901760
    %v3188 = vsub.f32 %v170, %v3187
    %v3189 = vand.u32 %v3188, 4294901760
    %3190 = vmatpush.msra.mxu0 %v3189
    %v3191 = vand.u32 %v166, 4294901760
    %v3192 = vsub.f32 %v166, %v3191
    %v3193 = vand.u32 %v3192, 4294901760
    %3194 = vmatpush.msra.mxu0 %v3193
    %v3195 = vand.u32 %v162, 4294901760
    %v3196 = vsub.f32 %v162, %v3195
    %v3197 = vand.u32 %v3196, 4294901760
    %3198 = vmatpush.msra.mxu0 %v3197
    %v3199 = vand.u32 %v158, 4294901760
    %v3200 = vsub.f32 %v158, %v3199
    %v3201 = vand.u32 %v3200, 4294901760
    %3202 = vmatpush.msra.mxu0 %v3201
    %v3203 = vand.u32 %v154, 4294901760
    %v3204 = vsub.f32 %v154, %v3203
    %v3205 = vand.u32 %v3204, 4294901760
    %3206 = vmatpush.msra.mxu0 %v3205
    %v3207 = vand.u32 %v150, 4294901760
    %v3208 = vsub.f32 %v150, %v3207
    %v3209 = vand.u32 %v3208, 4294901760
    %3210 = vmatpush.msra.mxu0 %v3209
    %v3211 = vand.u32 %v146, 4294901760
    %v3212 = vsub.f32 %v146, %v3211
    %v3213 = vand.u32 %v3212, 4294901760
    %3214 = vmatpush.msra.mxu0 %v3213
    %v3215 = vand.u32 %v142, 4294901760
    %v3216 = vsub.f32 %v142, %v3215
    %v3217 = vand.u32 %v3216, 4294901760
    %3218 = vmatpush.msra.mxu0 %v3217
    %v3219 = vand.u32 %v138, 4294901760
    %v3220 = vsub.f32 %v138, %v3219
    %v3221 = vand.u32 %v3220, 4294901760
    %3222 = vmatpush.msra.mxu0 %v3221
    %v3223 = vand.u32 %v134, 4294901760
    %v3224 = vsub.f32 %v134, %v3223
    %v3225 = vand.u32 %v3224, 4294901760
    %3226 = vmatpush.msra.mxu0 %v3225
    %v3227 = vand.u32 %v130, 4294901760
    %v3228 = vsub.f32 %v130, %v3227
    %v3229 = vand.u32 %v3228, 4294901760
    %3230 = vmatpush.msra.mxu0 %v3229
    %v3231 = vand.u32 %v126, 4294901760
    %v3232 = vsub.f32 %v126, %v3231
    %v3233 = vand.u32 %v3232, 4294901760
    %3234 = vmatpush.msra.mxu0 %v3233
    %v3235 = vand.u32 %v122, 4294901760
    %v3236 = vsub.f32 %v122, %v3235
    %v3237 = vand.u32 %v3236, 4294901760
    %3238 = vmatpush.msra.mxu0 %v3237
    %v3239 = vand.u32 %v118, 4294901760
    %v3240 = vsub.f32 %v118, %v3239
    %v3241 = vand.u32 %v3240, 4294901760
    %3242 = vmatpush.msra.mxu0 %v3241
    %v3243 = vand.u32 %v114, 4294901760
    %v3244 = vsub.f32 %v114, %v3243
    %v3245 = vand.u32 %v3244, 4294901760
    %3246 = vmatpush.msra.mxu0 %v3245
    %v3247 = vand.u32 %v95, 4294901760
    %3248 = vmatmul.f32.gmra.mxu0 %v3247
    %v3249 = vpop.f32.mrf.mxu0
    %v3250 = vadd.f32 %v3091, %v3249
    %v3251 = vand.u32 %v96, 4294901760
    %3252 = vmatmul.f32.gmra.mxu0 %v3251
    %v3253 = vpop.f32.mrf.mxu0
    %v3254 = vadd.f32 %v3097, %v3253
    %v3255 = vand.u32 %v97, 4294901760
    %3256 = vmatmul.f32.gmra.mxu0 %v3255
    %v3257 = vpop.f32.mrf.mxu0
    %v3258 = vadd.f32 %v3103, %v3257
    %v3259 = vand.u32 %v98, 4294901760
    %3260 = vmatmul.f32.gmra.mxu0 %v3259
    %v3261 = vpop.f32.mrf.mxu0
    %v3262 = vadd.f32 %v3109, %v3261
    %v3263 = vand.u32 %v99, 4294901760
    %3264 = vmatmul.f32.gmra.mxu0 %v3263
    %v3265 = vpop.f32.mrf.mxu0
    %v3266 = vadd.f32 %v3115, %v3265
    %v3267 = vand.u32 %v100, 4294901760
    %3268 = vmatmul.f32.gmra.mxu0 %v3267
    %v3269 = vpop.f32.mrf.mxu0
    %v3270 = vadd.f32 %v3121, %v3269
    %v3271 = vand.u32 %v101, 4294901760
    %3272 = vmatmul.f32.gmra.mxu0 %v3271
    %v3273 = vpop.f32.mrf.mxu0
    %v3274 = vadd.f32 %v3127, %v3273
    %v3275 = vand.u32 %v102, 4294901760
    %3276 = vmatmul.f32.gmra.mxu0 %v3275
    %v3277 = vpop.f32.mrf.mxu0
    %v3278 = vadd.f32 %v3133, %v3277
    %v3279 = vand.u32 %v103, 4294901760
    %3280 = vmatmul.f32.gmra.mxu0 %v3279
    %v3281 = vpop.f32.mrf.mxu0
    %v3282 = vadd.f32 %v3139, %v3281
    %v3283 = vand.u32 %v104, 4294901760
    %3284 = vmatmul.f32.gmra.mxu0 %v3283
    %v3285 = vpop.f32.mrf.mxu0
    %v3286 = vadd.f32 %v3145, %v3285
    %v3287 = vand.u32 %v105, 4294901760
    %3288 = vmatmul.f32.gmra.mxu0 %v3287
    %v3289 = vpop.f32.mrf.mxu0
    %v3290 = vadd.f32 %v3151, %v3289
    %v3291 = vand.u32 %v106, 4294901760
    %3292 = vmatmul.f32.gmra.mxu0 %v3291
    %v3293 = vpop.f32.mrf.mxu0
    %v3294 = vadd.f32 %v3157, %v3293
    %v3295 = vand.u32 %v107, 4294901760
    %3296 = vmatmul.f32.gmra.mxu0 %v3295
    %v3297 = vpop.f32.mrf.mxu0
    %v3298 = vadd.f32 %v3163, %v3297
    %v3299 = vand.u32 %v108, 4294901760
    %3300 = vmatmul.f32.gmra.mxu0 %v3299
    %v3301 = vpop.f32.mrf.mxu0
    %v3302 = vadd.f32 %v3169, %v3301
    %v3303 = vand.u32 %v109, 4294901760
    %3304 = vmatmul.f32.gmra.mxu0 %v3303
    %v3305 = vpop.f32.mrf.mxu0
    %v3306 = vadd.f32 %v3175, %v3305
    %v3307 = vand.u32 %v110, 4294901760
    %3308 = vmatmul.f32.gmra.mxu0 %v3307
    %v3309 = vpop.f32.mrf.mxu0
    %v3310 = vadd.f32 %v3181, %v3309
    %3311 = vdwg.mxu0
    %v3312 = vand.u32 %v174, 4294901760
    %3313 = vmatpush.msra.mxu0 %v3312
    %v3314 = vand.u32 %v170, 4294901760
    %3315 = vmatpush.msra.mxu0 %v3314
    %v3316 = vand.u32 %v166, 4294901760
    %3317 = vmatpush.msra.mxu0 %v3316
    %v3318 = vand.u32 %v162, 4294901760
    %3319 = vmatpush.msra.mxu0 %v3318
    %v3320 = vand.u32 %v158, 4294901760
    %3321 = vmatpush.msra.mxu0 %v3320
    %v3322 = vand.u32 %v154, 4294901760
    %3323 = vmatpush.msra.mxu0 %v3322
    %v3324 = vand.u32 %v150, 4294901760
    %3325 = vmatpush.msra.mxu0 %v3324
    %v3326 = vand.u32 %v146, 4294901760
    %3327 = vmatpush.msra.mxu0 %v3326
    %v3328 = vand.u32 %v142, 4294901760
    %3329 = vmatpush.msra.mxu0 %v3328
    %v3330 = vand.u32 %v138, 4294901760
    %3331 = vmatpush.msra.mxu0 %v3330
    %v3332 = vand.u32 %v134, 4294901760
    %3333 = vmatpush.msra.mxu0 %v3332
    %v3334 = vand.u32 %v130, 4294901760
    %3335 = vmatpush.msra.mxu0 %v3334
    %v3336 = vand.u32 %v126, 4294901760
    %3337 = vmatpush.msra.mxu0 %v3336
    %v3338 = vand.u32 %v122, 4294901760
    %3339 = vmatpush.msra.mxu0 %v3338
    %v3340 = vand.u32 %v118, 4294901760
    %3341 = vmatpush.msra.mxu0 %v3340
    %v3342 = vand.u32 %v114, 4294901760
    %3343 = vmatpush.msra.mxu0 %v3342
    %v3344 = vand.u32 %v95, 4294901760
    %3345 = vmatmul.f32.gmra.mxu0 %v3344
    %v3346 = vpop.f32.mrf.mxu0
    %v3347 = vadd.f32 %v3250, %v3346
    %v3348 = vand.u32 %v96, 4294901760
    %3349 = vmatmul.f32.gmra.mxu0 %v3348
    %v3350 = vpop.f32.mrf.mxu0
    %v3351 = vadd.f32 %v3254, %v3350
    %v3352 = vand.u32 %v97, 4294901760
    %3353 = vmatmul.f32.gmra.mxu0 %v3352
    %v3354 = vpop.f32.mrf.mxu0
    %v3355 = vadd.f32 %v3258, %v3354
    %v3356 = vand.u32 %v98, 4294901760
    %3357 = vmatmul.f32.gmra.mxu0 %v3356
    %v3358 = vpop.f32.mrf.mxu0
    %v3359 = vadd.f32 %v3262, %v3358
    %v3360 = vand.u32 %v99, 4294901760
    %3361 = vmatmul.f32.gmra.mxu0 %v3360
    %v3362 = vpop.f32.mrf.mxu0
    %v3363 = vadd.f32 %v3266, %v3362
    %v3364 = vand.u32 %v100, 4294901760
    %3365 = vmatmul.f32.gmra.mxu0 %v3364
    %v3366 = vpop.f32.mrf.mxu0
    %v3367 = vadd.f32 %v3270, %v3366
    %v3368 = vand.u32 %v101, 4294901760
    %3369 = vmatmul.f32.gmra.mxu0 %v3368
    %v3370 = vpop.f32.mrf.mxu0
    %v3371 = vadd.f32 %v3274, %v3370
    %v3372 = vand.u32 %v102, 4294901760
    %3373 = vmatmul.f32.gmra.mxu0 %v3372
    %v3374 = vpop.f32.mrf.mxu0
    %v3375 = vadd.f32 %v3278, %v3374
    %v3376 = vand.u32 %v103, 4294901760
    %3377 = vmatmul.f32.gmra.mxu0 %v3376
    %v3378 = vpop.f32.mrf.mxu0
    %v3379 = vadd.f32 %v3282, %v3378
    %v3380 = vand.u32 %v104, 4294901760
    %3381 = vmatmul.f32.gmra.mxu0 %v3380
    %v3382 = vpop.f32.mrf.mxu0
    %v3383 = vadd.f32 %v3286, %v3382
    %v3384 = vand.u32 %v105, 4294901760
    %3385 = vmatmul.f32.gmra.mxu0 %v3384
    %v3386 = vpop.f32.mrf.mxu0
    %v3387 = vadd.f32 %v3290, %v3386
    %v3388 = vand.u32 %v106, 4294901760
    %3389 = vmatmul.f32.gmra.mxu0 %v3388
    %v3390 = vpop.f32.mrf.mxu0
    %v3391 = vadd.f32 %v3294, %v3390
    %v3392 = vand.u32 %v107, 4294901760
    %3393 = vmatmul.f32.gmra.mxu0 %v3392
    %v3394 = vpop.f32.mrf.mxu0
    %v3395 = vadd.f32 %v3298, %v3394
    %v3396 = vand.u32 %v108, 4294901760
    %3397 = vmatmul.f32.gmra.mxu0 %v3396
    %v3398 = vpop.f32.mrf.mxu0
    %v3399 = vadd.f32 %v3302, %v3398
    %v3400 = vand.u32 %v109, 4294901760
    %3401 = vmatmul.f32.gmra.mxu0 %v3400
    %v3402 = vpop.f32.mrf.mxu0
    %v3403 = vadd.f32 %v3306, %v3402
    %v3404 = vand.u32 %v110, 4294901760
    %3405 = vmatmul.f32.gmra.mxu0 %v3404
    %v3406 = vpop.f32.mrf.mxu0
    %v3407 = vadd.f32 %v3310, %v3406
    %3408 = vdwg.mxu0
    %v3409 = vlaneseq
    %v3410 = vand.u32 %v3409, 127
    %3411 = vmin.xlane.f32.xlu0 %v929
    %v3412 = vpop.xlane.xlu0 %3411
    %3413 = vmin.xlane.f32.xlu0 %v933
    %v3414 = vpop.xlane.xlu0 %3413
    %3415 = vmin.xlane.f32.xlu0 %v937
    %v3416 = vpop.xlane.xlu0 %3415
    %3417 = vmin.xlane.f32.xlu0 %v941
    %v3418 = vpop.xlane.xlu0 %3417
    %3419 = vmin.xlane.f32.xlu0 %v945
    %v3420 = vpop.xlane.xlu0 %3419
    %3421 = vmin.xlane.f32.xlu0 %v949
    %v3422 = vpop.xlane.xlu0 %3421
    %3423 = vmin.xlane.f32.xlu0 %v953
    %v3424 = vpop.xlane.xlu0 %3423
    %3425 = vmin.xlane.f32.xlu0 %v957
    %v3426 = vpop.xlane.xlu0 %3425
    %3427 = vmin.xlane.f32.xlu0 %v961
    %v3428 = vpop.xlane.xlu0 %3427
    %3429 = vmin.xlane.f32.xlu0 %v965
    %v3430 = vpop.xlane.xlu0 %3429
    %3431 = vmin.xlane.f32.xlu0 %v969
    %v3432 = vpop.xlane.xlu0 %3431
    %3433 = vmin.xlane.f32.xlu0 %v973
    %v3434 = vpop.xlane.xlu0 %3433
    %3435 = vmin.xlane.f32.xlu0 %v977
    %v3436 = vpop.xlane.xlu0 %3435
    %3437 = vmin.xlane.f32.xlu0 %v981
    %v3438 = vpop.xlane.xlu0 %3437
    %3439 = vmin.xlane.f32.xlu0 %v985
    %v3440 = vpop.xlane.xlu0 %3439
    %3441 = vmin.xlane.f32.xlu0 %v989
    %v3442 = vpop.xlane.xlu0 %3441
    %vm3443 = vcmp.le.f32.partialorder %v929, %v3412
    %vm3444 = vcmp.le.f32.partialorder %v933, %v3414
    %vm3445 = vcmp.le.f32.partialorder %v937, %v3416
    %vm3446 = vcmp.le.f32.partialorder %v941, %v3418
    %vm3447 = vcmp.le.f32.partialorder %v945, %v3420
    %vm3448 = vcmp.le.f32.partialorder %v949, %v3422
    %vm3449 = vcmp.le.f32.partialorder %v953, %v3424
    %vm3450 = vcmp.le.f32.partialorder %v957, %v3426
    %vm3451 = vcmp.le.f32.partialorder %v961, %v3428
    %vm3452 = vcmp.le.f32.partialorder %v965, %v3430
    %vm3453 = vcmp.le.f32.partialorder %v969, %v3432
    %vm3454 = vcmp.le.f32.partialorder %v973, %v3434
    %vm3455 = vcmp.le.f32.partialorder %v977, %v3436
    %vm3456 = vcmp.le.f32.partialorder %v981, %v3438
    %vm3457 = vcmp.le.f32.partialorder %v985, %v3440
    %vm3458 = vcmp.le.f32.partialorder %v989, %v3442
    %v3459 = vsel %vm3443, %v3410, 128
    %v3460 = vsel %vm3444, %v3410, 128
    %v3461 = vsel %vm3445, %v3410, 128
    %v3462 = vsel %vm3446, %v3410, 128
    %v3463 = vsel %vm3447, %v3410, 128
    %v3464 = vsel %vm3448, %v3410, 128
    %v3465 = vsel %vm3449, %v3410, 128
    %v3466 = vsel %vm3450, %v3410, 128
    %v3467 = vsel %vm3451, %v3410, 128
    %v3468 = vsel %vm3452, %v3410, 128
    %v3469 = vsel %vm3453, %v3410, 128
    %v3470 = vsel %vm3454, %v3410, 128
    %v3471 = vsel %vm3455, %v3410, 128
    %v3472 = vsel %vm3456, %v3410, 128
    %v3473 = vsel %vm3457, %v3410, 128
    %v3474 = vsel %vm3458, %v3410, 128
    %v3475 = vand.u32 %v3459, 65535
    %v3476 = vshra.s32 %v3459, 16
    %v3477 = vcvt.s32.f32 %v3475
    %v3478 = vcvt.s32.f32 %v3476
    %3479 = vmin.xlane.f32.xlu0 %v3478
    %v3480 = vpop.xlane.xlu0 %3479
    %vm3481 = vcmp.eq.f32.partialorder %v3478, %v3480
    %v3482 = vsel %vm3481, %v3477, inf
    %3483 = vmin.xlane.f32.xlu0 %v3482
    %v3484 = vpop.xlane.xlu0 %3483
    %v3485 = vcvt.f32.s32 %v3484
    %v3486 = vcvt.f32.s32 %v3480
    %v3487 = vshll.u32 %v3486, 16
    %v3488 = vadd.s32 %v3487, %v3485
    %v3489 = vand.u32 %v3460, 65535
    %v3490 = vshra.s32 %v3460, 16
    %v3491 = vcvt.s32.f32 %v3489
    %v3492 = vcvt.s32.f32 %v3490
    %3493 = vmin.xlane.f32.xlu0 %v3492
    %v3494 = vpop.xlane.xlu0 %3493
    %vm3495 = vcmp.eq.f32.partialorder %v3492, %v3494
    %v3496 = vsel %vm3495, %v3491, inf
    %3497 = vmin.xlane.f32.xlu0 %v3496
    %v3498 = vpop.xlane.xlu0 %3497
    %v3499 = vcvt.f32.s32 %v3498
    %v3500 = vcvt.f32.s32 %v3494
    %v3501 = vshll.u32 %v3500, 16
    %v3502 = vadd.s32 %v3501, %v3499
    %v3503 = vand.u32 %v3461, 65535
    %v3504 = vshra.s32 %v3461, 16
    %v3505 = vcvt.s32.f32 %v3503
    %v3506 = vcvt.s32.f32 %v3504
    %3507 = vmin.xlane.f32.xlu0 %v3506
    %v3508 = vpop.xlane.xlu0 %3507
    %vm3509 = vcmp.eq.f32.partialorder %v3506, %v3508
    %v3510 = vsel %vm3509, %v3505, inf
    %3511 = vmin.xlane.f32.xlu0 %v3510
    %v3512 = vpop.xlane.xlu0 %3511
    %v3513 = vcvt.f32.s32 %v3512
    %v3514 = vcvt.f32.s32 %v3508
    %v3515 = vshll.u32 %v3514, 16
    %v3516 = vadd.s32 %v3515, %v3513
    %v3517 = vand.u32 %v3462, 65535
    %v3518 = vshra.s32 %v3462, 16
    %v3519 = vcvt.s32.f32 %v3517
    %v3520 = vcvt.s32.f32 %v3518
    %3521 = vmin.xlane.f32.xlu0 %v3520
    %v3522 = vpop.xlane.xlu0 %3521
    %vm3523 = vcmp.eq.f32.partialorder %v3520, %v3522
    %v3524 = vsel %vm3523, %v3519, inf
    %3525 = vmin.xlane.f32.xlu0 %v3524
    %v3526 = vpop.xlane.xlu0 %3525
    %v3527 = vcvt.f32.s32 %v3526
    %v3528 = vcvt.f32.s32 %v3522
    %v3529 = vshll.u32 %v3528, 16
    %v3530 = vadd.s32 %v3529, %v3527
    %v3531 = vand.u32 %v3463, 65535
    %v3532 = vshra.s32 %v3463, 16
    %v3533 = vcvt.s32.f32 %v3531
    %v3534 = vcvt.s32.f32 %v3532
    %3535 = vmin.xlane.f32.xlu0 %v3534
    %v3536 = vpop.xlane.xlu0 %3535
    %vm3537 = vcmp.eq.f32.partialorder %v3534, %v3536
    %v3538 = vsel %vm3537, %v3533, inf
    %3539 = vmin.xlane.f32.xlu0 %v3538
    %v3540 = vpop.xlane.xlu0 %3539
    %v3541 = vcvt.f32.s32 %v3540
    %v3542 = vcvt.f32.s32 %v3536
    %v3543 = vshll.u32 %v3542, 16
    %v3544 = vadd.s32 %v3543, %v3541
    %v3545 = vand.u32 %v3464, 65535
    %v3546 = vshra.s32 %v3464, 16
    %v3547 = vcvt.s32.f32 %v3545
    %v3548 = vcvt.s32.f32 %v3546
    %3549 = vmin.xlane.f32.xlu0 %v3548
    %v3550 = vpop.xlane.xlu0 %3549
    %vm3551 = vcmp.eq.f32.partialorder %v3548, %v3550
    %v3552 = vsel %vm3551, %v3547, inf
    %3553 = vmin.xlane.f32.xlu0 %v3552
    %v3554 = vpop.xlane.xlu0 %3553
    %v3555 = vcvt.f32.s32 %v3554
    %v3556 = vcvt.f32.s32 %v3550
    %v3557 = vshll.u32 %v3556, 16
    %v3558 = vadd.s32 %v3557, %v3555
    %v3559 = vand.u32 %v3465, 65535
    %v3560 = vshra.s32 %v3465, 16
    %v3561 = vcvt.s32.f32 %v3559
    %v3562 = vcvt.s32.f32 %v3560
    %3563 = vmin.xlane.f32.xlu0 %v3562
    %v3564 = vpop.xlane.xlu0 %3563
    %vm3565 = vcmp.eq.f32.partialorder %v3562, %v3564
    %v3566 = vsel %vm3565, %v3561, inf
    %3567 = vmin.xlane.f32.xlu0 %v3566
    %v3568 = vpop.xlane.xlu0 %3567
    %v3569 = vcvt.f32.s32 %v3568
    %v3570 = vcvt.f32.s32 %v3564
    %v3571 = vshll.u32 %v3570, 16
    %v3572 = vadd.s32 %v3571, %v3569
    %v3573 = vand.u32 %v3466, 65535
    %v3574 = vshra.s32 %v3466, 16
    %v3575 = vcvt.s32.f32 %v3573
    %v3576 = vcvt.s32.f32 %v3574
    %3577 = vmin.xlane.f32.xlu0 %v3576
    %v3578 = vpop.xlane.xlu0 %3577
    %vm3579 = vcmp.eq.f32.partialorder %v3576, %v3578
    %v3580 = vsel %vm3579, %v3575, inf
    %3581 = vmin.xlane.f32.xlu0 %v3580
    %v3582 = vpop.xlane.xlu0 %3581
    %v3583 = vcvt.f32.s32 %v3582
    %v3584 = vcvt.f32.s32 %v3578
    %v3585 = vshll.u32 %v3584, 16
    %v3586 = vadd.s32 %v3585, %v3583
    %v3587 = vand.u32 %v3467, 65535
    %v3588 = vshra.s32 %v3467, 16
    %v3589 = vcvt.s32.f32 %v3587
    %v3590 = vcvt.s32.f32 %v3588
    %3591 = vmin.xlane.f32.xlu0 %v3590
    %v3592 = vpop.xlane.xlu0 %3591
    %vm3593 = vcmp.eq.f32.partialorder %v3590, %v3592
    %v3594 = vsel %vm3593, %v3589, inf
    %3595 = vmin.xlane.f32.xlu0 %v3594
    %v3596 = vpop.xlane.xlu0 %3595
    %v3597 = vcvt.f32.s32 %v3596
    %v3598 = vcvt.f32.s32 %v3592
    %v3599 = vshll.u32 %v3598, 16
    %v3600 = vadd.s32 %v3599, %v3597
    %v3601 = vand.u32 %v3468, 65535
    %v3602 = vshra.s32 %v3468, 16
    %v3603 = vcvt.s32.f32 %v3601
    %v3604 = vcvt.s32.f32 %v3602
    %3605 = vmin.xlane.f32.xlu0 %v3604
    %v3606 = vpop.xlane.xlu0 %3605
    %vm3607 = vcmp.eq.f32.partialorder %v3604, %v3606
    %v3608 = vsel %vm3607, %v3603, inf
    %3609 = vmin.xlane.f32.xlu0 %v3608
    %v3610 = vpop.xlane.xlu0 %3609
    %v3611 = vcvt.f32.s32 %v3610
    %v3612 = vcvt.f32.s32 %v3606
    %v3613 = vshll.u32 %v3612, 16
    %v3614 = vadd.s32 %v3613, %v3611
    %v3615 = vand.u32 %v3469, 65535
    %v3616 = vshra.s32 %v3469, 16
    %v3617 = vcvt.s32.f32 %v3615
    %v3618 = vcvt.s32.f32 %v3616
    %3619 = vmin.xlane.f32.xlu0 %v3618
    %v3620 = vpop.xlane.xlu0 %3619
    %vm3621 = vcmp.eq.f32.partialorder %v3618, %v3620
    %v3622 = vsel %vm3621, %v3617, inf
    %3623 = vmin.xlane.f32.xlu0 %v3622
    %v3624 = vpop.xlane.xlu0 %3623
    %v3625 = vcvt.f32.s32 %v3624
    %v3626 = vcvt.f32.s32 %v3620
    %v3627 = vshll.u32 %v3626, 16
    %v3628 = vadd.s32 %v3627, %v3625
    %v3629 = vand.u32 %v3470, 65535
    %v3630 = vshra.s32 %v3470, 16
    %v3631 = vcvt.s32.f32 %v3629
    %v3632 = vcvt.s32.f32 %v3630
    %3633 = vmin.xlane.f32.xlu0 %v3632
    %v3634 = vpop.xlane.xlu0 %3633
    %vm3635 = vcmp.eq.f32.partialorder %v3632, %v3634
    %v3636 = vsel %vm3635, %v3631, inf
    %3637 = vmin.xlane.f32.xlu0 %v3636
    %v3638 = vpop.xlane.xlu0 %3637
    %v3639 = vcvt.f32.s32 %v3638
    %v3640 = vcvt.f32.s32 %v3634
    %v3641 = vshll.u32 %v3640, 16
    %v3642 = vadd.s32 %v3641, %v3639
    %v3643 = vand.u32 %v3471, 65535
    %v3644 = vshra.s32 %v3471, 16
    %v3645 = vcvt.s32.f32 %v3643
    %v3646 = vcvt.s32.f32 %v3644
    %3647 = vmin.xlane.f32.xlu0 %v3646
    %v3648 = vpop.xlane.xlu0 %3647
    %vm3649 = vcmp.eq.f32.partialorder %v3646, %v3648
    %v3650 = vsel %vm3649, %v3645, inf
    %3651 = vmin.xlane.f32.xlu0 %v3650
    %v3652 = vpop.xlane.xlu0 %3651
    %v3653 = vcvt.f32.s32 %v3652
    %v3654 = vcvt.f32.s32 %v3648
    %v3655 = vshll.u32 %v3654, 16
    %v3656 = vadd.s32 %v3655, %v3653
    %v3657 = vand.u32 %v3472, 65535
    %v3658 = vshra.s32 %v3472, 16
    %v3659 = vcvt.s32.f32 %v3657
    %v3660 = vcvt.s32.f32 %v3658
    %3661 = vmin.xlane.f32.xlu0 %v3660
    %v3662 = vpop.xlane.xlu0 %3661
    %vm3663 = vcmp.eq.f32.partialorder %v3660, %v3662
    %v3664 = vsel %vm3663, %v3659, inf
    %3665 = vmin.xlane.f32.xlu0 %v3664
    %v3666 = vpop.xlane.xlu0 %3665
    %v3667 = vcvt.f32.s32 %v3666
    %v3668 = vcvt.f32.s32 %v3662
    %v3669 = vshll.u32 %v3668, 16
    %v3670 = vadd.s32 %v3669, %v3667
    %v3671 = vand.u32 %v3473, 65535
    %v3672 = vshra.s32 %v3473, 16
    %v3673 = vcvt.s32.f32 %v3671
    %v3674 = vcvt.s32.f32 %v3672
    %3675 = vmin.xlane.f32.xlu0 %v3674
    %v3676 = vpop.xlane.xlu0 %3675
    %vm3677 = vcmp.eq.f32.partialorder %v3674, %v3676
    %v3678 = vsel %vm3677, %v3673, inf
    %3679 = vmin.xlane.f32.xlu0 %v3678
    %v3680 = vpop.xlane.xlu0 %3679
    %v3681 = vcvt.f32.s32 %v3680
    %v3682 = vcvt.f32.s32 %v3676
    %v3683 = vshll.u32 %v3682, 16
    %v3684 = vadd.s32 %v3683, %v3681
    %v3685 = vand.u32 %v3474, 65535
    %v3686 = vshra.s32 %v3474, 16
    %v3687 = vcvt.s32.f32 %v3685
    %v3688 = vcvt.s32.f32 %v3686
    %3689 = vmin.xlane.f32.xlu0 %v3688
    %v3690 = vpop.xlane.xlu0 %3689
    %vm3691 = vcmp.eq.f32.partialorder %v3688, %v3690
    %v3692 = vsel %vm3691, %v3687, inf
    %3693 = vmin.xlane.f32.xlu0 %v3692
    %v3694 = vpop.xlane.xlu0 %3693
    %v3695 = vcvt.f32.s32 %v3694
    %v3696 = vcvt.f32.s32 %v3690
    %v3697 = vshll.u32 %v3696, 16
    %v3698 = vadd.s32 %v3697, %v3695
    %vm3699 = vcmp.eq.s32.totalorder %v3410, %v3488
    %vm3700 = vcmp.eq.s32.totalorder %v3410, %v3502
    %vm3701 = vcmp.eq.s32.totalorder %v3410, %v3516
    %vm3702 = vcmp.eq.s32.totalorder %v3410, %v3530
    %vm3703 = vcmp.eq.s32.totalorder %v3410, %v3544
    %vm3704 = vcmp.eq.s32.totalorder %v3410, %v3558
    %vm3705 = vcmp.eq.s32.totalorder %v3410, %v3572
    %vm3706 = vcmp.eq.s32.totalorder %v3410, %v3586
    %vm3707 = vcmp.eq.s32.totalorder %v3410, %v3600
    %vm3708 = vcmp.eq.s32.totalorder %v3410, %v3614
    %vm3709 = vcmp.eq.s32.totalorder %v3410, %v3628
    %vm3710 = vcmp.eq.s32.totalorder %v3410, %v3642
    %vm3711 = vcmp.eq.s32.totalorder %v3410, %v3656
    %vm3712 = vcmp.eq.s32.totalorder %v3410, %v3670
    %vm3713 = vcmp.eq.s32.totalorder %v3410, %v3684
    %vm3714 = vcmp.eq.s32.totalorder %v3410, %v3698
    %v3715 = vsel %vm3699, 1, 0
    %v3716 = vsel %vm3700, 1, 0
    %v3717 = vsel %vm3701, 1, 0
    %v3718 = vsel %vm3702, 1, 0
    %v3719 = vsel %vm3703, 1, 0
    %v3720 = vsel %vm3704, 1, 0
    %v3721 = vsel %vm3705, 1, 0
    %v3722 = vsel %vm3706, 1, 0
    %v3723 = vsel %vm3707, 1, 0
    %v3724 = vsel %vm3708, 1, 0
    %v3725 = vsel %vm3709, 1, 0
    %v3726 = vsel %vm3710, 1, 0
    %v3727 = vsel %vm3711, 1, 0
    %v3728 = vsel %vm3712, 1, 0
    %v3729 = vsel %vm3713, 1, 0
    %v3730 = vsel %vm3714, 1, 0
    %v3731 = vcvt.s32.f32 %v3715
    %v3732 = vcvt.s32.f32 %v3716
    %v3733 = vcvt.s32.f32 %v3717
    %v3734 = vcvt.s32.f32 %v3718
    %v3735 = vcvt.s32.f32 %v3719
    %v3736 = vcvt.s32.f32 %v3720
    %v3737 = vcvt.s32.f32 %v3721
    %v3738 = vcvt.s32.f32 %v3722
    %v3739 = vcvt.s32.f32 %v3723
    %v3740 = vcvt.s32.f32 %v3724
    %v3741 = vcvt.s32.f32 %v3725
    %v3742 = vcvt.s32.f32 %v3726
    %v3743 = vcvt.s32.f32 %v3727
    %v3744 = vcvt.s32.f32 %v3728
    %v3745 = vcvt.s32.f32 %v3729
    %v3746 = vcvt.s32.f32 %v3730
    %3747 = vmin.xlane.f32.xlu0 %v1735
    %v3748 = vpop.xlane.xlu0 %3747
    %3749 = vmin.xlane.f32.xlu0 %v1739
    %v3750 = vpop.xlane.xlu0 %3749
    %3751 = vmin.xlane.f32.xlu0 %v1743
    %v3752 = vpop.xlane.xlu0 %3751
    %3753 = vmin.xlane.f32.xlu0 %v1747
    %v3754 = vpop.xlane.xlu0 %3753
    %3755 = vmin.xlane.f32.xlu0 %v1751
    %v3756 = vpop.xlane.xlu0 %3755
    %3757 = vmin.xlane.f32.xlu0 %v1755
    %v3758 = vpop.xlane.xlu0 %3757
    %3759 = vmin.xlane.f32.xlu0 %v1759
    %v3760 = vpop.xlane.xlu0 %3759
    %3761 = vmin.xlane.f32.xlu0 %v1763
    %v3762 = vpop.xlane.xlu0 %3761
    %3763 = vmin.xlane.f32.xlu0 %v1767
    %v3764 = vpop.xlane.xlu0 %3763
    %3765 = vmin.xlane.f32.xlu0 %v1771
    %v3766 = vpop.xlane.xlu0 %3765
    %3767 = vmin.xlane.f32.xlu0 %v1775
    %v3768 = vpop.xlane.xlu0 %3767
    %3769 = vmin.xlane.f32.xlu0 %v1779
    %v3770 = vpop.xlane.xlu0 %3769
    %3771 = vmin.xlane.f32.xlu0 %v1783
    %v3772 = vpop.xlane.xlu0 %3771
    %3773 = vmin.xlane.f32.xlu0 %v1787
    %v3774 = vpop.xlane.xlu0 %3773
    %3775 = vmin.xlane.f32.xlu0 %v1791
    %v3776 = vpop.xlane.xlu0 %3775
    %3777 = vmin.xlane.f32.xlu0 %v1795
    %v3778 = vpop.xlane.xlu0 %3777
    %vm3779 = vcmp.le.f32.partialorder %v1735, %v3748
    %vm3780 = vcmp.le.f32.partialorder %v1739, %v3750
    %vm3781 = vcmp.le.f32.partialorder %v1743, %v3752
    %vm3782 = vcmp.le.f32.partialorder %v1747, %v3754
    %vm3783 = vcmp.le.f32.partialorder %v1751, %v3756
    %vm3784 = vcmp.le.f32.partialorder %v1755, %v3758
    %vm3785 = vcmp.le.f32.partialorder %v1759, %v3760
    %vm3786 = vcmp.le.f32.partialorder %v1763, %v3762
    %vm3787 = vcmp.le.f32.partialorder %v1767, %v3764
    %vm3788 = vcmp.le.f32.partialorder %v1771, %v3766
    %vm3789 = vcmp.le.f32.partialorder %v1775, %v3768
    %vm3790 = vcmp.le.f32.partialorder %v1779, %v3770
    %vm3791 = vcmp.le.f32.partialorder %v1783, %v3772
    %vm3792 = vcmp.le.f32.partialorder %v1787, %v3774
    %vm3793 = vcmp.le.f32.partialorder %v1791, %v3776
    %vm3794 = vcmp.le.f32.partialorder %v1795, %v3778
    %v3795 = vsel %vm3779, %v3410, 128
    %v3796 = vsel %vm3780, %v3410, 128
    %v3797 = vsel %vm3781, %v3410, 128
    %v3798 = vsel %vm3782, %v3410, 128
    %v3799 = vsel %vm3783, %v3410, 128
    %v3800 = vsel %vm3784, %v3410, 128
    %v3801 = vsel %vm3785, %v3410, 128
    %v3802 = vsel %vm3786, %v3410, 128
    %v3803 = vsel %vm3787, %v3410, 128
    %v3804 = vsel %vm3788, %v3410, 128
    %v3805 = vsel %vm3789, %v3410, 128
    %v3806 = vsel %vm3790, %v3410, 128
    %v3807 = vsel %vm3791, %v3410, 128
    %v3808 = vsel %vm3792, %v3410, 128
    %v3809 = vsel %vm3793, %v3410, 128
    %v3810 = vsel %vm3794, %v3410, 128
    %v3811 = vand.u32 %v3795, 65535
    %v3812 = vshra.s32 %v3795, 16
    %v3813 = vcvt.s32.f32 %v3811
    %v3814 = vcvt.s32.f32 %v3812
    %3815 = vmin.xlane.f32.xlu0 %v3814
    %v3816 = vpop.xlane.xlu0 %3815
    %vm3817 = vcmp.eq.f32.partialorder %v3814, %v3816
    %v3818 = vsel %vm3817, %v3813, inf
    %3819 = vmin.xlane.f32.xlu0 %v3818
    %v3820 = vpop.xlane.xlu0 %3819
    %v3821 = vcvt.f32.s32 %v3820
    %v3822 = vcvt.f32.s32 %v3816
    %v3823 = vshll.u32 %v3822, 16
    %v3824 = vadd.s32 %v3823, %v3821
    %v3825 = vand.u32 %v3796, 65535
    %v3826 = vshra.s32 %v3796, 16
    %v3827 = vcvt.s32.f32 %v3825
    %v3828 = vcvt.s32.f32 %v3826
    %3829 = vmin.xlane.f32.xlu0 %v3828
    %v3830 = vpop.xlane.xlu0 %3829
    %vm3831 = vcmp.eq.f32.partialorder %v3828, %v3830
    %v3832 = vsel %vm3831, %v3827, inf
    %3833 = vmin.xlane.f32.xlu0 %v3832
    %v3834 = vpop.xlane.xlu0 %3833
    %v3835 = vcvt.f32.s32 %v3834
    %v3836 = vcvt.f32.s32 %v3830
    %v3837 = vshll.u32 %v3836, 16
    %v3838 = vadd.s32 %v3837, %v3835
    %v3839 = vand.u32 %v3797, 65535
    %v3840 = vshra.s32 %v3797, 16
    %v3841 = vcvt.s32.f32 %v3839
    %v3842 = vcvt.s32.f32 %v3840
    %3843 = vmin.xlane.f32.xlu0 %v3842
    %v3844 = vpop.xlane.xlu0 %3843
    %vm3845 = vcmp.eq.f32.partialorder %v3842, %v3844
    %v3846 = vsel %vm3845, %v3841, inf
    %3847 = vmin.xlane.f32.xlu0 %v3846
    %v3848 = vpop.xlane.xlu0 %3847
    %v3849 = vcvt.f32.s32 %v3848
    %v3850 = vcvt.f32.s32 %v3844
    %v3851 = vshll.u32 %v3850, 16
    %v3852 = vadd.s32 %v3851, %v3849
    %v3853 = vand.u32 %v3798, 65535
    %v3854 = vshra.s32 %v3798, 16
    %v3855 = vcvt.s32.f32 %v3853
    %v3856 = vcvt.s32.f32 %v3854
    %3857 = vmin.xlane.f32.xlu0 %v3856
    %v3858 = vpop.xlane.xlu0 %3857
    %vm3859 = vcmp.eq.f32.partialorder %v3856, %v3858
    %v3860 = vsel %vm3859, %v3855, inf
    %3861 = vmin.xlane.f32.xlu0 %v3860
    %v3862 = vpop.xlane.xlu0 %3861
    %v3863 = vcvt.f32.s32 %v3862
    %v3864 = vcvt.f32.s32 %v3858
    %v3865 = vshll.u32 %v3864, 16
    %v3866 = vadd.s32 %v3865, %v3863
    %v3867 = vand.u32 %v3799, 65535
    %v3868 = vshra.s32 %v3799, 16
    %v3869 = vcvt.s32.f32 %v3867
    %v3870 = vcvt.s32.f32 %v3868
    %3871 = vmin.xlane.f32.xlu0 %v3870
    %v3872 = vpop.xlane.xlu0 %3871
    %vm3873 = vcmp.eq.f32.partialorder %v3870, %v3872
    %v3874 = vsel %vm3873, %v3869, inf
    %3875 = vmin.xlane.f32.xlu0 %v3874
    %v3876 = vpop.xlane.xlu0 %3875
    %v3877 = vcvt.f32.s32 %v3876
    %v3878 = vcvt.f32.s32 %v3872
    %v3879 = vshll.u32 %v3878, 16
    %v3880 = vadd.s32 %v3879, %v3877
    %v3881 = vand.u32 %v3800, 65535
    %v3882 = vshra.s32 %v3800, 16
    %v3883 = vcvt.s32.f32 %v3881
    %v3884 = vcvt.s32.f32 %v3882
    %3885 = vmin.xlane.f32.xlu0 %v3884
    %v3886 = vpop.xlane.xlu0 %3885
    %vm3887 = vcmp.eq.f32.partialorder %v3884, %v3886
    %v3888 = vsel %vm3887, %v3883, inf
    %3889 = vmin.xlane.f32.xlu0 %v3888
    %v3890 = vpop.xlane.xlu0 %3889
    %v3891 = vcvt.f32.s32 %v3890
    %v3892 = vcvt.f32.s32 %v3886
    %v3893 = vshll.u32 %v3892, 16
    %v3894 = vadd.s32 %v3893, %v3891
    %v3895 = vand.u32 %v3801, 65535
    %v3896 = vshra.s32 %v3801, 16
    %v3897 = vcvt.s32.f32 %v3895
    %v3898 = vcvt.s32.f32 %v3896
    %3899 = vmin.xlane.f32.xlu0 %v3898
    %v3900 = vpop.xlane.xlu0 %3899
    %vm3901 = vcmp.eq.f32.partialorder %v3898, %v3900
    %v3902 = vsel %vm3901, %v3897, inf
    %3903 = vmin.xlane.f32.xlu0 %v3902
    %v3904 = vpop.xlane.xlu0 %3903
    %v3905 = vcvt.f32.s32 %v3904
    %v3906 = vcvt.f32.s32 %v3900
    %v3907 = vshll.u32 %v3906, 16
    %v3908 = vadd.s32 %v3907, %v3905
    %v3909 = vand.u32 %v3802, 65535
    %v3910 = vshra.s32 %v3802, 16
    %v3911 = vcvt.s32.f32 %v3909
    %v3912 = vcvt.s32.f32 %v3910
    %3913 = vmin.xlane.f32.xlu0 %v3912
    %v3914 = vpop.xlane.xlu0 %3913
    %vm3915 = vcmp.eq.f32.partialorder %v3912, %v3914
    %v3916 = vsel %vm3915, %v3911, inf
    %3917 = vmin.xlane.f32.xlu0 %v3916
    %v3918 = vpop.xlane.xlu0 %3917
    %v3919 = vcvt.f32.s32 %v3918
    %v3920 = vcvt.f32.s32 %v3914
    %v3921 = vshll.u32 %v3920, 16
    %v3922 = vadd.s32 %v3921, %v3919
    %v3923 = vand.u32 %v3803, 65535
    %v3924 = vshra.s32 %v3803, 16
    %v3925 = vcvt.s32.f32 %v3923
    %v3926 = vcvt.s32.f32 %v3924
    %3927 = vmin.xlane.f32.xlu0 %v3926
    %v3928 = vpop.xlane.xlu0 %3927
    %vm3929 = vcmp.eq.f32.partialorder %v3926, %v3928
    %v3930 = vsel %vm3929, %v3925, inf
    %3931 = vmin.xlane.f32.xlu0 %v3930
    %v3932 = vpop.xlane.xlu0 %3931
    %v3933 = vcvt.f32.s32 %v3932
    %v3934 = vcvt.f32.s32 %v3928
    %v3935 = vshll.u32 %v3934, 16
    %v3936 = vadd.s32 %v3935, %v3933
    %v3937 = vand.u32 %v3804, 65535
    %v3938 = vshra.s32 %v3804, 16
    %v3939 = vcvt.s32.f32 %v3937
    %v3940 = vcvt.s32.f32 %v3938
    %3941 = vmin.xlane.f32.xlu0 %v3940
    %v3942 = vpop.xlane.xlu0 %3941
    %vm3943 = vcmp.eq.f32.partialorder %v3940, %v3942
    %v3944 = vsel %vm3943, %v3939, inf
    %3945 = vmin.xlane.f32.xlu0 %v3944
    %v3946 = vpop.xlane.xlu0 %3945
    %v3947 = vcvt.f32.s32 %v3946
    %v3948 = vcvt.f32.s32 %v3942
    %v3949 = vshll.u32 %v3948, 16
    %v3950 = vadd.s32 %v3949, %v3947
    %v3951 = vand.u32 %v3805, 65535
    %v3952 = vshra.s32 %v3805, 16
    %v3953 = vcvt.s32.f32 %v3951
    %v3954 = vcvt.s32.f32 %v3952
    %3955 = vmin.xlane.f32.xlu0 %v3954
    %v3956 = vpop.xlane.xlu0 %3955
    %vm3957 = vcmp.eq.f32.partialorder %v3954, %v3956
    %v3958 = vsel %vm3957, %v3953, inf
    %3959 = vmin.xlane.f32.xlu0 %v3958
    %v3960 = vpop.xlane.xlu0 %3959
    %v3961 = vcvt.f32.s32 %v3960
    %v3962 = vcvt.f32.s32 %v3956
    %v3963 = vshll.u32 %v3962, 16
    %v3964 = vadd.s32 %v3963, %v3961
    %v3965 = vand.u32 %v3806, 65535
    %v3966 = vshra.s32 %v3806, 16
    %v3967 = vcvt.s32.f32 %v3965
    %v3968 = vcvt.s32.f32 %v3966
    %3969 = vmin.xlane.f32.xlu0 %v3968
    %v3970 = vpop.xlane.xlu0 %3969
    %vm3971 = vcmp.eq.f32.partialorder %v3968, %v3970
    %v3972 = vsel %vm3971, %v3967, inf
    %3973 = vmin.xlane.f32.xlu0 %v3972
    %v3974 = vpop.xlane.xlu0 %3973
    %v3975 = vcvt.f32.s32 %v3974
    %v3976 = vcvt.f32.s32 %v3970
    %v3977 = vshll.u32 %v3976, 16
    %v3978 = vadd.s32 %v3977, %v3975
    %v3979 = vand.u32 %v3807, 65535
    %v3980 = vshra.s32 %v3807, 16
    %v3981 = vcvt.s32.f32 %v3979
    %v3982 = vcvt.s32.f32 %v3980
    %3983 = vmin.xlane.f32.xlu0 %v3982
    %v3984 = vpop.xlane.xlu0 %3983
    %vm3985 = vcmp.eq.f32.partialorder %v3982, %v3984
    %v3986 = vsel %vm3985, %v3981, inf
    %3987 = vmin.xlane.f32.xlu0 %v3986
    %v3988 = vpop.xlane.xlu0 %3987
    %v3989 = vcvt.f32.s32 %v3988
    %v3990 = vcvt.f32.s32 %v3984
    %v3991 = vshll.u32 %v3990, 16
    %v3992 = vadd.s32 %v3991, %v3989
    %v3993 = vand.u32 %v3808, 65535
    %v3994 = vshra.s32 %v3808, 16
    %v3995 = vcvt.s32.f32 %v3993
    %v3996 = vcvt.s32.f32 %v3994
    %3997 = vmin.xlane.f32.xlu0 %v3996
    %v3998 = vpop.xlane.xlu0 %3997
    %vm3999 = vcmp.eq.f32.partialorder %v3996, %v3998
    %v4000 = vsel %vm3999, %v3995, inf
    %4001 = vmin.xlane.f32.xlu0 %v4000
    %v4002 = vpop.xlane.xlu0 %4001
    %v4003 = vcvt.f32.s32 %v4002
    %v4004 = vcvt.f32.s32 %v3998
    %v4005 = vshll.u32 %v4004, 16
    %v4006 = vadd.s32 %v4005, %v4003
    %v4007 = vand.u32 %v3809, 65535
    %v4008 = vshra.s32 %v3809, 16
    %v4009 = vcvt.s32.f32 %v4007
    %v4010 = vcvt.s32.f32 %v4008
    %4011 = vmin.xlane.f32.xlu0 %v4010
    %v4012 = vpop.xlane.xlu0 %4011
    %vm4013 = vcmp.eq.f32.partialorder %v4010, %v4012
    %v4014 = vsel %vm4013, %v4009, inf
    %4015 = vmin.xlane.f32.xlu0 %v4014
    %v4016 = vpop.xlane.xlu0 %4015
    %v4017 = vcvt.f32.s32 %v4016
    %v4018 = vcvt.f32.s32 %v4012
    %v4019 = vshll.u32 %v4018, 16
    %v4020 = vadd.s32 %v4019, %v4017
    %v4021 = vand.u32 %v3810, 65535
    %v4022 = vshra.s32 %v3810, 16
    %v4023 = vcvt.s32.f32 %v4021
    %v4024 = vcvt.s32.f32 %v4022
    %4025 = vmin.xlane.f32.xlu0 %v4024
    %v4026 = vpop.xlane.xlu0 %4025
    %vm4027 = vcmp.eq.f32.partialorder %v4024, %v4026
    %v4028 = vsel %vm4027, %v4023, inf
    %4029 = vmin.xlane.f32.xlu0 %v4028
    %v4030 = vpop.xlane.xlu0 %4029
    %v4031 = vcvt.f32.s32 %v4030
    %v4032 = vcvt.f32.s32 %v4026
    %v4033 = vshll.u32 %v4032, 16
    %v4034 = vadd.s32 %v4033, %v4031
    %vm4035 = vcmp.eq.s32.totalorder %v3410, %v3824
    %vm4036 = vcmp.eq.s32.totalorder %v3410, %v3838
    %vm4037 = vcmp.eq.s32.totalorder %v3410, %v3852
    %vm4038 = vcmp.eq.s32.totalorder %v3410, %v3866
    %vm4039 = vcmp.eq.s32.totalorder %v3410, %v3880
    %vm4040 = vcmp.eq.s32.totalorder %v3410, %v3894
    %vm4041 = vcmp.eq.s32.totalorder %v3410, %v3908
    %vm4042 = vcmp.eq.s32.totalorder %v3410, %v3922
    %vm4043 = vcmp.eq.s32.totalorder %v3410, %v3936
    %vm4044 = vcmp.eq.s32.totalorder %v3410, %v3950
    %vm4045 = vcmp.eq.s32.totalorder %v3410, %v3964
    %vm4046 = vcmp.eq.s32.totalorder %v3410, %v3978
    %vm4047 = vcmp.eq.s32.totalorder %v3410, %v3992
    %vm4048 = vcmp.eq.s32.totalorder %v3410, %v4006
    %vm4049 = vcmp.eq.s32.totalorder %v3410, %v4020
    %vm4050 = vcmp.eq.s32.totalorder %v3410, %v4034
    %v4051 = vsel %vm4035, 1, 0
    %v4052 = vsel %vm4036, 1, 0
    %v4053 = vsel %vm4037, 1, 0
    %v4054 = vsel %vm4038, 1, 0
    %v4055 = vsel %vm4039, 1, 0
    %v4056 = vsel %vm4040, 1, 0
    %v4057 = vsel %vm4041, 1, 0
    %v4058 = vsel %vm4042, 1, 0
    %v4059 = vsel %vm4043, 1, 0
    %v4060 = vsel %vm4044, 1, 0
    %v4061 = vsel %vm4045, 1, 0
    %v4062 = vsel %vm4046, 1, 0
    %v4063 = vsel %vm4047, 1, 0
    %v4064 = vsel %vm4048, 1, 0
    %v4065 = vsel %vm4049, 1, 0
    %v4066 = vsel %vm4050, 1, 0
    %v4067 = vcvt.s32.f32 %v4051
    %v4068 = vcvt.s32.f32 %v4052
    %v4069 = vcvt.s32.f32 %v4053
    %v4070 = vcvt.s32.f32 %v4054
    %v4071 = vcvt.s32.f32 %v4055
    %v4072 = vcvt.s32.f32 %v4056
    %v4073 = vcvt.s32.f32 %v4057
    %v4074 = vcvt.s32.f32 %v4058
    %v4075 = vcvt.s32.f32 %v4059
    %v4076 = vcvt.s32.f32 %v4060
    %v4077 = vcvt.s32.f32 %v4061
    %v4078 = vcvt.s32.f32 %v4062
    %v4079 = vcvt.s32.f32 %v4063
    %v4080 = vcvt.s32.f32 %v4064
    %v4081 = vcvt.s32.f32 %v4065
    %v4082 = vcvt.s32.f32 %v4066
    %4083 = vmin.xlane.f32.xlu0 %v2541
    %v4084 = vpop.xlane.xlu0 %4083
    %4085 = vmin.xlane.f32.xlu0 %v2545
    %v4086 = vpop.xlane.xlu0 %4085
    %4087 = vmin.xlane.f32.xlu0 %v2549
    %v4088 = vpop.xlane.xlu0 %4087
    %4089 = vmin.xlane.f32.xlu0 %v2553
    %v4090 = vpop.xlane.xlu0 %4089
    %4091 = vmin.xlane.f32.xlu0 %v2557
    %v4092 = vpop.xlane.xlu0 %4091
    %4093 = vmin.xlane.f32.xlu0 %v2561
    %v4094 = vpop.xlane.xlu0 %4093
    %4095 = vmin.xlane.f32.xlu0 %v2565
    %v4096 = vpop.xlane.xlu0 %4095
    %4097 = vmin.xlane.f32.xlu0 %v2569
    %v4098 = vpop.xlane.xlu0 %4097
    %4099 = vmin.xlane.f32.xlu0 %v2573
    %v4100 = vpop.xlane.xlu0 %4099
    %4101 = vmin.xlane.f32.xlu0 %v2577
    %v4102 = vpop.xlane.xlu0 %4101
    %4103 = vmin.xlane.f32.xlu0 %v2581
    %v4104 = vpop.xlane.xlu0 %4103
    %4105 = vmin.xlane.f32.xlu0 %v2585
    %v4106 = vpop.xlane.xlu0 %4105
    %4107 = vmin.xlane.f32.xlu0 %v2589
    %v4108 = vpop.xlane.xlu0 %4107
    %4109 = vmin.xlane.f32.xlu0 %v2593
    %v4110 = vpop.xlane.xlu0 %4109
    %4111 = vmin.xlane.f32.xlu0 %v2597
    %v4112 = vpop.xlane.xlu0 %4111
    %4113 = vmin.xlane.f32.xlu0 %v2601
    %v4114 = vpop.xlane.xlu0 %4113
    %vm4115 = vcmp.le.f32.partialorder %v2541, %v4084
    %vm4116 = vcmp.le.f32.partialorder %v2545, %v4086
    %vm4117 = vcmp.le.f32.partialorder %v2549, %v4088
    %vm4118 = vcmp.le.f32.partialorder %v2553, %v4090
    %vm4119 = vcmp.le.f32.partialorder %v2557, %v4092
    %vm4120 = vcmp.le.f32.partialorder %v2561, %v4094
    %vm4121 = vcmp.le.f32.partialorder %v2565, %v4096
    %vm4122 = vcmp.le.f32.partialorder %v2569, %v4098
    %vm4123 = vcmp.le.f32.partialorder %v2573, %v4100
    %vm4124 = vcmp.le.f32.partialorder %v2577, %v4102
    %vm4125 = vcmp.le.f32.partialorder %v2581, %v4104
    %vm4126 = vcmp.le.f32.partialorder %v2585, %v4106
    %vm4127 = vcmp.le.f32.partialorder %v2589, %v4108
    %vm4128 = vcmp.le.f32.partialorder %v2593, %v4110
    %vm4129 = vcmp.le.f32.partialorder %v2597, %v4112
    %vm4130 = vcmp.le.f32.partialorder %v2601, %v4114
    %v4131 = vsel %vm4115, %v3410, 128
    %v4132 = vsel %vm4116, %v3410, 128
    %v4133 = vsel %vm4117, %v3410, 128
    %v4134 = vsel %vm4118, %v3410, 128
    %v4135 = vsel %vm4119, %v3410, 128
    %v4136 = vsel %vm4120, %v3410, 128
    %v4137 = vsel %vm4121, %v3410, 128
    %v4138 = vsel %vm4122, %v3410, 128
    %v4139 = vsel %vm4123, %v3410, 128
    %v4140 = vsel %vm4124, %v3410, 128
    %v4141 = vsel %vm4125, %v3410, 128
    %v4142 = vsel %vm4126, %v3410, 128
    %v4143 = vsel %vm4127, %v3410, 128
    %v4144 = vsel %vm4128, %v3410, 128
    %v4145 = vsel %vm4129, %v3410, 128
    %v4146 = vsel %vm4130, %v3410, 128
    %v4147 = vand.u32 %v4131, 65535
    %v4148 = vshra.s32 %v4131, 16
    %v4149 = vcvt.s32.f32 %v4147
    %v4150 = vcvt.s32.f32 %v4148
    %4151 = vmin.xlane.f32.xlu0 %v4150
    %v4152 = vpop.xlane.xlu0 %4151
    %vm4153 = vcmp.eq.f32.partialorder %v4150, %v4152
    %v4154 = vsel %vm4153, %v4149, inf
    %4155 = vmin.xlane.f32.xlu0 %v4154
    %v4156 = vpop.xlane.xlu0 %4155
    %v4157 = vcvt.f32.s32 %v4156
    %v4158 = vcvt.f32.s32 %v4152
    %v4159 = vshll.u32 %v4158, 16
    %v4160 = vadd.s32 %v4159, %v4157
    %v4161 = vand.u32 %v4132, 65535
    %v4162 = vshra.s32 %v4132, 16
    %v4163 = vcvt.s32.f32 %v4161
    %v4164 = vcvt.s32.f32 %v4162
    %4165 = vmin.xlane.f32.xlu0 %v4164
    %v4166 = vpop.xlane.xlu0 %4165
    %vm4167 = vcmp.eq.f32.partialorder %v4164, %v4166
    %v4168 = vsel %vm4167, %v4163, inf
    %4169 = vmin.xlane.f32.xlu0 %v4168
    %v4170 = vpop.xlane.xlu0 %4169
    %v4171 = vcvt.f32.s32 %v4170
    %v4172 = vcvt.f32.s32 %v4166
    %v4173 = vshll.u32 %v4172, 16
    %v4174 = vadd.s32 %v4173, %v4171
    %v4175 = vand.u32 %v4133, 65535
    %v4176 = vshra.s32 %v4133, 16
    %v4177 = vcvt.s32.f32 %v4175
    %v4178 = vcvt.s32.f32 %v4176
    %4179 = vmin.xlane.f32.xlu0 %v4178
    %v4180 = vpop.xlane.xlu0 %4179
    %vm4181 = vcmp.eq.f32.partialorder %v4178, %v4180
    %v4182 = vsel %vm4181, %v4177, inf
    %4183 = vmin.xlane.f32.xlu0 %v4182
    %v4184 = vpop.xlane.xlu0 %4183
    %v4185 = vcvt.f32.s32 %v4184
    %v4186 = vcvt.f32.s32 %v4180
    %v4187 = vshll.u32 %v4186, 16
    %v4188 = vadd.s32 %v4187, %v4185
    %v4189 = vand.u32 %v4134, 65535
    %v4190 = vshra.s32 %v4134, 16
    %v4191 = vcvt.s32.f32 %v4189
    %v4192 = vcvt.s32.f32 %v4190
    %4193 = vmin.xlane.f32.xlu0 %v4192
    %v4194 = vpop.xlane.xlu0 %4193
    %vm4195 = vcmp.eq.f32.partialorder %v4192, %v4194
    %v4196 = vsel %vm4195, %v4191, inf
    %4197 = vmin.xlane.f32.xlu0 %v4196
    %v4198 = vpop.xlane.xlu0 %4197
    %v4199 = vcvt.f32.s32 %v4198
    %v4200 = vcvt.f32.s32 %v4194
    %v4201 = vshll.u32 %v4200, 16
    %v4202 = vadd.s32 %v4201, %v4199
    %v4203 = vand.u32 %v4135, 65535
    %v4204 = vshra.s32 %v4135, 16
    %v4205 = vcvt.s32.f32 %v4203
    %v4206 = vcvt.s32.f32 %v4204
    %4207 = vmin.xlane.f32.xlu0 %v4206
    %v4208 = vpop.xlane.xlu0 %4207
    %vm4209 = vcmp.eq.f32.partialorder %v4206, %v4208
    %v4210 = vsel %vm4209, %v4205, inf
    %4211 = vmin.xlane.f32.xlu0 %v4210
    %v4212 = vpop.xlane.xlu0 %4211
    %v4213 = vcvt.f32.s32 %v4212
    %v4214 = vcvt.f32.s32 %v4208
    %v4215 = vshll.u32 %v4214, 16
    %v4216 = vadd.s32 %v4215, %v4213
    %v4217 = vand.u32 %v4136, 65535
    %v4218 = vshra.s32 %v4136, 16
    %v4219 = vcvt.s32.f32 %v4217
    %v4220 = vcvt.s32.f32 %v4218
    %4221 = vmin.xlane.f32.xlu0 %v4220
    %v4222 = vpop.xlane.xlu0 %4221
    %vm4223 = vcmp.eq.f32.partialorder %v4220, %v4222
    %v4224 = vsel %vm4223, %v4219, inf
    %4225 = vmin.xlane.f32.xlu0 %v4224
    %v4226 = vpop.xlane.xlu0 %4225
    %v4227 = vcvt.f32.s32 %v4226
    %v4228 = vcvt.f32.s32 %v4222
    %v4229 = vshll.u32 %v4228, 16
    %v4230 = vadd.s32 %v4229, %v4227
    %v4231 = vand.u32 %v4137, 65535
    %v4232 = vshra.s32 %v4137, 16
    %v4233 = vcvt.s32.f32 %v4231
    %v4234 = vcvt.s32.f32 %v4232
    %4235 = vmin.xlane.f32.xlu0 %v4234
    %v4236 = vpop.xlane.xlu0 %4235
    %vm4237 = vcmp.eq.f32.partialorder %v4234, %v4236
    %v4238 = vsel %vm4237, %v4233, inf
    %4239 = vmin.xlane.f32.xlu0 %v4238
    %v4240 = vpop.xlane.xlu0 %4239
    %v4241 = vcvt.f32.s32 %v4240
    %v4242 = vcvt.f32.s32 %v4236
    %v4243 = vshll.u32 %v4242, 16
    %v4244 = vadd.s32 %v4243, %v4241
    %v4245 = vand.u32 %v4138, 65535
    %v4246 = vshra.s32 %v4138, 16
    %v4247 = vcvt.s32.f32 %v4245
    %v4248 = vcvt.s32.f32 %v4246
    %4249 = vmin.xlane.f32.xlu0 %v4248
    %v4250 = vpop.xlane.xlu0 %4249
    %vm4251 = vcmp.eq.f32.partialorder %v4248, %v4250
    %v4252 = vsel %vm4251, %v4247, inf
    %4253 = vmin.xlane.f32.xlu0 %v4252
    %v4254 = vpop.xlane.xlu0 %4253
    %v4255 = vcvt.f32.s32 %v4254
    %v4256 = vcvt.f32.s32 %v4250
    %v4257 = vshll.u32 %v4256, 16
    %v4258 = vadd.s32 %v4257, %v4255
    %v4259 = vand.u32 %v4139, 65535
    %v4260 = vshra.s32 %v4139, 16
    %v4261 = vcvt.s32.f32 %v4259
    %v4262 = vcvt.s32.f32 %v4260
    %4263 = vmin.xlane.f32.xlu0 %v4262
    %v4264 = vpop.xlane.xlu0 %4263
    %vm4265 = vcmp.eq.f32.partialorder %v4262, %v4264
    %v4266 = vsel %vm4265, %v4261, inf
    %4267 = vmin.xlane.f32.xlu0 %v4266
    %v4268 = vpop.xlane.xlu0 %4267
    %v4269 = vcvt.f32.s32 %v4268
    %v4270 = vcvt.f32.s32 %v4264
    %v4271 = vshll.u32 %v4270, 16
    %v4272 = vadd.s32 %v4271, %v4269
    %v4273 = vand.u32 %v4140, 65535
    %v4274 = vshra.s32 %v4140, 16
    %v4275 = vcvt.s32.f32 %v4273
    %v4276 = vcvt.s32.f32 %v4274
    %4277 = vmin.xlane.f32.xlu0 %v4276
    %v4278 = vpop.xlane.xlu0 %4277
    %vm4279 = vcmp.eq.f32.partialorder %v4276, %v4278
    %v4280 = vsel %vm4279, %v4275, inf
    %4281 = vmin.xlane.f32.xlu0 %v4280
    %v4282 = vpop.xlane.xlu0 %4281
    %v4283 = vcvt.f32.s32 %v4282
    %v4284 = vcvt.f32.s32 %v4278
    %v4285 = vshll.u32 %v4284, 16
    %v4286 = vadd.s32 %v4285, %v4283
    %v4287 = vand.u32 %v4141, 65535
    %v4288 = vshra.s32 %v4141, 16
    %v4289 = vcvt.s32.f32 %v4287
    %v4290 = vcvt.s32.f32 %v4288
    %4291 = vmin.xlane.f32.xlu0 %v4290
    %v4292 = vpop.xlane.xlu0 %4291
    %vm4293 = vcmp.eq.f32.partialorder %v4290, %v4292
    %v4294 = vsel %vm4293, %v4289, inf
    %4295 = vmin.xlane.f32.xlu0 %v4294
    %v4296 = vpop.xlane.xlu0 %4295
    %v4297 = vcvt.f32.s32 %v4296
    %v4298 = vcvt.f32.s32 %v4292
    %v4299 = vshll.u32 %v4298, 16
    %v4300 = vadd.s32 %v4299, %v4297
    %v4301 = vand.u32 %v4142, 65535
    %v4302 = vshra.s32 %v4142, 16
    %v4303 = vcvt.s32.f32 %v4301
    %v4304 = vcvt.s32.f32 %v4302
    %4305 = vmin.xlane.f32.xlu0 %v4304
    %v4306 = vpop.xlane.xlu0 %4305
    %vm4307 = vcmp.eq.f32.partialorder %v4304, %v4306
    %v4308 = vsel %vm4307, %v4303, inf
    %4309 = vmin.xlane.f32.xlu0 %v4308
    %v4310 = vpop.xlane.xlu0 %4309
    %v4311 = vcvt.f32.s32 %v4310
    %v4312 = vcvt.f32.s32 %v4306
    %v4313 = vshll.u32 %v4312, 16
    %v4314 = vadd.s32 %v4313, %v4311
    %v4315 = vand.u32 %v4143, 65535
    %v4316 = vshra.s32 %v4143, 16
    %v4317 = vcvt.s32.f32 %v4315
    %v4318 = vcvt.s32.f32 %v4316
    %4319 = vmin.xlane.f32.xlu0 %v4318
    %v4320 = vpop.xlane.xlu0 %4319
    %vm4321 = vcmp.eq.f32.partialorder %v4318, %v4320
    %v4322 = vsel %vm4321, %v4317, inf
    %4323 = vmin.xlane.f32.xlu0 %v4322
    %v4324 = vpop.xlane.xlu0 %4323
    %v4325 = vcvt.f32.s32 %v4324
    %v4326 = vcvt.f32.s32 %v4320
    %v4327 = vshll.u32 %v4326, 16
    %v4328 = vadd.s32 %v4327, %v4325
    %v4329 = vand.u32 %v4144, 65535
    %v4330 = vshra.s32 %v4144, 16
    %v4331 = vcvt.s32.f32 %v4329
    %v4332 = vcvt.s32.f32 %v4330
    %4333 = vmin.xlane.f32.xlu0 %v4332
    %v4334 = vpop.xlane.xlu0 %4333
    %vm4335 = vcmp.eq.f32.partialorder %v4332, %v4334
    %v4336 = vsel %vm4335, %v4331, inf
    %4337 = vmin.xlane.f32.xlu0 %v4336
    %v4338 = vpop.xlane.xlu0 %4337
    %v4339 = vcvt.f32.s32 %v4338
    %v4340 = vcvt.f32.s32 %v4334
    %v4341 = vshll.u32 %v4340, 16
    %v4342 = vadd.s32 %v4341, %v4339
    %v4343 = vand.u32 %v4145, 65535
    %v4344 = vshra.s32 %v4145, 16
    %v4345 = vcvt.s32.f32 %v4343
    %v4346 = vcvt.s32.f32 %v4344
    %4347 = vmin.xlane.f32.xlu0 %v4346
    %v4348 = vpop.xlane.xlu0 %4347
    %vm4349 = vcmp.eq.f32.partialorder %v4346, %v4348
    %v4350 = vsel %vm4349, %v4345, inf
    %4351 = vmin.xlane.f32.xlu0 %v4350
    %v4352 = vpop.xlane.xlu0 %4351
    %v4353 = vcvt.f32.s32 %v4352
    %v4354 = vcvt.f32.s32 %v4348
    %v4355 = vshll.u32 %v4354, 16
    %v4356 = vadd.s32 %v4355, %v4353
    %v4357 = vand.u32 %v4146, 65535
    %v4358 = vshra.s32 %v4146, 16
    %v4359 = vcvt.s32.f32 %v4357
    %v4360 = vcvt.s32.f32 %v4358
    %4361 = vmin.xlane.f32.xlu0 %v4360
    %v4362 = vpop.xlane.xlu0 %4361
    %vm4363 = vcmp.eq.f32.partialorder %v4360, %v4362
    %v4364 = vsel %vm4363, %v4359, inf
    %4365 = vmin.xlane.f32.xlu0 %v4364
    %v4366 = vpop.xlane.xlu0 %4365
    %v4367 = vcvt.f32.s32 %v4366
    %v4368 = vcvt.f32.s32 %v4362
    %v4369 = vshll.u32 %v4368, 16
    %v4370 = vadd.s32 %v4369, %v4367
    %vm4371 = vcmp.eq.s32.totalorder %v3410, %v4160
    %vm4372 = vcmp.eq.s32.totalorder %v3410, %v4174
    %vm4373 = vcmp.eq.s32.totalorder %v3410, %v4188
    %vm4374 = vcmp.eq.s32.totalorder %v3410, %v4202
    %vm4375 = vcmp.eq.s32.totalorder %v3410, %v4216
    %vm4376 = vcmp.eq.s32.totalorder %v3410, %v4230
    %vm4377 = vcmp.eq.s32.totalorder %v3410, %v4244
    %vm4378 = vcmp.eq.s32.totalorder %v3410, %v4258
    %vm4379 = vcmp.eq.s32.totalorder %v3410, %v4272
    %vm4380 = vcmp.eq.s32.totalorder %v3410, %v4286
    %vm4381 = vcmp.eq.s32.totalorder %v3410, %v4300
    %vm4382 = vcmp.eq.s32.totalorder %v3410, %v4314
    %vm4383 = vcmp.eq.s32.totalorder %v3410, %v4328
    %vm4384 = vcmp.eq.s32.totalorder %v3410, %v4342
    %vm4385 = vcmp.eq.s32.totalorder %v3410, %v4356
    %vm4386 = vcmp.eq.s32.totalorder %v3410, %v4370
    %v4387 = vsel %vm4371, 1, 0
    %v4388 = vsel %vm4372, 1, 0
    %v4389 = vsel %vm4373, 1, 0
    %v4390 = vsel %vm4374, 1, 0
    %v4391 = vsel %vm4375, 1, 0
    %v4392 = vsel %vm4376, 1, 0
    %v4393 = vsel %vm4377, 1, 0
    %v4394 = vsel %vm4378, 1, 0
    %v4395 = vsel %vm4379, 1, 0
    %v4396 = vsel %vm4380, 1, 0
    %v4397 = vsel %vm4381, 1, 0
    %v4398 = vsel %vm4382, 1, 0
    %v4399 = vsel %vm4383, 1, 0
    %v4400 = vsel %vm4384, 1, 0
    %v4401 = vsel %vm4385, 1, 0
    %v4402 = vsel %vm4386, 1, 0
    %v4403 = vcvt.s32.f32 %v4387
    %v4404 = vcvt.s32.f32 %v4388
    %v4405 = vcvt.s32.f32 %v4389
    %v4406 = vcvt.s32.f32 %v4390
    %v4407 = vcvt.s32.f32 %v4391
    %v4408 = vcvt.s32.f32 %v4392
    %v4409 = vcvt.s32.f32 %v4393
    %v4410 = vcvt.s32.f32 %v4394
    %v4411 = vcvt.s32.f32 %v4395
    %v4412 = vcvt.s32.f32 %v4396
    %v4413 = vcvt.s32.f32 %v4397
    %v4414 = vcvt.s32.f32 %v4398
    %v4415 = vcvt.s32.f32 %v4399
    %v4416 = vcvt.s32.f32 %v4400
    %v4417 = vcvt.s32.f32 %v4401
    %v4418 = vcvt.s32.f32 %v4402
    %4419 = vmin.xlane.f32.xlu0 %v3347
    %v4420 = vpop.xlane.xlu0 %4419
    %4421 = vmin.xlane.f32.xlu0 %v3351
    %v4422 = vpop.xlane.xlu0 %4421
    %4423 = vmin.xlane.f32.xlu0 %v3355
    %v4424 = vpop.xlane.xlu0 %4423
    %4425 = vmin.xlane.f32.xlu0 %v3359
    %v4426 = vpop.xlane.xlu0 %4425
    %4427 = vmin.xlane.f32.xlu0 %v3363
    %v4428 = vpop.xlane.xlu0 %4427
    %4429 = vmin.xlane.f32.xlu0 %v3367
    %v4430 = vpop.xlane.xlu0 %4429
    %4431 = vmin.xlane.f32.xlu0 %v3371
    %v4432 = vpop.xlane.xlu0 %4431
    %4433 = vmin.xlane.f32.xlu0 %v3375
    %v4434 = vpop.xlane.xlu0 %4433
    %4435 = vmin.xlane.f32.xlu0 %v3379
    %v4436 = vpop.xlane.xlu0 %4435
    %4437 = vmin.xlane.f32.xlu0 %v3383
    %v4438 = vpop.xlane.xlu0 %4437
    %4439 = vmin.xlane.f32.xlu0 %v3387
    %v4440 = vpop.xlane.xlu0 %4439
    %4441 = vmin.xlane.f32.xlu0 %v3391
    %v4442 = vpop.xlane.xlu0 %4441
    %4443 = vmin.xlane.f32.xlu0 %v3395
    %v4444 = vpop.xlane.xlu0 %4443
    %4445 = vmin.xlane.f32.xlu0 %v3399
    %v4446 = vpop.xlane.xlu0 %4445
    %4447 = vmin.xlane.f32.xlu0 %v3403
    %v4448 = vpop.xlane.xlu0 %4447
    %4449 = vmin.xlane.f32.xlu0 %v3407
    %v4450 = vpop.xlane.xlu0 %4449
    %vm4451 = vcmp.le.f32.partialorder %v3347, %v4420
    %vm4452 = vcmp.le.f32.partialorder %v3351, %v4422
    %vm4453 = vcmp.le.f32.partialorder %v3355, %v4424
    %vm4454 = vcmp.le.f32.partialorder %v3359, %v4426
    %vm4455 = vcmp.le.f32.partialorder %v3363, %v4428
    %vm4456 = vcmp.le.f32.partialorder %v3367, %v4430
    %vm4457 = vcmp.le.f32.partialorder %v3371, %v4432
    %vm4458 = vcmp.le.f32.partialorder %v3375, %v4434
    %vm4459 = vcmp.le.f32.partialorder %v3379, %v4436
    %vm4460 = vcmp.le.f32.partialorder %v3383, %v4438
    %vm4461 = vcmp.le.f32.partialorder %v3387, %v4440
    %vm4462 = vcmp.le.f32.partialorder %v3391, %v4442
    %vm4463 = vcmp.le.f32.partialorder %v3395, %v4444
    %vm4464 = vcmp.le.f32.partialorder %v3399, %v4446
    %vm4465 = vcmp.le.f32.partialorder %v3403, %v4448
    %vm4466 = vcmp.le.f32.partialorder %v3407, %v4450
    %v4467 = vsel %vm4451, %v3410, 128
    %v4468 = vsel %vm4452, %v3410, 128
    %v4469 = vsel %vm4453, %v3410, 128
    %v4470 = vsel %vm4454, %v3410, 128
    %v4471 = vsel %vm4455, %v3410, 128
    %v4472 = vsel %vm4456, %v3410, 128
    %v4473 = vsel %vm4457, %v3410, 128
    %v4474 = vsel %vm4458, %v3410, 128
    %v4475 = vsel %vm4459, %v3410, 128
    %v4476 = vsel %vm4460, %v3410, 128
    %v4477 = vsel %vm4461, %v3410, 128
    %v4478 = vsel %vm4462, %v3410, 128
    %v4479 = vsel %vm4463, %v3410, 128
    %v4480 = vsel %vm4464, %v3410, 128
    %v4481 = vsel %vm4465, %v3410, 128
    %v4482 = vsel %vm4466, %v3410, 128
    %v4483 = vand.u32 %v4467, 65535
    %v4484 = vshra.s32 %v4467, 16
    %v4485 = vcvt.s32.f32 %v4483
    %v4486 = vcvt.s32.f32 %v4484
    %4487 = vmin.xlane.f32.xlu0 %v4486
    %v4488 = vpop.xlane.xlu0 %4487
    %vm4489 = vcmp.eq.f32.partialorder %v4486, %v4488
    %v4490 = vsel %vm4489, %v4485, inf
    %4491 = vmin.xlane.f32.xlu0 %v4490
    %v4492 = vpop.xlane.xlu0 %4491
    %v4493 = vcvt.f32.s32 %v4492
    %v4494 = vcvt.f32.s32 %v4488
    %v4495 = vshll.u32 %v4494, 16
    %v4496 = vadd.s32 %v4495, %v4493
    %v4497 = vand.u32 %v4468, 65535
    %v4498 = vshra.s32 %v4468, 16
    %v4499 = vcvt.s32.f32 %v4497
    %v4500 = vcvt.s32.f32 %v4498
    %4501 = vmin.xlane.f32.xlu0 %v4500
    %v4502 = vpop.xlane.xlu0 %4501
    %vm4503 = vcmp.eq.f32.partialorder %v4500, %v4502
    %v4504 = vsel %vm4503, %v4499, inf
    %4505 = vmin.xlane.f32.xlu0 %v4504
    %v4506 = vpop.xlane.xlu0 %4505
    %v4507 = vcvt.f32.s32 %v4506
    %v4508 = vcvt.f32.s32 %v4502
    %v4509 = vshll.u32 %v4508, 16
    %v4510 = vadd.s32 %v4509, %v4507
    %v4511 = vand.u32 %v4469, 65535
    %v4512 = vshra.s32 %v4469, 16
    %v4513 = vcvt.s32.f32 %v4511
    %v4514 = vcvt.s32.f32 %v4512
    %4515 = vmin.xlane.f32.xlu0 %v4514
    %v4516 = vpop.xlane.xlu0 %4515
    %vm4517 = vcmp.eq.f32.partialorder %v4514, %v4516
    %v4518 = vsel %vm4517, %v4513, inf
    %4519 = vmin.xlane.f32.xlu0 %v4518
    %v4520 = vpop.xlane.xlu0 %4519
    %v4521 = vcvt.f32.s32 %v4520
    %v4522 = vcvt.f32.s32 %v4516
    %v4523 = vshll.u32 %v4522, 16
    %v4524 = vadd.s32 %v4523, %v4521
    %v4525 = vand.u32 %v4470, 65535
    %v4526 = vshra.s32 %v4470, 16
    %v4527 = vcvt.s32.f32 %v4525
    %v4528 = vcvt.s32.f32 %v4526
    %4529 = vmin.xlane.f32.xlu0 %v4528
    %v4530 = vpop.xlane.xlu0 %4529
    %vm4531 = vcmp.eq.f32.partialorder %v4528, %v4530
    %v4532 = vsel %vm4531, %v4527, inf
    %4533 = vmin.xlane.f32.xlu0 %v4532
    %v4534 = vpop.xlane.xlu0 %4533
    %v4535 = vcvt.f32.s32 %v4534
    %v4536 = vcvt.f32.s32 %v4530
    %v4537 = vshll.u32 %v4536, 16
    %v4538 = vadd.s32 %v4537, %v4535
    %v4539 = vand.u32 %v4471, 65535
    %v4540 = vshra.s32 %v4471, 16
    %v4541 = vcvt.s32.f32 %v4539
    %v4542 = vcvt.s32.f32 %v4540
    %4543 = vmin.xlane.f32.xlu0 %v4542
    %v4544 = vpop.xlane.xlu0 %4543
    %vm4545 = vcmp.eq.f32.partialorder %v4542, %v4544
    %v4546 = vsel %vm4545, %v4541, inf
    %4547 = vmin.xlane.f32.xlu0 %v4546
    %v4548 = vpop.xlane.xlu0 %4547
    %v4549 = vcvt.f32.s32 %v4548
    %v4550 = vcvt.f32.s32 %v4544
    %v4551 = vshll.u32 %v4550, 16
    %v4552 = vadd.s32 %v4551, %v4549
    %v4553 = vand.u32 %v4472, 65535
    %v4554 = vshra.s32 %v4472, 16
    %v4555 = vcvt.s32.f32 %v4553
    %v4556 = vcvt.s32.f32 %v4554
    %4557 = vmin.xlane.f32.xlu0 %v4556
    %v4558 = vpop.xlane.xlu0 %4557
    %vm4559 = vcmp.eq.f32.partialorder %v4556, %v4558
    %v4560 = vsel %vm4559, %v4555, inf
    %4561 = vmin.xlane.f32.xlu0 %v4560
    %v4562 = vpop.xlane.xlu0 %4561
    %v4563 = vcvt.f32.s32 %v4562
    %v4564 = vcvt.f32.s32 %v4558
    %v4565 = vshll.u32 %v4564, 16
    %v4566 = vadd.s32 %v4565, %v4563
    %v4567 = vand.u32 %v4473, 65535
    %v4568 = vshra.s32 %v4473, 16
    %v4569 = vcvt.s32.f32 %v4567
    %v4570 = vcvt.s32.f32 %v4568
    %4571 = vmin.xlane.f32.xlu0 %v4570
    %v4572 = vpop.xlane.xlu0 %4571
    %vm4573 = vcmp.eq.f32.partialorder %v4570, %v4572
    %v4574 = vsel %vm4573, %v4569, inf
    %4575 = vmin.xlane.f32.xlu0 %v4574
    %v4576 = vpop.xlane.xlu0 %4575
    %v4577 = vcvt.f32.s32 %v4576
    %v4578 = vcvt.f32.s32 %v4572
    %v4579 = vshll.u32 %v4578, 16
    %v4580 = vadd.s32 %v4579, %v4577
    %v4581 = vand.u32 %v4474, 65535
    %v4582 = vshra.s32 %v4474, 16
    %v4583 = vcvt.s32.f32 %v4581
    %v4584 = vcvt.s32.f32 %v4582
    %4585 = vmin.xlane.f32.xlu0 %v4584
    %v4586 = vpop.xlane.xlu0 %4585
    %vm4587 = vcmp.eq.f32.partialorder %v4584, %v4586
    %v4588 = vsel %vm4587, %v4583, inf
    %4589 = vmin.xlane.f32.xlu0 %v4588
    %v4590 = vpop.xlane.xlu0 %4589
    %v4591 = vcvt.f32.s32 %v4590
    %v4592 = vcvt.f32.s32 %v4586
    %v4593 = vshll.u32 %v4592, 16
    %v4594 = vadd.s32 %v4593, %v4591
    %v4595 = vand.u32 %v4475, 65535
    %v4596 = vshra.s32 %v4475, 16
    %v4597 = vcvt.s32.f32 %v4595
    %v4598 = vcvt.s32.f32 %v4596
    %4599 = vmin.xlane.f32.xlu0 %v4598
    %v4600 = vpop.xlane.xlu0 %4599
    %vm4601 = vcmp.eq.f32.partialorder %v4598, %v4600
    %v4602 = vsel %vm4601, %v4597, inf
    %4603 = vmin.xlane.f32.xlu0 %v4602
    %v4604 = vpop.xlane.xlu0 %4603
    %v4605 = vcvt.f32.s32 %v4604
    %v4606 = vcvt.f32.s32 %v4600
    %v4607 = vshll.u32 %v4606, 16
    %v4608 = vadd.s32 %v4607, %v4605
    %v4609 = vand.u32 %v4476, 65535
    %v4610 = vshra.s32 %v4476, 16
    %v4611 = vcvt.s32.f32 %v4609
    %v4612 = vcvt.s32.f32 %v4610
    %4613 = vmin.xlane.f32.xlu0 %v4612
    %v4614 = vpop.xlane.xlu0 %4613
    %vm4615 = vcmp.eq.f32.partialorder %v4612, %v4614
    %v4616 = vsel %vm4615, %v4611, inf
    %4617 = vmin.xlane.f32.xlu0 %v4616
    %v4618 = vpop.xlane.xlu0 %4617
    %v4619 = vcvt.f32.s32 %v4618
    %v4620 = vcvt.f32.s32 %v4614
    %v4621 = vshll.u32 %v4620, 16
    %v4622 = vadd.s32 %v4621, %v4619
    %v4623 = vand.u32 %v4477, 65535
    %v4624 = vshra.s32 %v4477, 16
    %v4625 = vcvt.s32.f32 %v4623
    %v4626 = vcvt.s32.f32 %v4624
    %4627 = vmin.xlane.f32.xlu0 %v4626
    %v4628 = vpop.xlane.xlu0 %4627
    %vm4629 = vcmp.eq.f32.partialorder %v4626, %v4628
    %v4630 = vsel %vm4629, %v4625, inf
    %4631 = vmin.xlane.f32.xlu0 %v4630
    %v4632 = vpop.xlane.xlu0 %4631
    %v4633 = vcvt.f32.s32 %v4632
    %v4634 = vcvt.f32.s32 %v4628
    %v4635 = vshll.u32 %v4634, 16
    %v4636 = vadd.s32 %v4635, %v4633
    %v4637 = vand.u32 %v4478, 65535
    %v4638 = vshra.s32 %v4478, 16
    %v4639 = vcvt.s32.f32 %v4637
    %v4640 = vcvt.s32.f32 %v4638
    %4641 = vmin.xlane.f32.xlu0 %v4640
    %v4642 = vpop.xlane.xlu0 %4641
    %vm4643 = vcmp.eq.f32.partialorder %v4640, %v4642
    %v4644 = vsel %vm4643, %v4639, inf
    %4645 = vmin.xlane.f32.xlu0 %v4644
    %v4646 = vpop.xlane.xlu0 %4645
    %v4647 = vcvt.f32.s32 %v4646
    %v4648 = vcvt.f32.s32 %v4642
    %v4649 = vshll.u32 %v4648, 16
    %v4650 = vadd.s32 %v4649, %v4647
    %v4651 = vand.u32 %v4479, 65535
    %v4652 = vshra.s32 %v4479, 16
    %v4653 = vcvt.s32.f32 %v4651
    %v4654 = vcvt.s32.f32 %v4652
    %4655 = vmin.xlane.f32.xlu0 %v4654
    %v4656 = vpop.xlane.xlu0 %4655
    %vm4657 = vcmp.eq.f32.partialorder %v4654, %v4656
    %v4658 = vsel %vm4657, %v4653, inf
    %4659 = vmin.xlane.f32.xlu0 %v4658
    %v4660 = vpop.xlane.xlu0 %4659
    %v4661 = vcvt.f32.s32 %v4660
    %v4662 = vcvt.f32.s32 %v4656
    %v4663 = vshll.u32 %v4662, 16
    %v4664 = vadd.s32 %v4663, %v4661
    %v4665 = vand.u32 %v4480, 65535
    %v4666 = vshra.s32 %v4480, 16
    %v4667 = vcvt.s32.f32 %v4665
    %v4668 = vcvt.s32.f32 %v4666
    %4669 = vmin.xlane.f32.xlu0 %v4668
    %v4670 = vpop.xlane.xlu0 %4669
    %vm4671 = vcmp.eq.f32.partialorder %v4668, %v4670
    %v4672 = vsel %vm4671, %v4667, inf
    %4673 = vmin.xlane.f32.xlu0 %v4672
    %v4674 = vpop.xlane.xlu0 %4673
    %v4675 = vcvt.f32.s32 %v4674
    %v4676 = vcvt.f32.s32 %v4670
    %v4677 = vshll.u32 %v4676, 16
    %v4678 = vadd.s32 %v4677, %v4675
    %v4679 = vand.u32 %v4481, 65535
    %v4680 = vshra.s32 %v4481, 16
    %v4681 = vcvt.s32.f32 %v4679
    %v4682 = vcvt.s32.f32 %v4680
    %4683 = vmin.xlane.f32.xlu0 %v4682
    %v4684 = vpop.xlane.xlu0 %4683
    %vm4685 = vcmp.eq.f32.partialorder %v4682, %v4684
    %v4686 = vsel %vm4685, %v4681, inf
    %4687 = vmin.xlane.f32.xlu0 %v4686
    %v4688 = vpop.xlane.xlu0 %4687
    %v4689 = vcvt.f32.s32 %v4688
    %v4690 = vcvt.f32.s32 %v4684
    %v4691 = vshll.u32 %v4690, 16
    %v4692 = vadd.s32 %v4691, %v4689
    %v4693 = vand.u32 %v4482, 65535
    %v4694 = vshra.s32 %v4482, 16
    %v4695 = vcvt.s32.f32 %v4693
    %v4696 = vcvt.s32.f32 %v4694
    %4697 = vmin.xlane.f32.xlu0 %v4696
    %v4698 = vpop.xlane.xlu0 %4697
    %vm4699 = vcmp.eq.f32.partialorder %v4696, %v4698
    %v4700 = vsel %vm4699, %v4695, inf
    %4701 = vmin.xlane.f32.xlu0 %v4700
    %v4702 = vpop.xlane.xlu0 %4701
    %v4703 = vcvt.f32.s32 %v4702
    %v4704 = vcvt.f32.s32 %v4698
    %v4705 = vshll.u32 %v4704, 16
    %v4706 = vadd.s32 %v4705, %v4703
    %vm4707 = vcmp.eq.s32.totalorder %v3410, %v4496
    %vm4708 = vcmp.eq.s32.totalorder %v3410, %v4510
    %vm4709 = vcmp.eq.s32.totalorder %v3410, %v4524
    %vm4710 = vcmp.eq.s32.totalorder %v3410, %v4538
    %vm4711 = vcmp.eq.s32.totalorder %v3410, %v4552
    %vm4712 = vcmp.eq.s32.totalorder %v3410, %v4566
    %vm4713 = vcmp.eq.s32.totalorder %v3410, %v4580
    %vm4714 = vcmp.eq.s32.totalorder %v3410, %v4594
    %vm4715 = vcmp.eq.s32.totalorder %v3410, %v4608
    %vm4716 = vcmp.eq.s32.totalorder %v3410, %v4622
    %vm4717 = vcmp.eq.s32.totalorder %v3410, %v4636
    %vm4718 = vcmp.eq.s32.totalorder %v3410, %v4650
    %vm4719 = vcmp.eq.s32.totalorder %v3410, %v4664
    %vm4720 = vcmp.eq.s32.totalorder %v3410, %v4678
    %vm4721 = vcmp.eq.s32.totalorder %v3410, %v4692
    %vm4722 = vcmp.eq.s32.totalorder %v3410, %v4706
    %v4723 = vsel %vm4707, 1, 0
    %v4724 = vsel %vm4708, 1, 0
    %v4725 = vsel %vm4709, 1, 0
    %v4726 = vsel %vm4710, 1, 0
    %v4727 = vsel %vm4711, 1, 0
    %v4728 = vsel %vm4712, 1, 0
    %v4729 = vsel %vm4713, 1, 0
    %v4730 = vsel %vm4714, 1, 0
    %v4731 = vsel %vm4715, 1, 0
    %v4732 = vsel %vm4716, 1, 0
    %v4733 = vsel %vm4717, 1, 0
    %v4734 = vsel %vm4718, 1, 0
    %v4735 = vsel %vm4719, 1, 0
    %v4736 = vsel %vm4720, 1, 0
    %v4737 = vsel %vm4721, 1, 0
    %v4738 = vsel %vm4722, 1, 0
    %v4739 = vcvt.s32.f32 %v4723
    %v4740 = vcvt.s32.f32 %v4724
    %v4741 = vcvt.s32.f32 %v4725
    %v4742 = vcvt.s32.f32 %v4726
    %v4743 = vcvt.s32.f32 %v4727
    %v4744 = vcvt.s32.f32 %v4728
    %v4745 = vcvt.s32.f32 %v4729
    %v4746 = vcvt.s32.f32 %v4730
    %v4747 = vcvt.s32.f32 %v4731
    %v4748 = vcvt.s32.f32 %v4732
    %v4749 = vcvt.s32.f32 %v4733
    %v4750 = vcvt.s32.f32 %v4734
    %v4751 = vcvt.s32.f32 %v4735
    %v4752 = vcvt.s32.f32 %v4736
    %v4753 = vcvt.s32.f32 %v4737
    %v4754 = vcvt.s32.f32 %v4738
    %v4755 = vld [vmem:[#allocation10] sm:$0xff]
    %v4756 = vld [vmem:[#allocation10 + $0x8] sm:$0xff]
    %v4757 = vld [vmem:[#allocation10 + $0x10] sm:$0xff]
    %v4758 = vld [vmem:[#allocation10 + $0x18] sm:$0xff]
    %v4759 = vld [vmem:[#allocation10 + $0x20] sm:$0xff]
    %v4760 = vld [vmem:[#allocation10 + $0x28] sm:$0xff]
    %v4761 = vld [vmem:[#allocation10 + $0x30] sm:$0xff]
    %v4762 = vld [vmem:[#allocation10 + $0x38] sm:$0xff]
    %v4763 = vld [vmem:[#allocation10 + $0x40] sm:$0xff]
    %v4764 = vld [vmem:[#allocation10 + $0x48] sm:$0xff]
    %v4765 = vld [vmem:[#allocation10 + $0x50] sm:$0xff]
    %v4766 = vld [vmem:[#allocation10 + $0x58] sm:$0xff]
    %v4767 = vld [vmem:[#allocation10 + $0x60] sm:$0xff]
    %v4768 = vld [vmem:[#allocation10 + $0x68] sm:$0xff]
    %v4769 = vld [vmem:[#allocation10 + $0x70] sm:$0xff]
    %v4770 = vld [vmem:[#allocation10 + $0x78] sm:$0xff]
    %v4771 = vld [vmem:[#allocation10 + $0x80] sm:$0xff]
    %v4772 = vld [vmem:[#allocation10 + $0x88] sm:$0xff]
    %v4773 = vld [vmem:[#allocation10 + $0x90] sm:$0xff]
    %v4774 = vld [vmem:[#allocation10 + $0x98] sm:$0xff]
    %v4775 = vld [vmem:[#allocation10 + $0xa0] sm:$0xff]
    %v4776 = vld [vmem:[#allocation10 + $0xa8] sm:$0xff]
    %v4777 = vld [vmem:[#allocation10 + $0xb0] sm:$0xff]
    %v4778 = vld [vmem:[#allocation10 + $0xb8] sm:$0xff]
    %v4779 = vld [vmem:[#allocation10 + $0xc0] sm:$0xff]
    %v4780 = vld [vmem:[#allocation10 + $0xc8] sm:$0xff]
    %v4781 = vld [vmem:[#allocation10 + $0xd0] sm:$0xff]
    %v4782 = vld [vmem:[#allocation10 + $0xd8] sm:$0xff]
    %v4783 = vld [vmem:[#allocation10 + $0xe0] sm:$0xff]
    %v4784 = vld [vmem:[#allocation10 + $0xe8] sm:$0xff]
    %v4785 = vld [vmem:[#allocation10 + $0xf0] sm:$0xff]
    %v4786 = vld [vmem:[#allocation10 + $0xf8] sm:$0xff]
    %v4787 = vld [vmem:[#allocation10 + $0x100] sm:$0xff]
    %v4788 = vld [vmem:[#allocation10 + $0x108] sm:$0xff]
    %v4789 = vld [vmem:[#allocation10 + $0x110] sm:$0xff]
    %v4790 = vld [vmem:[#allocation10 + $0x118] sm:$0xff]
    %v4791 = vld [vmem:[#allocation10 + $0x120] sm:$0xff]
    %v4792 = vld [vmem:[#allocation10 + $0x128] sm:$0xff]
    %v4793 = vld [vmem:[#allocation10 + $0x130] sm:$0xff]
    %v4794 = vld [vmem:[#allocation10 + $0x138] sm:$0xff]
    %v4795 = vld [vmem:[#allocation10 + $0x140] sm:$0xff]
    %v4796 = vld [vmem:[#allocation10 + $0x148] sm:$0xff]
    %v4797 = vld [vmem:[#allocation10 + $0x150] sm:$0xff]
    %v4798 = vld [vmem:[#allocation10 + $0x158] sm:$0xff]
    %v4799 = vld [vmem:[#allocation10 + $0x160] sm:$0xff]
    %v4800 = vld [vmem:[#allocation10 + $0x168] sm:$0xff]
    %v4801 = vld [vmem:[#allocation10 + $0x170] sm:$0xff]
    %v4802 = vld [vmem:[#allocation10 + $0x178] sm:$0xff]
    %v4803 = vld [vmem:[#allocation10 + $0x180] sm:$0xff]
    %v4804 = vld [vmem:[#allocation10 + $0x188] sm:$0xff]
    %v4805 = vld [vmem:[#allocation10 + $0x190] sm:$0xff]
    %v4806 = vld [vmem:[#allocation10 + $0x198] sm:$0xff]
    %v4807 = vld [vmem:[#allocation10 + $0x1a0] sm:$0xff]
    %v4808 = vld [vmem:[#allocation10 + $0x1a8] sm:$0xff]
    %v4809 = vld [vmem:[#allocation10 + $0x1b0] sm:$0xff]
    %v4810 = vld [vmem:[#allocation10 + $0x1b8] sm:$0xff]
    %v4811 = vld [vmem:[#allocation10 + $0x1c0] sm:$0xff]
    %v4812 = vld [vmem:[#allocation10 + $0x1c8] sm:$0xff]
    %v4813 = vld [vmem:[#allocation10 + $0x1d0] sm:$0xff]
    %v4814 = vld [vmem:[#allocation10 + $0x1d8] sm:$0xff]
    %v4815 = vld [vmem:[#allocation10 + $0x1e0] sm:$0xff]
    %v4816 = vld [vmem:[#allocation10 + $0x1e8] sm:$0xff]
    %v4817 = vld [vmem:[#allocation10 + $0x1f0] sm:$0xff]
    %v4818 = vld [vmem:[#allocation10 + $0x1f8] sm:$0xff]
    %v4819 = vand.u32 %v4770, 4294901760
    %4820 = vmatpush.msra.mxu0 %v4819
    %v4821 = vand.u32 %v4769, 4294901760
    %4822 = vmatpush.msra.mxu0 %v4821
    %v4823 = vand.u32 %v4768, 4294901760
    %4824 = vmatpush.msra.mxu0 %v4823
    %v4825 = vand.u32 %v4767, 4294901760
    %4826 = vmatpush.msra.mxu0 %v4825
    %v4827 = vand.u32 %v4766, 4294901760
    %4828 = vmatpush.msra.mxu0 %v4827
    %v4829 = vand.u32 %v4765, 4294901760
    %4830 = vmatpush.msra.mxu0 %v4829
    %v4831 = vand.u32 %v4764, 4294901760
    %4832 = vmatpush.msra.mxu0 %v4831
    %v4833 = vand.u32 %v4763, 4294901760
    %4834 = vmatpush.msra.mxu0 %v4833
    %v4835 = vand.u32 %v4762, 4294901760
    %4836 = vmatpush.msra.mxu0 %v4835
    %v4837 = vand.u32 %v4761, 4294901760
    %4838 = vmatpush.msra.mxu0 %v4837
    %v4839 = vand.u32 %v4760, 4294901760
    %4840 = vmatpush.msra.mxu0 %v4839
    %v4841 = vand.u32 %v4759, 4294901760
    %4842 = vmatpush.msra.mxu0 %v4841
    %v4843 = vand.u32 %v4758, 4294901760
    %4844 = vmatpush.msra.mxu0 %v4843
    %v4845 = vand.u32 %v4757, 4294901760
    %4846 = vmatpush.msra.mxu0 %v4845
    %v4847 = vand.u32 %v4756, 4294901760
    %4848 = vmatpush.msra.mxu0 %v4847
    %v4849 = vand.u32 %v4755, 4294901760
    %4850 = vmatpush.msra.mxu0 %v4849
    %v4851 = vand.u32 %v3731, 4294901760
    %v4852 = vsub.f32 %v3731, %v4851
    %v4853 = vand.u32 %v4852, 4294901760
    %v4854 = vsub.f32 %v4852, %v4853
    %v4855 = vand.u32 %v4854, 4294901760
    %4856 = vmatmul.f32.gmra.mxu0 %v4855
    %v4857 = vpop.f32.mrf.mxu0
    %v4858 = vadd.f32 0.0, %v4857
    %v4859 = vand.u32 %v3732, 4294901760
    %v4860 = vsub.f32 %v3732, %v4859
    %v4861 = vand.u32 %v4860, 4294901760
    %v4862 = vsub.f32 %v4860, %v4861
    %v4863 = vand.u32 %v4862, 4294901760
    %4864 = vmatmul.f32.gmra.mxu0 %v4863
    %v4865 = vpop.f32.mrf.mxu0
    %v4866 = vadd.f32 0.0, %v4865
    %v4867 = vand.u32 %v3733, 4294901760
    %v4868 = vsub.f32 %v3733, %v4867
    %v4869 = vand.u32 %v4868, 4294901760
    %v4870 = vsub.f32 %v4868, %v4869
    %v4871 = vand.u32 %v4870, 4294901760
    %4872 = vmatmul.f32.gmra.mxu0 %v4871
    %v4873 = vpop.f32.mrf.mxu0
    %v4874 = vadd.f32 0.0, %v4873
    %v4875 = vand.u32 %v3734, 4294901760
    %v4876 = vsub.f32 %v3734, %v4875
    %v4877 = vand.u32 %v4876, 4294901760
    %v4878 = vsub.f32 %v4876, %v4877
    %v4879 = vand.u32 %v4878, 4294901760
    %4880 = vmatmul.f32.gmra.mxu0 %v4879
    %v4881 = vpop.f32.mrf.mxu0
    %v4882 = vadd.f32 0.0, %v4881
    %v4883 = vand.u32 %v3735, 4294901760
    %v4884 = vsub.f32 %v3735, %v4883
    %v4885 = vand.u32 %v4884, 4294901760
    %v4886 = vsub.f32 %v4884, %v4885
    %v4887 = vand.u32 %v4886, 4294901760
    %4888 = vmatmul.f32.gmra.mxu0 %v4887
    %v4889 = vpop.f32.mrf.mxu0
    %v4890 = vadd.f32 0.0, %v4889
    %v4891 = vand.u32 %v3736, 4294901760
    %v4892 = vsub.f32 %v3736, %v4891
    %v4893 = vand.u32 %v4892, 4294901760
    %v4894 = vsub.f32 %v4892, %v4893
    %v4895 = vand.u32 %v4894, 4294901760
    %4896 = vmatmul.f32.gmra.mxu0 %v4895
    %v4897 = vpop.f32.mrf.mxu0
    %v4898 = vadd.f32 0.0, %v4897
    %v4899 = vand.u32 %v3737, 4294901760
    %v4900 = vsub.f32 %v3737, %v4899
    %v4901 = vand.u32 %v4900, 4294901760
    %v4902 = vsub.f32 %v4900, %v4901
    %v4903 = vand.u32 %v4902, 4294901760
    %4904 = vmatmul.f32.gmra.mxu0 %v4903
    %v4905 = vpop.f32.mrf.mxu0
    %v4906 = vadd.f32 0.0, %v4905
    %v4907 = vand.u32 %v3738, 4294901760
    %v4908 = vsub.f32 %v3738, %v4907
    %v4909 = vand.u32 %v4908, 4294901760
    %v4910 = vsub.f32 %v4908, %v4909
    %v4911 = vand.u32 %v4910, 4294901760
    %4912 = vmatmul.f32.gmra.mxu0 %v4911
    %v4913 = vpop.f32.mrf.mxu0
    %v4914 = vadd.f32 0.0, %v4913
    %v4915 = vand.u32 %v3739, 4294901760
    %v4916 = vsub.f32 %v3739, %v4915
    %v4917 = vand.u32 %v4916, 4294901760
    %v4918 = vsub.f32 %v4916, %v4917
    %v4919 = vand.u32 %v4918, 4294901760
    %4920 = vmatmul.f32.gmra.mxu0 %v4919
    %v4921 = vpop.f32.mrf.mxu0
    %v4922 = vadd.f32 0.0, %v4921
    %v4923 = vand.u32 %v3740, 4294901760
    %v4924 = vsub.f32 %v3740, %v4923
    %v4925 = vand.u32 %v4924, 4294901760
    %v4926 = vsub.f32 %v4924, %v4925
    %v4927 = vand.u32 %v4926, 4294901760
    %4928 = vmatmul.f32.gmra.mxu0 %v4927
    %v4929 = vpop.f32.mrf.mxu0
    %v4930 = vadd.f32 0.0, %v4929
    %v4931 = vand.u32 %v3741, 4294901760
    %v4932 = vsub.f32 %v3741, %v4931
    %v4933 = vand.u32 %v4932, 4294901760
    %v4934 = vsub.f32 %v4932, %v4933
    %v4935 = vand.u32 %v4934, 4294901760
    %4936 = vmatmul.f32.gmra.mxu0 %v4935
    %v4937 = vpop.f32.mrf.mxu0
    %v4938 = vadd.f32 0.0, %v4937
    %v4939 = vand.u32 %v3742, 4294901760
    %v4940 = vsub.f32 %v3742, %v4939
    %v4941 = vand.u32 %v4940, 4294901760
    %v4942 = vsub.f32 %v4940, %v4941
    %v4943 = vand.u32 %v4942, 4294901760
    %4944 = vmatmul.f32.gmra.mxu0 %v4943
    %v4945 = vpop.f32.mrf.mxu0
    %v4946 = vadd.f32 0.0, %v4945
    %v4947 = vand.u32 %v3743, 4294901760
    %v4948 = vsub.f32 %v3743, %v4947
    %v4949 = vand.u32 %v4948, 4294901760
    %v4950 = vsub.f32 %v4948, %v4949
    %v4951 = vand.u32 %v4950, 4294901760
    %4952 = vmatmul.f32.gmra.mxu0 %v4951
    %v4953 = vpop.f32.mrf.mxu0
    %v4954 = vadd.f32 0.0, %v4953
    %v4955 = vand.u32 %v3744, 4294901760
    %v4956 = vsub.f32 %v3744, %v4955
    %v4957 = vand.u32 %v4956, 4294901760
    %v4958 = vsub.f32 %v4956, %v4957
    %v4959 = vand.u32 %v4958, 4294901760
    %4960 = vmatmul.f32.gmra.mxu0 %v4959
    %v4961 = vpop.f32.mrf.mxu0
    %v4962 = vadd.f32 0.0, %v4961
    %v4963 = vand.u32 %v3745, 4294901760
    %v4964 = vsub.f32 %v3745, %v4963
    %v4965 = vand.u32 %v4964, 4294901760
    %v4966 = vsub.f32 %v4964, %v4965
    %v4967 = vand.u32 %v4966, 4294901760
    %4968 = vmatmul.f32.gmra.mxu0 %v4967
    %v4969 = vpop.f32.mrf.mxu0
    %v4970 = vadd.f32 0.0, %v4969
    %v4971 = vand.u32 %v3746, 4294901760
    %v4972 = vsub.f32 %v3746, %v4971
    %v4973 = vand.u32 %v4972, 4294901760
    %v4974 = vsub.f32 %v4972, %v4973
    %v4975 = vand.u32 %v4974, 4294901760
    %4976 = vmatmul.f32.gmra.mxu0 %v4975
    %v4977 = vpop.f32.mrf.mxu0
    %v4978 = vadd.f32 0.0, %v4977
    %4979 = vdwg.mxu0
    %v4980 = vand.u32 %v4770, 4294901760
    %v4981 = vsub.f32 %v4770, %v4980
    %v4982 = vand.u32 %v4981, 4294901760
    %v4983 = vsub.f32 %v4981, %v4982
    %v4984 = vand.u32 %v4983, 4294901760
    %4985 = vmatpush.msra.mxu0 %v4984
    %v4986 = vand.u32 %v4769, 4294901760
    %v4987 = vsub.f32 %v4769, %v4986
    %v4988 = vand.u32 %v4987, 4294901760
    %v4989 = vsub.f32 %v4987, %v4988
    %v4990 = vand.u32 %v4989, 4294901760
    %4991 = vmatpush.msra.mxu0 %v4990
    %v4992 = vand.u32 %v4768, 4294901760
    %v4993 = vsub.f32 %v4768, %v4992
    %v4994 = vand.u32 %v4993, 4294901760
    %v4995 = vsub.f32 %v4993, %v4994
    %v4996 = vand.u32 %v4995, 4294901760
    %4997 = vmatpush.msra.mxu0 %v4996
    %v4998 = vand.u32 %v4767, 4294901760
    %v4999 = vsub.f32 %v4767, %v4998
    %v5000 = vand.u32 %v4999, 4294901760
    %v5001 = vsub.f32 %v4999, %v5000
    %v5002 = vand.u32 %v5001, 4294901760
    %5003 = vmatpush.msra.mxu0 %v5002
    %v5004 = vand.u32 %v4766, 4294901760
    %v5005 = vsub.f32 %v4766, %v5004
    %v5006 = vand.u32 %v5005, 4294901760
    %v5007 = vsub.f32 %v5005, %v5006
    %v5008 = vand.u32 %v5007, 4294901760
    %5009 = vmatpush.msra.mxu0 %v5008
    %v5010 = vand.u32 %v4765, 4294901760
    %v5011 = vsub.f32 %v4765, %v5010
    %v5012 = vand.u32 %v5011, 4294901760
    %v5013 = vsub.f32 %v5011, %v5012
    %v5014 = vand.u32 %v5013, 4294901760
    %5015 = vmatpush.msra.mxu0 %v5014
    %v5016 = vand.u32 %v4764, 4294901760
    %v5017 = vsub.f32 %v4764, %v5016
    %v5018 = vand.u32 %v5017, 4294901760
    %v5019 = vsub.f32 %v5017, %v5018
    %v5020 = vand.u32 %v5019, 4294901760
    %5021 = vmatpush.msra.mxu0 %v5020
    %v5022 = vand.u32 %v4763, 4294901760
    %v5023 = vsub.f32 %v4763, %v5022
    %v5024 = vand.u32 %v5023, 4294901760
    %v5025 = vsub.f32 %v5023, %v5024
    %v5026 = vand.u32 %v5025, 4294901760
    %5027 = vmatpush.msra.mxu0 %v5026
    %v5028 = vand.u32 %v4762, 4294901760
    %v5029 = vsub.f32 %v4762, %v5028
    %v5030 = vand.u32 %v5029, 4294901760
    %v5031 = vsub.f32 %v5029, %v5030
    %v5032 = vand.u32 %v5031, 4294901760
    %5033 = vmatpush.msra.mxu0 %v5032
    %v5034 = vand.u32 %v4761, 4294901760
    %v5035 = vsub.f32 %v4761, %v5034
    %v5036 = vand.u32 %v5035, 4294901760
    %v5037 = vsub.f32 %v5035, %v5036
    %v5038 = vand.u32 %v5037, 4294901760
    %5039 = vmatpush.msra.mxu0 %v5038
    %v5040 = vand.u32 %v4760, 4294901760
    %v5041 = vsub.f32 %v4760, %v5040
    %v5042 = vand.u32 %v5041, 4294901760
    %v5043 = vsub.f32 %v5041, %v5042
    %v5044 = vand.u32 %v5043, 4294901760
    %5045 = vmatpush.msra.mxu0 %v5044
    %v5046 = vand.u32 %v4759, 4294901760
    %v5047 = vsub.f32 %v4759, %v5046
    %v5048 = vand.u32 %v5047, 4294901760
    %v5049 = vsub.f32 %v5047, %v5048
    %v5050 = vand.u32 %v5049, 4294901760
    %5051 = vmatpush.msra.mxu0 %v5050
    %v5052 = vand.u32 %v4758, 4294901760
    %v5053 = vsub.f32 %v4758, %v5052
    %v5054 = vand.u32 %v5053, 4294901760
    %v5055 = vsub.f32 %v5053, %v5054
    %v5056 = vand.u32 %v5055, 4294901760
    %5057 = vmatpush.msra.mxu0 %v5056
    %v5058 = vand.u32 %v4757, 4294901760
    %v5059 = vsub.f32 %v4757, %v5058
    %v5060 = vand.u32 %v5059, 4294901760
    %v5061 = vsub.f32 %v5059, %v5060
    %v5062 = vand.u32 %v5061, 4294901760
    %5063 = vmatpush.msra.mxu0 %v5062
    %v5064 = vand.u32 %v4756, 4294901760
    %v5065 = vsub.f32 %v4756, %v5064
    %v5066 = vand.u32 %v5065, 4294901760
    %v5067 = vsub.f32 %v5065, %v5066
    %v5068 = vand.u32 %v5067, 4294901760
    %5069 = vmatpush.msra.mxu0 %v5068
    %v5070 = vand.u32 %v4755, 4294901760
    %v5071 = vsub.f32 %v4755, %v5070
    %v5072 = vand.u32 %v5071, 4294901760
    %v5073 = vsub.f32 %v5071, %v5072
    %v5074 = vand.u32 %v5073, 4294901760
    %5075 = vmatpush.msra.mxu0 %v5074
    %v5076 = vand.u32 %v3731, 4294901760
    %5077 = vmatmul.f32.gmra.mxu0 %v5076
    %v5078 = vpop.f32.mrf.mxu0
    %v5079 = vadd.f32 %v4858, %v5078
    %v5080 = vand.u32 %v3732, 4294901760
    %5081 = vmatmul.f32.gmra.mxu0 %v5080
    %v5082 = vpop.f32.mrf.mxu0
    %v5083 = vadd.f32 %v4866, %v5082
    %v5084 = vand.u32 %v3733, 4294901760
    %5085 = vmatmul.f32.gmra.mxu0 %v5084
    %v5086 = vpop.f32.mrf.mxu0
    %v5087 = vadd.f32 %v4874, %v5086
    %v5088 = vand.u32 %v3734, 4294901760
    %5089 = vmatmul.f32.gmra.mxu0 %v5088
    %v5090 = vpop.f32.mrf.mxu0
    %v5091 = vadd.f32 %v4882, %v5090
    %v5092 = vand.u32 %v3735, 4294901760
    %5093 = vmatmul.f32.gmra.mxu0 %v5092
    %v5094 = vpop.f32.mrf.mxu0
    %v5095 = vadd.f32 %v4890, %v5094
    %v5096 = vand.u32 %v3736, 4294901760
    %5097 = vmatmul.f32.gmra.mxu0 %v5096
    %v5098 = vpop.f32.mrf.mxu0
    %v5099 = vadd.f32 %v4898, %v5098
    %v5100 = vand.u32 %v3737, 4294901760
    %5101 = vmatmul.f32.gmra.mxu0 %v5100
    %v5102 = vpop.f32.mrf.mxu0
    %v5103 = vadd.f32 %v4906, %v5102
    %v5104 = vand.u32 %v3738, 4294901760
    %5105 = vmatmul.f32.gmra.mxu0 %v5104
    %v5106 = vpop.f32.mrf.mxu0
    %v5107 = vadd.f32 %v4914, %v5106
    %v5108 = vand.u32 %v3739, 4294901760
    %5109 = vmatmul.f32.gmra.mxu0 %v5108
    %v5110 = vpop.f32.mrf.mxu0
    %v5111 = vadd.f32 %v4922, %v5110
    %v5112 = vand.u32 %v3740, 4294901760
    %5113 = vmatmul.f32.gmra.mxu0 %v5112
    %v5114 = vpop.f32.mrf.mxu0
    %v5115 = vadd.f32 %v4930, %v5114
    %v5116 = vand.u32 %v3741, 4294901760
    %5117 = vmatmul.f32.gmra.mxu0 %v5116
    %v5118 = vpop.f32.mrf.mxu0
    %v5119 = vadd.f32 %v4938, %v5118
    %v5120 = vand.u32 %v3742, 4294901760
    %5121 = vmatmul.f32.gmra.mxu0 %v5120
    %v5122 = vpop.f32.mrf.mxu0
    %v5123 = vadd.f32 %v4946, %v5122
    %v5124 = vand.u32 %v3743, 4294901760
    %5125 = vmatmul.f32.gmra.mxu0 %v5124
    %v5126 = vpop.f32.mrf.mxu0
    %v5127 = vadd.f32 %v4954, %v5126
    %v5128 = vand.u32 %v3744, 4294901760
    %5129 = vmatmul.f32.gmra.mxu0 %v5128
    %v5130 = vpop.f32.mrf.mxu0
    %v5131 = vadd.f32 %v4962, %v5130
    %v5132 = vand.u32 %v3745, 4294901760
    %5133 = vmatmul.f32.gmra.mxu0 %v5132
    %v5134 = vpop.f32.mrf.mxu0
    %v5135 = vadd.f32 %v4970, %v5134
    %v5136 = vand.u32 %v3746, 4294901760
    %5137 = vmatmul.f32.gmra.mxu0 %v5136
    %v5138 = vpop.f32.mrf.mxu0
    %v5139 = vadd.f32 %v4978, %v5138
    %5140 = vdwg.mxu0
    %v5141 = vand.u32 %v4770, 4294901760
    %v5142 = vsub.f32 %v4770, %v5141
    %5143 = vmatpush.msra.mxu0 %v5142
    %v5144 = vand.u32 %v4769, 4294901760
    %v5145 = vsub.f32 %v4769, %v5144
    %5146 = vmatpush.msra.mxu0 %v5145
    %v5147 = vand.u32 %v4768, 4294901760
    %v5148 = vsub.f32 %v4768, %v5147
    %5149 = vmatpush.msra.mxu0 %v5148
    %v5150 = vand.u32 %v4767, 4294901760
    %v5151 = vsub.f32 %v4767, %v5150
    %5152 = vmatpush.msra.mxu0 %v5151
    %v5153 = vand.u32 %v4766, 4294901760
    %v5154 = vsub.f32 %v4766, %v5153
    %5155 = vmatpush.msra.mxu0 %v5154
    %v5156 = vand.u32 %v4765, 4294901760
    %v5157 = vsub.f32 %v4765, %v5156
    %5158 = vmatpush.msra.mxu0 %v5157
    %v5159 = vand.u32 %v4764, 4294901760
    %v5160 = vsub.f32 %v4764, %v5159
    %5161 = vmatpush.msra.mxu0 %v5160
    %v5162 = vand.u32 %v4763, 4294901760
    %v5163 = vsub.f32 %v4763, %v5162
    %5164 = vmatpush.msra.mxu0 %v5163
    %v5165 = vand.u32 %v4762, 4294901760
    %v5166 = vsub.f32 %v4762, %v5165
    %5167 = vmatpush.msra.mxu0 %v5166
    %v5168 = vand.u32 %v4761, 4294901760
    %v5169 = vsub.f32 %v4761, %v5168
    %5170 = vmatpush.msra.mxu0 %v5169
    %v5171 = vand.u32 %v4760, 4294901760
    %v5172 = vsub.f32 %v4760, %v5171
    %5173 = vmatpush.msra.mxu0 %v5172
    %v5174 = vand.u32 %v4759, 4294901760
    %v5175 = vsub.f32 %v4759, %v5174
    %5176 = vmatpush.msra.mxu0 %v5175
    %v5177 = vand.u32 %v4758, 4294901760
    %v5178 = vsub.f32 %v4758, %v5177
    %5179 = vmatpush.msra.mxu0 %v5178
    %v5180 = vand.u32 %v4757, 4294901760
    %v5181 = vsub.f32 %v4757, %v5180
    %5182 = vmatpush.msra.mxu0 %v5181
    %v5183 = vand.u32 %v4756, 4294901760
    %v5184 = vsub.f32 %v4756, %v5183
    %5185 = vmatpush.msra.mxu0 %v5184
    %v5186 = vand.u32 %v4755, 4294901760
    %v5187 = vsub.f32 %v4755, %v5186
    %5188 = vmatpush.msra.mxu0 %v5187
    %v5189 = vand.u32 %v3731, 4294901760
    %v5190 = vsub.f32 %v3731, %v5189
    %5191 = vmatmul.f32.gmra.mxu0 %v5190
    %v5192 = vpop.f32.mrf.mxu0
    %v5193 = vadd.f32 %v5079, %v5192
    %v5194 = vand.u32 %v3732, 4294901760
    %v5195 = vsub.f32 %v3732, %v5194
    %5196 = vmatmul.f32.gmra.mxu0 %v5195
    %v5197 = vpop.f32.mrf.mxu0
    %v5198 = vadd.f32 %v5083, %v5197
    %v5199 = vand.u32 %v3733, 4294901760
    %v5200 = vsub.f32 %v3733, %v5199
    %5201 = vmatmul.f32.gmra.mxu0 %v5200
    %v5202 = vpop.f32.mrf.mxu0
    %v5203 = vadd.f32 %v5087, %v5202
    %v5204 = vand.u32 %v3734, 4294901760
    %v5205 = vsub.f32 %v3734, %v5204
    %5206 = vmatmul.f32.gmra.mxu0 %v5205
    %v5207 = vpop.f32.mrf.mxu0
    %v5208 = vadd.f32 %v5091, %v5207
    %v5209 = vand.u32 %v3735, 4294901760
    %v5210 = vsub.f32 %v3735, %v5209
    %5211 = vmatmul.f32.gmra.mxu0 %v5210
    %v5212 = vpop.f32.mrf.mxu0
    %v5213 = vadd.f32 %v5095, %v5212
    %v5214 = vand.u32 %v3736, 4294901760
    %v5215 = vsub.f32 %v3736, %v5214
    %5216 = vmatmul.f32.gmra.mxu0 %v5215
    %v5217 = vpop.f32.mrf.mxu0
    %v5218 = vadd.f32 %v5099, %v5217
    %v5219 = vand.u32 %v3737, 4294901760
    %v5220 = vsub.f32 %v3737, %v5219
    %5221 = vmatmul.f32.gmra.mxu0 %v5220
    %v5222 = vpop.f32.mrf.mxu0
    %v5223 = vadd.f32 %v5103, %v5222
    %v5224 = vand.u32 %v3738, 4294901760
    %v5225 = vsub.f32 %v3738, %v5224
    %5226 = vmatmul.f32.gmra.mxu0 %v5225
    %v5227 = vpop.f32.mrf.mxu0
    %v5228 = vadd.f32 %v5107, %v5227
    %v5229 = vand.u32 %v3739, 4294901760
    %v5230 = vsub.f32 %v3739, %v5229
    %5231 = vmatmul.f32.gmra.mxu0 %v5230
    %v5232 = vpop.f32.mrf.mxu0
    %v5233 = vadd.f32 %v5111, %v5232
    %v5234 = vand.u32 %v3740, 4294901760
    %v5235 = vsub.f32 %v3740, %v5234
    %5236 = vmatmul.f32.gmra.mxu0 %v5235
    %v5237 = vpop.f32.mrf.mxu0
    %v5238 = vadd.f32 %v5115, %v5237
    %v5239 = vand.u32 %v3741, 4294901760
    %v5240 = vsub.f32 %v3741, %v5239
    %5241 = vmatmul.f32.gmra.mxu0 %v5240
    %v5242 = vpop.f32.mrf.mxu0
    %v5243 = vadd.f32 %v5119, %v5242
    %v5244 = vand.u32 %v3742, 4294901760
    %v5245 = vsub.f32 %v3742, %v5244
    %5246 = vmatmul.f32.gmra.mxu0 %v5245
    %v5247 = vpop.f32.mrf.mxu0
    %v5248 = vadd.f32 %v5123, %v5247
    %v5249 = vand.u32 %v3743, 4294901760
    %v5250 = vsub.f32 %v3743, %v5249
    %5251 = vmatmul.f32.gmra.mxu0 %v5250
    %v5252 = vpop.f32.mrf.mxu0
    %v5253 = vadd.f32 %v5127, %v5252
    %v5254 = vand.u32 %v3744, 4294901760
    %v5255 = vsub.f32 %v3744, %v5254
    %5256 = vmatmul.f32.gmra.mxu0 %v5255
    %v5257 = vpop.f32.mrf.mxu0
    %v5258 = vadd.f32 %v5131, %v5257
    %v5259 = vand.u32 %v3745, 4294901760
    %v5260 = vsub.f32 %v3745, %v5259
    %5261 = vmatmul.f32.gmra.mxu0 %v5260
    %v5262 = vpop.f32.mrf.mxu0
    %v5263 = vadd.f32 %v5135, %v5262
    %v5264 = vand.u32 %v3746, 4294901760
    %v5265 = vsub.f32 %v3746, %v5264
    %5266 = vmatmul.f32.gmra.mxu0 %v5265
    %v5267 = vpop.f32.mrf.mxu0
    %v5268 = vadd.f32 %v5139, %v5267
    %5269 = vdwg.mxu0
    %v5270 = vand.u32 %v4770, 4294901760
    %5271 = vmatpush.msra.mxu0 %v5270
    %v5272 = vand.u32 %v4769, 4294901760
    %5273 = vmatpush.msra.mxu0 %v5272
    %v5274 = vand.u32 %v4768, 4294901760
    %5275 = vmatpush.msra.mxu0 %v5274
    %v5276 = vand.u32 %v4767, 4294901760
    %5277 = vmatpush.msra.mxu0 %v5276
    %v5278 = vand.u32 %v4766, 4294901760
    %5279 = vmatpush.msra.mxu0 %v5278
    %v5280 = vand.u32 %v4765, 4294901760
    %5281 = vmatpush.msra.mxu0 %v5280
    %v5282 = vand.u32 %v4764, 4294901760
    %5283 = vmatpush.msra.mxu0 %v5282
    %v5284 = vand.u32 %v4763, 4294901760
    %5285 = vmatpush.msra.mxu0 %v5284
    %v5286 = vand.u32 %v4762, 4294901760
    %5287 = vmatpush.msra.mxu0 %v5286
    %v5288 = vand.u32 %v4761, 4294901760
    %5289 = vmatpush.msra.mxu0 %v5288
    %v5290 = vand.u32 %v4760, 4294901760
    %5291 = vmatpush.msra.mxu0 %v5290
    %v5292 = vand.u32 %v4759, 4294901760
    %5293 = vmatpush.msra.mxu0 %v5292
    %v5294 = vand.u32 %v4758, 4294901760
    %5295 = vmatpush.msra.mxu0 %v5294
    %v5296 = vand.u32 %v4757, 4294901760
    %5297 = vmatpush.msra.mxu0 %v5296
    %v5298 = vand.u32 %v4756, 4294901760
    %5299 = vmatpush.msra.mxu0 %v5298
    %v5300 = vand.u32 %v4755, 4294901760
    %5301 = vmatpush.msra.mxu0 %v5300
    %v5302 = vand.u32 %v3731, 4294901760
    %v5303 = vsub.f32 %v3731, %v5302
    %v5304 = vand.u32 %v5303, 4294901760
    %5305 = vmatmul.f32.gmra.mxu0 %v5304
    %v5306 = vpop.f32.mrf.mxu0
    %v5307 = vadd.f32 %v5193, %v5306
    %v5308 = vand.u32 %v3732, 4294901760
    %v5309 = vsub.f32 %v3732, %v5308
    %v5310 = vand.u32 %v5309, 4294901760
    %5311 = vmatmul.f32.gmra.mxu0 %v5310
    %v5312 = vpop.f32.mrf.mxu0
    %v5313 = vadd.f32 %v5198, %v5312
    %v5314 = vand.u32 %v3733, 4294901760
    %v5315 = vsub.f32 %v3733, %v5314
    %v5316 = vand.u32 %v5315, 4294901760
    %5317 = vmatmul.f32.gmra.mxu0 %v5316
    %v5318 = vpop.f32.mrf.mxu0
    %v5319 = vadd.f32 %v5203, %v5318
    %v5320 = vand.u32 %v3734, 4294901760
    %v5321 = vsub.f32 %v3734, %v5320
    %v5322 = vand.u32 %v5321, 4294901760
    %5323 = vmatmul.f32.gmra.mxu0 %v5322
    %v5324 = vpop.f32.mrf.mxu0
    %v5325 = vadd.f32 %v5208, %v5324
    %v5326 = vand.u32 %v3735, 4294901760
    %v5327 = vsub.f32 %v3735, %v5326
    %v5328 = vand.u32 %v5327, 4294901760
    %5329 = vmatmul.f32.gmra.mxu0 %v5328
    %v5330 = vpop.f32.mrf.mxu0
    %v5331 = vadd.f32 %v5213, %v5330
    %v5332 = vand.u32 %v3736, 4294901760
    %v5333 = vsub.f32 %v3736, %v5332
    %v5334 = vand.u32 %v5333, 4294901760
    %5335 = vmatmul.f32.gmra.mxu0 %v5334
    %v5336 = vpop.f32.mrf.mxu0
    %v5337 = vadd.f32 %v5218, %v5336
    %v5338 = vand.u32 %v3737, 4294901760
    %v5339 = vsub.f32 %v3737, %v5338
    %v5340 = vand.u32 %v5339, 4294901760
    %5341 = vmatmul.f32.gmra.mxu0 %v5340
    %v5342 = vpop.f32.mrf.mxu0
    %v5343 = vadd.f32 %v5223, %v5342
    %v5344 = vand.u32 %v3738, 4294901760
    %v5345 = vsub.f32 %v3738, %v5344
    %v5346 = vand.u32 %v5345, 4294901760
    %5347 = vmatmul.f32.gmra.mxu0 %v5346
    %v5348 = vpop.f32.mrf.mxu0
    %v5349 = vadd.f32 %v5228, %v5348
    %v5350 = vand.u32 %v3739, 4294901760
    %v5351 = vsub.f32 %v3739, %v5350
    %v5352 = vand.u32 %v5351, 4294901760
    %5353 = vmatmul.f32.gmra.mxu0 %v5352
    %v5354 = vpop.f32.mrf.mxu0
    %v5355 = vadd.f32 %v5233, %v5354
    %v5356 = vand.u32 %v3740, 4294901760
    %v5357 = vsub.f32 %v3740, %v5356
    %v5358 = vand.u32 %v5357, 4294901760
    %5359 = vmatmul.f32.gmra.mxu0 %v5358
    %v5360 = vpop.f32.mrf.mxu0
    %v5361 = vadd.f32 %v5238, %v5360
    %v5362 = vand.u32 %v3741, 4294901760
    %v5363 = vsub.f32 %v3741, %v5362
    %v5364 = vand.u32 %v5363, 4294901760
    %5365 = vmatmul.f32.gmra.mxu0 %v5364
    %v5366 = vpop.f32.mrf.mxu0
    %v5367 = vadd.f32 %v5243, %v5366
    %v5368 = vand.u32 %v3742, 4294901760
    %v5369 = vsub.f32 %v3742, %v5368
    %v5370 = vand.u32 %v5369, 4294901760
    %5371 = vmatmul.f32.gmra.mxu0 %v5370
    %v5372 = vpop.f32.mrf.mxu0
    %v5373 = vadd.f32 %v5248, %v5372
    %v5374 = vand.u32 %v3743, 4294901760
    %v5375 = vsub.f32 %v3743, %v5374
    %v5376 = vand.u32 %v5375, 4294901760
    %5377 = vmatmul.f32.gmra.mxu0 %v5376
    %v5378 = vpop.f32.mrf.mxu0
    %v5379 = vadd.f32 %v5253, %v5378
    %v5380 = vand.u32 %v3744, 4294901760
    %v5381 = vsub.f32 %v3744, %v5380
    %v5382 = vand.u32 %v5381, 4294901760
    %5383 = vmatmul.f32.gmra.mxu0 %v5382
    %v5384 = vpop.f32.mrf.mxu0
    %v5385 = vadd.f32 %v5258, %v5384
    %v5386 = vand.u32 %v3745, 4294901760
    %v5387 = vsub.f32 %v3745, %v5386
    %v5388 = vand.u32 %v5387, 4294901760
    %5389 = vmatmul.f32.gmra.mxu0 %v5388
    %v5390 = vpop.f32.mrf.mxu0
    %v5391 = vadd.f32 %v5263, %v5390
    %v5392 = vand.u32 %v3746, 4294901760
    %v5393 = vsub.f32 %v3746, %v5392
    %v5394 = vand.u32 %v5393, 4294901760
    %5395 = vmatmul.f32.gmra.mxu0 %v5394
    %v5396 = vpop.f32.mrf.mxu0
    %v5397 = vadd.f32 %v5268, %v5396
    %5398 = vdwg.mxu0
    %v5399 = vand.u32 %v4770, 4294901760
    %v5400 = vsub.f32 %v4770, %v5399
    %v5401 = vand.u32 %v5400, 4294901760
    %5402 = vmatpush.msra.mxu0 %v5401
    %v5403 = vand.u32 %v4769, 4294901760
    %v5404 = vsub.f32 %v4769, %v5403
    %v5405 = vand.u32 %v5404, 4294901760
    %5406 = vmatpush.msra.mxu0 %v5405
    %v5407 = vand.u32 %v4768, 4294901760
    %v5408 = vsub.f32 %v4768, %v5407
    %v5409 = vand.u32 %v5408, 4294901760
    %5410 = vmatpush.msra.mxu0 %v5409
    %v5411 = vand.u32 %v4767, 4294901760
    %v5412 = vsub.f32 %v4767, %v5411
    %v5413 = vand.u32 %v5412, 4294901760
    %5414 = vmatpush.msra.mxu0 %v5413
    %v5415 = vand.u32 %v4766, 4294901760
    %v5416 = vsub.f32 %v4766, %v5415
    %v5417 = vand.u32 %v5416, 4294901760
    %5418 = vmatpush.msra.mxu0 %v5417
    %v5419 = vand.u32 %v4765, 4294901760
    %v5420 = vsub.f32 %v4765, %v5419
    %v5421 = vand.u32 %v5420, 4294901760
    %5422 = vmatpush.msra.mxu0 %v5421
    %v5423 = vand.u32 %v4764, 4294901760
    %v5424 = vsub.f32 %v4764, %v5423
    %v5425 = vand.u32 %v5424, 4294901760
    %5426 = vmatpush.msra.mxu0 %v5425
    %v5427 = vand.u32 %v4763, 4294901760
    %v5428 = vsub.f32 %v4763, %v5427
    %v5429 = vand.u32 %v5428, 4294901760
    %5430 = vmatpush.msra.mxu0 %v5429
    %v5431 = vand.u32 %v4762, 4294901760
    %v5432 = vsub.f32 %v4762, %v5431
    %v5433 = vand.u32 %v5432, 4294901760
    %5434 = vmatpush.msra.mxu0 %v5433
    %v5435 = vand.u32 %v4761, 4294901760
    %v5436 = vsub.f32 %v4761, %v5435
    %v5437 = vand.u32 %v5436, 4294901760
    %5438 = vmatpush.msra.mxu0 %v5437
    %v5439 = vand.u32 %v4760, 4294901760
    %v5440 = vsub.f32 %v4760, %v5439
    %v5441 = vand.u32 %v5440, 4294901760
    %5442 = vmatpush.msra.mxu0 %v5441
    %v5443 = vand.u32 %v4759, 4294901760
    %v5444 = vsub.f32 %v4759, %v5443
    %v5445 = vand.u32 %v5444, 4294901760
    %5446 = vmatpush.msra.mxu0 %v5445
    %v5447 = vand.u32 %v4758, 4294901760
    %v5448 = vsub.f32 %v4758, %v5447
    %v5449 = vand.u32 %v5448, 4294901760
    %5450 = vmatpush.msra.mxu0 %v5449
    %v5451 = vand.u32 %v4757, 4294901760
    %v5452 = vsub.f32 %v4757, %v5451
    %v5453 = vand.u32 %v5452, 4294901760
    %5454 = vmatpush.msra.mxu0 %v5453
    %v5455 = vand.u32 %v4756, 4294901760
    %v5456 = vsub.f32 %v4756, %v5455
    %v5457 = vand.u32 %v5456, 4294901760
    %5458 = vmatpush.msra.mxu0 %v5457
    %v5459 = vand.u32 %v4755, 4294901760
    %v5460 = vsub.f32 %v4755, %v5459
    %v5461 = vand.u32 %v5460, 4294901760
    %5462 = vmatpush.msra.mxu0 %v5461
    %v5463 = vand.u32 %v3731, 4294901760
    %5464 = vmatmul.f32.gmra.mxu0 %v5463
    %v5465 = vpop.f32.mrf.mxu0
    %v5466 = vadd.f32 %v5307, %v5465
    %v5467 = vand.u32 %v3732, 4294901760
    %5468 = vmatmul.f32.gmra.mxu0 %v5467
    %v5469 = vpop.f32.mrf.mxu0
    %v5470 = vadd.f32 %v5313, %v5469
    %v5471 = vand.u32 %v3733, 4294901760
    %5472 = vmatmul.f32.gmra.mxu0 %v5471
    %v5473 = vpop.f32.mrf.mxu0
    %v5474 = vadd.f32 %v5319, %v5473
    %v5475 = vand.u32 %v3734, 4294901760
    %5476 = vmatmul.f32.gmra.mxu0 %v5475
    %v5477 = vpop.f32.mrf.mxu0
    %v5478 = vadd.f32 %v5325, %v5477
    %v5479 = vand.u32 %v3735, 4294901760
    %5480 = vmatmul.f32.gmra.mxu0 %v5479
    %v5481 = vpop.f32.mrf.mxu0
    %v5482 = vadd.f32 %v5331, %v5481
    %v5483 = vand.u32 %v3736, 4294901760
    %5484 = vmatmul.f32.gmra.mxu0 %v5483
    %v5485 = vpop.f32.mrf.mxu0
    %v5486 = vadd.f32 %v5337, %v5485
    %v5487 = vand.u32 %v3737, 4294901760
    %5488 = vmatmul.f32.gmra.mxu0 %v5487
    %v5489 = vpop.f32.mrf.mxu0
    %v5490 = vadd.f32 %v5343, %v5489
    %v5491 = vand.u32 %v3738, 4294901760
    %5492 = vmatmul.f32.gmra.mxu0 %v5491
    %v5493 = vpop.f32.mrf.mxu0
    %v5494 = vadd.f32 %v5349, %v5493
    %v5495 = vand.u32 %v3739, 4294901760
    %5496 = vmatmul.f32.gmra.mxu0 %v5495
    %v5497 = vpop.f32.mrf.mxu0
    %v5498 = vadd.f32 %v5355, %v5497
    %v5499 = vand.u32 %v3740, 4294901760
    %5500 = vmatmul.f32.gmra.mxu0 %v5499
    %v5501 = vpop.f32.mrf.mxu0
    %v5502 = vadd.f32 %v5361, %v5501
    %v5503 = vand.u32 %v3741, 4294901760
    %5504 = vmatmul.f32.gmra.mxu0 %v5503
    %v5505 = vpop.f32.mrf.mxu0
    %v5506 = vadd.f32 %v5367, %v5505
    %v5507 = vand.u32 %v3742, 4294901760
    %5508 = vmatmul.f32.gmra.mxu0 %v5507
    %v5509 = vpop.f32.mrf.mxu0
    %v5510 = vadd.f32 %v5373, %v5509
    %v5511 = vand.u32 %v3743, 4294901760
    %5512 = vmatmul.f32.gmra.mxu0 %v5511
    %v5513 = vpop.f32.mrf.mxu0
    %v5514 = vadd.f32 %v5379, %v5513
    %v5515 = vand.u32 %v3744, 4294901760
    %5516 = vmatmul.f32.gmra.mxu0 %v5515
    %v5517 = vpop.f32.mrf.mxu0
    %v5518 = vadd.f32 %v5385, %v5517
    %v5519 = vand.u32 %v3745, 4294901760
    %5520 = vmatmul.f32.gmra.mxu0 %v5519
    %v5521 = vpop.f32.mrf.mxu0
    %v5522 = vadd.f32 %v5391, %v5521
    %v5523 = vand.u32 %v3746, 4294901760
    %5524 = vmatmul.f32.gmra.mxu0 %v5523
    %v5525 = vpop.f32.mrf.mxu0
    %v5526 = vadd.f32 %v5397, %v5525
    %5527 = vdwg.mxu0
    %v5528 = vand.u32 %v4770, 4294901760
    %5529 = vmatpush.msra.mxu0 %v5528
    %v5530 = vand.u32 %v4769, 4294901760
    %5531 = vmatpush.msra.mxu0 %v5530
    %v5532 = vand.u32 %v4768, 4294901760
    %5533 = vmatpush.msra.mxu0 %v5532
    %v5534 = vand.u32 %v4767, 4294901760
    %5535 = vmatpush.msra.mxu0 %v5534
    %v5536 = vand.u32 %v4766, 4294901760
    %5537 = vmatpush.msra.mxu0 %v5536
    %v5538 = vand.u32 %v4765, 4294901760
    %5539 = vmatpush.msra.mxu0 %v5538
    %v5540 = vand.u32 %v4764, 4294901760
    %5541 = vmatpush.msra.mxu0 %v5540
    %v5542 = vand.u32 %v4763, 4294901760
    %5543 = vmatpush.msra.mxu0 %v5542
    %v5544 = vand.u32 %v4762, 4294901760
    %5545 = vmatpush.msra.mxu0 %v5544
    %v5546 = vand.u32 %v4761, 4294901760
    %5547 = vmatpush.msra.mxu0 %v5546
    %v5548 = vand.u32 %v4760, 4294901760
    %5549 = vmatpush.msra.mxu0 %v5548
    %v5550 = vand.u32 %v4759, 4294901760
    %5551 = vmatpush.msra.mxu0 %v5550
    %v5552 = vand.u32 %v4758, 4294901760
    %5553 = vmatpush.msra.mxu0 %v5552
    %v5554 = vand.u32 %v4757, 4294901760
    %5555 = vmatpush.msra.mxu0 %v5554
    %v5556 = vand.u32 %v4756, 4294901760
    %5557 = vmatpush.msra.mxu0 %v5556
    %v5558 = vand.u32 %v4755, 4294901760
    %5559 = vmatpush.msra.mxu0 %v5558
    %v5560 = vand.u32 %v3731, 4294901760
    %5561 = vmatmul.f32.gmra.mxu0 %v5560
    %v5562 = vpop.f32.mrf.mxu0
    %v5563 = vadd.f32 %v5466, %v5562
    %v5564 = vand.u32 %v3732, 4294901760
    %5565 = vmatmul.f32.gmra.mxu0 %v5564
    %v5566 = vpop.f32.mrf.mxu0
    %v5567 = vadd.f32 %v5470, %v5566
    %v5568 = vand.u32 %v3733, 4294901760
    %5569 = vmatmul.f32.gmra.mxu0 %v5568
    %v5570 = vpop.f32.mrf.mxu0
    %v5571 = vadd.f32 %v5474, %v5570
    %v5572 = vand.u32 %v3734, 4294901760
    %5573 = vmatmul.f32.gmra.mxu0 %v5572
    %v5574 = vpop.f32.mrf.mxu0
    %v5575 = vadd.f32 %v5478, %v5574
    %v5576 = vand.u32 %v3735, 4294901760
    %5577 = vmatmul.f32.gmra.mxu0 %v5576
    %v5578 = vpop.f32.mrf.mxu0
    %v5579 = vadd.f32 %v5482, %v5578
    %v5580 = vand.u32 %v3736, 4294901760
    %5581 = vmatmul.f32.gmra.mxu0 %v5580
    %v5582 = vpop.f32.mrf.mxu0
    %v5583 = vadd.f32 %v5486, %v5582
    %v5584 = vand.u32 %v3737, 4294901760
    %5585 = vmatmul.f32.gmra.mxu0 %v5584
    %v5586 = vpop.f32.mrf.mxu0
    %v5587 = vadd.f32 %v5490, %v5586
    %v5588 = vand.u32 %v3738, 4294901760
    %5589 = vmatmul.f32.gmra.mxu0 %v5588
    %v5590 = vpop.f32.mrf.mxu0
    %v5591 = vadd.f32 %v5494, %v5590
    %v5592 = vand.u32 %v3739, 4294901760
    %5593 = vmatmul.f32.gmra.mxu0 %v5592
    %v5594 = vpop.f32.mrf.mxu0
    %v5595 = vadd.f32 %v5498, %v5594
    %v5596 = vand.u32 %v3740, 4294901760
    %5597 = vmatmul.f32.gmra.mxu0 %v5596
    %v5598 = vpop.f32.mrf.mxu0
    %v5599 = vadd.f32 %v5502, %v5598
    %v5600 = vand.u32 %v3741, 4294901760
    %5601 = vmatmul.f32.gmra.mxu0 %v5600
    %v5602 = vpop.f32.mrf.mxu0
    %v5603 = vadd.f32 %v5506, %v5602
    %v5604 = vand.u32 %v3742, 4294901760
    %5605 = vmatmul.f32.gmra.mxu0 %v5604
    %v5606 = vpop.f32.mrf.mxu0
    %v5607 = vadd.f32 %v5510, %v5606
    %v5608 = vand.u32 %v3743, 4294901760
    %5609 = vmatmul.f32.gmra.mxu0 %v5608
    %v5610 = vpop.f32.mrf.mxu0
    %v5611 = vadd.f32 %v5514, %v5610
    %v5612 = vand.u32 %v3744, 4294901760
    %5613 = vmatmul.f32.gmra.mxu0 %v5612
    %v5614 = vpop.f32.mrf.mxu0
    %v5615 = vadd.f32 %v5518, %v5614
    %v5616 = vand.u32 %v3745, 4294901760
    %5617 = vmatmul.f32.gmra.mxu0 %v5616
    %v5618 = vpop.f32.mrf.mxu0
    %v5619 = vadd.f32 %v5522, %v5618
    %v5620 = vand.u32 %v3746, 4294901760
    %5621 = vmatmul.f32.gmra.mxu0 %v5620
    %v5622 = vpop.f32.mrf.mxu0
    %v5623 = vadd.f32 %v5526, %v5622
    %5624 = vdwg.mxu0
    %v5625 = vand.u32 %v4786, 4294901760
    %5626 = vmatpush.msra.mxu0 %v5625
    %v5627 = vand.u32 %v4785, 4294901760
    %5628 = vmatpush.msra.mxu0 %v5627
    %v5629 = vand.u32 %v4784, 4294901760
    %5630 = vmatpush.msra.mxu0 %v5629
    %v5631 = vand.u32 %v4783, 4294901760
    %5632 = vmatpush.msra.mxu0 %v5631
    %v5633 = vand.u32 %v4782, 4294901760
    %5634 = vmatpush.msra.mxu0 %v5633
    %v5635 = vand.u32 %v4781, 4294901760
    %5636 = vmatpush.msra.mxu0 %v5635
    %v5637 = vand.u32 %v4780, 4294901760
    %5638 = vmatpush.msra.mxu0 %v5637
    %v5639 = vand.u32 %v4779, 4294901760
    %5640 = vmatpush.msra.mxu0 %v5639
    %v5641 = vand.u32 %v4778, 4294901760
    %5642 = vmatpush.msra.mxu0 %v5641
    %v5643 = vand.u32 %v4777, 4294901760
    %5644 = vmatpush.msra.mxu0 %v5643
    %v5645 = vand.u32 %v4776, 4294901760
    %5646 = vmatpush.msra.mxu0 %v5645
    %v5647 = vand.u32 %v4775, 4294901760
    %5648 = vmatpush.msra.mxu0 %v5647
    %v5649 = vand.u32 %v4774, 4294901760
    %5650 = vmatpush.msra.mxu0 %v5649
    %v5651 = vand.u32 %v4773, 4294901760
    %5652 = vmatpush.msra.mxu0 %v5651
    %v5653 = vand.u32 %v4772, 4294901760
    %5654 = vmatpush.msra.mxu0 %v5653
    %v5655 = vand.u32 %v4771, 4294901760
    %5656 = vmatpush.msra.mxu0 %v5655
    %v5657 = vand.u32 %v4067, 4294901760
    %v5658 = vsub.f32 %v4067, %v5657
    %v5659 = vand.u32 %v5658, 4294901760
    %v5660 = vsub.f32 %v5658, %v5659
    %v5661 = vand.u32 %v5660, 4294901760
    %5662 = vmatmul.f32.gmra.mxu0 %v5661
    %v5663 = vpop.f32.mrf.mxu0
    %v5664 = vadd.f32 %v5563, %v5663
    %v5665 = vand.u32 %v4068, 4294901760
    %v5666 = vsub.f32 %v4068, %v5665
    %v5667 = vand.u32 %v5666, 4294901760
    %v5668 = vsub.f32 %v5666, %v5667
    %v5669 = vand.u32 %v5668, 4294901760
    %5670 = vmatmul.f32.gmra.mxu0 %v5669
    %v5671 = vpop.f32.mrf.mxu0
    %v5672 = vadd.f32 %v5567, %v5671
    %v5673 = vand.u32 %v4069, 4294901760
    %v5674 = vsub.f32 %v4069, %v5673
    %v5675 = vand.u32 %v5674, 4294901760
    %v5676 = vsub.f32 %v5674, %v5675
    %v5677 = vand.u32 %v5676, 4294901760
    %5678 = vmatmul.f32.gmra.mxu0 %v5677
    %v5679 = vpop.f32.mrf.mxu0
    %v5680 = vadd.f32 %v5571, %v5679
    %v5681 = vand.u32 %v4070, 4294901760
    %v5682 = vsub.f32 %v4070, %v5681
    %v5683 = vand.u32 %v5682, 4294901760
    %v5684 = vsub.f32 %v5682, %v5683
    %v5685 = vand.u32 %v5684, 4294901760
    %5686 = vmatmul.f32.gmra.mxu0 %v5685
    %v5687 = vpop.f32.mrf.mxu0
    %v5688 = vadd.f32 %v5575, %v5687
    %v5689 = vand.u32 %v4071, 4294901760
    %v5690 = vsub.f32 %v4071, %v5689
    %v5691 = vand.u32 %v5690, 4294901760
    %v5692 = vsub.f32 %v5690, %v5691
    %v5693 = vand.u32 %v5692, 4294901760
    %5694 = vmatmul.f32.gmra.mxu0 %v5693
    %v5695 = vpop.f32.mrf.mxu0
    %v5696 = vadd.f32 %v5579, %v5695
    %v5697 = vand.u32 %v4072, 4294901760
    %v5698 = vsub.f32 %v4072, %v5697
    %v5699 = vand.u32 %v5698, 4294901760
    %v5700 = vsub.f32 %v5698, %v5699
    %v5701 = vand.u32 %v5700, 4294901760
    %5702 = vmatmul.f32.gmra.mxu0 %v5701
    %v5703 = vpop.f32.mrf.mxu0
    %v5704 = vadd.f32 %v5583, %v5703
    %v5705 = vand.u32 %v4073, 4294901760
    %v5706 = vsub.f32 %v4073, %v5705
    %v5707 = vand.u32 %v5706, 4294901760
    %v5708 = vsub.f32 %v5706, %v5707
    %v5709 = vand.u32 %v5708, 4294901760
    %5710 = vmatmul.f32.gmra.mxu0 %v5709
    %v5711 = vpop.f32.mrf.mxu0
    %v5712 = vadd.f32 %v5587, %v5711
    %v5713 = vand.u32 %v4074, 4294901760
    %v5714 = vsub.f32 %v4074, %v5713
    %v5715 = vand.u32 %v5714, 4294901760
    %v5716 = vsub.f32 %v5714, %v5715
    %v5717 = vand.u32 %v5716, 4294901760
    %5718 = vmatmul.f32.gmra.mxu0 %v5717
    %v5719 = vpop.f32.mrf.mxu0
    %v5720 = vadd.f32 %v5591, %v5719
    %v5721 = vand.u32 %v4075, 4294901760
    %v5722 = vsub.f32 %v4075, %v5721
    %v5723 = vand.u32 %v5722, 4294901760
    %v5724 = vsub.f32 %v5722, %v5723
    %v5725 = vand.u32 %v5724, 4294901760
    %5726 = vmatmul.f32.gmra.mxu0 %v5725
    %v5727 = vpop.f32.mrf.mxu0
    %v5728 = vadd.f32 %v5595, %v5727
    %v5729 = vand.u32 %v4076, 4294901760
    %v5730 = vsub.f32 %v4076, %v5729
    %v5731 = vand.u32 %v5730, 4294901760
    %v5732 = vsub.f32 %v5730, %v5731
    %v5733 = vand.u32 %v5732, 4294901760
    %5734 = vmatmul.f32.gmra.mxu0 %v5733
    %v5735 = vpop.f32.mrf.mxu0
    %v5736 = vadd.f32 %v5599, %v5735
    %v5737 = vand.u32 %v4077, 4294901760
    %v5738 = vsub.f32 %v4077, %v5737
    %v5739 = vand.u32 %v5738, 4294901760
    %v5740 = vsub.f32 %v5738, %v5739
    %v5741 = vand.u32 %v5740, 4294901760
    %5742 = vmatmul.f32.gmra.mxu0 %v5741
    %v5743 = vpop.f32.mrf.mxu0
    %v5744 = vadd.f32 %v5603, %v5743
    %v5745 = vand.u32 %v4078, 4294901760
    %v5746 = vsub.f32 %v4078, %v5745
    %v5747 = vand.u32 %v5746, 4294901760
    %v5748 = vsub.f32 %v5746, %v5747
    %v5749 = vand.u32 %v5748, 4294901760
    %5750 = vmatmul.f32.gmra.mxu0 %v5749
    %v5751 = vpop.f32.mrf.mxu0
    %v5752 = vadd.f32 %v5607, %v5751
    %v5753 = vand.u32 %v4079, 4294901760
    %v5754 = vsub.f32 %v4079, %v5753
    %v5755 = vand.u32 %v5754, 4294901760
    %v5756 = vsub.f32 %v5754, %v5755
    %v5757 = vand.u32 %v5756, 4294901760
    %5758 = vmatmul.f32.gmra.mxu0 %v5757
    %v5759 = vpop.f32.mrf.mxu0
    %v5760 = vadd.f32 %v5611, %v5759
    %v5761 = vand.u32 %v4080, 4294901760
    %v5762 = vsub.f32 %v4080, %v5761
    %v5763 = vand.u32 %v5762, 4294901760
    %v5764 = vsub.f32 %v5762, %v5763
    %v5765 = vand.u32 %v5764, 4294901760
    %5766 = vmatmul.f32.gmra.mxu0 %v5765
    %v5767 = vpop.f32.mrf.mxu0
    %v5768 = vadd.f32 %v5615, %v5767
    %v5769 = vand.u32 %v4081, 4294901760
    %v5770 = vsub.f32 %v4081, %v5769
    %v5771 = vand.u32 %v5770, 4294901760
    %v5772 = vsub.f32 %v5770, %v5771
    %v5773 = vand.u32 %v5772, 4294901760
    %5774 = vmatmul.f32.gmra.mxu0 %v5773
    %v5775 = vpop.f32.mrf.mxu0
    %v5776 = vadd.f32 %v5619, %v5775
    %v5777 = vand.u32 %v4082, 4294901760
    %v5778 = vsub.f32 %v4082, %v5777
    %v5779 = vand.u32 %v5778, 4294901760
    %v5780 = vsub.f32 %v5778, %v5779
    %v5781 = vand.u32 %v5780, 4294901760
    %5782 = vmatmul.f32.gmra.mxu0 %v5781
    %v5783 = vpop.f32.mrf.mxu0
    %v5784 = vadd.f32 %v5623, %v5783
    %5785 = vdwg.mxu0
    %v5786 = vand.u32 %v4786, 4294901760
    %v5787 = vsub.f32 %v4786, %v5786
    %v5788 = vand.u32 %v5787, 4294901760
    %v5789 = vsub.f32 %v5787, %v5788
    %v5790 = vand.u32 %v5789, 4294901760
    %5791 = vmatpush.msra.mxu0 %v5790
    %v5792 = vand.u32 %v4785, 4294901760
    %v5793 = vsub.f32 %v4785, %v5792
    %v5794 = vand.u32 %v5793, 4294901760
    %v5795 = vsub.f32 %v5793, %v5794
    %v5796 = vand.u32 %v5795, 4294901760
    %5797 = vmatpush.msra.mxu0 %v5796
    %v5798 = vand.u32 %v4784, 4294901760
    %v5799 = vsub.f32 %v4784, %v5798
    %v5800 = vand.u32 %v5799, 4294901760
    %v5801 = vsub.f32 %v5799, %v5800
    %v5802 = vand.u32 %v5801, 4294901760
    %5803 = vmatpush.msra.mxu0 %v5802
    %v5804 = vand.u32 %v4783, 4294901760
    %v5805 = vsub.f32 %v4783, %v5804
    %v5806 = vand.u32 %v5805, 4294901760
    %v5807 = vsub.f32 %v5805, %v5806
    %v5808 = vand.u32 %v5807, 4294901760
    %5809 = vmatpush.msra.mxu0 %v5808
    %v5810 = vand.u32 %v4782, 4294901760
    %v5811 = vsub.f32 %v4782, %v5810
    %v5812 = vand.u32 %v5811, 4294901760
    %v5813 = vsub.f32 %v5811, %v5812
    %v5814 = vand.u32 %v5813, 4294901760
    %5815 = vmatpush.msra.mxu0 %v5814
    %v5816 = vand.u32 %v4781, 4294901760
    %v5817 = vsub.f32 %v4781, %v5816
    %v5818 = vand.u32 %v5817, 4294901760
    %v5819 = vsub.f32 %v5817, %v5818
    %v5820 = vand.u32 %v5819, 4294901760
    %5821 = vmatpush.msra.mxu0 %v5820
    %v5822 = vand.u32 %v4780, 4294901760
    %v5823 = vsub.f32 %v4780, %v5822
    %v5824 = vand.u32 %v5823, 4294901760
    %v5825 = vsub.f32 %v5823, %v5824
    %v5826 = vand.u32 %v5825, 4294901760
    %5827 = vmatpush.msra.mxu0 %v5826
    %v5828 = vand.u32 %v4779, 4294901760
    %v5829 = vsub.f32 %v4779, %v5828
    %v5830 = vand.u32 %v5829, 4294901760
    %v5831 = vsub.f32 %v5829, %v5830
    %v5832 = vand.u32 %v5831, 4294901760
    %5833 = vmatpush.msra.mxu0 %v5832
    %v5834 = vand.u32 %v4778, 4294901760
    %v5835 = vsub.f32 %v4778, %v5834
    %v5836 = vand.u32 %v5835, 4294901760
    %v5837 = vsub.f32 %v5835, %v5836
    %v5838 = vand.u32 %v5837, 4294901760
    %5839 = vmatpush.msra.mxu0 %v5838
    %v5840 = vand.u32 %v4777, 4294901760
    %v5841 = vsub.f32 %v4777, %v5840
    %v5842 = vand.u32 %v5841, 4294901760
    %v5843 = vsub.f32 %v5841, %v5842
    %v5844 = vand.u32 %v5843, 4294901760
    %5845 = vmatpush.msra.mxu0 %v5844
    %v5846 = vand.u32 %v4776, 4294901760
    %v5847 = vsub.f32 %v4776, %v5846
    %v5848 = vand.u32 %v5847, 4294901760
    %v5849 = vsub.f32 %v5847, %v5848
    %v5850 = vand.u32 %v5849, 4294901760
    %5851 = vmatpush.msra.mxu0 %v5850
    %v5852 = vand.u32 %v4775, 4294901760
    %v5853 = vsub.f32 %v4775, %v5852
    %v5854 = vand.u32 %v5853, 4294901760
    %v5855 = vsub.f32 %v5853, %v5854
    %v5856 = vand.u32 %v5855, 4294901760
    %5857 = vmatpush.msra.mxu0 %v5856
    %v5858 = vand.u32 %v4774, 4294901760
    %v5859 = vsub.f32 %v4774, %v5858
    %v5860 = vand.u32 %v5859, 4294901760
    %v5861 = vsub.f32 %v5859, %v5860
    %v5862 = vand.u32 %v5861, 4294901760
    %5863 = vmatpush.msra.mxu0 %v5862
    %v5864 = vand.u32 %v4773, 4294901760
    %v5865 = vsub.f32 %v4773, %v5864
    %v5866 = vand.u32 %v5865, 4294901760
    %v5867 = vsub.f32 %v5865, %v5866
    %v5868 = vand.u32 %v5867, 4294901760
    %5869 = vmatpush.msra.mxu0 %v5868
    %v5870 = vand.u32 %v4772, 4294901760
    %v5871 = vsub.f32 %v4772, %v5870
    %v5872 = vand.u32 %v5871, 4294901760
    %v5873 = vsub.f32 %v5871, %v5872
    %v5874 = vand.u32 %v5873, 4294901760
    %5875 = vmatpush.msra.mxu0 %v5874
    %v5876 = vand.u32 %v4771, 4294901760
    %v5877 = vsub.f32 %v4771, %v5876
    %v5878 = vand.u32 %v5877, 4294901760
    %v5879 = vsub.f32 %v5877, %v5878
    %v5880 = vand.u32 %v5879, 4294901760
    %5881 = vmatpush.msra.mxu0 %v5880
    %v5882 = vand.u32 %v4067, 4294901760
    %5883 = vmatmul.f32.gmra.mxu0 %v5882
    %v5884 = vpop.f32.mrf.mxu0
    %v5885 = vadd.f32 %v5664, %v5884
    %v5886 = vand.u32 %v4068, 4294901760
    %5887 = vmatmul.f32.gmra.mxu0 %v5886
    %v5888 = vpop.f32.mrf.mxu0
    %v5889 = vadd.f32 %v5672, %v5888
    %v5890 = vand.u32 %v4069, 4294901760
    %5891 = vmatmul.f32.gmra.mxu0 %v5890
    %v5892 = vpop.f32.mrf.mxu0
    %v5893 = vadd.f32 %v5680, %v5892
    %v5894 = vand.u32 %v4070, 4294901760
    %5895 = vmatmul.f32.gmra.mxu0 %v5894
    %v5896 = vpop.f32.mrf.mxu0
    %v5897 = vadd.f32 %v5688, %v5896
    %v5898 = vand.u32 %v4071, 4294901760
    %5899 = vmatmul.f32.gmra.mxu0 %v5898
    %v5900 = vpop.f32.mrf.mxu0
    %v5901 = vadd.f32 %v5696, %v5900
    %v5902 = vand.u32 %v4072, 4294901760
    %5903 = vmatmul.f32.gmra.mxu0 %v5902
    %v5904 = vpop.f32.mrf.mxu0
    %v5905 = vadd.f32 %v5704, %v5904
    %v5906 = vand.u32 %v4073, 4294901760
    %5907 = vmatmul.f32.gmra.mxu0 %v5906
    %v5908 = vpop.f32.mrf.mxu0
    %v5909 = vadd.f32 %v5712, %v5908
    %v5910 = vand.u32 %v4074, 4294901760
    %5911 = vmatmul.f32.gmra.mxu0 %v5910
    %v5912 = vpop.f32.mrf.mxu0
    %v5913 = vadd.f32 %v5720, %v5912
    %v5914 = vand.u32 %v4075, 4294901760
    %5915 = vmatmul.f32.gmra.mxu0 %v5914
    %v5916 = vpop.f32.mrf.mxu0
    %v5917 = vadd.f32 %v5728, %v5916
    %v5918 = vand.u32 %v4076, 4294901760
    %5919 = vmatmul.f32.gmra.mxu0 %v5918
    %v5920 = vpop.f32.mrf.mxu0
    %v5921 = vadd.f32 %v5736, %v5920
    %v5922 = vand.u32 %v4077, 4294901760
    %5923 = vmatmul.f32.gmra.mxu0 %v5922
    %v5924 = vpop.f32.mrf.mxu0
    %v5925 = vadd.f32 %v5744, %v5924
    %v5926 = vand.u32 %v4078, 4294901760
    %5927 = vmatmul.f32.gmra.mxu0 %v5926
    %v5928 = vpop.f32.mrf.mxu0
    %v5929 = vadd.f32 %v5752, %v5928
    %v5930 = vand.u32 %v4079, 4294901760
    %5931 = vmatmul.f32.gmra.mxu0 %v5930
    %v5932 = vpop.f32.mrf.mxu0
    %v5933 = vadd.f32 %v5760, %v5932
    %v5934 = vand.u32 %v4080, 4294901760
    %5935 = vmatmul.f32.gmra.mxu0 %v5934
    %v5936 = vpop.f32.mrf.mxu0
    %v5937 = vadd.f32 %v5768, %v5936
    %v5938 = vand.u32 %v4081, 4294901760
    %5939 = vmatmul.f32.gmra.mxu0 %v5938
    %v5940 = vpop.f32.mrf.mxu0
    %v5941 = vadd.f32 %v5776, %v5940
    %v5942 = vand.u32 %v4082, 4294901760
    %5943 = vmatmul.f32.gmra.mxu0 %v5942
    %v5944 = vpop.f32.mrf.mxu0
    %v5945 = vadd.f32 %v5784, %v5944
    %5946 = vdwg.mxu0
    %v5947 = vand.u32 %v4786, 4294901760
    %v5948 = vsub.f32 %v4786, %v5947
    %5949 = vmatpush.msra.mxu0 %v5948
    %v5950 = vand.u32 %v4785, 4294901760
    %v5951 = vsub.f32 %v4785, %v5950
    %5952 = vmatpush.msra.mxu0 %v5951
    %v5953 = vand.u32 %v4784, 4294901760
    %v5954 = vsub.f32 %v4784, %v5953
    %5955 = vmatpush.msra.mxu0 %v5954
    %v5956 = vand.u32 %v4783, 4294901760
    %v5957 = vsub.f32 %v4783, %v5956
    %5958 = vmatpush.msra.mxu0 %v5957
    %v5959 = vand.u32 %v4782, 4294901760
    %v5960 = vsub.f32 %v4782, %v5959
    %5961 = vmatpush.msra.mxu0 %v5960
    %v5962 = vand.u32 %v4781, 4294901760
    %v5963 = vsub.f32 %v4781, %v5962
    %5964 = vmatpush.msra.mxu0 %v5963
    %v5965 = vand.u32 %v4780, 4294901760
    %v5966 = vsub.f32 %v4780, %v5965
    %5967 = vmatpush.msra.mxu0 %v5966
    %v5968 = vand.u32 %v4779, 4294901760
    %v5969 = vsub.f32 %v4779, %v5968
    %5970 = vmatpush.msra.mxu0 %v5969
    %v5971 = vand.u32 %v4778, 4294901760
    %v5972 = vsub.f32 %v4778, %v5971
    %5973 = vmatpush.msra.mxu0 %v5972
    %v5974 = vand.u32 %v4777, 4294901760
    %v5975 = vsub.f32 %v4777, %v5974
    %5976 = vmatpush.msra.mxu0 %v5975
    %v5977 = vand.u32 %v4776, 4294901760
    %v5978 = vsub.f32 %v4776, %v5977
    %5979 = vmatpush.msra.mxu0 %v5978
    %v5980 = vand.u32 %v4775, 4294901760
    %v5981 = vsub.f32 %v4775, %v5980
    %5982 = vmatpush.msra.mxu0 %v5981
    %v5983 = vand.u32 %v4774, 4294901760
    %v5984 = vsub.f32 %v4774, %v5983
    %5985 = vmatpush.msra.mxu0 %v5984
    %v5986 = vand.u32 %v4773, 4294901760
    %v5987 = vsub.f32 %v4773, %v5986
    %5988 = vmatpush.msra.mxu0 %v5987
    %v5989 = vand.u32 %v4772, 4294901760
    %v5990 = vsub.f32 %v4772, %v5989
    %5991 = vmatpush.msra.mxu0 %v5990
    %v5992 = vand.u32 %v4771, 4294901760
    %v5993 = vsub.f32 %v4771, %v5992
    %5994 = vmatpush.msra.mxu0 %v5993
    %v5995 = vand.u32 %v4067, 4294901760
    %v5996 = vsub.f32 %v4067, %v5995
    %5997 = vmatmul.f32.gmra.mxu0 %v5996
    %v5998 = vpop.f32.mrf.mxu0
    %v5999 = vadd.f32 %v5885, %v5998
    %v6000 = vand.u32 %v4068, 4294901760
    %v6001 = vsub.f32 %v4068, %v6000
    %6002 = vmatmul.f32.gmra.mxu0 %v6001
    %v6003 = vpop.f32.mrf.mxu0
    %v6004 = vadd.f32 %v5889, %v6003
    %v6005 = vand.u32 %v4069, 4294901760
    %v6006 = vsub.f32 %v4069, %v6005
    %6007 = vmatmul.f32.gmra.mxu0 %v6006
    %v6008 = vpop.f32.mrf.mxu0
    %v6009 = vadd.f32 %v5893, %v6008
    %v6010 = vand.u32 %v4070, 4294901760
    %v6011 = vsub.f32 %v4070, %v6010
    %6012 = vmatmul.f32.gmra.mxu0 %v6011
    %v6013 = vpop.f32.mrf.mxu0
    %v6014 = vadd.f32 %v5897, %v6013
    %v6015 = vand.u32 %v4071, 4294901760
    %v6016 = vsub.f32 %v4071, %v6015
    %6017 = vmatmul.f32.gmra.mxu0 %v6016
    %v6018 = vpop.f32.mrf.mxu0
    %v6019 = vadd.f32 %v5901, %v6018
    %v6020 = vand.u32 %v4072, 4294901760
    %v6021 = vsub.f32 %v4072, %v6020
    %6022 = vmatmul.f32.gmra.mxu0 %v6021
    %v6023 = vpop.f32.mrf.mxu0
    %v6024 = vadd.f32 %v5905, %v6023
    %v6025 = vand.u32 %v4073, 4294901760
    %v6026 = vsub.f32 %v4073, %v6025
    %6027 = vmatmul.f32.gmra.mxu0 %v6026
    %v6028 = vpop.f32.mrf.mxu0
    %v6029 = vadd.f32 %v5909, %v6028
    %v6030 = vand.u32 %v4074, 4294901760
    %v6031 = vsub.f32 %v4074, %v6030
    %6032 = vmatmul.f32.gmra.mxu0 %v6031
    %v6033 = vpop.f32.mrf.mxu0
    %v6034 = vadd.f32 %v5913, %v6033
    %v6035 = vand.u32 %v4075, 4294901760
    %v6036 = vsub.f32 %v4075, %v6035
    %6037 = vmatmul.f32.gmra.mxu0 %v6036
    %v6038 = vpop.f32.mrf.mxu0
    %v6039 = vadd.f32 %v5917, %v6038
    %v6040 = vand.u32 %v4076, 4294901760
    %v6041 = vsub.f32 %v4076, %v6040
    %6042 = vmatmul.f32.gmra.mxu0 %v6041
    %v6043 = vpop.f32.mrf.mxu0
    %v6044 = vadd.f32 %v5921, %v6043
    %v6045 = vand.u32 %v4077, 4294901760
    %v6046 = vsub.f32 %v4077, %v6045
    %6047 = vmatmul.f32.gmra.mxu0 %v6046
    %v6048 = vpop.f32.mrf.mxu0
    %v6049 = vadd.f32 %v5925, %v6048
    %v6050 = vand.u32 %v4078, 4294901760
    %v6051 = vsub.f32 %v4078, %v6050
    %6052 = vmatmul.f32.gmra.mxu0 %v6051
    %v6053 = vpop.f32.mrf.mxu0
    %v6054 = vadd.f32 %v5929, %v6053
    %v6055 = vand.u32 %v4079, 4294901760
    %v6056 = vsub.f32 %v4079, %v6055
    %6057 = vmatmul.f32.gmra.mxu0 %v6056
    %v6058 = vpop.f32.mrf.mxu0
    %v6059 = vadd.f32 %v5933, %v6058
    %v6060 = vand.u32 %v4080, 4294901760
    %v6061 = vsub.f32 %v4080, %v6060
    %6062 = vmatmul.f32.gmra.mxu0 %v6061
    %v6063 = vpop.f32.mrf.mxu0
    %v6064 = vadd.f32 %v5937, %v6063
    %v6065 = vand.u32 %v4081, 4294901760
    %v6066 = vsub.f32 %v4081, %v6065
    %6067 = vmatmul.f32.gmra.mxu0 %v6066
    %v6068 = vpop.f32.mrf.mxu0
    %v6069 = vadd.f32 %v5941, %v6068
    %v6070 = vand.u32 %v4082, 4294901760
    %v6071 = vsub.f32 %v4082, %v6070
    %6072 = vmatmul.f32.gmra.mxu0 %v6071
    %v6073 = vpop.f32.mrf.mxu0
    %v6074 = vadd.f32 %v5945, %v6073
    %6075 = vdwg.mxu0
    %v6076 = vand.u32 %v4786, 4294901760
    %6077 = vmatpush.msra.mxu0 %v6076
    %v6078 = vand.u32 %v4785, 4294901760
    %6079 = vmatpush.msra.mxu0 %v6078
    %v6080 = vand.u32 %v4784, 4294901760
    %6081 = vmatpush.msra.mxu0 %v6080
    %v6082 = vand.u32 %v4783, 4294901760
    %6083 = vmatpush.msra.mxu0 %v6082
    %v6084 = vand.u32 %v4782, 4294901760
    %6085 = vmatpush.msra.mxu0 %v6084
    %v6086 = vand.u32 %v4781, 4294901760
    %6087 = vmatpush.msra.mxu0 %v6086
    %v6088 = vand.u32 %v4780, 4294901760
    %6089 = vmatpush.msra.mxu0 %v6088
    %v6090 = vand.u32 %v4779, 4294901760
    %6091 = vmatpush.msra.mxu0 %v6090
    %v6092 = vand.u32 %v4778, 4294901760
    %6093 = vmatpush.msra.mxu0 %v6092
    %v6094 = vand.u32 %v4777, 4294901760
    %6095 = vmatpush.msra.mxu0 %v6094
    %v6096 = vand.u32 %v4776, 4294901760
    %6097 = vmatpush.msra.mxu0 %v6096
    %v6098 = vand.u32 %v4775, 4294901760
    %6099 = vmatpush.msra.mxu0 %v6098
    %v6100 = vand.u32 %v4774, 4294901760
    %6101 = vmatpush.msra.mxu0 %v6100
    %v6102 = vand.u32 %v4773, 4294901760
    %6103 = vmatpush.msra.mxu0 %v6102
    %v6104 = vand.u32 %v4772, 4294901760
    %6105 = vmatpush.msra.mxu0 %v6104
    %v6106 = vand.u32 %v4771, 4294901760
    %6107 = vmatpush.msra.mxu0 %v6106
    %v6108 = vand.u32 %v4067, 4294901760
    %v6109 = vsub.f32 %v4067, %v6108
    %v6110 = vand.u32 %v6109, 4294901760
    %6111 = vmatmul.f32.gmra.mxu0 %v6110
    %v6112 = vpop.f32.mrf.mxu0
    %v6113 = vadd.f32 %v5999, %v6112
    %v6114 = vand.u32 %v4068, 4294901760
    %v6115 = vsub.f32 %v4068, %v6114
    %v6116 = vand.u32 %v6115, 4294901760
    %6117 = vmatmul.f32.gmra.mxu0 %v6116
    %v6118 = vpop.f32.mrf.mxu0
    %v6119 = vadd.f32 %v6004, %v6118
    %v6120 = vand.u32 %v4069, 4294901760
    %v6121 = vsub.f32 %v4069, %v6120
    %v6122 = vand.u32 %v6121, 4294901760
    %6123 = vmatmul.f32.gmra.mxu0 %v6122
    %v6124 = vpop.f32.mrf.mxu0
    %v6125 = vadd.f32 %v6009, %v6124
    %v6126 = vand.u32 %v4070, 4294901760
    %v6127 = vsub.f32 %v4070, %v6126
    %v6128 = vand.u32 %v6127, 4294901760
    %6129 = vmatmul.f32.gmra.mxu0 %v6128
    %v6130 = vpop.f32.mrf.mxu0
    %v6131 = vadd.f32 %v6014, %v6130
    %v6132 = vand.u32 %v4071, 4294901760
    %v6133 = vsub.f32 %v4071, %v6132
    %v6134 = vand.u32 %v6133, 4294901760
    %6135 = vmatmul.f32.gmra.mxu0 %v6134
    %v6136 = vpop.f32.mrf.mxu0
    %v6137 = vadd.f32 %v6019, %v6136
    %v6138 = vand.u32 %v4072, 4294901760
    %v6139 = vsub.f32 %v4072, %v6138
    %v6140 = vand.u32 %v6139, 4294901760
    %6141 = vmatmul.f32.gmra.mxu0 %v6140
    %v6142 = vpop.f32.mrf.mxu0
    %v6143 = vadd.f32 %v6024, %v6142
    %v6144 = vand.u32 %v4073, 4294901760
    %v6145 = vsub.f32 %v4073, %v6144
    %v6146 = vand.u32 %v6145, 4294901760
    %6147 = vmatmul.f32.gmra.mxu0 %v6146
    %v6148 = vpop.f32.mrf.mxu0
    %v6149 = vadd.f32 %v6029, %v6148
    %v6150 = vand.u32 %v4074, 4294901760
    %v6151 = vsub.f32 %v4074, %v6150
    %v6152 = vand.u32 %v6151, 4294901760
    %6153 = vmatmul.f32.gmra.mxu0 %v6152
    %v6154 = vpop.f32.mrf.mxu0
    %v6155 = vadd.f32 %v6034, %v6154
    %v6156 = vand.u32 %v4075, 4294901760
    %v6157 = vsub.f32 %v4075, %v6156
    %v6158 = vand.u32 %v6157, 4294901760
    %6159 = vmatmul.f32.gmra.mxu0 %v6158
    %v6160 = vpop.f32.mrf.mxu0
    %v6161 = vadd.f32 %v6039, %v6160
    %v6162 = vand.u32 %v4076, 4294901760
    %v6163 = vsub.f32 %v4076, %v6162
    %v6164 = vand.u32 %v6163, 4294901760
    %6165 = vmatmul.f32.gmra.mxu0 %v6164
    %v6166 = vpop.f32.mrf.mxu0
    %v6167 = vadd.f32 %v6044, %v6166
    %v6168 = vand.u32 %v4077, 4294901760
    %v6169 = vsub.f32 %v4077, %v6168
    %v6170 = vand.u32 %v6169, 4294901760
    %6171 = vmatmul.f32.gmra.mxu0 %v6170
    %v6172 = vpop.f32.mrf.mxu0
    %v6173 = vadd.f32 %v6049, %v6172
    %v6174 = vand.u32 %v4078, 4294901760
    %v6175 = vsub.f32 %v4078, %v6174
    %v6176 = vand.u32 %v6175, 4294901760
    %6177 = vmatmul.f32.gmra.mxu0 %v6176
    %v6178 = vpop.f32.mrf.mxu0
    %v6179 = vadd.f32 %v6054, %v6178
    %v6180 = vand.u32 %v4079, 4294901760
    %v6181 = vsub.f32 %v4079, %v6180
    %v6182 = vand.u32 %v6181, 4294901760
    %6183 = vmatmul.f32.gmra.mxu0 %v6182
    %v6184 = vpop.f32.mrf.mxu0
    %v6185 = vadd.f32 %v6059, %v6184
    %v6186 = vand.u32 %v4080, 4294901760
    %v6187 = vsub.f32 %v4080, %v6186
    %v6188 = vand.u32 %v6187, 4294901760
    %6189 = vmatmul.f32.gmra.mxu0 %v6188
    %v6190 = vpop.f32.mrf.mxu0
    %v6191 = vadd.f32 %v6064, %v6190
    %v6192 = vand.u32 %v4081, 4294901760
    %v6193 = vsub.f32 %v4081, %v6192
    %v6194 = vand.u32 %v6193, 4294901760
    %6195 = vmatmul.f32.gmra.mxu0 %v6194
    %v6196 = vpop.f32.mrf.mxu0
    %v6197 = vadd.f32 %v6069, %v6196
    %v6198 = vand.u32 %v4082, 4294901760
    %v6199 = vsub.f32 %v4082, %v6198
    %v6200 = vand.u32 %v6199, 4294901760
    %6201 = vmatmul.f32.gmra.mxu0 %v6200
    %v6202 = vpop.f32.mrf.mxu0
    %v6203 = vadd.f32 %v6074, %v6202
    %6204 = vdwg.mxu0
    %v6205 = vand.u32 %v4786, 4294901760
    %v6206 = vsub.f32 %v4786, %v6205
    %v6207 = vand.u32 %v6206, 4294901760
    %6208 = vmatpush.msra.mxu0 %v6207
    %v6209 = vand.u32 %v4785, 4294901760
    %v6210 = vsub.f32 %v4785, %v6209
    %v6211 = vand.u32 %v6210, 4294901760
    %6212 = vmatpush.msra.mxu0 %v6211
    %v6213 = vand.u32 %v4784, 4294901760
    %v6214 = vsub.f32 %v4784, %v6213
    %v6215 = vand.u32 %v6214, 4294901760
    %6216 = vmatpush.msra.mxu0 %v6215
    %v6217 = vand.u32 %v4783, 4294901760
    %v6218 = vsub.f32 %v4783, %v6217
    %v6219 = vand.u32 %v6218, 4294901760
    %6220 = vmatpush.msra.mxu0 %v6219
    %v6221 = vand.u32 %v4782, 4294901760
    %v6222 = vsub.f32 %v4782, %v6221
    %v6223 = vand.u32 %v6222, 4294901760
    %6224 = vmatpush.msra.mxu0 %v6223
    %v6225 = vand.u32 %v4781, 4294901760
    %v6226 = vsub.f32 %v4781, %v6225
    %v6227 = vand.u32 %v6226, 4294901760
    %6228 = vmatpush.msra.mxu0 %v6227
    %v6229 = vand.u32 %v4780, 4294901760
    %v6230 = vsub.f32 %v4780, %v6229
    %v6231 = vand.u32 %v6230, 4294901760
    %6232 = vmatpush.msra.mxu0 %v6231
    %v6233 = vand.u32 %v4779, 4294901760
    %v6234 = vsub.f32 %v4779, %v6233
    %v6235 = vand.u32 %v6234, 4294901760
    %6236 = vmatpush.msra.mxu0 %v6235
    %v6237 = vand.u32 %v4778, 4294901760
    %v6238 = vsub.f32 %v4778, %v6237
    %v6239 = vand.u32 %v6238, 4294901760
    %6240 = vmatpush.msra.mxu0 %v6239
    %v6241 = vand.u32 %v4777, 4294901760
    %v6242 = vsub.f32 %v4777, %v6241
    %v6243 = vand.u32 %v6242, 4294901760
    %6244 = vmatpush.msra.mxu0 %v6243
    %v6245 = vand.u32 %v4776, 4294901760
    %v6246 = vsub.f32 %v4776, %v6245
    %v6247 = vand.u32 %v6246, 4294901760
    %6248 = vmatpush.msra.mxu0 %v6247
    %v6249 = vand.u32 %v4775, 4294901760
    %v6250 = vsub.f32 %v4775, %v6249
    %v6251 = vand.u32 %v6250, 4294901760
    %6252 = vmatpush.msra.mxu0 %v6251
    %v6253 = vand.u32 %v4774, 4294901760
    %v6254 = vsub.f32 %v4774, %v6253
    %v6255 = vand.u32 %v6254, 4294901760
    %6256 = vmatpush.msra.mxu0 %v6255
    %v6257 = vand.u32 %v4773, 4294901760
    %v6258 = vsub.f32 %v4773, %v6257
    %v6259 = vand.u32 %v6258, 4294901760
    %6260 = vmatpush.msra.mxu0 %v6259
    %v6261 = vand.u32 %v4772, 4294901760
    %v6262 = vsub.f32 %v4772, %v6261
    %v6263 = vand.u32 %v6262, 4294901760
    %6264 = vmatpush.msra.mxu0 %v6263
    %v6265 = vand.u32 %v4771, 4294901760
    %v6266 = vsub.f32 %v4771, %v6265
    %v6267 = vand.u32 %v6266, 4294901760
    %6268 = vmatpush.msra.mxu0 %v6267
    %v6269 = vand.u32 %v4067, 4294901760
    %6270 = vmatmul.f32.gmra.mxu0 %v6269
    %v6271 = vpop.f32.mrf.mxu0
    %v6272 = vadd.f32 %v6113, %v6271
    %v6273 = vand.u32 %v4068, 4294901760
    %6274 = vmatmul.f32.gmra.mxu0 %v6273
    %v6275 = vpop.f32.mrf.mxu0
    %v6276 = vadd.f32 %v6119, %v6275
    %v6277 = vand.u32 %v4069, 4294901760
    %6278 = vmatmul.f32.gmra.mxu0 %v6277
    %v6279 = vpop.f32.mrf.mxu0
    %v6280 = vadd.f32 %v6125, %v6279
    %v6281 = vand.u32 %v4070, 4294901760
    %6282 = vmatmul.f32.gmra.mxu0 %v6281
    %v6283 = vpop.f32.mrf.mxu0
    %v6284 = vadd.f32 %v6131, %v6283
    %v6285 = vand.u32 %v4071, 4294901760
    %6286 = vmatmul.f32.gmra.mxu0 %v6285
    %v6287 = vpop.f32.mrf.mxu0
    %v6288 = vadd.f32 %v6137, %v6287
    %v6289 = vand.u32 %v4072, 4294901760
    %6290 = vmatmul.f32.gmra.mxu0 %v6289
    %v6291 = vpop.f32.mrf.mxu0
    %v6292 = vadd.f32 %v6143, %v6291
    %v6293 = vand.u32 %v4073, 4294901760
    %6294 = vmatmul.f32.gmra.mxu0 %v6293
    %v6295 = vpop.f32.mrf.mxu0
    %v6296 = vadd.f32 %v6149, %v6295
    %v6297 = vand.u32 %v4074, 4294901760
    %6298 = vmatmul.f32.gmra.mxu0 %v6297
    %v6299 = vpop.f32.mrf.mxu0
    %v6300 = vadd.f32 %v6155, %v6299
    %v6301 = vand.u32 %v4075, 4294901760
    %6302 = vmatmul.f32.gmra.mxu0 %v6301
    %v6303 = vpop.f32.mrf.mxu0
    %v6304 = vadd.f32 %v6161, %v6303
    %v6305 = vand.u32 %v4076, 4294901760
    %6306 = vmatmul.f32.gmra.mxu0 %v6305
    %v6307 = vpop.f32.mrf.mxu0
    %v6308 = vadd.f32 %v6167, %v6307
    %v6309 = vand.u32 %v4077, 4294901760
    %6310 = vmatmul.f32.gmra.mxu0 %v6309
    %v6311 = vpop.f32.mrf.mxu0
    %v6312 = vadd.f32 %v6173, %v6311
    %v6313 = vand.u32 %v4078, 4294901760
    %6314 = vmatmul.f32.gmra.mxu0 %v6313
    %v6315 = vpop.f32.mrf.mxu0
    %v6316 = vadd.f32 %v6179, %v6315
    %v6317 = vand.u32 %v4079, 4294901760
    %6318 = vmatmul.f32.gmra.mxu0 %v6317
    %v6319 = vpop.f32.mrf.mxu0
    %v6320 = vadd.f32 %v6185, %v6319
    %v6321 = vand.u32 %v4080, 4294901760
    %6322 = vmatmul.f32.gmra.mxu0 %v6321
    %v6323 = vpop.f32.mrf.mxu0
    %v6324 = vadd.f32 %v6191, %v6323
    %v6325 = vand.u32 %v4081, 4294901760
    %6326 = vmatmul.f32.gmra.mxu0 %v6325
    %v6327 = vpop.f32.mrf.mxu0
    %v6328 = vadd.f32 %v6197, %v6327
    %v6329 = vand.u32 %v4082, 4294901760
    %6330 = vmatmul.f32.gmra.mxu0 %v6329
    %v6331 = vpop.f32.mrf.mxu0
    %v6332 = vadd.f32 %v6203, %v6331
    %6333 = vdwg.mxu0
    %v6334 = vand.u32 %v4786, 4294901760
    %6335 = vmatpush.msra.mxu0 %v6334
    %v6336 = vand.u32 %v4785, 4294901760
    %6337 = vmatpush.msra.mxu0 %v6336
    %v6338 = vand.u32 %v4784, 4294901760
    %6339 = vmatpush.msra.mxu0 %v6338
    %v6340 = vand.u32 %v4783, 4294901760
    %6341 = vmatpush.msra.mxu0 %v6340
    %v6342 = vand.u32 %v4782, 4294901760
    %6343 = vmatpush.msra.mxu0 %v6342
    %v6344 = vand.u32 %v4781, 4294901760
    %6345 = vmatpush.msra.mxu0 %v6344
    %v6346 = vand.u32 %v4780, 4294901760
    %6347 = vmatpush.msra.mxu0 %v6346
    %v6348 = vand.u32 %v4779, 4294901760
    %6349 = vmatpush.msra.mxu0 %v6348
    %v6350 = vand.u32 %v4778, 4294901760
    %6351 = vmatpush.msra.mxu0 %v6350
    %v6352 = vand.u32 %v4777, 4294901760
    %6353 = vmatpush.msra.mxu0 %v6352
    %v6354 = vand.u32 %v4776, 4294901760
    %6355 = vmatpush.msra.mxu0 %v6354
    %v6356 = vand.u32 %v4775, 4294901760
    %6357 = vmatpush.msra.mxu0 %v6356
    %v6358 = vand.u32 %v4774, 4294901760
    %6359 = vmatpush.msra.mxu0 %v6358
    %v6360 = vand.u32 %v4773, 4294901760
    %6361 = vmatpush.msra.mxu0 %v6360
    %v6362 = vand.u32 %v4772, 4294901760
    %6363 = vmatpush.msra.mxu0 %v6362
    %v6364 = vand.u32 %v4771, 4294901760
    %6365 = vmatpush.msra.mxu0 %v6364
    %v6366 = vand.u32 %v4067, 4294901760
    %6367 = vmatmul.f32.gmra.mxu0 %v6366
    %v6368 = vpop.f32.mrf.mxu0
    %v6369 = vadd.f32 %v6272, %v6368
    %v6370 = vand.u32 %v4068, 4294901760
    %6371 = vmatmul.f32.gmra.mxu0 %v6370
    %v6372 = vpop.f32.mrf.mxu0
    %v6373 = vadd.f32 %v6276, %v6372
    %v6374 = vand.u32 %v4069, 4294901760
    %6375 = vmatmul.f32.gmra.mxu0 %v6374
    %v6376 = vpop.f32.mrf.mxu0
    %v6377 = vadd.f32 %v6280, %v6376
    %v6378 = vand.u32 %v4070, 4294901760
    %6379 = vmatmul.f32.gmra.mxu0 %v6378
    %v6380 = vpop.f32.mrf.mxu0
    %v6381 = vadd.f32 %v6284, %v6380
    %v6382 = vand.u32 %v4071, 4294901760
    %6383 = vmatmul.f32.gmra.mxu0 %v6382
    %v6384 = vpop.f32.mrf.mxu0
    %v6385 = vadd.f32 %v6288, %v6384
    %v6386 = vand.u32 %v4072, 4294901760
    %6387 = vmatmul.f32.gmra.mxu0 %v6386
    %v6388 = vpop.f32.mrf.mxu0
    %v6389 = vadd.f32 %v6292, %v6388
    %v6390 = vand.u32 %v4073, 4294901760
    %6391 = vmatmul.f32.gmra.mxu0 %v6390
    %v6392 = vpop.f32.mrf.mxu0
    %v6393 = vadd.f32 %v6296, %v6392
    %v6394 = vand.u32 %v4074, 4294901760
    %6395 = vmatmul.f32.gmra.mxu0 %v6394
    %v6396 = vpop.f32.mrf.mxu0
    %v6397 = vadd.f32 %v6300, %v6396
    %v6398 = vand.u32 %v4075, 4294901760
    %6399 = vmatmul.f32.gmra.mxu0 %v6398
    %v6400 = vpop.f32.mrf.mxu0
    %v6401 = vadd.f32 %v6304, %v6400
    %v6402 = vand.u32 %v4076, 4294901760
    %6403 = vmatmul.f32.gmra.mxu0 %v6402
    %v6404 = vpop.f32.mrf.mxu0
    %v6405 = vadd.f32 %v6308, %v6404
    %v6406 = vand.u32 %v4077, 4294901760
    %6407 = vmatmul.f32.gmra.mxu0 %v6406
    %v6408 = vpop.f32.mrf.mxu0
    %v6409 = vadd.f32 %v6312, %v6408
    %v6410 = vand.u32 %v4078, 4294901760
    %6411 = vmatmul.f32.gmra.mxu0 %v6410
    %v6412 = vpop.f32.mrf.mxu0
    %v6413 = vadd.f32 %v6316, %v6412
    %v6414 = vand.u32 %v4079, 4294901760
    %6415 = vmatmul.f32.gmra.mxu0 %v6414
    %v6416 = vpop.f32.mrf.mxu0
    %v6417 = vadd.f32 %v6320, %v6416
    %v6418 = vand.u32 %v4080, 4294901760
    %6419 = vmatmul.f32.gmra.mxu0 %v6418
    %v6420 = vpop.f32.mrf.mxu0
    %v6421 = vadd.f32 %v6324, %v6420
    %v6422 = vand.u32 %v4081, 4294901760
    %6423 = vmatmul.f32.gmra.mxu0 %v6422
    %v6424 = vpop.f32.mrf.mxu0
    %v6425 = vadd.f32 %v6328, %v6424
    %v6426 = vand.u32 %v4082, 4294901760
    %6427 = vmatmul.f32.gmra.mxu0 %v6426
    %v6428 = vpop.f32.mrf.mxu0
    %v6429 = vadd.f32 %v6332, %v6428
    %6430 = vdwg.mxu0
    %v6431 = vand.u32 %v4802, 4294901760
    %6432 = vmatpush.msra.mxu0 %v6431
    %v6433 = vand.u32 %v4801, 4294901760
    %6434 = vmatpush.msra.mxu0 %v6433
    %v6435 = vand.u32 %v4800, 4294901760
    %6436 = vmatpush.msra.mxu0 %v6435
    %v6437 = vand.u32 %v4799, 4294901760
    %6438 = vmatpush.msra.mxu0 %v6437
    %v6439 = vand.u32 %v4798, 4294901760
    %6440 = vmatpush.msra.mxu0 %v6439
    %v6441 = vand.u32 %v4797, 4294901760
    %6442 = vmatpush.msra.mxu0 %v6441
    %v6443 = vand.u32 %v4796, 4294901760
    %6444 = vmatpush.msra.mxu0 %v6443
    %v6445 = vand.u32 %v4795, 4294901760
    %6446 = vmatpush.msra.mxu0 %v6445
    %v6447 = vand.u32 %v4794, 4294901760
    %6448 = vmatpush.msra.mxu0 %v6447
    %v6449 = vand.u32 %v4793, 4294901760
    %6450 = vmatpush.msra.mxu0 %v6449
    %v6451 = vand.u32 %v4792, 4294901760
    %6452 = vmatpush.msra.mxu0 %v6451
    %v6453 = vand.u32 %v4791, 4294901760
    %6454 = vmatpush.msra.mxu0 %v6453
    %v6455 = vand.u32 %v4790, 4294901760
    %6456 = vmatpush.msra.mxu0 %v6455
    %v6457 = vand.u32 %v4789, 4294901760
    %6458 = vmatpush.msra.mxu0 %v6457
    %v6459 = vand.u32 %v4788, 4294901760
    %6460 = vmatpush.msra.mxu0 %v6459
    %v6461 = vand.u32 %v4787, 4294901760
    %6462 = vmatpush.msra.mxu0 %v6461
    %v6463 = vand.u32 %v4403, 4294901760
    %v6464 = vsub.f32 %v4403, %v6463
    %v6465 = vand.u32 %v6464, 4294901760
    %v6466 = vsub.f32 %v6464, %v6465
    %v6467 = vand.u32 %v6466, 4294901760
    %6468 = vmatmul.f32.gmra.mxu0 %v6467
    %v6469 = vpop.f32.mrf.mxu0
    %v6470 = vadd.f32 %v6369, %v6469
    %v6471 = vand.u32 %v4404, 4294901760
    %v6472 = vsub.f32 %v4404, %v6471
    %v6473 = vand.u32 %v6472, 4294901760
    %v6474 = vsub.f32 %v6472, %v6473
    %v6475 = vand.u32 %v6474, 4294901760
    %6476 = vmatmul.f32.gmra.mxu0 %v6475
    %v6477 = vpop.f32.mrf.mxu0
    %v6478 = vadd.f32 %v6373, %v6477
    %v6479 = vand.u32 %v4405, 4294901760
    %v6480 = vsub.f32 %v4405, %v6479
    %v6481 = vand.u32 %v6480, 4294901760
    %v6482 = vsub.f32 %v6480, %v6481
    %v6483 = vand.u32 %v6482, 4294901760
    %6484 = vmatmul.f32.gmra.mxu0 %v6483
    %v6485 = vpop.f32.mrf.mxu0
    %v6486 = vadd.f32 %v6377, %v6485
    %v6487 = vand.u32 %v4406, 4294901760
    %v6488 = vsub.f32 %v4406, %v6487
    %v6489 = vand.u32 %v6488, 4294901760
    %v6490 = vsub.f32 %v6488, %v6489
    %v6491 = vand.u32 %v6490, 4294901760
    %6492 = vmatmul.f32.gmra.mxu0 %v6491
    %v6493 = vpop.f32.mrf.mxu0
    %v6494 = vadd.f32 %v6381, %v6493
    %v6495 = vand.u32 %v4407, 4294901760
    %v6496 = vsub.f32 %v4407, %v6495
    %v6497 = vand.u32 %v6496, 4294901760
    %v6498 = vsub.f32 %v6496, %v6497
    %v6499 = vand.u32 %v6498, 4294901760
    %6500 = vmatmul.f32.gmra.mxu0 %v6499
    %v6501 = vpop.f32.mrf.mxu0
    %v6502 = vadd.f32 %v6385, %v6501
    %v6503 = vand.u32 %v4408, 4294901760
    %v6504 = vsub.f32 %v4408, %v6503
    %v6505 = vand.u32 %v6504, 4294901760
    %v6506 = vsub.f32 %v6504, %v6505
    %v6507 = vand.u32 %v6506, 4294901760
    %6508 = vmatmul.f32.gmra.mxu0 %v6507
    %v6509 = vpop.f32.mrf.mxu0
    %v6510 = vadd.f32 %v6389, %v6509
    %v6511 = vand.u32 %v4409, 4294901760
    %v6512 = vsub.f32 %v4409, %v6511
    %v6513 = vand.u32 %v6512, 4294901760
    %v6514 = vsub.f32 %v6512, %v6513
    %v6515 = vand.u32 %v6514, 4294901760
    %6516 = vmatmul.f32.gmra.mxu0 %v6515
    %v6517 = vpop.f32.mrf.mxu0
    %v6518 = vadd.f32 %v6393, %v6517
    %v6519 = vand.u32 %v4410, 4294901760
    %v6520 = vsub.f32 %v4410, %v6519
    %v6521 = vand.u32 %v6520, 4294901760
    %v6522 = vsub.f32 %v6520, %v6521
    %v6523 = vand.u32 %v6522, 4294901760
    %6524 = vmatmul.f32.gmra.mxu0 %v6523
    %v6525 = vpop.f32.mrf.mxu0
    %v6526 = vadd.f32 %v6397, %v6525
    %v6527 = vand.u32 %v4411, 4294901760
    %v6528 = vsub.f32 %v4411, %v6527
    %v6529 = vand.u32 %v6528, 4294901760
    %v6530 = vsub.f32 %v6528, %v6529
    %v6531 = vand.u32 %v6530, 4294901760
    %6532 = vmatmul.f32.gmra.mxu0 %v6531
    %v6533 = vpop.f32.mrf.mxu0
    %v6534 = vadd.f32 %v6401, %v6533
    %v6535 = vand.u32 %v4412, 4294901760
    %v6536 = vsub.f32 %v4412, %v6535
    %v6537 = vand.u32 %v6536, 4294901760
    %v6538 = vsub.f32 %v6536, %v6537
    %v6539 = vand.u32 %v6538, 4294901760
    %6540 = vmatmul.f32.gmra.mxu0 %v6539
    %v6541 = vpop.f32.mrf.mxu0
    %v6542 = vadd.f32 %v6405, %v6541
    %v6543 = vand.u32 %v4413, 4294901760
    %v6544 = vsub.f32 %v4413, %v6543
    %v6545 = vand.u32 %v6544, 4294901760
    %v6546 = vsub.f32 %v6544, %v6545
    %v6547 = vand.u32 %v6546, 4294901760
    %6548 = vmatmul.f32.gmra.mxu0 %v6547
    %v6549 = vpop.f32.mrf.mxu0
    %v6550 = vadd.f32 %v6409, %v6549
    %v6551 = vand.u32 %v4414, 4294901760
    %v6552 = vsub.f32 %v4414, %v6551
    %v6553 = vand.u32 %v6552, 4294901760
    %v6554 = vsub.f32 %v6552, %v6553
    %v6555 = vand.u32 %v6554, 4294901760
    %6556 = vmatmul.f32.gmra.mxu0 %v6555
    %v6557 = vpop.f32.mrf.mxu0
    %v6558 = vadd.f32 %v6413, %v6557
    %v6559 = vand.u32 %v4415, 4294901760
    %v6560 = vsub.f32 %v4415, %v6559
    %v6561 = vand.u32 %v6560, 4294901760
    %v6562 = vsub.f32 %v6560, %v6561
    %v6563 = vand.u32 %v6562, 4294901760
    %6564 = vmatmul.f32.gmra.mxu0 %v6563
    %v6565 = vpop.f32.mrf.mxu0
    %v6566 = vadd.f32 %v6417, %v6565
    %v6567 = vand.u32 %v4416, 4294901760
    %v6568 = vsub.f32 %v4416, %v6567
    %v6569 = vand.u32 %v6568, 4294901760
    %v6570 = vsub.f32 %v6568, %v6569
    %v6571 = vand.u32 %v6570, 4294901760
    %6572 = vmatmul.f32.gmra.mxu0 %v6571
    %v6573 = vpop.f32.mrf.mxu0
    %v6574 = vadd.f32 %v6421, %v6573
    %v6575 = vand.u32 %v4417, 4294901760
    %v6576 = vsub.f32 %v4417, %v6575
    %v6577 = vand.u32 %v6576, 4294901760
    %v6578 = vsub.f32 %v6576, %v6577
    %v6579 = vand.u32 %v6578, 4294901760
    %6580 = vmatmul.f32.gmra.mxu0 %v6579
    %v6581 = vpop.f32.mrf.mxu0
    %v6582 = vadd.f32 %v6425, %v6581
    %v6583 = vand.u32 %v4418, 4294901760
    %v6584 = vsub.f32 %v4418, %v6583
    %v6585 = vand.u32 %v6584, 4294901760
    %v6586 = vsub.f32 %v6584, %v6585
    %v6587 = vand.u32 %v6586, 4294901760
    %6588 = vmatmul.f32.gmra.mxu0 %v6587
    %v6589 = vpop.f32.mrf.mxu0
    %v6590 = vadd.f32 %v6429, %v6589
    %6591 = vdwg.mxu0
    %v6592 = vand.u32 %v4802, 4294901760
    %v6593 = vsub.f32 %v4802, %v6592
    %v6594 = vand.u32 %v6593, 4294901760
    %v6595 = vsub.f32 %v6593, %v6594
    %v6596 = vand.u32 %v6595, 4294901760
    %6597 = vmatpush.msra.mxu0 %v6596
    %v6598 = vand.u32 %v4801, 4294901760
    %v6599 = vsub.f32 %v4801, %v6598
    %v6600 = vand.u32 %v6599, 4294901760
    %v6601 = vsub.f32 %v6599, %v6600
    %v6602 = vand.u32 %v6601, 4294901760
    %6603 = vmatpush.msra.mxu0 %v6602
    %v6604 = vand.u32 %v4800, 4294901760
    %v6605 = vsub.f32 %v4800, %v6604
    %v6606 = vand.u32 %v6605, 4294901760
    %v6607 = vsub.f32 %v6605, %v6606
    %v6608 = vand.u32 %v6607, 4294901760
    %6609 = vmatpush.msra.mxu0 %v6608
    %v6610 = vand.u32 %v4799, 4294901760
    %v6611 = vsub.f32 %v4799, %v6610
    %v6612 = vand.u32 %v6611, 4294901760
    %v6613 = vsub.f32 %v6611, %v6612
    %v6614 = vand.u32 %v6613, 4294901760
    %6615 = vmatpush.msra.mxu0 %v6614
    %v6616 = vand.u32 %v4798, 4294901760
    %v6617 = vsub.f32 %v4798, %v6616
    %v6618 = vand.u32 %v6617, 4294901760
    %v6619 = vsub.f32 %v6617, %v6618
    %v6620 = vand.u32 %v6619, 4294901760
    %6621 = vmatpush.msra.mxu0 %v6620
    %v6622 = vand.u32 %v4797, 4294901760
    %v6623 = vsub.f32 %v4797, %v6622
    %v6624 = vand.u32 %v6623, 4294901760
    %v6625 = vsub.f32 %v6623, %v6624
    %v6626 = vand.u32 %v6625, 4294901760
    %6627 = vmatpush.msra.mxu0 %v6626
    %v6628 = vand.u32 %v4796, 4294901760
    %v6629 = vsub.f32 %v4796, %v6628
    %v6630 = vand.u32 %v6629, 4294901760
    %v6631 = vsub.f32 %v6629, %v6630
    %v6632 = vand.u32 %v6631, 4294901760
    %6633 = vmatpush.msra.mxu0 %v6632
    %v6634 = vand.u32 %v4795, 4294901760
    %v6635 = vsub.f32 %v4795, %v6634
    %v6636 = vand.u32 %v6635, 4294901760
    %v6637 = vsub.f32 %v6635, %v6636
    %v6638 = vand.u32 %v6637, 4294901760
    %6639 = vmatpush.msra.mxu0 %v6638
    %v6640 = vand.u32 %v4794, 4294901760
    %v6641 = vsub.f32 %v4794, %v6640
    %v6642 = vand.u32 %v6641, 4294901760
    %v6643 = vsub.f32 %v6641, %v6642
    %v6644 = vand.u32 %v6643, 4294901760
    %6645 = vmatpush.msra.mxu0 %v6644
    %v6646 = vand.u32 %v4793, 4294901760
    %v6647 = vsub.f32 %v4793, %v6646
    %v6648 = vand.u32 %v6647, 4294901760
    %v6649 = vsub.f32 %v6647, %v6648
    %v6650 = vand.u32 %v6649, 4294901760
    %6651 = vmatpush.msra.mxu0 %v6650
    %v6652 = vand.u32 %v4792, 4294901760
    %v6653 = vsub.f32 %v4792, %v6652
    %v6654 = vand.u32 %v6653, 4294901760
    %v6655 = vsub.f32 %v6653, %v6654
    %v6656 = vand.u32 %v6655, 4294901760
    %6657 = vmatpush.msra.mxu0 %v6656
    %v6658 = vand.u32 %v4791, 4294901760
    %v6659 = vsub.f32 %v4791, %v6658
    %v6660 = vand.u32 %v6659, 4294901760
    %v6661 = vsub.f32 %v6659, %v6660
    %v6662 = vand.u32 %v6661, 4294901760
    %6663 = vmatpush.msra.mxu0 %v6662
    %v6664 = vand.u32 %v4790, 4294901760
    %v6665 = vsub.f32 %v4790, %v6664
    %v6666 = vand.u32 %v6665, 4294901760
    %v6667 = vsub.f32 %v6665, %v6666
    %v6668 = vand.u32 %v6667, 4294901760
    %6669 = vmatpush.msra.mxu0 %v6668
    %v6670 = vand.u32 %v4789, 4294901760
    %v6671 = vsub.f32 %v4789, %v6670
    %v6672 = vand.u32 %v6671, 4294901760
    %v6673 = vsub.f32 %v6671, %v6672
    %v6674 = vand.u32 %v6673, 4294901760
    %6675 = vmatpush.msra.mxu0 %v6674
    %v6676 = vand.u32 %v4788, 4294901760
    %v6677 = vsub.f32 %v4788, %v6676
    %v6678 = vand.u32 %v6677, 4294901760
    %v6679 = vsub.f32 %v6677, %v6678
    %v6680 = vand.u32 %v6679, 4294901760
    %6681 = vmatpush.msra.mxu0 %v6680
    %v6682 = vand.u32 %v4787, 4294901760
    %v6683 = vsub.f32 %v4787, %v6682
    %v6684 = vand.u32 %v6683, 4294901760
    %v6685 = vsub.f32 %v6683, %v6684
    %v6686 = vand.u32 %v6685, 4294901760
    %6687 = vmatpush.msra.mxu0 %v6686
    %v6688 = vand.u32 %v4403, 4294901760
    %6689 = vmatmul.f32.gmra.mxu0 %v6688
    %v6690 = vpop.f32.mrf.mxu0
    %v6691 = vadd.f32 %v6470, %v6690
    %v6692 = vand.u32 %v4404, 4294901760
    %6693 = vmatmul.f32.gmra.mxu0 %v6692
    %v6694 = vpop.f32.mrf.mxu0
    %v6695 = vadd.f32 %v6478, %v6694
    %v6696 = vand.u32 %v4405, 4294901760
    %6697 = vmatmul.f32.gmra.mxu0 %v6696
    %v6698 = vpop.f32.mrf.mxu0
    %v6699 = vadd.f32 %v6486, %v6698
    %v6700 = vand.u32 %v4406, 4294901760
    %6701 = vmatmul.f32.gmra.mxu0 %v6700
    %v6702 = vpop.f32.mrf.mxu0
    %v6703 = vadd.f32 %v6494, %v6702
    %v6704 = vand.u32 %v4407, 4294901760
    %6705 = vmatmul.f32.gmra.mxu0 %v6704
    %v6706 = vpop.f32.mrf.mxu0
    %v6707 = vadd.f32 %v6502, %v6706
    %v6708 = vand.u32 %v4408, 4294901760
    %6709 = vmatmul.f32.gmra.mxu0 %v6708
    %v6710 = vpop.f32.mrf.mxu0
    %v6711 = vadd.f32 %v6510, %v6710
    %v6712 = vand.u32 %v4409, 4294901760
    %6713 = vmatmul.f32.gmra.mxu0 %v6712
    %v6714 = vpop.f32.mrf.mxu0
    %v6715 = vadd.f32 %v6518, %v6714
    %v6716 = vand.u32 %v4410, 4294901760
    %6717 = vmatmul.f32.gmra.mxu0 %v6716
    %v6718 = vpop.f32.mrf.mxu0
    %v6719 = vadd.f32 %v6526, %v6718
    %v6720 = vand.u32 %v4411, 4294901760
    %6721 = vmatmul.f32.gmra.mxu0 %v6720
    %v6722 = vpop.f32.mrf.mxu0
    %v6723 = vadd.f32 %v6534, %v6722
    %v6724 = vand.u32 %v4412, 4294901760
    %6725 = vmatmul.f32.gmra.mxu0 %v6724
    %v6726 = vpop.f32.mrf.mxu0
    %v6727 = vadd.f32 %v6542, %v6726
    %v6728 = vand.u32 %v4413, 4294901760
    %6729 = vmatmul.f32.gmra.mxu0 %v6728
    %v6730 = vpop.f32.mrf.mxu0
    %v6731 = vadd.f32 %v6550, %v6730
    %v6732 = vand.u32 %v4414, 4294901760
    %6733 = vmatmul.f32.gmra.mxu0 %v6732
    %v6734 = vpop.f32.mrf.mxu0
    %v6735 = vadd.f32 %v6558, %v6734
    %v6736 = vand.u32 %v4415, 4294901760
    %6737 = vmatmul.f32.gmra.mxu0 %v6736
    %v6738 = vpop.f32.mrf.mxu0
    %v6739 = vadd.f32 %v6566, %v6738
    %v6740 = vand.u32 %v4416, 4294901760
    %6741 = vmatmul.f32.gmra.mxu0 %v6740
    %v6742 = vpop.f32.mrf.mxu0
    %v6743 = vadd.f32 %v6574, %v6742
    %v6744 = vand.u32 %v4417, 4294901760
    %6745 = vmatmul.f32.gmra.mxu0 %v6744
    %v6746 = vpop.f32.mrf.mxu0
    %v6747 = vadd.f32 %v6582, %v6746
    %v6748 = vand.u32 %v4418, 4294901760
    %6749 = vmatmul.f32.gmra.mxu0 %v6748
    %v6750 = vpop.f32.mrf.mxu0
    %v6751 = vadd.f32 %v6590, %v6750
    %6752 = vdwg.mxu0
    %v6753 = vand.u32 %v4802, 4294901760
    %v6754 = vsub.f32 %v4802, %v6753
    %6755 = vmatpush.msra.mxu0 %v6754
    %v6756 = vand.u32 %v4801, 4294901760
    %v6757 = vsub.f32 %v4801, %v6756
    %6758 = vmatpush.msra.mxu0 %v6757
    %v6759 = vand.u32 %v4800, 4294901760
    %v6760 = vsub.f32 %v4800, %v6759
    %6761 = vmatpush.msra.mxu0 %v6760
    %v6762 = vand.u32 %v4799, 4294901760
    %v6763 = vsub.f32 %v4799, %v6762
    %6764 = vmatpush.msra.mxu0 %v6763
    %v6765 = vand.u32 %v4798, 4294901760
    %v6766 = vsub.f32 %v4798, %v6765
    %6767 = vmatpush.msra.mxu0 %v6766
    %v6768 = vand.u32 %v4797, 4294901760
    %v6769 = vsub.f32 %v4797, %v6768
    %6770 = vmatpush.msra.mxu0 %v6769
    %v6771 = vand.u32 %v4796, 4294901760
    %v6772 = vsub.f32 %v4796, %v6771
    %6773 = vmatpush.msra.mxu0 %v6772
    %v6774 = vand.u32 %v4795, 4294901760
    %v6775 = vsub.f32 %v4795, %v6774
    %6776 = vmatpush.msra.mxu0 %v6775
    %v6777 = vand.u32 %v4794, 4294901760
    %v6778 = vsub.f32 %v4794, %v6777
    %6779 = vmatpush.msra.mxu0 %v6778
    %v6780 = vand.u32 %v4793, 4294901760
    %v6781 = vsub.f32 %v4793, %v6780
    %6782 = vmatpush.msra.mxu0 %v6781
    %v6783 = vand.u32 %v4792, 4294901760
    %v6784 = vsub.f32 %v4792, %v6783
    %6785 = vmatpush.msra.mxu0 %v6784
    %v6786 = vand.u32 %v4791, 4294901760
    %v6787 = vsub.f32 %v4791, %v6786
    %6788 = vmatpush.msra.mxu0 %v6787
    %v6789 = vand.u32 %v4790, 4294901760
    %v6790 = vsub.f32 %v4790, %v6789
    %6791 = vmatpush.msra.mxu0 %v6790
    %v6792 = vand.u32 %v4789, 4294901760
    %v6793 = vsub.f32 %v4789, %v6792
    %6794 = vmatpush.msra.mxu0 %v6793
    %v6795 = vand.u32 %v4788, 4294901760
    %v6796 = vsub.f32 %v4788, %v6795
    %6797 = vmatpush.msra.mxu0 %v6796
    %v6798 = vand.u32 %v4787, 4294901760
    %v6799 = vsub.f32 %v4787, %v6798
    %6800 = vmatpush.msra.mxu0 %v6799
    %v6801 = vand.u32 %v4403, 4294901760
    %v6802 = vsub.f32 %v4403, %v6801
    %6803 = vmatmul.f32.gmra.mxu0 %v6802
    %v6804 = vpop.f32.mrf.mxu0
    %v6805 = vadd.f32 %v6691, %v6804
    %v6806 = vand.u32 %v4404, 4294901760
    %v6807 = vsub.f32 %v4404, %v6806
    %6808 = vmatmul.f32.gmra.mxu0 %v6807
    %v6809 = vpop.f32.mrf.mxu0
    %v6810 = vadd.f32 %v6695, %v6809
    %v6811 = vand.u32 %v4405, 4294901760
    %v6812 = vsub.f32 %v4405, %v6811
    %6813 = vmatmul.f32.gmra.mxu0 %v6812
    %v6814 = vpop.f32.mrf.mxu0
    %v6815 = vadd.f32 %v6699, %v6814
    %v6816 = vand.u32 %v4406, 4294901760
    %v6817 = vsub.f32 %v4406, %v6816
    %6818 = vmatmul.f32.gmra.mxu0 %v6817
    %v6819 = vpop.f32.mrf.mxu0
    %v6820 = vadd.f32 %v6703, %v6819
    %v6821 = vand.u32 %v4407, 4294901760
    %v6822 = vsub.f32 %v4407, %v6821
    %6823 = vmatmul.f32.gmra.mxu0 %v6822
    %v6824 = vpop.f32.mrf.mxu0
    %v6825 = vadd.f32 %v6707, %v6824
    %v6826 = vand.u32 %v4408, 4294901760
    %v6827 = vsub.f32 %v4408, %v6826
    %6828 = vmatmul.f32.gmra.mxu0 %v6827
    %v6829 = vpop.f32.mrf.mxu0
    %v6830 = vadd.f32 %v6711, %v6829
    %v6831 = vand.u32 %v4409, 4294901760
    %v6832 = vsub.f32 %v4409, %v6831
    %6833 = vmatmul.f32.gmra.mxu0 %v6832
    %v6834 = vpop.f32.mrf.mxu0
    %v6835 = vadd.f32 %v6715, %v6834
    %v6836 = vand.u32 %v4410, 4294901760
    %v6837 = vsub.f32 %v4410, %v6836
    %6838 = vmatmul.f32.gmra.mxu0 %v6837
    %v6839 = vpop.f32.mrf.mxu0
    %v6840 = vadd.f32 %v6719, %v6839
    %v6841 = vand.u32 %v4411, 4294901760
    %v6842 = vsub.f32 %v4411, %v6841
    %6843 = vmatmul.f32.gmra.mxu0 %v6842
    %v6844 = vpop.f32.mrf.mxu0
    %v6845 = vadd.f32 %v6723, %v6844
    %v6846 = vand.u32 %v4412, 4294901760
    %v6847 = vsub.f32 %v4412, %v6846
    %6848 = vmatmul.f32.gmra.mxu0 %v6847
    %v6849 = vpop.f32.mrf.mxu0
    %v6850 = vadd.f32 %v6727, %v6849
    %v6851 = vand.u32 %v4413, 4294901760
    %v6852 = vsub.f32 %v4413, %v6851
    %6853 = vmatmul.f32.gmra.mxu0 %v6852
    %v6854 = vpop.f32.mrf.mxu0
    %v6855 = vadd.f32 %v6731, %v6854
    %v6856 = vand.u32 %v4414, 4294901760
    %v6857 = vsub.f32 %v4414, %v6856
    %6858 = vmatmul.f32.gmra.mxu0 %v6857
    %v6859 = vpop.f32.mrf.mxu0
    %v6860 = vadd.f32 %v6735, %v6859
    %v6861 = vand.u32 %v4415, 4294901760
    %v6862 = vsub.f32 %v4415, %v6861
    %6863 = vmatmul.f32.gmra.mxu0 %v6862
    %v6864 = vpop.f32.mrf.mxu0
    %v6865 = vadd.f32 %v6739, %v6864
    %v6866 = vand.u32 %v4416, 4294901760
    %v6867 = vsub.f32 %v4416, %v6866
    %6868 = vmatmul.f32.gmra.mxu0 %v6867
    %v6869 = vpop.f32.mrf.mxu0
    %v6870 = vadd.f32 %v6743, %v6869
    %v6871 = vand.u32 %v4417, 4294901760
    %v6872 = vsub.f32 %v4417, %v6871
    %6873 = vmatmul.f32.gmra.mxu0 %v6872
    %v6874 = vpop.f32.mrf.mxu0
    %v6875 = vadd.f32 %v6747, %v6874
    %v6876 = vand.u32 %v4418, 4294901760
    %v6877 = vsub.f32 %v4418, %v6876
    %6878 = vmatmul.f32.gmra.mxu0 %v6877
    %v6879 = vpop.f32.mrf.mxu0
    %v6880 = vadd.f32 %v6751, %v6879
    %6881 = vdwg.mxu0
    %v6882 = vand.u32 %v4802, 4294901760
    %6883 = vmatpush.msra.mxu0 %v6882
    %v6884 = vand.u32 %v4801, 4294901760
    %6885 = vmatpush.msra.mxu0 %v6884
    %v6886 = vand.u32 %v4800, 4294901760
    %6887 = vmatpush.msra.mxu0 %v6886
    %v6888 = vand.u32 %v4799, 4294901760
    %6889 = vmatpush.msra.mxu0 %v6888
    %v6890 = vand.u32 %v4798, 4294901760
    %6891 = vmatpush.msra.mxu0 %v6890
    %v6892 = vand.u32 %v4797, 4294901760
    %6893 = vmatpush.msra.mxu0 %v6892
    %v6894 = vand.u32 %v4796, 4294901760
    %6895 = vmatpush.msra.mxu0 %v6894
    %v6896 = vand.u32 %v4795, 4294901760
    %6897 = vmatpush.msra.mxu0 %v6896
    %v6898 = vand.u32 %v4794, 4294901760
    %6899 = vmatpush.msra.mxu0 %v6898
    %v6900 = vand.u32 %v4793, 4294901760
    %6901 = vmatpush.msra.mxu0 %v6900
    %v6902 = vand.u32 %v4792, 4294901760
    %6903 = vmatpush.msra.mxu0 %v6902
    %v6904 = vand.u32 %v4791, 4294901760
    %6905 = vmatpush.msra.mxu0 %v6904
    %v6906 = vand.u32 %v4790, 4294901760
    %6907 = vmatpush.msra.mxu0 %v6906
    %v6908 = vand.u32 %v4789, 4294901760
    %6909 = vmatpush.msra.mxu0 %v6908
    %v6910 = vand.u32 %v4788, 4294901760
    %6911 = vmatpush.msra.mxu0 %v6910
    %v6912 = vand.u32 %v4787, 4294901760
    %6913 = vmatpush.msra.mxu0 %v6912
    %v6914 = vand.u32 %v4403, 4294901760
    %v6915 = vsub.f32 %v4403, %v6914
    %v6916 = vand.u32 %v6915, 4294901760
    %6917 = vmatmul.f32.gmra.mxu0 %v6916
    %v6918 = vpop.f32.mrf.mxu0
    %v6919 = vadd.f32 %v6805, %v6918
    %v6920 = vand.u32 %v4404, 4294901760
    %v6921 = vsub.f32 %v4404, %v6920
    %v6922 = vand.u32 %v6921, 4294901760
    %6923 = vmatmul.f32.gmra.mxu0 %v6922
    %v6924 = vpop.f32.mrf.mxu0
    %v6925 = vadd.f32 %v6810, %v6924
    %v6926 = vand.u32 %v4405, 4294901760
    %v6927 = vsub.f32 %v4405, %v6926
    %v6928 = vand.u32 %v6927, 4294901760
    %6929 = vmatmul.f32.gmra.mxu0 %v6928
    %v6930 = vpop.f32.mrf.mxu0
    %v6931 = vadd.f32 %v6815, %v6930
    %v6932 = vand.u32 %v4406, 4294901760
    %v6933 = vsub.f32 %v4406, %v6932
    %v6934 = vand.u32 %v6933, 4294901760
    %6935 = vmatmul.f32.gmra.mxu0 %v6934
    %v6936 = vpop.f32.mrf.mxu0
    %v6937 = vadd.f32 %v6820, %v6936
    %v6938 = vand.u32 %v4407, 4294901760
    %v6939 = vsub.f32 %v4407, %v6938
    %v6940 = vand.u32 %v6939, 4294901760
    %6941 = vmatmul.f32.gmra.mxu0 %v6940
    %v6942 = vpop.f32.mrf.mxu0
    %v6943 = vadd.f32 %v6825, %v6942
    %v6944 = vand.u32 %v4408, 4294901760
    %v6945 = vsub.f32 %v4408, %v6944
    %v6946 = vand.u32 %v6945, 4294901760
    %6947 = vmatmul.f32.gmra.mxu0 %v6946
    %v6948 = vpop.f32.mrf.mxu0
    %v6949 = vadd.f32 %v6830, %v6948
    %v6950 = vand.u32 %v4409, 4294901760
    %v6951 = vsub.f32 %v4409, %v6950
    %v6952 = vand.u32 %v6951, 4294901760
    %6953 = vmatmul.f32.gmra.mxu0 %v6952
    %v6954 = vpop.f32.mrf.mxu0
    %v6955 = vadd.f32 %v6835, %v6954
    %v6956 = vand.u32 %v4410, 4294901760
    %v6957 = vsub.f32 %v4410, %v6956
    %v6958 = vand.u32 %v6957, 4294901760
    %6959 = vmatmul.f32.gmra.mxu0 %v6958
    %v6960 = vpop.f32.mrf.mxu0
    %v6961 = vadd.f32 %v6840, %v6960
    %v6962 = vand.u32 %v4411, 4294901760
    %v6963 = vsub.f32 %v4411, %v6962
    %v6964 = vand.u32 %v6963, 4294901760
    %6965 = vmatmul.f32.gmra.mxu0 %v6964
    %v6966 = vpop.f32.mrf.mxu0
    %v6967 = vadd.f32 %v6845, %v6966
    %v6968 = vand.u32 %v4412, 4294901760
    %v6969 = vsub.f32 %v4412, %v6968
    %v6970 = vand.u32 %v6969, 4294901760
    %6971 = vmatmul.f32.gmra.mxu0 %v6970
    %v6972 = vpop.f32.mrf.mxu0
    %v6973 = vadd.f32 %v6850, %v6972
    %v6974 = vand.u32 %v4413, 4294901760
    %v6975 = vsub.f32 %v4413, %v6974
    %v6976 = vand.u32 %v6975, 4294901760
    %6977 = vmatmul.f32.gmra.mxu0 %v6976
    %v6978 = vpop.f32.mrf.mxu0
    %v6979 = vadd.f32 %v6855, %v6978
    %v6980 = vand.u32 %v4414, 4294901760
    %v6981 = vsub.f32 %v4414, %v6980
    %v6982 = vand.u32 %v6981, 4294901760
    %6983 = vmatmul.f32.gmra.mxu0 %v6982
    %v6984 = vpop.f32.mrf.mxu0
    %v6985 = vadd.f32 %v6860, %v6984
    %v6986 = vand.u32 %v4415, 4294901760
    %v6987 = vsub.f32 %v4415, %v6986
    %v6988 = vand.u32 %v6987, 4294901760
    %6989 = vmatmul.f32.gmra.mxu0 %v6988
    %v6990 = vpop.f32.mrf.mxu0
    %v6991 = vadd.f32 %v6865, %v6990
    %v6992 = vand.u32 %v4416, 4294901760
    %v6993 = vsub.f32 %v4416, %v6992
    %v6994 = vand.u32 %v6993, 4294901760
    %6995 = vmatmul.f32.gmra.mxu0 %v6994
    %v6996 = vpop.f32.mrf.mxu0
    %v6997 = vadd.f32 %v6870, %v6996
    %v6998 = vand.u32 %v4417, 4294901760
    %v6999 = vsub.f32 %v4417, %v6998
    %v7000 = vand.u32 %v6999, 4294901760
    %7001 = vmatmul.f32.gmra.mxu0 %v7000
    %v7002 = vpop.f32.mrf.mxu0
    %v7003 = vadd.f32 %v6875, %v7002
    %v7004 = vand.u32 %v4418, 4294901760
    %v7005 = vsub.f32 %v4418, %v7004
    %v7006 = vand.u32 %v7005, 4294901760
    %7007 = vmatmul.f32.gmra.mxu0 %v7006
    %v7008 = vpop.f32.mrf.mxu0
    %v7009 = vadd.f32 %v6880, %v7008
    %7010 = vdwg.mxu0
    %v7011 = vand.u32 %v4802, 4294901760
    %v7012 = vsub.f32 %v4802, %v7011
    %v7013 = vand.u32 %v7012, 4294901760
    %7014 = vmatpush.msra.mxu0 %v7013
    %v7015 = vand.u32 %v4801, 4294901760
    %v7016 = vsub.f32 %v4801, %v7015
    %v7017 = vand.u32 %v7016, 4294901760
    %7018 = vmatpush.msra.mxu0 %v7017
    %v7019 = vand.u32 %v4800, 4294901760
    %v7020 = vsub.f32 %v4800, %v7019
    %v7021 = vand.u32 %v7020, 4294901760
    %7022 = vmatpush.msra.mxu0 %v7021
    %v7023 = vand.u32 %v4799, 4294901760
    %v7024 = vsub.f32 %v4799, %v7023
    %v7025 = vand.u32 %v7024, 4294901760
    %7026 = vmatpush.msra.mxu0 %v7025
    %v7027 = vand.u32 %v4798, 4294901760
    %v7028 = vsub.f32 %v4798, %v7027
    %v7029 = vand.u32 %v7028, 4294901760
    %7030 = vmatpush.msra.mxu0 %v7029
    %v7031 = vand.u32 %v4797, 4294901760
    %v7032 = vsub.f32 %v4797, %v7031
    %v7033 = vand.u32 %v7032, 4294901760
    %7034 = vmatpush.msra.mxu0 %v7033
    %v7035 = vand.u32 %v4796, 4294901760
    %v7036 = vsub.f32 %v4796, %v7035
    %v7037 = vand.u32 %v7036, 4294901760
    %7038 = vmatpush.msra.mxu0 %v7037
    %v7039 = vand.u32 %v4795, 4294901760
    %v7040 = vsub.f32 %v4795, %v7039
    %v7041 = vand.u32 %v7040, 4294901760
    %7042 = vmatpush.msra.mxu0 %v7041
    %v7043 = vand.u32 %v4794, 4294901760
    %v7044 = vsub.f32 %v4794, %v7043
    %v7045 = vand.u32 %v7044, 4294901760
    %7046 = vmatpush.msra.mxu0 %v7045
    %v7047 = vand.u32 %v4793, 4294901760
    %v7048 = vsub.f32 %v4793, %v7047
    %v7049 = vand.u32 %v7048, 4294901760
    %7050 = vmatpush.msra.mxu0 %v7049
    %v7051 = vand.u32 %v4792, 4294901760
    %v7052 = vsub.f32 %v4792, %v7051
    %v7053 = vand.u32 %v7052, 4294901760
    %7054 = vmatpush.msra.mxu0 %v7053
    %v7055 = vand.u32 %v4791, 4294901760
    %v7056 = vsub.f32 %v4791, %v7055
    %v7057 = vand.u32 %v7056, 4294901760
    %7058 = vmatpush.msra.mxu0 %v7057
    %v7059 = vand.u32 %v4790, 4294901760
    %v7060 = vsub.f32 %v4790, %v7059
    %v7061 = vand.u32 %v7060, 4294901760
    %7062 = vmatpush.msra.mxu0 %v7061
    %v7063 = vand.u32 %v4789, 4294901760
    %v7064 = vsub.f32 %v4789, %v7063
    %v7065 = vand.u32 %v7064, 4294901760
    %7066 = vmatpush.msra.mxu0 %v7065
    %v7067 = vand.u32 %v4788, 4294901760
    %v7068 = vsub.f32 %v4788, %v7067
    %v7069 = vand.u32 %v7068, 4294901760
    %7070 = vmatpush.msra.mxu0 %v7069
    %v7071 = vand.u32 %v4787, 4294901760
    %v7072 = vsub.f32 %v4787, %v7071
    %v7073 = vand.u32 %v7072, 4294901760
    %7074 = vmatpush.msra.mxu0 %v7073
    %v7075 = vand.u32 %v4403, 4294901760
    %7076 = vmatmul.f32.gmra.mxu0 %v7075
    %v7077 = vpop.f32.mrf.mxu0
    %v7078 = vadd.f32 %v6919, %v7077
    %v7079 = vand.u32 %v4404, 4294901760
    %7080 = vmatmul.f32.gmra.mxu0 %v7079
    %v7081 = vpop.f32.mrf.mxu0
    %v7082 = vadd.f32 %v6925, %v7081
    %v7083 = vand.u32 %v4405, 4294901760
    %7084 = vmatmul.f32.gmra.mxu0 %v7083
    %v7085 = vpop.f32.mrf.mxu0
    %v7086 = vadd.f32 %v6931, %v7085
    %v7087 = vand.u32 %v4406, 4294901760
    %7088 = vmatmul.f32.gmra.mxu0 %v7087
    %v7089 = vpop.f32.mrf.mxu0
    %v7090 = vadd.f32 %v6937, %v7089
    %v7091 = vand.u32 %v4407, 4294901760
    %7092 = vmatmul.f32.gmra.mxu0 %v7091
    %v7093 = vpop.f32.mrf.mxu0
    %v7094 = vadd.f32 %v6943, %v7093
    %v7095 = vand.u32 %v4408, 4294901760
    %7096 = vmatmul.f32.gmra.mxu0 %v7095
    %v7097 = vpop.f32.mrf.mxu0
    %v7098 = vadd.f32 %v6949, %v7097
    %v7099 = vand.u32 %v4409, 4294901760
    %7100 = vmatmul.f32.gmra.mxu0 %v7099
    %v7101 = vpop.f32.mrf.mxu0
    %v7102 = vadd.f32 %v6955, %v7101
    %v7103 = vand.u32 %v4410, 4294901760
    %7104 = vmatmul.f32.gmra.mxu0 %v7103
    %v7105 = vpop.f32.mrf.mxu0
    %v7106 = vadd.f32 %v6961, %v7105
    %v7107 = vand.u32 %v4411, 4294901760
    %7108 = vmatmul.f32.gmra.mxu0 %v7107
    %v7109 = vpop.f32.mrf.mxu0
    %v7110 = vadd.f32 %v6967, %v7109
    %v7111 = vand.u32 %v4412, 4294901760
    %7112 = vmatmul.f32.gmra.mxu0 %v7111
    %v7113 = vpop.f32.mrf.mxu0
    %v7114 = vadd.f32 %v6973, %v7113
    %v7115 = vand.u32 %v4413, 4294901760
    %7116 = vmatmul.f32.gmra.mxu0 %v7115
    %v7117 = vpop.f32.mrf.mxu0
    %v7118 = vadd.f32 %v6979, %v7117
    %v7119 = vand.u32 %v4414, 4294901760
    %7120 = vmatmul.f32.gmra.mxu0 %v7119
    %v7121 = vpop.f32.mrf.mxu0
    %v7122 = vadd.f32 %v6985, %v7121
    %v7123 = vand.u32 %v4415, 4294901760
    %7124 = vmatmul.f32.gmra.mxu0 %v7123
    %v7125 = vpop.f32.mrf.mxu0
    %v7126 = vadd.f32 %v6991, %v7125
    %v7127 = vand.u32 %v4416, 4294901760
    %7128 = vmatmul.f32.gmra.mxu0 %v7127
    %v7129 = vpop.f32.mrf.mxu0
    %v7130 = vadd.f32 %v6997, %v7129
    %v7131 = vand.u32 %v4417, 4294901760
    %7132 = vmatmul.f32.gmra.mxu0 %v7131
    %v7133 = vpop.f32.mrf.mxu0
    %v7134 = vadd.f32 %v7003, %v7133
    %v7135 = vand.u32 %v4418, 4294901760
    %7136 = vmatmul.f32.gmra.mxu0 %v7135
    %v7137 = vpop.f32.mrf.mxu0
    %v7138 = vadd.f32 %v7009, %v7137
    %7139 = vdwg.mxu0
    %v7140 = vand.u32 %v4802, 4294901760
    %7141 = vmatpush.msra.mxu0 %v7140
    %v7142 = vand.u32 %v4801, 4294901760
    %7143 = vmatpush.msra.mxu0 %v7142
    %v7144 = vand.u32 %v4800, 4294901760
    %7145 = vmatpush.msra.mxu0 %v7144
    %v7146 = vand.u32 %v4799, 4294901760
    %7147 = vmatpush.msra.mxu0 %v7146
    %v7148 = vand.u32 %v4798, 4294901760
    %7149 = vmatpush.msra.mxu0 %v7148
    %v7150 = vand.u32 %v4797, 4294901760
    %7151 = vmatpush.msra.mxu0 %v7150
    %v7152 = vand.u32 %v4796, 4294901760
    %7153 = vmatpush.msra.mxu0 %v7152
    %v7154 = vand.u32 %v4795, 4294901760
    %7155 = vmatpush.msra.mxu0 %v7154
    %v7156 = vand.u32 %v4794, 4294901760
    %7157 = vmatpush.msra.mxu0 %v7156
    %v7158 = vand.u32 %v4793, 4294901760
    %7159 = vmatpush.msra.mxu0 %v7158
    %v7160 = vand.u32 %v4792, 4294901760
    %7161 = vmatpush.msra.mxu0 %v7160
    %v7162 = vand.u32 %v4791, 4294901760
    %7163 = vmatpush.msra.mxu0 %v7162
    %v7164 = vand.u32 %v4790, 4294901760
    %7165 = vmatpush.msra.mxu0 %v7164
    %v7166 = vand.u32 %v4789, 4294901760
    %7167 = vmatpush.msra.mxu0 %v7166
    %v7168 = vand.u32 %v4788, 4294901760
    %7169 = vmatpush.msra.mxu0 %v7168
    %v7170 = vand.u32 %v4787, 4294901760
    %7171 = vmatpush.msra.mxu0 %v7170
    %v7172 = vand.u32 %v4403, 4294901760
    %7173 = vmatmul.f32.gmra.mxu0 %v7172
    %v7174 = vpop.f32.mrf.mxu0
    %v7175 = vadd.f32 %v7078, %v7174
    %v7176 = vand.u32 %v4404, 4294901760
    %7177 = vmatmul.f32.gmra.mxu0 %v7176
    %v7178 = vpop.f32.mrf.mxu0
    %v7179 = vadd.f32 %v7082, %v7178
    %v7180 = vand.u32 %v4405, 4294901760
    %7181 = vmatmul.f32.gmra.mxu0 %v7180
    %v7182 = vpop.f32.mrf.mxu0
    %v7183 = vadd.f32 %v7086, %v7182
    %v7184 = vand.u32 %v4406, 4294901760
    %7185 = vmatmul.f32.gmra.mxu0 %v7184
    %v7186 = vpop.f32.mrf.mxu0
    %v7187 = vadd.f32 %v7090, %v7186
    %v7188 = vand.u32 %v4407, 4294901760
    %7189 = vmatmul.f32.gmra.mxu0 %v7188
    %v7190 = vpop.f32.mrf.mxu0
    %v7191 = vadd.f32 %v7094, %v7190
    %v7192 = vand.u32 %v4408, 4294901760
    %7193 = vmatmul.f32.gmra.mxu0 %v7192
    %v7194 = vpop.f32.mrf.mxu0
    %v7195 = vadd.f32 %v7098, %v7194
    %v7196 = vand.u32 %v4409, 4294901760
    %7197 = vmatmul.f32.gmra.mxu0 %v7196
    %v7198 = vpop.f32.mrf.mxu0
    %v7199 = vadd.f32 %v7102, %v7198
    %v7200 = vand.u32 %v4410, 4294901760
    %7201 = vmatmul.f32.gmra.mxu0 %v7200
    %v7202 = vpop.f32.mrf.mxu0
    %v7203 = vadd.f32 %v7106, %v7202
    %v7204 = vand.u32 %v4411, 4294901760
    %7205 = vmatmul.f32.gmra.mxu0 %v7204
    %v7206 = vpop.f32.mrf.mxu0
    %v7207 = vadd.f32 %v7110, %v7206
    %v7208 = vand.u32 %v4412, 4294901760
    %7209 = vmatmul.f32.gmra.mxu0 %v7208
    %v7210 = vpop.f32.mrf.mxu0
    %v7211 = vadd.f32 %v7114, %v7210
    %v7212 = vand.u32 %v4413, 4294901760
    %7213 = vmatmul.f32.gmra.mxu0 %v7212
    %v7214 = vpop.f32.mrf.mxu0
    %v7215 = vadd.f32 %v7118, %v7214
    %v7216 = vand.u32 %v4414, 4294901760
    %7217 = vmatmul.f32.gmra.mxu0 %v7216
    %v7218 = vpop.f32.mrf.mxu0
    %v7219 = vadd.f32 %v7122, %v7218
    %v7220 = vand.u32 %v4415, 4294901760
    %7221 = vmatmul.f32.gmra.mxu0 %v7220
    %v7222 = vpop.f32.mrf.mxu0
    %v7223 = vadd.f32 %v7126, %v7222
    %v7224 = vand.u32 %v4416, 4294901760
    %7225 = vmatmul.f32.gmra.mxu0 %v7224
    %v7226 = vpop.f32.mrf.mxu0
    %v7227 = vadd.f32 %v7130, %v7226
    %v7228 = vand.u32 %v4417, 4294901760
    %7229 = vmatmul.f32.gmra.mxu0 %v7228
    %v7230 = vpop.f32.mrf.mxu0
    %v7231 = vadd.f32 %v7134, %v7230
    %v7232 = vand.u32 %v4418, 4294901760
    %7233 = vmatmul.f32.gmra.mxu0 %v7232
    %v7234 = vpop.f32.mrf.mxu0
    %v7235 = vadd.f32 %v7138, %v7234
    %7236 = vdwg.mxu0
    %v7237 = vand.u32 %v4818, 4294901760
    %7238 = vmatpush.msra.mxu0 %v7237
    %v7239 = vand.u32 %v4817, 4294901760
    %7240 = vmatpush.msra.mxu0 %v7239
    %v7241 = vand.u32 %v4816, 4294901760
    %7242 = vmatpush.msra.mxu0 %v7241
    %v7243 = vand.u32 %v4815, 4294901760
    %7244 = vmatpush.msra.mxu0 %v7243
    %v7245 = vand.u32 %v4814, 4294901760
    %7246 = vmatpush.msra.mxu0 %v7245
    %v7247 = vand.u32 %v4813, 4294901760
    %7248 = vmatpush.msra.mxu0 %v7247
    %v7249 = vand.u32 %v4812, 4294901760
    %7250 = vmatpush.msra.mxu0 %v7249
    %v7251 = vand.u32 %v4811, 4294901760
    %7252 = vmatpush.msra.mxu0 %v7251
    %v7253 = vand.u32 %v4810, 4294901760
    %7254 = vmatpush.msra.mxu0 %v7253
    %v7255 = vand.u32 %v4809, 4294901760
    %7256 = vmatpush.msra.mxu0 %v7255
    %v7257 = vand.u32 %v4808, 4294901760
    %7258 = vmatpush.msra.mxu0 %v7257
    %v7259 = vand.u32 %v4807, 4294901760
    %7260 = vmatpush.msra.mxu0 %v7259
    %v7261 = vand.u32 %v4806, 4294901760
    %7262 = vmatpush.msra.mxu0 %v7261
    %v7263 = vand.u32 %v4805, 4294901760
    %7264 = vmatpush.msra.mxu0 %v7263
    %v7265 = vand.u32 %v4804, 4294901760
    %7266 = vmatpush.msra.mxu0 %v7265
    %v7267 = vand.u32 %v4803, 4294901760
    %7268 = vmatpush.msra.mxu0 %v7267
    %v7269 = vand.u32 %v4739, 4294901760
    %v7270 = vsub.f32 %v4739, %v7269
    %v7271 = vand.u32 %v7270, 4294901760
    %v7272 = vsub.f32 %v7270, %v7271
    %v7273 = vand.u32 %v7272, 4294901760
    %7274 = vmatmul.f32.gmra.mxu0 %v7273
    %v7275 = vpop.f32.mrf.mxu0
    %v7276 = vadd.f32 %v7175, %v7275
    %v7277 = vand.u32 %v4740, 4294901760
    %v7278 = vsub.f32 %v4740, %v7277
    %v7279 = vand.u32 %v7278, 4294901760
    %v7280 = vsub.f32 %v7278, %v7279
    %v7281 = vand.u32 %v7280, 4294901760
    %7282 = vmatmul.f32.gmra.mxu0 %v7281
    %v7283 = vpop.f32.mrf.mxu0
    %v7284 = vadd.f32 %v7179, %v7283
    %v7285 = vand.u32 %v4741, 4294901760
    %v7286 = vsub.f32 %v4741, %v7285
    %v7287 = vand.u32 %v7286, 4294901760
    %v7288 = vsub.f32 %v7286, %v7287
    %v7289 = vand.u32 %v7288, 4294901760
    %7290 = vmatmul.f32.gmra.mxu0 %v7289
    %v7291 = vpop.f32.mrf.mxu0
    %v7292 = vadd.f32 %v7183, %v7291
    %v7293 = vand.u32 %v4742, 4294901760
    %v7294 = vsub.f32 %v4742, %v7293
    %v7295 = vand.u32 %v7294, 4294901760
    %v7296 = vsub.f32 %v7294, %v7295
    %v7297 = vand.u32 %v7296, 4294901760
    %7298 = vmatmul.f32.gmra.mxu0 %v7297
    %v7299 = vpop.f32.mrf.mxu0
    %v7300 = vadd.f32 %v7187, %v7299
    %v7301 = vand.u32 %v4743, 4294901760
    %v7302 = vsub.f32 %v4743, %v7301
    %v7303 = vand.u32 %v7302, 4294901760
    %v7304 = vsub.f32 %v7302, %v7303
    %v7305 = vand.u32 %v7304, 4294901760
    %7306 = vmatmul.f32.gmra.mxu0 %v7305
    %v7307 = vpop.f32.mrf.mxu0
    %v7308 = vadd.f32 %v7191, %v7307
    %v7309 = vand.u32 %v4744, 4294901760
    %v7310 = vsub.f32 %v4744, %v7309
    %v7311 = vand.u32 %v7310, 4294901760
    %v7312 = vsub.f32 %v7310, %v7311
    %v7313 = vand.u32 %v7312, 4294901760
    %7314 = vmatmul.f32.gmra.mxu0 %v7313
    %v7315 = vpop.f32.mrf.mxu0
    %v7316 = vadd.f32 %v7195, %v7315
    %v7317 = vand.u32 %v4745, 4294901760
    %v7318 = vsub.f32 %v4745, %v7317
    %v7319 = vand.u32 %v7318, 4294901760
    %v7320 = vsub.f32 %v7318, %v7319
    %v7321 = vand.u32 %v7320, 4294901760
    %7322 = vmatmul.f32.gmra.mxu0 %v7321
    %v7323 = vpop.f32.mrf.mxu0
    %v7324 = vadd.f32 %v7199, %v7323
    %v7325 = vand.u32 %v4746, 4294901760
    %v7326 = vsub.f32 %v4746, %v7325
    %v7327 = vand.u32 %v7326, 4294901760
    %v7328 = vsub.f32 %v7326, %v7327
    %v7329 = vand.u32 %v7328, 4294901760
    %7330 = vmatmul.f32.gmra.mxu0 %v7329
    %v7331 = vpop.f32.mrf.mxu0
    %v7332 = vadd.f32 %v7203, %v7331
    %v7333 = vand.u32 %v4747, 4294901760
    %v7334 = vsub.f32 %v4747, %v7333
    %v7335 = vand.u32 %v7334, 4294901760
    %v7336 = vsub.f32 %v7334, %v7335
    %v7337 = vand.u32 %v7336, 4294901760
    %7338 = vmatmul.f32.gmra.mxu0 %v7337
    %v7339 = vpop.f32.mrf.mxu0
    %v7340 = vadd.f32 %v7207, %v7339
    %v7341 = vand.u32 %v4748, 4294901760
    %v7342 = vsub.f32 %v4748, %v7341
    %v7343 = vand.u32 %v7342, 4294901760
    %v7344 = vsub.f32 %v7342, %v7343
    %v7345 = vand.u32 %v7344, 4294901760
    %7346 = vmatmul.f32.gmra.mxu0 %v7345
    %v7347 = vpop.f32.mrf.mxu0
    %v7348 = vadd.f32 %v7211, %v7347
    %v7349 = vand.u32 %v4749, 4294901760
    %v7350 = vsub.f32 %v4749, %v7349
    %v7351 = vand.u32 %v7350, 4294901760
    %v7352 = vsub.f32 %v7350, %v7351
    %v7353 = vand.u32 %v7352, 4294901760
    %7354 = vmatmul.f32.gmra.mxu0 %v7353
    %v7355 = vpop.f32.mrf.mxu0
    %v7356 = vadd.f32 %v7215, %v7355
    %v7357 = vand.u32 %v4750, 4294901760
    %v7358 = vsub.f32 %v4750, %v7357
    %v7359 = vand.u32 %v7358, 4294901760
    %v7360 = vsub.f32 %v7358, %v7359
    %v7361 = vand.u32 %v7360, 4294901760
    %7362 = vmatmul.f32.gmra.mxu0 %v7361
    %v7363 = vpop.f32.mrf.mxu0
    %v7364 = vadd.f32 %v7219, %v7363
    %v7365 = vand.u32 %v4751, 4294901760
    %v7366 = vsub.f32 %v4751, %v7365
    %v7367 = vand.u32 %v7366, 4294901760
    %v7368 = vsub.f32 %v7366, %v7367
    %v7369 = vand.u32 %v7368, 4294901760
    %7370 = vmatmul.f32.gmra.mxu0 %v7369
    %v7371 = vpop.f32.mrf.mxu0
    %v7372 = vadd.f32 %v7223, %v7371
    %v7373 = vand.u32 %v4752, 4294901760
    %v7374 = vsub.f32 %v4752, %v7373
    %v7375 = vand.u32 %v7374, 4294901760
    %v7376 = vsub.f32 %v7374, %v7375
    %v7377 = vand.u32 %v7376, 4294901760
    %7378 = vmatmul.f32.gmra.mxu0 %v7377
    %v7379 = vpop.f32.mrf.mxu0
    %v7380 = vadd.f32 %v7227, %v7379
    %v7381 = vand.u32 %v4753, 4294901760
    %v7382 = vsub.f32 %v4753, %v7381
    %v7383 = vand.u32 %v7382, 4294901760
    %v7384 = vsub.f32 %v7382, %v7383
    %v7385 = vand.u32 %v7384, 4294901760
    %7386 = vmatmul.f32.gmra.mxu0 %v7385
    %v7387 = vpop.f32.mrf.mxu0
    %v7388 = vadd.f32 %v7231, %v7387
    %v7389 = vand.u32 %v4754, 4294901760
    %v7390 = vsub.f32 %v4754, %v7389
    %v7391 = vand.u32 %v7390, 4294901760
    %v7392 = vsub.f32 %v7390, %v7391
    %v7393 = vand.u32 %v7392, 4294901760
    %7394 = vmatmul.f32.gmra.mxu0 %v7393
    %v7395 = vpop.f32.mrf.mxu0
    %v7396 = vadd.f32 %v7235, %v7395
    %7397 = vdwg.mxu0
    %v7398 = vand.u32 %v4818, 4294901760
    %v7399 = vsub.f32 %v4818, %v7398
    %v7400 = vand.u32 %v7399, 4294901760
    %v7401 = vsub.f32 %v7399, %v7400
    %v7402 = vand.u32 %v7401, 4294901760
    %7403 = vmatpush.msra.mxu0 %v7402
    %v7404 = vand.u32 %v4817, 4294901760
    %v7405 = vsub.f32 %v4817, %v7404
    %v7406 = vand.u32 %v7405, 4294901760
    %v7407 = vsub.f32 %v7405, %v7406
    %v7408 = vand.u32 %v7407, 4294901760
    %7409 = vmatpush.msra.mxu0 %v7408
    %v7410 = vand.u32 %v4816, 4294901760
    %v7411 = vsub.f32 %v4816, %v7410
    %v7412 = vand.u32 %v7411, 4294901760
    %v7413 = vsub.f32 %v7411, %v7412
    %v7414 = vand.u32 %v7413, 4294901760
    %7415 = vmatpush.msra.mxu0 %v7414
    %v7416 = vand.u32 %v4815, 4294901760
    %v7417 = vsub.f32 %v4815, %v7416
    %v7418 = vand.u32 %v7417, 4294901760
    %v7419 = vsub.f32 %v7417, %v7418
    %v7420 = vand.u32 %v7419, 4294901760
    %7421 = vmatpush.msra.mxu0 %v7420
    %v7422 = vand.u32 %v4814, 4294901760
    %v7423 = vsub.f32 %v4814, %v7422
    %v7424 = vand.u32 %v7423, 4294901760
    %v7425 = vsub.f32 %v7423, %v7424
    %v7426 = vand.u32 %v7425, 4294901760
    %7427 = vmatpush.msra.mxu0 %v7426
    %v7428 = vand.u32 %v4813, 4294901760
    %v7429 = vsub.f32 %v4813, %v7428
    %v7430 = vand.u32 %v7429, 4294901760
    %v7431 = vsub.f32 %v7429, %v7430
    %v7432 = vand.u32 %v7431, 4294901760
    %7433 = vmatpush.msra.mxu0 %v7432
    %v7434 = vand.u32 %v4812, 4294901760
    %v7435 = vsub.f32 %v4812, %v7434
    %v7436 = vand.u32 %v7435, 4294901760
    %v7437 = vsub.f32 %v7435, %v7436
    %v7438 = vand.u32 %v7437, 4294901760
    %7439 = vmatpush.msra.mxu0 %v7438
    %v7440 = vand.u32 %v4811, 4294901760
    %v7441 = vsub.f32 %v4811, %v7440
    %v7442 = vand.u32 %v7441, 4294901760
    %v7443 = vsub.f32 %v7441, %v7442
    %v7444 = vand.u32 %v7443, 4294901760
    %7445 = vmatpush.msra.mxu0 %v7444
    %v7446 = vand.u32 %v4810, 4294901760
    %v7447 = vsub.f32 %v4810, %v7446
    %v7448 = vand.u32 %v7447, 4294901760
    %v7449 = vsub.f32 %v7447, %v7448
    %v7450 = vand.u32 %v7449, 4294901760
    %7451 = vmatpush.msra.mxu0 %v7450
    %v7452 = vand.u32 %v4809, 4294901760
    %v7453 = vsub.f32 %v4809, %v7452
    %v7454 = vand.u32 %v7453, 4294901760
    %v7455 = vsub.f32 %v7453, %v7454
    %v7456 = vand.u32 %v7455, 4294901760
    %7457 = vmatpush.msra.mxu0 %v7456
    %v7458 = vand.u32 %v4808, 4294901760
    %v7459 = vsub.f32 %v4808, %v7458
    %v7460 = vand.u32 %v7459, 4294901760
    %v7461 = vsub.f32 %v7459, %v7460
    %v7462 = vand.u32 %v7461, 4294901760
    %7463 = vmatpush.msra.mxu0 %v7462
    %v7464 = vand.u32 %v4807, 4294901760
    %v7465 = vsub.f32 %v4807, %v7464
    %v7466 = vand.u32 %v7465, 4294901760
    %v7467 = vsub.f32 %v7465, %v7466
    %v7468 = vand.u32 %v7467, 4294901760
    %7469 = vmatpush.msra.mxu0 %v7468
    %v7470 = vand.u32 %v4806, 4294901760
    %v7471 = vsub.f32 %v4806, %v7470
    %v7472 = vand.u32 %v7471, 4294901760
    %v7473 = vsub.f32 %v7471, %v7472
    %v7474 = vand.u32 %v7473, 4294901760
    %7475 = vmatpush.msra.mxu0 %v7474
    %v7476 = vand.u32 %v4805, 4294901760
    %v7477 = vsub.f32 %v4805, %v7476
    %v7478 = vand.u32 %v7477, 4294901760
    %v7479 = vsub.f32 %v7477, %v7478
    %v7480 = vand.u32 %v7479, 4294901760
    %7481 = vmatpush.msra.mxu0 %v7480
    %v7482 = vand.u32 %v4804, 4294901760
    %v7483 = vsub.f32 %v4804, %v7482
    %v7484 = vand.u32 %v7483, 4294901760
    %v7485 = vsub.f32 %v7483, %v7484
    %v7486 = vand.u32 %v7485, 4294901760
    %7487 = vmatpush.msra.mxu0 %v7486
    %v7488 = vand.u32 %v4803, 4294901760
    %v7489 = vsub.f32 %v4803, %v7488
    %v7490 = vand.u32 %v7489, 4294901760
    %v7491 = vsub.f32 %v7489, %v7490
    %v7492 = vand.u32 %v7491, 4294901760
    %7493 = vmatpush.msra.mxu0 %v7492
    %v7494 = vand.u32 %v4739, 4294901760
    %7495 = vmatmul.f32.gmra.mxu0 %v7494
    %v7496 = vpop.f32.mrf.mxu0
    %v7497 = vadd.f32 %v7276, %v7496
    %v7498 = vand.u32 %v4740, 4294901760
    %7499 = vmatmul.f32.gmra.mxu0 %v7498
    %v7500 = vpop.f32.mrf.mxu0
    %v7501 = vadd.f32 %v7284, %v7500
    %v7502 = vand.u32 %v4741, 4294901760
    %7503 = vmatmul.f32.gmra.mxu0 %v7502
    %v7504 = vpop.f32.mrf.mxu0
    %v7505 = vadd.f32 %v7292, %v7504
    %v7506 = vand.u32 %v4742, 4294901760
    %7507 = vmatmul.f32.gmra.mxu0 %v7506
    %v7508 = vpop.f32.mrf.mxu0
    %v7509 = vadd.f32 %v7300, %v7508
    %v7510 = vand.u32 %v4743, 4294901760
    %7511 = vmatmul.f32.gmra.mxu0 %v7510
    %v7512 = vpop.f32.mrf.mxu0
    %v7513 = vadd.f32 %v7308, %v7512
    %v7514 = vand.u32 %v4744, 4294901760
    %7515 = vmatmul.f32.gmra.mxu0 %v7514
    %v7516 = vpop.f32.mrf.mxu0
    %v7517 = vadd.f32 %v7316, %v7516
    %v7518 = vand.u32 %v4745, 4294901760
    %7519 = vmatmul.f32.gmra.mxu0 %v7518
    %v7520 = vpop.f32.mrf.mxu0
    %v7521 = vadd.f32 %v7324, %v7520
    %v7522 = vand.u32 %v4746, 4294901760
    %7523 = vmatmul.f32.gmra.mxu0 %v7522
    %v7524 = vpop.f32.mrf.mxu0
    %v7525 = vadd.f32 %v7332, %v7524
    %v7526 = vand.u32 %v4747, 4294901760
    %7527 = vmatmul.f32.gmra.mxu0 %v7526
    %v7528 = vpop.f32.mrf.mxu0
    %v7529 = vadd.f32 %v7340, %v7528
    %v7530 = vand.u32 %v4748, 4294901760
    %7531 = vmatmul.f32.gmra.mxu0 %v7530
    %v7532 = vpop.f32.mrf.mxu0
    %v7533 = vadd.f32 %v7348, %v7532
    %v7534 = vand.u32 %v4749, 4294901760
    %7535 = vmatmul.f32.gmra.mxu0 %v7534
    %v7536 = vpop.f32.mrf.mxu0
    %v7537 = vadd.f32 %v7356, %v7536
    %v7538 = vand.u32 %v4750, 4294901760
    %7539 = vmatmul.f32.gmra.mxu0 %v7538
    %v7540 = vpop.f32.mrf.mxu0
    %v7541 = vadd.f32 %v7364, %v7540
    %v7542 = vand.u32 %v4751, 4294901760
    %7543 = vmatmul.f32.gmra.mxu0 %v7542
    %v7544 = vpop.f32.mrf.mxu0
    %v7545 = vadd.f32 %v7372, %v7544
    %v7546 = vand.u32 %v4752, 4294901760
    %7547 = vmatmul.f32.gmra.mxu0 %v7546
    %v7548 = vpop.f32.mrf.mxu0
    %v7549 = vadd.f32 %v7380, %v7548
    %v7550 = vand.u32 %v4753, 4294901760
    %7551 = vmatmul.f32.gmra.mxu0 %v7550
    %v7552 = vpop.f32.mrf.mxu0
    %v7553 = vadd.f32 %v7388, %v7552
    %v7554 = vand.u32 %v4754, 4294901760
    %7555 = vmatmul.f32.gmra.mxu0 %v7554
    %v7556 = vpop.f32.mrf.mxu0
    %v7557 = vadd.f32 %v7396, %v7556
    %7558 = vdwg.mxu0
    %v7559 = vand.u32 %v4818, 4294901760
    %v7560 = vsub.f32 %v4818, %v7559
    %7561 = vmatpush.msra.mxu0 %v7560
    %v7562 = vand.u32 %v4817, 4294901760
    %v7563 = vsub.f32 %v4817, %v7562
    %7564 = vmatpush.msra.mxu0 %v7563
    %v7565 = vand.u32 %v4816, 4294901760
    %v7566 = vsub.f32 %v4816, %v7565
    %7567 = vmatpush.msra.mxu0 %v7566
    %v7568 = vand.u32 %v4815, 4294901760
    %v7569 = vsub.f32 %v4815, %v7568
    %7570 = vmatpush.msra.mxu0 %v7569
    %v7571 = vand.u32 %v4814, 4294901760
    %v7572 = vsub.f32 %v4814, %v7571
    %7573 = vmatpush.msra.mxu0 %v7572
    %v7574 = vand.u32 %v4813, 4294901760
    %v7575 = vsub.f32 %v4813, %v7574
    %7576 = vmatpush.msra.mxu0 %v7575
    %v7577 = vand.u32 %v4812, 4294901760
    %v7578 = vsub.f32 %v4812, %v7577
    %7579 = vmatpush.msra.mxu0 %v7578
    %v7580 = vand.u32 %v4811, 4294901760
    %v7581 = vsub.f32 %v4811, %v7580
    %7582 = vmatpush.msra.mxu0 %v7581
    %v7583 = vand.u32 %v4810, 4294901760
    %v7584 = vsub.f32 %v4810, %v7583
    %7585 = vmatpush.msra.mxu0 %v7584
    %v7586 = vand.u32 %v4809, 4294901760
    %v7587 = vsub.f32 %v4809, %v7586
    %7588 = vmatpush.msra.mxu0 %v7587
    %v7589 = vand.u32 %v4808, 4294901760
    %v7590 = vsub.f32 %v4808, %v7589
    %7591 = vmatpush.msra.mxu0 %v7590
    %v7592 = vand.u32 %v4807, 4294901760
    %v7593 = vsub.f32 %v4807, %v7592
    %7594 = vmatpush.msra.mxu0 %v7593
    %v7595 = vand.u32 %v4806, 4294901760
    %v7596 = vsub.f32 %v4806, %v7595
    %7597 = vmatpush.msra.mxu0 %v7596
    %v7598 = vand.u32 %v4805, 4294901760
    %v7599 = vsub.f32 %v4805, %v7598
    %7600 = vmatpush.msra.mxu0 %v7599
    %v7601 = vand.u32 %v4804, 4294901760
    %v7602 = vsub.f32 %v4804, %v7601
    %7603 = vmatpush.msra.mxu0 %v7602
    %v7604 = vand.u32 %v4803, 4294901760
    %v7605 = vsub.f32 %v4803, %v7604
    %7606 = vmatpush.msra.mxu0 %v7605
    %v7607 = vand.u32 %v4739, 4294901760
    %v7608 = vsub.f32 %v4739, %v7607
    %7609 = vmatmul.f32.gmra.mxu0 %v7608
    %v7610 = vpop.f32.mrf.mxu0
    %v7611 = vadd.f32 %v7497, %v7610
    %v7612 = vand.u32 %v4740, 4294901760
    %v7613 = vsub.f32 %v4740, %v7612
    %7614 = vmatmul.f32.gmra.mxu0 %v7613
    %v7615 = vpop.f32.mrf.mxu0
    %v7616 = vadd.f32 %v7501, %v7615
    %v7617 = vand.u32 %v4741, 4294901760
    %v7618 = vsub.f32 %v4741, %v7617
    %7619 = vmatmul.f32.gmra.mxu0 %v7618
    %v7620 = vpop.f32.mrf.mxu0
    %v7621 = vadd.f32 %v7505, %v7620
    %v7622 = vand.u32 %v4742, 4294901760
    %v7623 = vsub.f32 %v4742, %v7622
    %7624 = vmatmul.f32.gmra.mxu0 %v7623
    %v7625 = vpop.f32.mrf.mxu0
    %v7626 = vadd.f32 %v7509, %v7625
    %v7627 = vand.u32 %v4743, 4294901760
    %v7628 = vsub.f32 %v4743, %v7627
    %7629 = vmatmul.f32.gmra.mxu0 %v7628
    %v7630 = vpop.f32.mrf.mxu0
    %v7631 = vadd.f32 %v7513, %v7630
    %v7632 = vand.u32 %v4744, 4294901760
    %v7633 = vsub.f32 %v4744, %v7632
    %7634 = vmatmul.f32.gmra.mxu0 %v7633
    %v7635 = vpop.f32.mrf.mxu0
    %v7636 = vadd.f32 %v7517, %v7635
    %v7637 = vand.u32 %v4745, 4294901760
    %v7638 = vsub.f32 %v4745, %v7637
    %7639 = vmatmul.f32.gmra.mxu0 %v7638
    %v7640 = vpop.f32.mrf.mxu0
    %v7641 = vadd.f32 %v7521, %v7640
    %v7642 = vand.u32 %v4746, 4294901760
    %v7643 = vsub.f32 %v4746, %v7642
    %7644 = vmatmul.f32.gmra.mxu0 %v7643
    %v7645 = vpop.f32.mrf.mxu0
    %v7646 = vadd.f32 %v7525, %v7645
    %v7647 = vand.u32 %v4747, 4294901760
    %v7648 = vsub.f32 %v4747, %v7647
    %7649 = vmatmul.f32.gmra.mxu0 %v7648
    %v7650 = vpop.f32.mrf.mxu0
    %v7651 = vadd.f32 %v7529, %v7650
    %v7652 = vand.u32 %v4748, 4294901760
    %v7653 = vsub.f32 %v4748, %v7652
    %7654 = vmatmul.f32.gmra.mxu0 %v7653
    %v7655 = vpop.f32.mrf.mxu0
    %v7656 = vadd.f32 %v7533, %v7655
    %v7657 = vand.u32 %v4749, 4294901760
    %v7658 = vsub.f32 %v4749, %v7657
    %7659 = vmatmul.f32.gmra.mxu0 %v7658
    %v7660 = vpop.f32.mrf.mxu0
    %v7661 = vadd.f32 %v7537, %v7660
    %v7662 = vand.u32 %v4750, 4294901760
    %v7663 = vsub.f32 %v4750, %v7662
    %7664 = vmatmul.f32.gmra.mxu0 %v7663
    %v7665 = vpop.f32.mrf.mxu0
    %v7666 = vadd.f32 %v7541, %v7665
    %v7667 = vand.u32 %v4751, 4294901760
    %v7668 = vsub.f32 %v4751, %v7667
    %7669 = vmatmul.f32.gmra.mxu0 %v7668
    %v7670 = vpop.f32.mrf.mxu0
    %v7671 = vadd.f32 %v7545, %v7670
    %v7672 = vand.u32 %v4752, 4294901760
    %v7673 = vsub.f32 %v4752, %v7672
    %7674 = vmatmul.f32.gmra.mxu0 %v7673
    %v7675 = vpop.f32.mrf.mxu0
    %v7676 = vadd.f32 %v7549, %v7675
    %v7677 = vand.u32 %v4753, 4294901760
    %v7678 = vsub.f32 %v4753, %v7677
    %7679 = vmatmul.f32.gmra.mxu0 %v7678
    %v7680 = vpop.f32.mrf.mxu0
    %v7681 = vadd.f32 %v7553, %v7680
    %v7682 = vand.u32 %v4754, 4294901760
    %v7683 = vsub.f32 %v4754, %v7682
    %7684 = vmatmul.f32.gmra.mxu0 %v7683
    %v7685 = vpop.f32.mrf.mxu0
    %v7686 = vadd.f32 %v7557, %v7685
    %7687 = vdwg.mxu0
    %v7688 = vand.u32 %v4818, 4294901760
    %7689 = vmatpush.msra.mxu0 %v7688
    %v7690 = vand.u32 %v4817, 4294901760
    %7691 = vmatpush.msra.mxu0 %v7690
    %v7692 = vand.u32 %v4816, 4294901760
    %7693 = vmatpush.msra.mxu0 %v7692
    %v7694 = vand.u32 %v4815, 4294901760
    %7695 = vmatpush.msra.mxu0 %v7694
    %v7696 = vand.u32 %v4814, 4294901760
    %7697 = vmatpush.msra.mxu0 %v7696
    %v7698 = vand.u32 %v4813, 4294901760
    %7699 = vmatpush.msra.mxu0 %v7698
    %v7700 = vand.u32 %v4812, 4294901760
    %7701 = vmatpush.msra.mxu0 %v7700
    %v7702 = vand.u32 %v4811, 4294901760
    %7703 = vmatpush.msra.mxu0 %v7702
    %v7704 = vand.u32 %v4810, 4294901760
    %7705 = vmatpush.msra.mxu0 %v7704
    %v7706 = vand.u32 %v4809, 4294901760
    %7707 = vmatpush.msra.mxu0 %v7706
    %v7708 = vand.u32 %v4808, 4294901760
    %7709 = vmatpush.msra.mxu0 %v7708
    %v7710 = vand.u32 %v4807, 4294901760
    %7711 = vmatpush.msra.mxu0 %v7710
    %v7712 = vand.u32 %v4806, 4294901760
    %7713 = vmatpush.msra.mxu0 %v7712
    %v7714 = vand.u32 %v4805, 4294901760
    %7715 = vmatpush.msra.mxu0 %v7714
    %v7716 = vand.u32 %v4804, 4294901760
    %7717 = vmatpush.msra.mxu0 %v7716
    %v7718 = vand.u32 %v4803, 4294901760
    %7719 = vmatpush.msra.mxu0 %v7718
    %v7720 = vand.u32 %v4739, 4294901760
    %v7721 = vsub.f32 %v4739, %v7720
    %v7722 = vand.u32 %v7721, 4294901760
    %7723 = vmatmul.f32.gmra.mxu0 %v7722
    %v7724 = vpop.f32.mrf.mxu0
    %v7725 = vadd.f32 %v7611, %v7724
    %v7726 = vand.u32 %v4740, 4294901760
    %v7727 = vsub.f32 %v4740, %v7726
    %v7728 = vand.u32 %v7727, 4294901760
    %7729 = vmatmul.f32.gmra.mxu0 %v7728
    %v7730 = vpop.f32.mrf.mxu0
    %v7731 = vadd.f32 %v7616, %v7730
    %v7732 = vand.u32 %v4741, 4294901760
    %v7733 = vsub.f32 %v4741, %v7732
    %v7734 = vand.u32 %v7733, 4294901760
    %7735 = vmatmul.f32.gmra.mxu0 %v7734
    %v7736 = vpop.f32.mrf.mxu0
    %v7737 = vadd.f32 %v7621, %v7736
    %v7738 = vand.u32 %v4742, 4294901760
    %v7739 = vsub.f32 %v4742, %v7738
    %v7740 = vand.u32 %v7739, 4294901760
    %7741 = vmatmul.f32.gmra.mxu0 %v7740
    %v7742 = vpop.f32.mrf.mxu0
    %v7743 = vadd.f32 %v7626, %v7742
    %v7744 = vand.u32 %v4743, 4294901760
    %v7745 = vsub.f32 %v4743, %v7744
    %v7746 = vand.u32 %v7745, 4294901760
    %7747 = vmatmul.f32.gmra.mxu0 %v7746
    %v7748 = vpop.f32.mrf.mxu0
    %v7749 = vadd.f32 %v7631, %v7748
    %v7750 = vand.u32 %v4744, 4294901760
    %v7751 = vsub.f32 %v4744, %v7750
    %v7752 = vand.u32 %v7751, 4294901760
    %7753 = vmatmul.f32.gmra.mxu0 %v7752
    %v7754 = vpop.f32.mrf.mxu0
    %v7755 = vadd.f32 %v7636, %v7754
    %v7756 = vand.u32 %v4745, 4294901760
    %v7757 = vsub.f32 %v4745, %v7756
    %v7758 = vand.u32 %v7757, 4294901760
    %7759 = vmatmul.f32.gmra.mxu0 %v7758
    %v7760 = vpop.f32.mrf.mxu0
    %v7761 = vadd.f32 %v7641, %v7760
    %v7762 = vand.u32 %v4746, 4294901760
    %v7763 = vsub.f32 %v4746, %v7762
    %v7764 = vand.u32 %v7763, 4294901760
    %7765 = vmatmul.f32.gmra.mxu0 %v7764
    %v7766 = vpop.f32.mrf.mxu0
    %v7767 = vadd.f32 %v7646, %v7766
    %v7768 = vand.u32 %v4747, 4294901760
    %v7769 = vsub.f32 %v4747, %v7768
    %v7770 = vand.u32 %v7769, 4294901760
    %7771 = vmatmul.f32.gmra.mxu0 %v7770
    %v7772 = vpop.f32.mrf.mxu0
    %v7773 = vadd.f32 %v7651, %v7772
    %v7774 = vand.u32 %v4748, 4294901760
    %v7775 = vsub.f32 %v4748, %v7774
    %v7776 = vand.u32 %v7775, 4294901760
    %7777 = vmatmul.f32.gmra.mxu0 %v7776
    %v7778 = vpop.f32.mrf.mxu0
    %v7779 = vadd.f32 %v7656, %v7778
    %v7780 = vand.u32 %v4749, 4294901760
    %v7781 = vsub.f32 %v4749, %v7780
    %v7782 = vand.u32 %v7781, 4294901760
    %7783 = vmatmul.f32.gmra.mxu0 %v7782
    %v7784 = vpop.f32.mrf.mxu0
    %v7785 = vadd.f32 %v7661, %v7784
    %v7786 = vand.u32 %v4750, 4294901760
    %v7787 = vsub.f32 %v4750, %v7786
    %v7788 = vand.u32 %v7787, 4294901760
    %7789 = vmatmul.f32.gmra.mxu0 %v7788
    %v7790 = vpop.f32.mrf.mxu0
    %v7791 = vadd.f32 %v7666, %v7790
    %v7792 = vand.u32 %v4751, 4294901760
    %v7793 = vsub.f32 %v4751, %v7792
    %v7794 = vand.u32 %v7793, 4294901760
    %7795 = vmatmul.f32.gmra.mxu0 %v7794
    %v7796 = vpop.f32.mrf.mxu0
    %v7797 = vadd.f32 %v7671, %v7796
    %v7798 = vand.u32 %v4752, 4294901760
    %v7799 = vsub.f32 %v4752, %v7798
    %v7800 = vand.u32 %v7799, 4294901760
    %7801 = vmatmul.f32.gmra.mxu0 %v7800
    %v7802 = vpop.f32.mrf.mxu0
    %v7803 = vadd.f32 %v7676, %v7802
    %v7804 = vand.u32 %v4753, 4294901760
    %v7805 = vsub.f32 %v4753, %v7804
    %v7806 = vand.u32 %v7805, 4294901760
    %7807 = vmatmul.f32.gmra.mxu0 %v7806
    %v7808 = vpop.f32.mrf.mxu0
    %v7809 = vadd.f32 %v7681, %v7808
    %v7810 = vand.u32 %v4754, 4294901760
    %v7811 = vsub.f32 %v4754, %v7810
    %v7812 = vand.u32 %v7811, 4294901760
    %7813 = vmatmul.f32.gmra.mxu0 %v7812
    %v7814 = vpop.f32.mrf.mxu0
    %v7815 = vadd.f32 %v7686, %v7814
    %7816 = vdwg.mxu0
    %v7817 = vand.u32 %v4818, 4294901760
    %v7818 = vsub.f32 %v4818, %v7817
    %v7819 = vand.u32 %v7818, 4294901760
    %7820 = vmatpush.msra.mxu0 %v7819
    %v7821 = vand.u32 %v4817, 4294901760
    %v7822 = vsub.f32 %v4817, %v7821
    %v7823 = vand.u32 %v7822, 4294901760
    %7824 = vmatpush.msra.mxu0 %v7823
    %v7825 = vand.u32 %v4816, 4294901760
    %v7826 = vsub.f32 %v4816, %v7825
    %v7827 = vand.u32 %v7826, 4294901760
    %7828 = vmatpush.msra.mxu0 %v7827
    %v7829 = vand.u32 %v4815, 4294901760
    %v7830 = vsub.f32 %v4815, %v7829
    %v7831 = vand.u32 %v7830, 4294901760
    %7832 = vmatpush.msra.mxu0 %v7831
    %v7833 = vand.u32 %v4814, 4294901760
    %v7834 = vsub.f32 %v4814, %v7833
    %v7835 = vand.u32 %v7834, 4294901760
    %7836 = vmatpush.msra.mxu0 %v7835
    %v7837 = vand.u32 %v4813, 4294901760
    %v7838 = vsub.f32 %v4813, %v7837
    %v7839 = vand.u32 %v7838, 4294901760
    %7840 = vmatpush.msra.mxu0 %v7839
    %v7841 = vand.u32 %v4812, 4294901760
    %v7842 = vsub.f32 %v4812, %v7841
    %v7843 = vand.u32 %v7842, 4294901760
    %7844 = vmatpush.msra.mxu0 %v7843
    %v7845 = vand.u32 %v4811, 4294901760
    %v7846 = vsub.f32 %v4811, %v7845
    %v7847 = vand.u32 %v7846, 4294901760
    %7848 = vmatpush.msra.mxu0 %v7847
    %v7849 = vand.u32 %v4810, 4294901760
    %v7850 = vsub.f32 %v4810, %v7849
    %v7851 = vand.u32 %v7850, 4294901760
    %7852 = vmatpush.msra.mxu0 %v7851
    %v7853 = vand.u32 %v4809, 4294901760
    %v7854 = vsub.f32 %v4809, %v7853
    %v7855 = vand.u32 %v7854, 4294901760
    %7856 = vmatpush.msra.mxu0 %v7855
    %v7857 = vand.u32 %v4808, 4294901760
    %v7858 = vsub.f32 %v4808, %v7857
    %v7859 = vand.u32 %v7858, 4294901760
    %7860 = vmatpush.msra.mxu0 %v7859
    %v7861 = vand.u32 %v4807, 4294901760
    %v7862 = vsub.f32 %v4807, %v7861
    %v7863 = vand.u32 %v7862, 4294901760
    %7864 = vmatpush.msra.mxu0 %v7863
    %v7865 = vand.u32 %v4806, 4294901760
    %v7866 = vsub.f32 %v4806, %v7865
    %v7867 = vand.u32 %v7866, 4294901760
    %7868 = vmatpush.msra.mxu0 %v7867
    %v7869 = vand.u32 %v4805, 4294901760
    %v7870 = vsub.f32 %v4805, %v7869
    %v7871 = vand.u32 %v7870, 4294901760
    %7872 = vmatpush.msra.mxu0 %v7871
    %v7873 = vand.u32 %v4804, 4294901760
    %v7874 = vsub.f32 %v4804, %v7873
    %v7875 = vand.u32 %v7874, 4294901760
    %7876 = vmatpush.msra.mxu0 %v7875
    %v7877 = vand.u32 %v4803, 4294901760
    %v7878 = vsub.f32 %v4803, %v7877
    %v7879 = vand.u32 %v7878, 4294901760
    %7880 = vmatpush.msra.mxu0 %v7879
    %v7881 = vand.u32 %v4739, 4294901760
    %7882 = vmatmul.f32.gmra.mxu0 %v7881
    %v7883 = vpop.f32.mrf.mxu0
    %v7884 = vadd.f32 %v7725, %v7883
    %v7885 = vand.u32 %v4740, 4294901760
    %7886 = vmatmul.f32.gmra.mxu0 %v7885
    %v7887 = vpop.f32.mrf.mxu0
    %v7888 = vadd.f32 %v7731, %v7887
    %v7889 = vand.u32 %v4741, 4294901760
    %7890 = vmatmul.f32.gmra.mxu0 %v7889
    %v7891 = vpop.f32.mrf.mxu0
    %v7892 = vadd.f32 %v7737, %v7891
    %v7893 = vand.u32 %v4742, 4294901760
    %7894 = vmatmul.f32.gmra.mxu0 %v7893
    %v7895 = vpop.f32.mrf.mxu0
    %v7896 = vadd.f32 %v7743, %v7895
    %v7897 = vand.u32 %v4743, 4294901760
    %7898 = vmatmul.f32.gmra.mxu0 %v7897
    %v7899 = vpop.f32.mrf.mxu0
    %v7900 = vadd.f32 %v7749, %v7899
    %v7901 = vand.u32 %v4744, 4294901760
    %7902 = vmatmul.f32.gmra.mxu0 %v7901
    %v7903 = vpop.f32.mrf.mxu0
    %v7904 = vadd.f32 %v7755, %v7903
    %v7905 = vand.u32 %v4745, 4294901760
    %7906 = vmatmul.f32.gmra.mxu0 %v7905
    %v7907 = vpop.f32.mrf.mxu0
    %v7908 = vadd.f32 %v7761, %v7907
    %v7909 = vand.u32 %v4746, 4294901760
    %7910 = vmatmul.f32.gmra.mxu0 %v7909
    %v7911 = vpop.f32.mrf.mxu0
    %v7912 = vadd.f32 %v7767, %v7911
    %v7913 = vand.u32 %v4747, 4294901760
    %7914 = vmatmul.f32.gmra.mxu0 %v7913
    %v7915 = vpop.f32.mrf.mxu0
    %v7916 = vadd.f32 %v7773, %v7915
    %v7917 = vand.u32 %v4748, 4294901760
    %7918 = vmatmul.f32.gmra.mxu0 %v7917
    %v7919 = vpop.f32.mrf.mxu0
    %v7920 = vadd.f32 %v7779, %v7919
    %v7921 = vand.u32 %v4749, 4294901760
    %7922 = vmatmul.f32.gmra.mxu0 %v7921
    %v7923 = vpop.f32.mrf.mxu0
    %v7924 = vadd.f32 %v7785, %v7923
    %v7925 = vand.u32 %v4750, 4294901760
    %7926 = vmatmul.f32.gmra.mxu0 %v7925
    %v7927 = vpop.f32.mrf.mxu0
    %v7928 = vadd.f32 %v7791, %v7927
    %v7929 = vand.u32 %v4751, 4294901760
    %7930 = vmatmul.f32.gmra.mxu0 %v7929
    %v7931 = vpop.f32.mrf.mxu0
    %v7932 = vadd.f32 %v7797, %v7931
    %v7933 = vand.u32 %v4752, 4294901760
    %7934 = vmatmul.f32.gmra.mxu0 %v7933
    %v7935 = vpop.f32.mrf.mxu0
    %v7936 = vadd.f32 %v7803, %v7935
    %v7937 = vand.u32 %v4753, 4294901760
    %7938 = vmatmul.f32.gmra.mxu0 %v7937
    %v7939 = vpop.f32.mrf.mxu0
    %v7940 = vadd.f32 %v7809, %v7939
    %v7941 = vand.u32 %v4754, 4294901760
    %7942 = vmatmul.f32.gmra.mxu0 %v7941
    %v7943 = vpop.f32.mrf.mxu0
    %v7944 = vadd.f32 %v7815, %v7943
    %7945 = vdwg.mxu0
    %v7946 = vand.u32 %v4818, 4294901760
    %7947 = vmatpush.msra.mxu0 %v7946
    %v7948 = vand.u32 %v4817, 4294901760
    %7949 = vmatpush.msra.mxu0 %v7948
    %v7950 = vand.u32 %v4816, 4294901760
    %7951 = vmatpush.msra.mxu0 %v7950
    %v7952 = vand.u32 %v4815, 4294901760
    %7953 = vmatpush.msra.mxu0 %v7952
    %v7954 = vand.u32 %v4814, 4294901760
    %7955 = vmatpush.msra.mxu0 %v7954
    %v7956 = vand.u32 %v4813, 4294901760
    %7957 = vmatpush.msra.mxu0 %v7956
    %v7958 = vand.u32 %v4812, 4294901760
    %7959 = vmatpush.msra.mxu0 %v7958
    %v7960 = vand.u32 %v4811, 4294901760
    %7961 = vmatpush.msra.mxu0 %v7960
    %v7962 = vand.u32 %v4810, 4294901760
    %7963 = vmatpush.msra.mxu0 %v7962
    %v7964 = vand.u32 %v4809, 4294901760
    %7965 = vmatpush.msra.mxu0 %v7964
    %v7966 = vand.u32 %v4808, 4294901760
    %7967 = vmatpush.msra.mxu0 %v7966
    %v7968 = vand.u32 %v4807, 4294901760
    %7969 = vmatpush.msra.mxu0 %v7968
    %v7970 = vand.u32 %v4806, 4294901760
    %7971 = vmatpush.msra.mxu0 %v7970
    %v7972 = vand.u32 %v4805, 4294901760
    %7973 = vmatpush.msra.mxu0 %v7972
    %v7974 = vand.u32 %v4804, 4294901760
    %7975 = vmatpush.msra.mxu0 %v7974
    %v7976 = vand.u32 %v4803, 4294901760
    %7977 = vmatpush.msra.mxu0 %v7976
    %v7978 = vand.u32 %v4739, 4294901760
    %7979 = vmatmul.f32.gmra.mxu0 %v7978
    %v7980 = vpop.f32.mrf.mxu0
    %v7981 = vadd.f32 %v7884, %v7980
    %v7982 = vand.u32 %v4740, 4294901760
    %7983 = vmatmul.f32.gmra.mxu0 %v7982
    %v7984 = vpop.f32.mrf.mxu0
    %v7985 = vadd.f32 %v7888, %v7984
    %v7986 = vand.u32 %v4741, 4294901760
    %7987 = vmatmul.f32.gmra.mxu0 %v7986
    %v7988 = vpop.f32.mrf.mxu0
    %v7989 = vadd.f32 %v7892, %v7988
    %v7990 = vand.u32 %v4742, 4294901760
    %7991 = vmatmul.f32.gmra.mxu0 %v7990
    %v7992 = vpop.f32.mrf.mxu0
    %v7993 = vadd.f32 %v7896, %v7992
    %v7994 = vand.u32 %v4743, 4294901760
    %7995 = vmatmul.f32.gmra.mxu0 %v7994
    %v7996 = vpop.f32.mrf.mxu0
    %v7997 = vadd.f32 %v7900, %v7996
    %v7998 = vand.u32 %v4744, 4294901760
    %7999 = vmatmul.f32.gmra.mxu0 %v7998
    %v8000 = vpop.f32.mrf.mxu0
    %v8001 = vadd.f32 %v7904, %v8000
    %v8002 = vand.u32 %v4745, 4294901760
    %8003 = vmatmul.f32.gmra.mxu0 %v8002
    %v8004 = vpop.f32.mrf.mxu0
    %v8005 = vadd.f32 %v7908, %v8004
    %v8006 = vand.u32 %v4746, 4294901760
    %8007 = vmatmul.f32.gmra.mxu0 %v8006
    %v8008 = vpop.f32.mrf.mxu0
    %v8009 = vadd.f32 %v7912, %v8008
    %v8010 = vand.u32 %v4747, 4294901760
    %8011 = vmatmul.f32.gmra.mxu0 %v8010
    %v8012 = vpop.f32.mrf.mxu0
    %v8013 = vadd.f32 %v7916, %v8012
    %v8014 = vand.u32 %v4748, 4294901760
    %8015 = vmatmul.f32.gmra.mxu0 %v8014
    %v8016 = vpop.f32.mrf.mxu0
    %v8017 = vadd.f32 %v7920, %v8016
    %v8018 = vand.u32 %v4749, 4294901760
    %8019 = vmatmul.f32.gmra.mxu0 %v8018
    %v8020 = vpop.f32.mrf.mxu0
    %v8021 = vadd.f32 %v7924, %v8020
    %v8022 = vand.u32 %v4750, 4294901760
    %8023 = vmatmul.f32.gmra.mxu0 %v8022
    %v8024 = vpop.f32.mrf.mxu0
    %v8025 = vadd.f32 %v7928, %v8024
    %v8026 = vand.u32 %v4751, 4294901760
    %8027 = vmatmul.f32.gmra.mxu0 %v8026
    %v8028 = vpop.f32.mrf.mxu0
    %v8029 = vadd.f32 %v7932, %v8028
    %v8030 = vand.u32 %v4752, 4294901760
    %8031 = vmatmul.f32.gmra.mxu0 %v8030
    %v8032 = vpop.f32.mrf.mxu0
    %v8033 = vadd.f32 %v7936, %v8032
    %v8034 = vand.u32 %v4753, 4294901760
    %8035 = vmatmul.f32.gmra.mxu0 %v8034
    %v8036 = vpop.f32.mrf.mxu0
    %v8037 = vadd.f32 %v7940, %v8036
    %v8038 = vand.u32 %v4754, 4294901760
    %8039 = vmatmul.f32.gmra.mxu0 %v8038
    %v8040 = vpop.f32.mrf.mxu0
    %v8041 = vadd.f32 %v7944, %v8040
    %8042 = vdwg.mxu0
    %8043 = vst [vmem:[#allocation12] sm:$0xff] %v7981
    %8044 = vst [vmem:[#allocation12 + $0x8] sm:$0xff] %v7985
    %8045 = vst [vmem:[#allocation12 + $0x10] sm:$0xff] %v7989
    %8046 = vst [vmem:[#allocation12 + $0x18] sm:$0xff] %v7993
    %8047 = vst [vmem:[#allocation12 + $0x20] sm:$0xff] %v7997
    %8048 = vst [vmem:[#allocation12 + $0x28] sm:$0xff] %v8001
    %8049 = vst [vmem:[#allocation12 + $0x30] sm:$0xff] %v8005
    %8050 = vst [vmem:[#allocation12 + $0x38] sm:$0xff] %v8009
    %8051 = vst [vmem:[#allocation12 + $0x40] sm:$0xff] %v8013
    %8052 = vst [vmem:[#allocation12 + $0x48] sm:$0xff] %v8017
    %8053 = vst [vmem:[#allocation12 + $0x50] sm:$0xff] %v8021
    %8054 = vst [vmem:[#allocation12 + $0x58] sm:$0xff] %v8025
    %8055 = vst [vmem:[#allocation12 + $0x60] sm:$0xff] %v8029
    %8056 = vst [vmem:[#allocation12 + $0x68] sm:$0xff] %v8033
    %8057 = vst [vmem:[#allocation12 + $0x70] sm:$0xff] %v8037
    %8058 = vst [vmem:[#allocation12 + $0x78] sm:$0xff] %v8041
    %v8059 = vpack.c.bf16 %v4067, %v3731
    %v8060 = vpack.c.bf16 %v4739, %v4403
    %v8061 = vpack.c.bf16 %v4068, %v3732
    %v8062 = vpack.c.bf16 %v4740, %v4404
    %v8063 = vpack.c.bf16 %v4069, %v3733
    %v8064 = vpack.c.bf16 %v4741, %v4405
    %v8065 = vpack.c.bf16 %v4070, %v3734
    %v8066 = vpack.c.bf16 %v4742, %v4406
    %v8067 = vpack.c.bf16 %v4071, %v3735
    %v8068 = vpack.c.bf16 %v4743, %v4407
    %v8069 = vpack.c.bf16 %v4072, %v3736
    %v8070 = vpack.c.bf16 %v4744, %v4408
    %v8071 = vpack.c.bf16 %v4073, %v3737
    %v8072 = vpack.c.bf16 %v4745, %v4409
    %v8073 = vpack.c.bf16 %v4074, %v3738
    %v8074 = vpack.c.bf16 %v4746, %v4410
    %v8075 = vpack.c.bf16 %v4075, %v3739
    %v8076 = vpack.c.bf16 %v4747, %v4411
    %v8077 = vpack.c.bf16 %v4076, %v3740
    %v8078 = vpack.c.bf16 %v4748, %v4412
    %v8079 = vpack.c.bf16 %v4077, %v3741
    %v8080 = vpack.c.bf16 %v4749, %v4413
    %v8081 = vpack.c.bf16 %v4078, %v3742
    %v8082 = vpack.c.bf16 %v4750, %v4414
    %v8083 = vpack.c.bf16 %v4079, %v3743
    %v8084 = vpack.c.bf16 %v4751, %v4415
    %v8085 = vpack.c.bf16 %v4080, %v3744
    %v8086 = vpack.c.bf16 %v4752, %v4416
    %v8087 = vpack.c.bf16 %v4081, %v3745
    %v8088 = vpack.c.bf16 %v4753, %v4417
    %v8089 = vpack.c.bf16 %v4082, %v3746
    %v8090 = vpack.c.bf16 %v4754, %v4418
    %8091 = vst [vmem:[#allocation13] sm:$0xff] %v8059
    %8092 = vst [vmem:[#allocation13 + $0x8] sm:$0xff] %v8060
    %8093 = vst [vmem:[#allocation13 + $0x10] sm:$0xff] %v8061
    %8094 = vst [vmem:[#allocation13 + $0x18] sm:$0xff] %v8062
    %8095 = vst [vmem:[#allocation13 + $0x20] sm:$0xff] %v8063
    %8096 = vst [vmem:[#allocation13 + $0x28] sm:$0xff] %v8064
    %8097 = vst [vmem:[#allocation13 + $0x30] sm:$0xff] %v8065
    %8098 = vst [vmem:[#allocation13 + $0x38] sm:$0xff] %v8066
    %8099 = vst [vmem:[#allocation13 + $0x40] sm:$0xff] %v8067
    %8100 = vst [vmem:[#allocation13 + $0x48] sm:$0xff] %v8068
    %8101 = vst [vmem:[#allocation13 + $0x50] sm:$0xff] %v8069
    %8102 = vst [vmem:[#allocation13 + $0x58] sm:$0xff] %v8070
    %8103 = vst [vmem:[#allocation13 + $0x60] sm:$0xff] %v8071
    %8104 = vst [vmem:[#allocation13 + $0x68] sm:$0xff] %v8072
    %8105 = vst [vmem:[#allocation13 + $0x70] sm:$0xff] %v8073
    %8106 = vst [vmem:[#allocation13 + $0x78] sm:$0xff] %v8074
    %8107 = vst [vmem:[#allocation13 + $0x80] sm:$0xff] %v8075
    %8108 = vst [vmem:[#allocation13 + $0x88] sm:$0xff] %v8076
    %8109 = vst [vmem:[#allocation13 + $0x90] sm:$0xff] %v8077
    %8110 = vst [vmem:[#allocation13 + $0x98] sm:$0xff] %v8078
    %8111 = vst [vmem:[#allocation13 + $0xa0] sm:$0xff] %v8079
    %8112 = vst [vmem:[#allocation13 + $0xa8] sm:$0xff] %v8080
    %8113 = vst [vmem:[#allocation13 + $0xb0] sm:$0xff] %v8081
    %8114 = vst [vmem:[#allocation13 + $0xb8] sm:$0xff] %v8082
    %8115 = vst [vmem:[#allocation13 + $0xc0] sm:$0xff] %v8083
    %8116 = vst [vmem:[#allocation13 + $0xc8] sm:$0xff] %v8084
    %8117 = vst [vmem:[#allocation13 + $0xd0] sm:$0xff] %v8085
    %8118 = vst [vmem:[#allocation13 + $0xd8] sm:$0xff] %v8086
    %8119 = vst [vmem:[#allocation13 + $0xe0] sm:$0xff] %v8087
    %8120 = vst [vmem:[#allocation13 + $0xe8] sm:$0xff] %v8088
    %8121 = vst [vmem:[#allocation13 + $0xf0] sm:$0xff] %v8089
    %8122 = vst [vmem:[#allocation13 + $0xf8] sm:$0xff] %v8090
    %v8123 = vsub.f32 %v7981, %v95
    %v8124 = vsub.f32 %v7985, %v96
    %v8125 = vsub.f32 %v7989, %v97
    %v8126 = vsub.f32 %v7993, %v98
    %v8127 = vsub.f32 %v7997, %v99
    %v8128 = vsub.f32 %v8001, %v100
    %v8129 = vsub.f32 %v8005, %v101
    %v8130 = vsub.f32 %v8009, %v102
    %v8131 = vsub.f32 %v8013, %v103
    %v8132 = vsub.f32 %v8017, %v104
    %v8133 = vsub.f32 %v8021, %v105
    %v8134 = vsub.f32 %v8025, %v106
    %v8135 = vsub.f32 %v8029, %v107
    %v8136 = vsub.f32 %v8033, %v108
    %v8137 = vsub.f32 %v8037, %v109
    %v8138 = vsub.f32 %v8041, %v110
    %v8139 = vmul.f32 %v8123, %v8123
    %v8140 = vmul.f32 %v8124, %v8124
    %v8141 = vmul.f32 %v8125, %v8125
    %v8142 = vmul.f32 %v8126, %v8126
    %v8143 = vmul.f32 %v8127, %v8127
    %v8144 = vmul.f32 %v8128, %v8128
    %v8145 = vmul.f32 %v8129, %v8129
    %v8146 = vmul.f32 %v8130, %v8130
    %v8147 = vmul.f32 %v8131, %v8131
    %v8148 = vmul.f32 %v8132, %v8132
    %v8149 = vmul.f32 %v8133, %v8133
    %v8150 = vmul.f32 %v8134, %v8134
    %v8151 = vmul.f32 %v8135, %v8135
    %v8152 = vmul.f32 %v8136, %v8136
    %v8153 = vmul.f32 %v8137, %v8137
    %v8154 = vmul.f32 %v8138, %v8138
    %v8155 = vld [vmem:[#allocation2] sm:$0x1]
    %v8156 = vadd.f32 %v8139, %v8140
    %v8157 = vadd.f32 %v8156, %v8141
    %v8158 = vadd.f32 %v8157, %v8142
    %v8159 = vadd.f32 %v8158, %v8143
    %v8160 = vadd.f32 %v8159, %v8144
    %v8161 = vadd.f32 %v8160, %v8145
    %v8162 = vadd.f32 %v8161, %v8146
    %v8163 = vadd.f32 %v8162, %v8147
    %v8164 = vadd.f32 %v8163, %v8148
    %v8165 = vadd.f32 %v8164, %v8149
    %v8166 = vadd.f32 %v8165, %v8150
    %v8167 = vadd.f32 %v8166, %v8151
    %v8168 = vadd.f32 %v8167, %v8152
    %v8169 = vadd.f32 %v8168, %v8153
    %v8170 = vadd.f32 %v8169, %v8154
    %v8171 = vrot.slane %v8170, 4
    %v8172 = vadd.f32 %v8170, %v8171
    %v8173 = vrot.slane %v8172, 2
    %v8174 = vadd.f32 %v8172, %v8173
    %v8175 = vrot.slane %v8174, 1
    %v8176 = vadd.f32 %v8174, %v8175
    %v8177 = vadd.f32 %v8155, %v8176
    %8178 = vst [vmem:[#allocation2] sm:$0x1] %v8177
    %v8179 = vld [vmem:[#allocation3] sm:$0xf]
    %v8180 = vadd.f32 %v3731, %v3732
    %v8181 = vadd.f32 %v8180, %v3733
    %v8182 = vadd.f32 %v8181, %v3734
    %v8183 = vadd.f32 %v8182, %v3735
    %v8184 = vadd.f32 %v8183, %v3736
    %v8185 = vadd.f32 %v8184, %v3737
    %v8186 = vadd.f32 %v8185, %v3738
    %v8187 = vadd.f32 %v8186, %v3739
    %v8188 = vadd.f32 %v8187, %v3740
    %v8189 = vadd.f32 %v8188, %v3741
    %v8190 = vadd.f32 %v8189, %v3742
    %v8191 = vadd.f32 %v8190, %v3743
    %v8192 = vadd.f32 %v8191, %v3744
    %v8193 = vadd.f32 %v8192, %v3745
    %v8194 = vadd.f32 %v8193, %v3746
    %v8195 = vrot.slane %v8194, 4
    %v8196 = vadd.f32 %v8194, %v8195
    %v8197 = vrot.slane %v8196, 2
    %v8198 = vadd.f32 %v8196, %v8197
    %v8199 = vrot.slane %v8198, 1
    %v8200 = vadd.f32 %v8198, %v8199
    %v8201 = vadd.f32 %v4067, %v4068
    %v8202 = vadd.f32 %v8201, %v4069
    %v8203 = vadd.f32 %v8202, %v4070
    %v8204 = vadd.f32 %v8203, %v4071
    %v8205 = vadd.f32 %v8204, %v4072
    %v8206 = vadd.f32 %v8205, %v4073
    %v8207 = vadd.f32 %v8206, %v4074
    %v8208 = vadd.f32 %v8207, %v4075
    %v8209 = vadd.f32 %v8208, %v4076
    %v8210 = vadd.f32 %v8209, %v4077
    %v8211 = vadd.f32 %v8210, %v4078
    %v8212 = vadd.f32 %v8211, %v4079
    %v8213 = vadd.f32 %v8212, %v4080
    %v8214 = vadd.f32 %v8213, %v4081
    %v8215 = vadd.f32 %v8214, %v4082
    %v8216 = vrot.slane %v8215, 4
    %v8217 = vadd.f32 %v8215, %v8216
    %v8218 = vrot.slane %v8217, 2
    %v8219 = vadd.f32 %v8217, %v8218
    %v8220 = vrot.slane %v8219, 1
    %v8221 = vadd.f32 %v8219, %v8220
    %v8222 = vadd.f32 %v4403, %v4404
    %v8223 = vadd.f32 %v8222, %v4405
    %v8224 = vadd.f32 %v8223, %v4406
    %v8225 = vadd.f32 %v8224, %v4407
    %v8226 = vadd.f32 %v8225, %v4408
    %v8227 = vadd.f32 %v8226, %v4409
    %v8228 = vadd.f32 %v8227, %v4410
    %v8229 = vadd.f32 %v8228, %v4411
    %v8230 = vadd.f32 %v8229, %v4412
    %v8231 = vadd.f32 %v8230, %v4413
    %v8232 = vadd.f32 %v8231, %v4414
    %v8233 = vadd.f32 %v8232, %v4415
    %v8234 = vadd.f32 %v8233, %v4416
    %v8235 = vadd.f32 %v8234, %v4417
    %v8236 = vadd.f32 %v8235, %v4418
    %v8237 = vrot.slane %v8236, 4
    %v8238 = vadd.f32 %v8236, %v8237
    %v8239 = vrot.slane %v8238, 2
    %v8240 = vadd.f32 %v8238, %v8239
    %v8241 = vrot.slane %v8240, 1
    %v8242 = vadd.f32 %v8240, %v8241
    %v8243 = vadd.f32 %v4739, %v4740
    %v8244 = vadd.f32 %v8243, %v4741
    %v8245 = vadd.f32 %v8244, %v4742
    %v8246 = vadd.f32 %v8245, %v4743
    %v8247 = vadd.f32 %v8246, %v4744
    %v8248 = vadd.f32 %v8247, %v4745
    %v8249 = vadd.f32 %v8248, %v4746
    %v8250 = vadd.f32 %v8249, %v4747
    %v8251 = vadd.f32 %v8250, %v4748
    %v8252 = vadd.f32 %v8251, %v4749
    %v8253 = vadd.f32 %v8252, %v4750
    %v8254 = vadd.f32 %v8253, %v4751
    %v8255 = vadd.f32 %v8254, %v4752
    %v8256 = vadd.f32 %v8255, %v4753
    %v8257 = vadd.f32 %v8256, %v4754
    %v8258 = vrot.slane %v8257, 4
    %v8259 = vadd.f32 %v8257, %v8258
    %v8260 = vrot.slane %v8259, 2
    %v8261 = vadd.f32 %v8259, %v8260
    %v8262 = vrot.slane %v8261, 1
    %v8263 = vadd.f32 %v8261, %v8262
    %v8268 = vrot.slane %v8221, 7
    %v8269 = vrot.slane %v8242, 6
    %v8270 = vrot.slane %v8263, 5
    %vm8271 = vcmask 1040384
    %v8272 = vsel %vm8271, %v8200, %v8268
    %vm8273 = vcmask 1042434
    %v8274 = vsel %vm8273, %v8269, %v8270
    %vm8275 = vcmask 1041408
    %v8276 = vsel %vm8275, %v8272, %v8274
    %v8278 = vadd.f32 %v8179, %v8276
    %v8279 = vlaneseq
    %vm8280 = vcmp.ge.s32.totalorder %v8279, 0
    %vm8281 = vcmp.lt.s32.totalorder %v8279, 512
    %vm8282 = vmand %vm8280, %vm8281
    %8283 = vst.msk [vmem:[#allocation3] sm:$0xf] %vm8282, %v8278
    // Predicated region
    $region38: #{tpu_custom_call.1} parent=1 // pred_check
      %p8284 = pneg %p85
    $region39: #{tpu_custom_call.1} parent=1 // pred_check_branch
      %8286 = sbr.rel (%p8284) target = $region41
    $region40: #{tpu_custom_call.1} parent=1 // pred_region
      %v8287 = vld [vmem:[#allocation2] sm:$0x1]
      %v8288 = vsel %vm8271, %v8287, 0.0
      %8289 = vadd.xlane.f32.xlu0 %v8288
      %v8290 = vpop.xlane.xlu0 %8289
      %v8291 = vmul.f32 %v8290, 1.5258789e-05
      %vm8292 = vcmask 0
      %8293 = vst.msk [vmem:[#allocation15] sm:$0x1] %vm8292, %v8291
      %v8294 = vld [vmem:[#allocation3] sm:$0xf]
      %v8296 = vrot.slane %v8294, 1
      %v8298 = vadd.f32 %v8294, %v8296
      %v8299 = vrot.slane %v8294, 2
      %v8301 = vadd.f32 %v8298, %v8299
      %v8302 = vrot.slane %v8294, 3
      %v8304 = vadd.f32 %v8301, %v8302
      %v8305 = vmul.f32 %v8304, 0.001953125
      %v8306 = vadd.f32 %v8305, 1e-10
      %v8307 = vlog2.pop %v8306
      %v8308 = vmul.f32 %v8307, 0.6931472
      %v8309 = vmul.f32 %v8305, %v8308
      %v8310 = vsel %vm8271, %v8309, 0.0
      %8311 = vadd.xlane.f32.xlu0 %v8310
      %v8312 = vpop.xlane.xlu0 %8311
      %v8313 = vsub.f32 0.0, %v8312
      %v8314 = vmul.f32 %v8313, 1.442695
      %v8315 = vpow.pop %v8314
      %8316 = vst.msk [vmem:[#allocation16] sm:$0x1] %vm8292, %v8315
    $region41: #{tpu_custom_call.1} parent=1 // pred_fallthru
      _
    // Predicated region
    $region42: #{tpu_custom_call.1} parent=1 // pred_check
      _
    $region43: #{tpu_custom_call.1} parent=1 // pred_check_branch
      %8318 = sbr.rel (0) target = $region45
    $region44: #{tpu_custom_call.1} parent=1 // pred_region
      %8320 = vsyncadd [#allocation6], 0
      %s8321 = sshll.u32 [#allocation12], 4
      %s8322 = int_to_ptr.vmem [resolvable:$true] %s8321
      %s8323 = sshll.u32 %s4, 4
      %s8324 = int_to_ptr.hbm [resolvable:$true] %s8323
      %8329 = dma.vmem_to_hbm [thread:$0]  %s8322, 2048, %s8324, [#allocation6], 128, 128, 8
    $region45: #{tpu_custom_call.1} parent=1 // pred_fallthru
      _
    // Predicated region
    $region46: #{tpu_custom_call.1} parent=1 // pred_check
      _
    $region47: #{tpu_custom_call.1} parent=1 // pred_check_branch
      %8331 = sbr.rel (0) target = $region49
    $region48: #{tpu_custom_call.1} parent=1 // pred_region
      %8333 = vsyncadd [#allocation14], 0
      %s8334 = sshll.u32 [#allocation13], 4
      %s8335 = int_to_ptr.vmem [resolvable:$true] %s8334
      %s8336 = sshll.u32 %s5, 4
      %s8337 = int_to_ptr.hbm [resolvable:$true] %s8336
      %8342 = dma.vmem_to_hbm [thread:$0]  %s8335, 4096, %s8337, [#allocation14], 256, 256, 16
    $region49: #{tpu_custom_call.1} parent=1 // pred_fallthru
      _
    // Predicated region
    $region50: #{tpu_custom_call.1} parent=1 // pred_check
      _
    $region51: #{tpu_custom_call.1} parent=1 // pred_check_branch
      %8344 = sbr.rel (0) target = $region53
    $region52: #{tpu_custom_call.1} parent=1 // pred_region
      %8346 = vsyncadd [#allocation14], 0
      %s8348 = sshll.u32 [#allocation15], 4
      %s8349 = int_to_ptr.vmem [resolvable:$true] %s8348
      %s8350 = sshll.u32 %s6, 4
      %s8351 = int_to_ptr.hbm [resolvable:$true] %s8350
      %8353 = dma.vmem_to_hbm [thread:$0]  %s8349, 16, %s8351, [#allocation14]
    $region53: #{tpu_custom_call.1} parent=1 // pred_fallthru
      _
    // Predicated region
    $region54: #{tpu_custom_call.1} parent=1 // pred_check
      _
    $region55: #{tpu_custom_call.1} parent=1 // pred_check_branch
      %8355 = sbr.rel (0) target = $region57
    $region56: #{tpu_custom_call.1} parent=1 // pred_region
      %8357 = vsyncadd [#allocation17], 0
      %s8359 = sshll.u32 [#allocation16], 4
      %s8360 = int_to_ptr.vmem [resolvable:$true] %s8359
      %s8361 = sshll.u32 %s7, 4
      %s8362 = int_to_ptr.hbm [resolvable:$true] %s8361
      %8364 = dma.vmem_to_hbm [thread:$0]  %s8360, 16, %s8362, [#allocation17]
    $region57: #{tpu_custom_call.1} parent=1 // pred_fallthru
      _
    // Predicated region
    $region58: #{tpu_custom_call.1} parent=1 // pred_check
      _
    $region59: #{tpu_custom_call.1} parent=1 // pred_check_branch
      %8366 = sbr.rel (0) target = $region61
    $region60: #{tpu_custom_call.1} parent=1 // pred_region
      %8368 = dma.done [#allocation6], 2048
    $region61: #{tpu_custom_call.1} parent=1 // pred_fallthru
      _
    // Predicated region
    $region62: #{tpu_custom_call.1} parent=1 // pred_check
      _
    $region63: #{tpu_custom_call.1} parent=1 // pred_check_branch
      %8370 = sbr.rel (0) target = $region65
    $region64: #{tpu_custom_call.1} parent=1 // pred_region
      %8372 = dma.done [#allocation14], 4096
    $region65: #{tpu_custom_call.1} parent=1 // pred_fallthru
      _
    // Predicated region
    $region66: #{tpu_custom_call.1} parent=1 // pred_check
      _
    $region67: #{tpu_custom_call.1} parent=1 // pred_check_branch
      %8374 = sbr.rel (0) target = $region69
    $region68: #{tpu_custom_call.1} parent=1 // pred_region
      %8376 = dma.done [#allocation14], 16
    $region69: #{tpu_custom_call.1} parent=1 // pred_fallthru
      _
    // Predicated region
    $region70: #{tpu_custom_call.1} parent=1 // pred_check
      _
    $region71: #{tpu_custom_call.1} parent=1 // pred_check_branch
      %8378 = sbr.rel (0) target = $region73
    $region72: #{tpu_custom_call.1} parent=1 // pred_region
      %8380 = dma.done [#allocation17], 16
    $region73: #{tpu_custom_call.1} parent=1 // pred_fallthru
      _
    %8381 = vsyncpa [#allocation5], 1
    %8382 = vsyncpa [#allocation8], 1
    %8383 = vsyncpa [#allocation11], 1
    %8384 = vsyncpa [#allocation6], 1
    %8385 = vsyncpa [#allocation14], 1
    %8386 = vsyncpa [#allocation17], 1

</llo_original>
